<compile_context>
chip_gen: v5e
topology: v5e:2x2
jax: 0.10.0
libtpu: 0.0.40
codegen_flags: <defaults>
</compile_context>

<pallas_src>
import math
import functools

import jax
import jax.numpy as jnp
from jax import lax
from jax.experimental import pallas as pl
from jax.experimental.pallas import tpu as pltpu


# ----------------------------------------------------------------------------
# Pallas kernel: fused bidirectional GRU recurrence over one
# (batch-block, time-chunk) grid step.
# ----------------------------------------------------------------------------
def _bigru_chunk_kernel(gi_f_ref, gi_b_ref, whh_hbm, bhn_ref,
                        out_f_ref, out_b_ref, h_fin_ref,
                        h_scr, w_scr, dma_sem,
                        *, t_real, t_padded):
    """Grid = (batch_blocks, time_blocks); time is sequential ("arbitrary"),
    batch is "parallel" (v7x megacore).  Hidden state of both directions lives
    in a (2, Bb, H) VMEM scratch across the time sweep; recurrent weights live
    single-buffered in a VMEM scratch DMA'd from HBM once per sweep.  The
    backward stream reads/writes through time-reversed index maps."""
    i = pl.program_id(1)
    nb = pl.num_programs(1)
    ts, bb, hdim = out_f_ref.shape
    pad = t_padded - t_real                      # static python int

    @pl.when(i == 0)
    def _():
        # PyTorch GRU with hidden=None starts from zeros.
        h_scr[...] = jnp.zeros_like(h_scr)
        # Single-buffered resident weights: one DMA per sweep.
        cp = pltpu.make_async_copy(whh_hbm, w_scr, dma_sem.at[0])
        cp.start()
        cp.wait()

    cdt = w_scr.dtype
    # Per-gate (H, H) weight slabs, hoisted out of the time loop.
    w_f = (w_scr[0, 0], w_scr[0, 1], w_scr[0, 2])
    w_b = (w_scr[1, 0], w_scr[1, 1], w_scr[1, 2])
    # Hoist the b_hn broadcast out of the (unrolled) time loop.
    b_hn_f = jnp.broadcast_to(bhn_ref[0], (bb, hdim)).astype(jnp.float32)
    b_hn_b = jnp.broadcast_to(bhn_ref[1], (bb, hdim)).astype(jnp.float32)

    def sigmoid(x):
        # tanh form: one EUP op instead of exp + divide.
        return 0.5 * jnp.tanh(0.5 * x) + 0.5

    def cell(gi_r, gi_z, gi_n, w, b_n, h):
        hc = h.astype(cdt)
        gh_r = jnp.dot(hc, w[0], preferred_element_type=jnp.float32)
        gh_z = jnp.dot(hc, w[1], preferred_element_type=jnp.float32)
        gh_n = jnp.dot(hc, w[2], preferred_element_type=jnp.float32)
        r = sigmoid(gi_r + gh_r)                 # b_hh_r folded into gi_r
        z = sigmoid(gi_z + gh_z)                 # b_hh_z folded into gi_z
        n = jnp.tanh(gi_n + r * (gh_n + b_n))    # b_hh_n stays inside r*(...)
        return (1.0 - z) * n + z * h

    def step(t, carry):
        h_f, h_b = carry
        tb = ts - 1 - t                          # backward: reversed in-block
        gi_f = [gi_f_ref[g, t].astype(jnp.float32) for g in range(3)]
        gi_b = [gi_b_ref[g, tb].astype(jnp.float32) for g in range(3)]
        h_f_new = cell(gi_f[0], gi_f[1], gi_f[2], w_f, b_hn_f, h_f)
        h_b_new = cell(gi_b[0], gi_b[1], gi_b[2], w_b, b_hn_b, h_b)
        if pad:
            # Zero-padded timesteps (end of the fwd sweep / start of the bwd
            # sweep) must not advance the recurrence.
            q = i * ts + t
            m_f = (q < t_real).astype(jnp.float32)
            m_b = (q >= pad).astype(jnp.float32)
            h_f_new = m_f * h_f_new + (1.0 - m_f) * h_f
            h_b_new = m_b * h_b_new + (1.0 - m_b) * h_b
        out_f_ref[t] = h_f_new.astype(out_f_ref.dtype)
        out_b_ref[tb] = h_b_new.astype(out_b_ref.dtype)
        return h_f_new, h_b_new

    h_f, h_b = lax.fori_loop(0, ts, step, (h_scr[0], h_scr[1]),
                             unroll=min(ts, 8))
    h_scr[0] = h_f
    h_scr[1] = h_b

    @pl.when(i == nb - 1)
    def _():
        # Final hidden: fwd after the last real timestep, bwd after timestep 0.
        h_fin_ref[0] = h_f.astype(h_fin_ref.dtype)
        h_fin_ref[1] = h_b.astype(h_fin_ref.dtype)


# ----------------------------------------------------------------------------
# VMEM budgeting / chunk sizing
# ----------------------------------------------------------------------------
def _default_vmem_budget():
    """~70% of physical VMEM: ~45 MiB on v7x (64 MiB), ~90 MiB on v5e/v6e."""
    try:
        cap = int(pltpu.get_tpu_info().vmem_capacity_bytes)
        if cap > 0:
            return cap * 7 // 10
    except Exception:
        pass
    return 48 * 1024 * 1024


def _choose_ts(t, bb, h, gi_isz, w_isz, budget):
    """Largest time chunk whose double-buffered gi/out blocks fit the VMEM
    budget (amortizes the ~600-cycle per-grid-step overhead)."""
    per_t = 2 * 2 * 3 * bb * h * gi_isz + 2 * 2 * bb * h * 4   # gi + out blocks
    fixed = (2 * 3 * h * h * w_isz          # resident weights (single-buffered)
             + 2 * 2 * bb * h * 4           # final-hidden output block
             + 2 * bb * h * 4               # hidden-state scratch
             + 2 * 2 * 2 * h * 4            # b_hn block
             + (4 << 20))                   # slack for compiler-internal scratch
    ts = (budget - fixed) // max(per_t, 1)
    return int(max(1, min(ts, t, 256)))


# ----------------------------------------------------------------------------
# One fused bidirectional GRU layer
# ----------------------------------------------------------------------------
def _bigru_layer(gi_f, gi_b, whh, bhn, *, ts=None, vmem_budget_bytes=None):
    """gi_f / gi_b : (3, T, B, H) per-gate input projections (biases folded).
    whh : (2, 3, H, H) per-direction, per-gate W_hh^T.  bhn : (2, 1, H) f32.
    Returns (out_f (T,B,H), out_b (T,B,H), h_fin (2,B,H)), all float32."""
    g, t, b, h = gi_f.shape
    assert g == 3
    budget = (vmem_budget_bytes if vmem_budget_bytes is not None
              else _default_vmem_budget())

    # Shard the batch over v7x's two TensorCores when it is big enough; the
    # recurrence is independent per batch row.  Degenerates to one block here.
    nbb = 2 if (b >= 16 and b % 16 == 0) else 1
    bb = b // nbb

    if ts is None:
        ts = _choose_ts(t, bb, h, jnp.dtype(gi_f.dtype).itemsize,
                        jnp.dtype(whh.dtype).itemsize, budget)
    ts = int(max(1, min(ts, t)))
    nb = -(-t // ts)
    tp = nb * ts
    if tp != t:
        # Pad awkward T instead of shrinking the chunk; the kernel masks the
        # recurrence update on padded steps and we discard padded outputs.
        pw = ((0, 0), (0, tp - t), (0, 0), (0, 0))
        gi_f = jnp.pad(gi_f, pw)
        gi_b = jnp.pad(gi_b, pw)

    fwd_map = lambda pb, i: (0, i, pb, 0)
    bwd_map = lambda pb, i: (0, nb - 1 - i, pb, 0)      # time-reversed blocks

    # TODO(synk): for best output-store width, H should be a multiple of 128
    # and B a multiple of 8 at production sizes (pad in the caller if needed).
    out_f, out_b, h_fin = pl.pallas_call(
        functools.partial(_bigru_chunk_kernel, t_real=t, t_padded=tp),
        out_shape=(jax.ShapeDtypeStruct((tp, b, h), jnp.float32),
                   jax.ShapeDtypeStruct((tp, b, h), jnp.float32),
                   jax.ShapeDtypeStruct((2, b, h), jnp.float32)),
        grid_spec=pltpu.PrefetchScalarGridSpec(
            num_scalar_prefetch=0,
            grid=(nbb, nb),
            in_specs=[
                pl.BlockSpec((3, ts, bb, h), fwd_map),        # gi fwd chunk
                pl.BlockSpec((3, ts, bb, h), bwd_map),        # gi bwd chunk
                pl.BlockSpec(memory_space=pl.ANY),            # W_hh (raw HBM)
                pl.BlockSpec((2, 1, h), lambda pb, i: (0, 0, 0)),  # b_hn
            ],
            out_specs=[
                pl.BlockSpec((ts, bb, h), lambda pb, i: (i, pb, 0)),
                pl.BlockSpec((ts, bb, h), lambda pb, i: (nb - 1 - i, pb, 0)),
                pl.BlockSpec((2, bb, h), lambda pb, i: (0, pb, 0)),
            ],
            scratch_shapes=[
                pltpu.VMEM((2, bb, h), jnp.float32),          # hidden state
                pltpu.VMEM((2, 3, h, h), whh.dtype),          # resident weights
                pltpu.SemaphoreType.DMA((1,)),
            ]),
        compiler_params=pltpu.CompilerParams(
            dimension_semantics=("parallel", "arbitrary"),
            vmem_limit_bytes=int(budget)),
    )(gi_f, gi_b, whh, bhn)

    if tp != t:
        out_f = out_f[:t]
        out_b = out_b[:t]
    return out_f, out_b, h_fin


def _input_proj(parts, eq, w_ih_gt, bias_g, out_dtype):
    """Per-gate input projection gi[g] = sum_p parts[p] @ w_ih_gt[g, off_p:, :]
    + bias_g[g]; the fwd/bwd concat of the previous layer is never
    materialized.  Returns (3, T, B, H) in `out_dtype`."""
    off = 0
    acc = None
    for part in parts:
        d = part.shape[-1]
        term = jnp.einsum(eq, part, w_ih_gt[:, off:off + d, :],
                          preferred_element_type=jnp.float32)
        acc = term if acc is None else acc + term
        off += d
    return (acc + bias_g[:, None, None, :]).astype(out_dtype)


# ----------------------------------------------------------------------------
# Encoder forward (projection + glue in plain JAX; recurrence in Pallas).
# ----------------------------------------------------------------------------
def encoder_forward(x_btd, params, hidden_dim, num_layers, *,
                    ts=None, vmem_budget_bytes=None):
    """x_btd : (B, T, input_dim).  Returns ((B, T, H), (num_layers*2, B, H))."""
    assert params[0]['whh'].shape[-1] == hidden_dim
    # TODO(synk): an optional non-zero initial hidden state is not plumbed
    # through (the module's default hidden=None path is what is implemented).
    hiddens = []
    parts, eq = [x_btd], 'btd,gdh->gtbh'   # layer-0 transpose fused in einsum
    out_f = out_b = None
    for l in range(num_layers):
        p = params[l]
        gi_f = _input_proj(parts, eq, p['w_ih_gt_f'], p['bias_g_f'],
                           p['whh'].dtype)
        gi_b = _input_proj(parts, eq, p['w_ih_gt_b'], p['bias_g_b'],
                           p['whh'].dtype)
        out_f, out_b, h_fin = _bigru_layer(
            gi_f, gi_b, p['whh'], p['bhn'],
            ts=ts, vmem_budget_bytes=vmem_budget_bytes)
        hiddens.append(h_fin)                  # (2, B, H) = [fwd, bwd]
        parts, eq = [out_f, out_b], 'tbh,ghk->gtbk'   # no concat materialized
        # TODO(synk): inter-layer dropout omitted (inference / eval semantics).
    # output_rnn[:, :, :H] + output_rnn[:, :, H:]  ==  fwd + bwd of last layer
    out = jnp.transpose(out_f + out_b, (1, 0, 2))      # add fused into relayout
    hidden = jnp.concatenate(hiddens, axis=0)          # (num_layers*2, B, H)
    return out, hidden


# ----------------------------------------------------------------------------
# Parameters: torch.nn.GRU-layout init + conversion to the kernel layout.
# ----------------------------------------------------------------------------
def init_raw_params(key, input_dim, hidden_dim, num_layers):
    """Per layer, per direction: (w_ih (3H,Din), w_hh (3H,H), b_ih, b_hh),
    gate order [r, z, n] as in torch.nn.GRU."""
    k = 1.0 / math.sqrt(hidden_dim)
    raw = []
    for l in range(num_layers):
        d_in = input_dim if l == 0 else 2 * hidden_dim
        layer = {}
        for dirname in ("fwd", "bwd"):
            key, k1, k2, k3, k4 = jax.random.split(key, 5)
            layer[dirname] = (
                jax.random.uniform(k1, (3 * hidden_dim, d_in),
                                   dtype=jnp.float32, minval=-k, maxval=k),
                jax.random.uniform(k2, (3 * hidden_dim, hidden_dim),
                                   dtype=jnp.float32, minval=-k, maxval=k),
                jax.random.uniform(k3, (3 * hidden_dim,),
                                   dtype=jnp.float32, minval=-k, maxval=k),
                jax.random.uniform(k4, (3 * hidden_dim,),
                                   dtype=jnp.float32, minval=-k, maxval=k),
            )
        raw.append(layer)
    return raw


def prepare_params(raw, compute_dtype=jnp.bfloat16):
    """Convert torch-layout params to the kernel layout:
      w_ih_gt_{f,b}: (3, Din, H) per-gate W_ih^T          (compute dtype)
      bias_g_{f,b} : (3, H)      b_ih + [b_hh_r, b_hh_z, 0]   (f32, folded)
      whh          : (2, 3, H, H) per-dir, per-gate W_hh^T (compute dtype)
      bhn          : (2, 1, H)    b_hh_n per direction        (f32)"""
    params = []
    for layer in raw:
        out = {}
        whh, bhn = [], []
        for dirname, tag in (("fwd", "f"), ("bwd", "b")):
            w_ih, w_hh, b_ih, b_hh = layer[dirname]
            hh = w_hh.shape[1]
            out['w_ih_gt_' + tag] = (
                w_ih.reshape(3, hh, -1).transpose(0, 2, 1).astype(compute_dtype))
            out['bias_g_' + tag] = (
                b_ih.reshape(3, hh)
                + jnp.stack([b_hh[:hh], b_hh[hh:2 * hh],
                             jnp.zeros((hh,), jnp.float32)]))
            whh.append(w_hh.reshape(3, hh, hh).transpose(0, 2, 1))
            bhn.append(b_hh[2 * hh:])
        out['whh'] = jnp.stack(whh).astype(compute_dtype)            # (2,3,H,H)
        out['bhn'] = jnp.stack(bhn)[:, None, :].astype(jnp.float32)  # (2,1,H)
        params.append(out)
    return params


# ----------------------------------------------------------------------------
# Pure-JAX reference (same math, no Pallas) for correctness checking.
# ----------------------------------------------------------------------------
def _ref_gru_direction(x_tbd, w_ih, w_hh, b_ih, b_hh, reverse):
    tt, bsz, _ = x_tbd.shape
    hh = w_hh.shape[1]
    h = jnp.zeros((bsz, hh), jnp.float32)
    outs = [None] * tt
    steps = range(tt - 1, -1, -1) if reverse else range(tt)
    for s in steps:
        gi = x_tbd[s] @ w_ih.T + b_ih
        gh = h @ w_hh.T + b_hh
        r = jax.nn.sigmoid(gi[:, :hh] + gh[:, :hh])
        z = jax.nn.sigmoid(gi[:, hh:2 * hh] + gh[:, hh:2 * hh])
        n = jnp.tanh(gi[:, 2 * hh:] + r * gh[:, 2 * hh:])
        h = (1.0 - z) * n + z * h
        outs[s] = h
    return jnp.stack(outs, axis=0), h


def _ref_encoder_forward(x_btd, raw_params, hidden_dim, num_layers):
    x = jnp.transpose(x_btd, (1, 0, 2))
    hiddens = []
    layer_in = x
    out_f = out_b = None
    for l in range(num_layers):
        p = raw_params[l]
        out_f, h_f = _ref_gru_direction(layer_in, *p["fwd"], reverse=False)
        out_b, h_b = _ref_gru_direction(layer_in, *p["bwd"], reverse=True)
        hiddens += [h_f, h_b]
        layer_in = jnp.concatenate([out_f, out_b], axis=-1)
    out = jnp.transpose(out_f + out_b, (1, 0, 2))
    return out, jnp.stack(hiddens, axis=0)


if __name__ == "__main__":
    batch, seq_len = 2, 8
    input_dim, hidden_dim, num_layers = 16, 32, 2

    key = jax.random.PRNGKey(0)
    key, xkey = jax.random.split(key)
    x = jax.random.normal(xkey, (batch, seq_len, input_dim), dtype=jnp.float32)

    raw = init_raw_params(key, input_dim, hidden_dim, num_layers)
    ref_out, ref_hid = _ref_encoder_forward(x, raw, hidden_dim, num_layers)

    # --- float32 storage path: tight check against the pure-JAX reference ---
    p32 = prepare_params(raw, jnp.float32)
    fwd32 = jax.jit(functools.partial(encoder_forward, hidden_dim=hidden_dim,
                                      num_layers=num_layers))
    out32, hid32 = fwd32(x, p32)
    out32 = jax.block_until_ready(out32)
    hid32 = jax.block_until_ready(hid32)
    assert out32.shape == (batch, seq_len, hidden_dim)
    assert hid32.shape == (num_layers * 2, batch, hidden_dim)
    assert jnp.allclose(out32, ref_out, atol=1e-4, rtol=1e-4)
    assert jnp.allclose(hid32, ref_hid, atol=1e-4, rtol=1e-4)

    # --- awkward chunking: exercises T padding + multi-block sweep + masking ---
    fwd_pad = jax.jit(functools.partial(encoder_forward, hidden_dim=hidden_dim,
                                        num_layers=num_layers, ts=5))
    out_p, hid_p = fwd_pad(x, p32)
    out_p = jax.block_until_ready(out_p)
    assert jnp.allclose(out_p, ref_out, atol=1e-4, rtol=1e-4)
    assert jnp.allclose(hid_p, ref_hid, atol=1e-4, rtol=1e-4)

    # --- bfloat16 storage for gi / W_hh (f32 accumulation): loose sanity check
    pbf = prepare_params(raw, jnp.bfloat16)
    fwd_bf = jax.jit(functools.partial(encoder_forward, hidden_dim=hidden_dim,
                                       num_layers=num_layers))
    out_bf, hid_bf = fwd_bf(x, pbf)
    out_bf = jax.block_until_ready(out_bf)
    assert jnp.allclose(out_bf, ref_out, atol=1e-1, rtol=1e-1)
    assert jnp.allclose(hid_bf, ref_hid, atol=1e-1, rtol=1e-1)

    print("KERNEL_OK")
</pallas_src>

<mosaic_0001>
module attributes {stable_mosaic.version = 11 : i64} {
  func.func @_bigru_chunk_kernel(%arg0: i32, %arg1: i32, %arg2: memref<3x8x2x32xf32, #tpu.memory_space<vmem>>, %arg3: memref<3x8x2x32xf32, #tpu.memory_space<vmem>>, %arg4: memref<2x3x32x32xf32, #tpu.memory_space<any>>, %arg5: memref<2x1x32xf32, #tpu.memory_space<vmem>>, %arg6: memref<8x2x32xf32, #tpu.memory_space<vmem>>, %arg7: memref<8x2x32xf32, #tpu.memory_space<vmem>>, %arg8: memref<2x2x32xf32, #tpu.memory_space<vmem>>, %arg9: memref<2x2x32xf32, #tpu.memory_space<vmem>>, %arg10: memref<2x3x32x32xf32, #tpu.memory_space<vmem>>, %arg11: memref<1x!tpu.dma_semaphore, #tpu.memory_space<semaphore_mem>>) attributes {dimension_semantics = [#tpu.dimension_semantics<parallel>, #tpu.dimension_semantics<arbitrary>], iteration_bounds = array<i64: 1, 1>, scalar_prefetch = 0 : i64, scratch_operands = 3 : i64, tpu.core_type = #tpu.core_type<tc>, window_params = [{transform_indices = @transform_0, window_bounds = array<i64: 3, 8, 2, 32>}, {transform_indices = @transform_1, window_bounds = array<i64: 3, 8, 2, 32>}, {}, {pipeline_mode = #tpu.pipeline_mode<synchronous>, transform_indices = @transform_3, window_bounds = array<i64: 2, 1, 32>}, {transform_indices = @transform_4, window_bounds = array<i64: 8, 2, 32>}, {transform_indices = @transform_5, window_bounds = array<i64: 8, 2, 32>}, {transform_indices = @transform_6, window_bounds = array<i64: 2, 2, 32>}]} {
    %c0_i32 = arith.constant 0 : i32
    %0 = arith.cmpi eq, %arg1, %c0_i32 : i32
    %1 = arith.extui %0 : i1 to i32
    %c0_i32_0 = arith.constant 0 : i32
    %2 = arith.cmpi ne, %1, %c0_i32_0 : i32
    scf.if %2 {
      %cst_386 = arith.constant 0.000000e+00 : f32
      %700 = vector.broadcast %cst_386 : f32 to vector<2x2x32xf32>
      %c0_387 = arith.constant 0 : index
      %c0_388 = arith.constant 0 : index
      %c0_389 = arith.constant 0 : index
      %701 = vector.load %arg9[%c0_387, %c0_388, %c0_389] : memref<2x2x32xf32, #tpu.memory_space<vmem>>, vector<2x2x32xf32>
      tpu.vector_store %arg9[%c0_387, %c0_388, %c0_389], %700 {strides = array<i32>} : memref<2x2x32xf32, #tpu.memory_space<vmem>>, vector<2x2x32xf32>,
      %c0_i32_390 = arith.constant 0 : i32
      %702 = tpu.memref_slice %arg11[%c0_i32_390] : memref<1x!tpu.dma_semaphore, #tpu.memory_space<semaphore_mem>> -> memref<1x!tpu.dma_semaphore, #tpu.memory_space<semaphore_mem>>
      %703 = tpu.memref_squeeze %702 : memref<1x!tpu.dma_semaphore, #tpu.memory_space<semaphore_mem>> -> memref<!tpu.dma_semaphore, #tpu.memory_space<semaphore_mem>>
      tpu.enqueue_dma source(%arg4 : memref<2x3x32x32xf32, #tpu.memory_space<any>>) target(%arg10 : memref<2x3x32x32xf32, #tpu.memory_space<vmem>>) target_semaphore(%703 : memref<!tpu.dma_semaphore, #tpu.memory_space<semaphore_mem>>)
      %c0_i32_391 = arith.constant 0 : i32
      %704 = tpu.memref_slice %arg11[%c0_i32_391] : memref<1x!tpu.dma_semaphore, #tpu.memory_space<semaphore_mem>> -> memref<1x!tpu.dma_semaphore, #tpu.memory_space<semaphore_mem>>
      %705 = tpu.memref_squeeze %704 : memref<1x!tpu.dma_semaphore, #tpu.memory_space<semaphore_mem>> -> memref<!tpu.dma_semaphore, #tpu.memory_space<semaphore_mem>>
      tpu.wait_dma2 semaphore(%705 : memref<!tpu.dma_semaphore, #tpu.memory_space<semaphore_mem>>) src(%arg4 : memref<2x3x32x32xf32, #tpu.memory_space<any>>) dst(%arg10 : memref<2x3x32x32xf32, #tpu.memory_space<vmem>>)
    } else {
    }
    %c0 = arith.constant 0 : index
    %c0_1 = arith.constant 0 : index
    %c0_2 = arith.constant 0 : index
    %c0_3 = arith.constant 0 : index
    %3 = vector.load %arg10[%c0, %c0_1, %c0_2, %c0_3] : memref<2x3x32x32xf32, #tpu.memory_space<vmem>>, vector<1x1x32x32xf32>
    %4 = vector.shape_cast %3 : vector<1x1x32x32xf32> to vector<32x32xf32>
    %c0_4 = arith.constant 0 : index
    %c1 = arith.constant 1 : index
    %c0_5 = arith.constant 0 : index
    %c0_6 = arith.constant 0 : index
    %5 = vector.load %arg10[%c0_4, %c1, %c0_5, %c0_6] : memref<2x3x32x32xf32, #tpu.memory_space<vmem>>, vector<1x1x32x32xf32>
    %6 = vector.shape_cast %5 : vector<1x1x32x32xf32> to vector<32x32xf32>
    %c0_7 = arith.constant 0 : index
    %c2 = arith.constant 2 : index
    %c0_8 = arith.constant 0 : index
    %c0_9 = arith.constant 0 : index
    %7 = vector.load %arg10[%c0_7, %c2, %c0_8, %c0_9] : memref<2x3x32x32xf32, #tpu.memory_space<vmem>>, vector<1x1x32x32xf32>
    %8 = vector.shape_cast %7 : vector<1x1x32x32xf32> to vector<32x32xf32>
    %c1_10 = arith.constant 1 : index
    %c0_11 = arith.constant 0 : index
    %c0_12 = arith.constant 0 : index
    %c0_13 = arith.constant 0 : index
    %9 = vector.load %arg10[%c1_10, %c0_11, %c0_12, %c0_13] : memref<2x3x32x32xf32, #tpu.memory_space<vmem>>, vector<1x1x32x32xf32>
    %10 = vector.shape_cast %9 : vector<1x1x32x32xf32> to vector<32x32xf32>
    %c1_14 = arith.constant 1 : index
    %c1_15 = arith.constant 1 : index
    %c0_16 = arith.constant 0 : index
    %c0_17 = arith.constant 0 : index
    %11 = vector.load %arg10[%c1_14, %c1_15, %c0_16, %c0_17] : memref<2x3x32x32xf32, #tpu.memory_space<vmem>>, vector<1x1x32x32xf32>
    %12 = vector.shape_cast %11 : vector<1x1x32x32xf32> to vector<32x32xf32>
    %c1_18 = arith.constant 1 : index
    %c2_19 = arith.constant 2 : index
    %c0_20 = arith.constant 0 : index
    %c0_21 = arith.constant 0 : index
    %13 = vector.load %arg10[%c1_18, %c2_19, %c0_20, %c0_21] : memref<2x3x32x32xf32, #tpu.memory_space<vmem>>, vector<1x1x32x32xf32>
    %14 = vector.shape_cast %13 : vector<1x1x32x32xf32> to vector<32x32xf32>
    %c0_22 = arith.constant 0 : index
    %c0_23 = arith.constant 0 : index
    %c0_24 = arith.constant 0 : index
    %15 = vector.load %arg5[%c0_22, %c0_23, %c0_24] : memref<2x1x32xf32, #tpu.memory_space<vmem>>, vector<1x1x32xf32>
    %16 = vector.shape_cast %15 : vector<1x1x32xf32> to vector<1x32xf32>
    %17 = vector.shape_cast %16 : vector<1x32xf32> to vector<1x32xf32>
    %18 = vector.broadcast %17 : vector<1x32xf32> to vector<2x32xf32>
    %c1_25 = arith.constant 1 : index
    %c0_26 = arith.constant 0 : index
    %c0_27 = arith.constant 0 : index
    %19 = vector.load %arg5[%c1_25, %c0_26, %c0_27] : memref<2x1x32xf32, #tpu.memory_space<vmem>>, vector<1x1x32xf32>
    %20 = vector.shape_cast %19 : vector<1x1x32xf32> to vector<1x32xf32>
    %21 = vector.shape_cast %20 : vector<1x32xf32> to vector<1x32xf32>
    %22 = vector.broadcast %21 : vector<1x32xf32> to vector<2x32xf32>
    %c0_28 = arith.constant 0 : index
    %c0_29 = arith.constant 0 : index
    %c0_30 = arith.constant 0 : index
    %23 = vector.load %arg9[%c0_28, %c0_29, %c0_30] : memref<2x2x32xf32, #tpu.memory_space<vmem>>, vector<1x2x32xf32>
    %24 = vector.shape_cast %23 : vector<1x2x32xf32> to vector<2x32xf32>
    %c1_31 = arith.constant 1 : index
    %c0_32 = arith.constant 0 : index
    %c0_33 = arith.constant 0 : index
    %25 = vector.load %arg9[%c1_31, %c0_32, %c0_33] : memref<2x2x32xf32, #tpu.memory_space<vmem>>, vector<1x2x32xf32>
    %26 = vector.shape_cast %25 : vector<1x2x32xf32> to vector<2x32xf32>
    %c0_i32_34 = arith.constant 0 : i32
    %c7_i32 = arith.constant 7 : i32
    %27 = arith.subi %c7_i32, %c0_i32_34 : i32
    %c0_35 = arith.constant 0 : index
    %28 = arith.index_cast %c0_i32_34 : i32 to index
    %c0_36 = arith.constant 0 : index
    %c0_37 = arith.constant 0 : index
    %29 = vector.load %arg2[%c0_35, %28, %c0_36, %c0_37] : memref<3x8x2x32xf32, #tpu.memory_space<vmem>>, vector<1x1x2x32xf32>
    %30 = vector.shape_cast %29 : vector<1x1x2x32xf32> to vector<2x32xf32>
    %c1_38 = arith.constant 1 : index
    %31 = arith.index_cast %c0_i32_34 : i32 to index
    %c0_39 = arith.constant 0 : index
    %c0_40 = arith.constant 0 : index
    %32 = vector.load %arg2[%c1_38, %31, %c0_39, %c0_40] : memref<3x8x2x32xf32, #tpu.memory_space<vmem>>, vector<1x1x2x32xf32>
    %33 = vector.shape_cast %32 : vector<1x1x2x32xf32> to vector<2x32xf32>
    %c2_41 = arith.constant 2 : index
    %34 = arith.index_cast %c0_i32_34 : i32 to index
    %c0_42 = arith.constant 0 : index
    %c0_43 = arith.constant 0 : index
    %35 = vector.load %arg2[%c2_41, %34, %c0_42, %c0_43] : memref<3x8x2x32xf32, #tpu.memory_space<vmem>>, vector<1x1x2x32xf32>
    %36 = vector.shape_cast %35 : vector<1x1x2x32xf32> to vector<2x32xf32>
    %c0_44 = arith.constant 0 : index
    %37 = arith.index_cast %27 : i32 to index
    %c0_45 = arith.constant 0 : index
    %c0_46 = arith.constant 0 : index
    %38 = vector.load %arg3[%c0_44, %37, %c0_45, %c0_46] : memref<3x8x2x32xf32, #tpu.memory_space<vmem>>, vector<1x1x2x32xf32>
    %39 = vector.shape_cast %38 : vector<1x1x2x32xf32> to vector<2x32xf32>
    %c1_47 = arith.constant 1 : index
    %40 = arith.index_cast %27 : i32 to index
    %c0_48 = arith.constant 0 : index
    %c0_49 = arith.constant 0 : index
    %41 = vector.load %arg3[%c1_47, %40, %c0_48, %c0_49] : memref<3x8x2x32xf32, #tpu.memory_space<vmem>>, vector<1x1x2x32xf32>
    %42 = vector.shape_cast %41 : vector<1x1x2x32xf32> to vector<2x32xf32>
    %c2_50 = arith.constant 2 : index
    %43 = arith.index_cast %27 : i32 to index
    %c0_51 = arith.constant 0 : index
    %c0_52 = arith.constant 0 : index
    %44 = vector.load %arg3[%c2_50, %43, %c0_51, %c0_52] : memref<3x8x2x32xf32, #tpu.memory_space<vmem>>, vector<1x1x2x32xf32>
    %45 = vector.shape_cast %44 : vector<1x1x2x32xf32> to vector<2x32xf32>
    %cst = arith.constant dense<0.000000e+00> : vector<2x32xf32>
    %46 = tpu.matmul %24, %4, %cst {dimension_numbers = #tpu.dot_dimension_numbers<[1], [0], [0], [1], [0, 0, 1, 1], [], []>} : vector<2x32xf32>, vector<32x32xf32>, vector<2x32xf32> -> vector<2x32xf32>
    %cst_53 = arith.constant dense<0.000000e+00> : vector<2x32xf32>
    %47 = tpu.matmul %24, %6, %cst_53 {dimension_numbers = #tpu.dot_dimension_numbers<[1], [0], [0], [1], [0, 0, 1, 1], [], []>} : vector<2x32xf32>, vector<32x32xf32>, vector<2x32xf32> -> vector<2x32xf32>
    %cst_54 = arith.constant dense<0.000000e+00> : vector<2x32xf32>
    %48 = tpu.matmul %24, %8, %cst_54 {dimension_numbers = #tpu.dot_dimension_numbers<[1], [0], [0], [1], [0, 0, 1, 1], [], []>} : vector<2x32xf32>, vector<32x32xf32>, vector<2x32xf32> -> vector<2x32xf32>
    %49 = arith.addf %30, %46 : vector<2x32xf32>
    %cst_55 = arith.constant 5.000000e-01 : f32
    %50 = vector.broadcast %cst_55 : f32 to vector<2x32xf32>
    %51 = arith.mulf %50, %49 : vector<2x32xf32>
    %52 = math.tanh %51 : vector<2x32xf32>
    %cst_56 = arith.constant 5.000000e-01 : f32
    %53 = vector.broadcast %cst_56 : f32 to vector<2x32xf32>
    %54 = arith.mulf %53, %52 : vector<2x32xf32>
    %cst_57 = arith.constant 5.000000e-01 : f32
    %55 = vector.broadcast %cst_57 : f32 to vector<2x32xf32>
    %56 = arith.addf %54, %55 : vector<2x32xf32>
    %57 = arith.addf %33, %47 : vector<2x32xf32>
    %cst_58 = arith.constant 5.000000e-01 : f32
    %58 = vector.broadcast %cst_58 : f32 to vector<2x32xf32>
    %59 = arith.mulf %58, %57 : vector<2x32xf32>
    %60 = math.tanh %59 : vector<2x32xf32>
    %cst_59 = arith.constant 5.000000e-01 : f32
    %61 = vector.broadcast %cst_59 : f32 to vector<2x32xf32>
    %62 = arith.mulf %61, %60 : vector<2x32xf32>
    %cst_60 = arith.constant 5.000000e-01 : f32
    %63 = vector.broadcast %cst_60 : f32 to vector<2x32xf32>
    %64 = arith.addf %62, %63 : vector<2x32xf32>
    %65 = arith.addf %48, %18 : vector<2x32xf32>
    %66 = arith.mulf %56, %65 : vector<2x32xf32>
    %67 = arith.addf %36, %66 : vector<2x32xf32>
    %68 = math.tanh %67 : vector<2x32xf32>
    %cst_61 = arith.constant 1.000000e+00 : f32
    %69 = vector.broadcast %cst_61 : f32 to vector<2x32xf32>
    %70 = arith.subf %69, %64 : vector<2x32xf32>
    %71 = arith.mulf %70, %68 : vector<2x32xf32>
    %72 = arith.mulf %64, %24 : vector<2x32xf32>
    %73 = arith.addf %71, %72 : vector<2x32xf32>
    %cst_62 = arith.constant dense<0.000000e+00> : vector<2x32xf32>
    %74 = tpu.matmul %26, %10, %cst_62 {dimension_numbers = #tpu.dot_dimension_numbers<[1], [0], [0], [1], [0, 0, 1, 1], [], []>} : vector<2x32xf32>, vector<32x32xf32>, vector<2x32xf32> -> vector<2x32xf32>
    %cst_63 = arith.constant dense<0.000000e+00> : vector<2x32xf32>
    %75 = tpu.matmul %26, %12, %cst_63 {dimension_numbers = #tpu.dot_dimension_numbers<[1], [0], [0], [1], [0, 0, 1, 1], [], []>} : vector<2x32xf32>, vector<32x32xf32>, vector<2x32xf32> -> vector<2x32xf32>
    %cst_64 = arith.constant dense<0.000000e+00> : vector<2x32xf32>
    %76 = tpu.matmul %26, %14, %cst_64 {dimension_numbers = #tpu.dot_dimension_numbers<[1], [0], [0], [1], [0, 0, 1, 1], [], []>} : vector<2x32xf32>, vector<32x32xf32>, vector<2x32xf32> -> vector<2x32xf32>
    %77 = arith.addf %39, %74 : vector<2x32xf32>
    %cst_65 = arith.constant 5.000000e-01 : f32
    %78 = vector.broadcast %cst_65 : f32 to vector<2x32xf32>
    %79 = arith.mulf %78, %77 : vector<2x32xf32>
    %80 = math.tanh %79 : vector<2x32xf32>
    %cst_66 = arith.constant 5.000000e-01 : f32
    %81 = vector.broadcast %cst_66 : f32 to vector<2x32xf32>
    %82 = arith.mulf %81, %80 : vector<2x32xf32>
    %cst_67 = arith.constant 5.000000e-01 : f32
    %83 = vector.broadcast %cst_67 : f32 to vector<2x32xf32>
    %84 = arith.addf %82, %83 : vector<2x32xf32>
    %85 = arith.addf %42, %75 : vector<2x32xf32>
    %cst_68 = arith.constant 5.000000e-01 : f32
    %86 = vector.broadcast %cst_68 : f32 to vector<2x32xf32>
    %87 = arith.mulf %86, %85 : vector<2x32xf32>
    %88 = math.tanh %87 : vector<2x32xf32>
    %cst_69 = arith.constant 5.000000e-01 : f32
    %89 = vector.broadcast %cst_69 : f32 to vector<2x32xf32>
    %90 = arith.mulf %89, %88 : vector<2x32xf32>
    %cst_70 = arith.constant 5.000000e-01 : f32
    %91 = vector.broadcast %cst_70 : f32 to vector<2x32xf32>
    %92 = arith.addf %90, %91 : vector<2x32xf32>
    %93 = arith.addf %76, %22 : vector<2x32xf32>
    %94 = arith.mulf %84, %93 : vector<2x32xf32>
    %95 = arith.addf %45, %94 : vector<2x32xf32>
    %96 = math.tanh %95 : vector<2x32xf32>
    %cst_71 = arith.constant 1.000000e+00 : f32
    %97 = vector.broadcast %cst_71 : f32 to vector<2x32xf32>
    %98 = arith.subf %97, %92 : vector<2x32xf32>
    %99 = arith.mulf %98, %96 : vector<2x32xf32>
    %100 = arith.mulf %92, %26 : vector<2x32xf32>
    %101 = arith.addf %99, %100 : vector<2x32xf32>
    %102 = arith.index_cast %c0_i32_34 : i32 to index
    %c0_72 = arith.constant 0 : index
    %c0_73 = arith.constant 0 : index
    %103 = vector.load %arg6[%102, %c0_72, %c0_73] : memref<8x2x32xf32, #tpu.memory_space<vmem>>, vector<1x2x32xf32>
    %104 = vector.shape_cast %103 : vector<1x2x32xf32> to vector<2x32xf32>
    %105 = vector.shape_cast %73 : vector<2x32xf32> to vector<1x2x32xf32>
    tpu.vector_store %arg6[%102, %c0_72, %c0_73], %105 {strides = array<i32>} : memref<8x2x32xf32, #tpu.memory_space<vmem>>, vector<1x2x32xf32>,
    %106 = arith.index_cast %27 : i32 to index
    %c0_74 = arith.constant 0 : index
    %c0_75 = arith.constant 0 : index
    %107 = vector.load %arg7[%106, %c0_74, %c0_75] : memref<8x2x32xf32, #tpu.memory_space<vmem>>, vector<1x2x32xf32>
    %108 = vector.shape_cast %107 : vector<1x2x32xf32> to vector<2x32xf32>
    %109 = vector.shape_cast %101 : vector<2x32xf32> to vector<1x2x32xf32>
    tpu.vector_store %arg7[%106, %c0_74, %c0_75], %109 {strides = array<i32>} : memref<8x2x32xf32, #tpu.memory_space<vmem>>, vector<1x2x32xf32>,
    %c1_i32 = arith.constant 1 : i32
    %c7_i32_76 = arith.constant 7 : i32
    %110 = arith.subi %c7_i32_76, %c1_i32 : i32
    %c0_77 = arith.constant 0 : index
    %111 = arith.index_cast %c1_i32 : i32 to index
    %c0_78 = arith.constant 0 : index
    %c0_79 = arith.constant 0 : index
    %112 = vector.load %arg2[%c0_77, %111, %c0_78, %c0_79] : memref<3x8x2x32xf32, #tpu.memory_space<vmem>>, vector<1x1x2x32xf32>
    %113 = vector.shape_cast %112 : vector<1x1x2x32xf32> to vector<2x32xf32>
    %c1_80 = arith.constant 1 : index
    %114 = arith.index_cast %c1_i32 : i32 to index
    %c0_81 = arith.constant 0 : index
    %c0_82 = arith.constant 0 : index
    %115 = vector.load %arg2[%c1_80, %114, %c0_81, %c0_82] : memref<3x8x2x32xf32, #tpu.memory_space<vmem>>, vector<1x1x2x32xf32>
    %116 = vector.shape_cast %115 : vector<1x1x2x32xf32> to vector<2x32xf32>
    %c2_83 = arith.constant 2 : index
    %117 = arith.index_cast %c1_i32 : i32 to index
    %c0_84 = arith.constant 0 : index
    %c0_85 = arith.constant 0 : index
    %118 = vector.load %arg2[%c2_83, %117, %c0_84, %c0_85] : memref<3x8x2x32xf32, #tpu.memory_space<vmem>>, vector<1x1x2x32xf32>
    %119 = vector.shape_cast %118 : vector<1x1x2x32xf32> to vector<2x32xf32>
    %c0_86 = arith.constant 0 : index
    %120 = arith.index_cast %110 : i32 to index
    %c0_87 = arith.constant 0 : index
    %c0_88 = arith.constant 0 : index
    %121 = vector.load %arg3[%c0_86, %120, %c0_87, %c0_88] : memref<3x8x2x32xf32, #tpu.memory_space<vmem>>, vector<1x1x2x32xf32>
    %122 = vector.shape_cast %121 : vector<1x1x2x32xf32> to vector<2x32xf32>
    %c1_89 = arith.constant 1 : index
    %123 = arith.index_cast %110 : i32 to index
    %c0_90 = arith.constant 0 : index
    %c0_91 = arith.constant 0 : index
    %124 = vector.load %arg3[%c1_89, %123, %c0_90, %c0_91] : memref<3x8x2x32xf32, #tpu.memory_space<vmem>>, vector<1x1x2x32xf32>
    %125 = vector.shape_cast %124 : vector<1x1x2x32xf32> to vector<2x32xf32>
    %c2_92 = arith.constant 2 : index
    %126 = arith.index_cast %110 : i32 to index
    %c0_93 = arith.constant 0 : index
    %c0_94 = arith.constant 0 : index
    %127 = vector.load %arg3[%c2_92, %126, %c0_93, %c0_94] : memref<3x8x2x32xf32, #tpu.memory_space<vmem>>, vector<1x1x2x32xf32>
    %128 = vector.shape_cast %127 : vector<1x1x2x32xf32> to vector<2x32xf32>
    %cst_95 = arith.constant dense<0.000000e+00> : vector<2x32xf32>
    %129 = tpu.matmul %73, %4, %cst_95 {dimension_numbers = #tpu.dot_dimension_numbers<[1], [0], [0], [1], [0, 0, 1, 1], [], []>} : vector<2x32xf32>, vector<32x32xf32>, vector<2x32xf32> -> vector<2x32xf32>
    %cst_96 = arith.constant dense<0.000000e+00> : vector<2x32xf32>
    %130 = tpu.matmul %73, %6, %cst_96 {dimension_numbers = #tpu.dot_dimension_numbers<[1], [0], [0], [1], [0, 0, 1, 1], [], []>} : vector<2x32xf32>, vector<32x32xf32>, vector<2x32xf32> -> vector<2x32xf32>
    %cst_97 = arith.constant dense<0.000000e+00> : vector<2x32xf32>
    %131 = tpu.matmul %73, %8, %cst_97 {dimension_numbers = #tpu.dot_dimension_numbers<[1], [0], [0], [1], [0, 0, 1, 1], [], []>} : vector<2x32xf32>, vector<32x32xf32>, vector<2x32xf32> -> vector<2x32xf32>
    %132 = arith.addf %113, %129 : vector<2x32xf32>
    %cst_98 = arith.constant 5.000000e-01 : f32
    %133 = vector.broadcast %cst_98 : f32 to vector<2x32xf32>
    %134 = arith.mulf %133, %132 : vector<2x32xf32>
    %135 = math.tanh %134 : vector<2x32xf32>
    %cst_99 = arith.constant 5.000000e-01 : f32
    %136 = vector.broadcast %cst_99 : f32 to vector<2x32xf32>
    %137 = arith.mulf %136, %135 : vector<2x32xf32>
    %cst_100 = arith.constant 5.000000e-01 : f32
    %138 = vector.broadcast %cst_100 : f32 to vector<2x32xf32>
    %139 = arith.addf %137, %138 : vector<2x32xf32>
    %140 = arith.addf %116, %130 : vector<2x32xf32>
    %cst_101 = arith.constant 5.000000e-01 : f32
    %141 = vector.broadcast %cst_101 : f32 to vector<2x32xf32>
    %142 = arith.mulf %141, %140 : vector<2x32xf32>
    %143 = math.tanh %142 : vector<2x32xf32>
    %cst_102 = arith.constant 5.000000e-01 : f32
    %144 = vector.broadcast %cst_102 : f32 to vector<2x32xf32>
    %145 = arith.mulf %144, %143 : vector<2x32xf32>
    %cst_103 = arith.constant 5.000000e-01 : f32
    %146 = vector.broadcast %cst_103 : f32 to vector<2x32xf32>
    %147 = arith.addf %145, %146 : vector<2x32xf32>
    %148 = arith.addf %131, %18 : vector<2x32xf32>
    %149 = arith.mulf %139, %148 : vector<2x32xf32>
    %150 = arith.addf %119, %149 : vector<2x32xf32>
    %151 = math.tanh %150 : vector<2x32xf32>
    %cst_104 = arith.constant 1.000000e+00 : f32
    %152 = vector.broadcast %cst_104 : f32 to vector<2x32xf32>
    %153 = arith.subf %152, %147 : vector<2x32xf32>
    %154 = arith.mulf %153, %151 : vector<2x32xf32>
    %155 = arith.mulf %147, %73 : vector<2x32xf32>
    %156 = arith.addf %154, %155 : vector<2x32xf32>
    %cst_105 = arith.constant dense<0.000000e+00> : vector<2x32xf32>
    %157 = tpu.matmul %101, %10, %cst_105 {dimension_numbers = #tpu.dot_dimension_numbers<[1], [0], [0], [1], [0, 0, 1, 1], [], []>} : vector<2x32xf32>, vector<32x32xf32>, vector<2x32xf32> -> vector<2x32xf32>
    %cst_106 = arith.constant dense<0.000000e+00> : vector<2x32xf32>
    %158 = tpu.matmul %101, %12, %cst_106 {dimension_numbers = #tpu.dot_dimension_numbers<[1], [0], [0], [1], [0, 0, 1, 1], [], []>} : vector<2x32xf32>, vector<32x32xf32>, vector<2x32xf32> -> vector<2x32xf32>
    %cst_107 = arith.constant dense<0.000000e+00> : vector<2x32xf32>
    %159 = tpu.matmul %101, %14, %cst_107 {dimension_numbers = #tpu.dot_dimension_numbers<[1], [0], [0], [1], [0, 0, 1, 1], [], []>} : vector<2x32xf32>, vector<32x32xf32>, vector<2x32xf32> -> vector<2x32xf32>
    %160 = arith.addf %122, %157 : vector<2x32xf32>
    %cst_108 = arith.constant 5.000000e-01 : f32
    %161 = vector.broadcast %cst_108 : f32 to vector<2x32xf32>
    %162 = arith.mulf %161, %160 : vector<2x32xf32>
    %163 = math.tanh %162 : vector<2x32xf32>
    %cst_109 = arith.constant 5.000000e-01 : f32
    %164 = vector.broadcast %cst_109 : f32 to vector<2x32xf32>
    %165 = arith.mulf %164, %163 : vector<2x32xf32>
    %cst_110 = arith.constant 5.000000e-01 : f32
    %166 = vector.broadcast %cst_110 : f32 to vector<2x32xf32>
    %167 = arith.addf %165, %166 : vector<2x32xf32>
    %168 = arith.addf %125, %158 : vector<2x32xf32>
    %cst_111 = arith.constant 5.000000e-01 : f32
    %169 = vector.broadcast %cst_111 : f32 to vector<2x32xf32>
    %170 = arith.mulf %169, %168 : vector<2x32xf32>
    %171 = math.tanh %170 : vector<2x32xf32>
    %cst_112 = arith.constant 5.000000e-01 : f32
    %172 = vector.broadcast %cst_112 : f32 to vector<2x32xf32>
    %173 = arith.mulf %172, %171 : vector<2x32xf32>
    %cst_113 = arith.constant 5.000000e-01 : f32
    %174 = vector.broadcast %cst_113 : f32 to vector<2x32xf32>
    %175 = arith.addf %173, %174 : vector<2x32xf32>
    %176 = arith.addf %159, %22 : vector<2x32xf32>
    %177 = arith.mulf %167, %176 : vector<2x32xf32>
    %178 = arith.addf %128, %177 : vector<2x32xf32>
    %179 = math.tanh %178 : vector<2x32xf32>
    %cst_114 = arith.constant 1.000000e+00 : f32
    %180 = vector.broadcast %cst_114 : f32 to vector<2x32xf32>
    %181 = arith.subf %180, %175 : vector<2x32xf32>
    %182 = arith.mulf %181, %179 : vector<2x32xf32>
    %183 = arith.mulf %175, %101 : vector<2x32xf32>
    %184 = arith.addf %182, %183 : vector<2x32xf32>
    %185 = arith.index_cast %c1_i32 : i32 to index
    %c0_115 = arith.constant 0 : index
    %c0_116 = arith.constant 0 : index
    %186 = vector.load %arg6[%185, %c0_115, %c0_116] : memref<8x2x32xf32, #tpu.memory_space<vmem>>, vector<1x2x32xf32>
    %187 = vector.shape_cast %186 : vector<1x2x32xf32> to vector<2x32xf32>
    %188 = vector.shape_cast %156 : vector<2x32xf32> to vector<1x2x32xf32>
    tpu.vector_store %arg6[%185, %c0_115, %c0_116], %188 {strides = array<i32>} : memref<8x2x32xf32, #tpu.memory_space<vmem>>, vector<1x2x32xf32>,
    %189 = arith.index_cast %110 : i32 to index
    %c0_117 = arith.constant 0 : index
    %c0_118 = arith.constant 0 : index
    %190 = vector.load %arg7[%189, %c0_117, %c0_118] : memref<8x2x32xf32, #tpu.memory_space<vmem>>, vector<1x2x32xf32>
    %191 = vector.shape_cast %190 : vector<1x2x32xf32> to vector<2x32xf32>
    %192 = vector.shape_cast %184 : vector<2x32xf32> to vector<1x2x32xf32>
    tpu.vector_store %arg7[%189, %c0_117, %c0_118], %192 {strides = array<i32>} : memref<8x2x32xf32, #tpu.memory_space<vmem>>, vector<1x2x32xf32>,
    %c2_i32 = arith.constant 2 : i32
    %c7_i32_119 = arith.constant 7 : i32
    %193 = arith.subi %c7_i32_119, %c2_i32 : i32
    %c0_120 = arith.constant 0 : index
    %194 = arith.index_cast %c2_i32 : i32 to index
    %c0_121 = arith.constant 0 : index
    %c0_122 = arith.constant 0 : index
    %195 = vector.load %arg2[%c0_120, %194, %c0_121, %c0_122] : memref<3x8x2x32xf32, #tpu.memory_space<vmem>>, vector<1x1x2x32xf32>
    %196 = vector.shape_cast %195 : vector<1x1x2x32xf32> to vector<2x32xf32>
    %c1_123 = arith.constant 1 : index
    %197 = arith.index_cast %c2_i32 : i32 to index
    %c0_124 = arith.constant 0 : index
    %c0_125 = arith.constant 0 : index
    %198 = vector.load %arg2[%c1_123, %197, %c0_124, %c0_125] : memref<3x8x2x32xf32, #tpu.memory_space<vmem>>, vector<1x1x2x32xf32>
    %199 = vector.shape_cast %198 : vector<1x1x2x32xf32> to vector<2x32xf32>
    %c2_126 = arith.constant 2 : index
    %200 = arith.index_cast %c2_i32 : i32 to index
    %c0_127 = arith.constant 0 : index
    %c0_128 = arith.constant 0 : index
    %201 = vector.load %arg2[%c2_126, %200, %c0_127, %c0_128] : memref<3x8x2x32xf32, #tpu.memory_space<vmem>>, vector<1x1x2x32xf32>
    %202 = vector.shape_cast %201 : vector<1x1x2x32xf32> to vector<2x32xf32>
    %c0_129 = arith.constant 0 : index
    %203 = arith.index_cast %193 : i32 to index
    %c0_130 = arith.constant 0 : index
    %c0_131 = arith.constant 0 : index
    %204 = vector.load %arg3[%c0_129, %203, %c0_130, %c0_131] : memref<3x8x2x32xf32, #tpu.memory_space<vmem>>, vector<1x1x2x32xf32>
    %205 = vector.shape_cast %204 : vector<1x1x2x32xf32> to vector<2x32xf32>
    %c1_132 = arith.constant 1 : index
    %206 = arith.index_cast %193 : i32 to index
    %c0_133 = arith.constant 0 : index
    %c0_134 = arith.constant 0 : index
    %207 = vector.load %arg3[%c1_132, %206, %c0_133, %c0_134] : memref<3x8x2x32xf32, #tpu.memory_space<vmem>>, vector<1x1x2x32xf32>
    %208 = vector.shape_cast %207 : vector<1x1x2x32xf32> to vector<2x32xf32>
    %c2_135 = arith.constant 2 : index
    %209 = arith.index_cast %193 : i32 to index
    %c0_136 = arith.constant 0 : index
    %c0_137 = arith.constant 0 : index
    %210 = vector.load %arg3[%c2_135, %209, %c0_136, %c0_137] : memref<3x8x2x32xf32, #tpu.memory_space<vmem>>, vector<1x1x2x32xf32>
    %211 = vector.shape_cast %210 : vector<1x1x2x32xf32> to vector<2x32xf32>
    %cst_138 = arith.constant dense<0.000000e+00> : vector<2x32xf32>
    %212 = tpu.matmul %156, %4, %cst_138 {dimension_numbers = #tpu.dot_dimension_numbers<[1], [0], [0], [1], [0, 0, 1, 1], [], []>} : vector<2x32xf32>, vector<32x32xf32>, vector<2x32xf32> -> vector<2x32xf32>
    %cst_139 = arith.constant dense<0.000000e+00> : vector<2x32xf32>
    %213 = tpu.matmul %156, %6, %cst_139 {dimension_numbers = #tpu.dot_dimension_numbers<[1], [0], [0], [1], [0, 0, 1, 1], [], []>} : vector<2x32xf32>, vector<32x32xf32>, vector<2x32xf32> -> vector<2x32xf32>
    %cst_140 = arith.constant dense<0.000000e+00> : vector<2x32xf32>
    %214 = tpu.matmul %156, %8, %cst_140 {dimension_numbers = #tpu.dot_dimension_numbers<[1], [0], [0], [1], [0, 0, 1, 1], [], []>} : vector<2x32xf32>, vector<32x32xf32>, vector<2x32xf32> -> vector<2x32xf32>
    %215 = arith.addf %196, %212 : vector<2x32xf32>
    %cst_141 = arith.constant 5.000000e-01 : f32
    %216 = vector.broadcast %cst_141 : f32 to vector<2x32xf32>
    %217 = arith.mulf %216, %215 : vector<2x32xf32>
    %218 = math.tanh %217 : vector<2x32xf32>
    %cst_142 = arith.constant 5.000000e-01 : f32
    %219 = vector.broadcast %cst_142 : f32 to vector<2x32xf32>
    %220 = arith.mulf %219, %218 : vector<2x32xf32>
    %cst_143 = arith.constant 5.000000e-01 : f32
    %221 = vector.broadcast %cst_143 : f32 to vector<2x32xf32>
    %222 = arith.addf %220, %221 : vector<2x32xf32>
    %223 = arith.addf %199, %213 : vector<2x32xf32>
    %cst_144 = arith.constant 5.000000e-01 : f32
    %224 = vector.broadcast %cst_144 : f32 to vector<2x32xf32>
    %225 = arith.mulf %224, %223 : vector<2x32xf32>
    %226 = math.tanh %225 : vector<2x32xf32>
    %cst_145 = arith.constant 5.000000e-01 : f32
    %227 = vector.broadcast %cst_145 : f32 to vector<2x32xf32>
    %228 = arith.mulf %227, %226 : vector<2x32xf32>
    %cst_146 = arith.constant 5.000000e-01 : f32
    %229 = vector.broadcast %cst_146 : f32 to vector<2x32xf32>
    %230 = arith.addf %228, %229 : vector<2x32xf32>
    %231 = arith.addf %214, %18 : vector<2x32xf32>
    %232 = arith.mulf %222, %231 : vector<2x32xf32>
    %233 = arith.addf %202, %232 : vector<2x32xf32>
    %234 = math.tanh %233 : vector<2x32xf32>
    %cst_147 = arith.constant 1.000000e+00 : f32
    %235 = vector.broadcast %cst_147 : f32 to vector<2x32xf32>
    %236 = arith.subf %235, %230 : vector<2x32xf32>
    %237 = arith.mulf %236, %234 : vector<2x32xf32>
    %238 = arith.mulf %230, %156 : vector<2x32xf32>
    %239 = arith.addf %237, %238 : vector<2x32xf32>
    %cst_148 = arith.constant dense<0.000000e+00> : vector<2x32xf32>
    %240 = tpu.matmul %184, %10, %cst_148 {dimension_numbers = #tpu.dot_dimension_numbers<[1], [0], [0], [1], [0, 0, 1, 1], [], []>} : vector<2x32xf32>, vector<32x32xf32>, vector<2x32xf32> -> vector<2x32xf32>
    %cst_149 = arith.constant dense<0.000000e+00> : vector<2x32xf32>
    %241 = tpu.matmul %184, %12, %cst_149 {dimension_numbers = #tpu.dot_dimension_numbers<[1], [0], [0], [1], [0, 0, 1, 1], [], []>} : vector<2x32xf32>, vector<32x32xf32>, vector<2x32xf32> -> vector<2x32xf32>
    %cst_150 = arith.constant dense<0.000000e+00> : vector<2x32xf32>
    %242 = tpu.matmul %184, %14, %cst_150 {dimension_numbers = #tpu.dot_dimension_numbers<[1], [0], [0], [1], [0, 0, 1, 1], [], []>} : vector<2x32xf32>, vector<32x32xf32>, vector<2x32xf32> -> vector<2x32xf32>
    %243 = arith.addf %205, %240 : vector<2x32xf32>
    %cst_151 = arith.constant 5.000000e-01 : f32
    %244 = vector.broadcast %cst_151 : f32 to vector<2x32xf32>
    %245 = arith.mulf %244, %243 : vector<2x32xf32>
    %246 = math.tanh %245 : vector<2x32xf32>
    %cst_152 = arith.constant 5.000000e-01 : f32
    %247 = vector.broadcast %cst_152 : f32 to vector<2x32xf32>
    %248 = arith.mulf %247, %246 : vector<2x32xf32>
    %cst_153 = arith.constant 5.000000e-01 : f32
    %249 = vector.broadcast %cst_153 : f32 to vector<2x32xf32>
    %250 = arith.addf %248, %249 : vector<2x32xf32>
    %251 = arith.addf %208, %241 : vector<2x32xf32>
    %cst_154 = arith.constant 5.000000e-01 : f32
    %252 = vector.broadcast %cst_154 : f32 to vector<2x32xf32>
    %253 = arith.mulf %252, %251 : vector<2x32xf32>
    %254 = math.tanh %253 : vector<2x32xf32>
    %cst_155 = arith.constant 5.000000e-01 : f32
    %255 = vector.broadcast %cst_155 : f32 to vector<2x32xf32>
    %256 = arith.mulf %255, %254 : vector<2x32xf32>
    %cst_156 = arith.constant 5.000000e-01 : f32
    %257 = vector.broadcast %cst_156 : f32 to vector<2x32xf32>
    %258 = arith.addf %256, %257 : vector<2x32xf32>
    %259 = arith.addf %242, %22 : vector<2x32xf32>
    %260 = arith.mulf %250, %259 : vector<2x32xf32>
    %261 = arith.addf %211, %260 : vector<2x32xf32>
    %262 = math.tanh %261 : vector<2x32xf32>
    %cst_157 = arith.constant 1.000000e+00 : f32
    %263 = vector.broadcast %cst_157 : f32 to vector<2x32xf32>
    %264 = arith.subf %263, %258 : vector<2x32xf32>
    %265 = arith.mulf %264, %262 : vector<2x32xf32>
    %266 = arith.mulf %258, %184 : vector<2x32xf32>
    %267 = arith.addf %265, %266 : vector<2x32xf32>
    %268 = arith.index_cast %c2_i32 : i32 to index
    %c0_158 = arith.constant 0 : index
    %c0_159 = arith.constant 0 : index
    %269 = vector.load %arg6[%268, %c0_158, %c0_159] : memref<8x2x32xf32, #tpu.memory_space<vmem>>, vector<1x2x32xf32>
    %270 = vector.shape_cast %269 : vector<1x2x32xf32> to vector<2x32xf32>
    %271 = vector.shape_cast %239 : vector<2x32xf32> to vector<1x2x32xf32>
    tpu.vector_store %arg6[%268, %c0_158, %c0_159], %271 {strides = array<i32>} : memref<8x2x32xf32, #tpu.memory_space<vmem>>, vector<1x2x32xf32>,
    %272 = arith.index_cast %193 : i32 to index
    %c0_160 = arith.constant 0 : index
    %c0_161 = arith.constant 0 : index
    %273 = vector.load %arg7[%272, %c0_160, %c0_161] : memref<8x2x32xf32, #tpu.memory_space<vmem>>, vector<1x2x32xf32>
    %274 = vector.shape_cast %273 : vector<1x2x32xf32> to vector<2x32xf32>
    %275 = vector.shape_cast %267 : vector<2x32xf32> to vector<1x2x32xf32>
    tpu.vector_store %arg7[%272, %c0_160, %c0_161], %275 {strides = array<i32>} : memref<8x2x32xf32, #tpu.memory_space<vmem>>, vector<1x2x32xf32>,
    %c3_i32 = arith.constant 3 : i32
    %c7_i32_162 = arith.constant 7 : i32
    %276 = arith.subi %c7_i32_162, %c3_i32 : i32
    %c0_163 = arith.constant 0 : index
    %277 = arith.index_cast %c3_i32 : i32 to index
    %c0_164 = arith.constant 0 : index
    %c0_165 = arith.constant 0 : index
    %278 = vector.load %arg2[%c0_163, %277, %c0_164, %c0_165] : memref<3x8x2x32xf32, #tpu.memory_space<vmem>>, vector<1x1x2x32xf32>
    %279 = vector.shape_cast %278 : vector<1x1x2x32xf32> to vector<2x32xf32>
    %c1_166 = arith.constant 1 : index
    %280 = arith.index_cast %c3_i32 : i32 to index
    %c0_167 = arith.constant 0 : index
    %c0_168 = arith.constant 0 : index
    %281 = vector.load %arg2[%c1_166, %280, %c0_167, %c0_168] : memref<3x8x2x32xf32, #tpu.memory_space<vmem>>, vector<1x1x2x32xf32>
    %282 = vector.shape_cast %281 : vector<1x1x2x32xf32> to vector<2x32xf32>
    %c2_169 = arith.constant 2 : index
    %283 = arith.index_cast %c3_i32 : i32 to index
    %c0_170 = arith.constant 0 : index
    %c0_171 = arith.constant 0 : index
    %284 = vector.load %arg2[%c2_169, %283, %c0_170, %c0_171] : memref<3x8x2x32xf32, #tpu.memory_space<vmem>>, vector<1x1x2x32xf32>
    %285 = vector.shape_cast %284 : vector<1x1x2x32xf32> to vector<2x32xf32>
    %c0_172 = arith.constant 0 : index
    %286 = arith.index_cast %276 : i32 to index
    %c0_173 = arith.constant 0 : index
    %c0_174 = arith.constant 0 : index
    %287 = vector.load %arg3[%c0_172, %286, %c0_173, %c0_174] : memref<3x8x2x32xf32, #tpu.memory_space<vmem>>, vector<1x1x2x32xf32>
    %288 = vector.shape_cast %287 : vector<1x1x2x32xf32> to vector<2x32xf32>
    %c1_175 = arith.constant 1 : index
    %289 = arith.index_cast %276 : i32 to index
    %c0_176 = arith.constant 0 : index
    %c0_177 = arith.constant 0 : index
    %290 = vector.load %arg3[%c1_175, %289, %c0_176, %c0_177] : memref<3x8x2x32xf32, #tpu.memory_space<vmem>>, vector<1x1x2x32xf32>
    %291 = vector.shape_cast %290 : vector<1x1x2x32xf32> to vector<2x32xf32>
    %c2_178 = arith.constant 2 : index
    %292 = arith.index_cast %276 : i32 to index
    %c0_179 = arith.constant 0 : index
    %c0_180 = arith.constant 0 : index
    %293 = vector.load %arg3[%c2_178, %292, %c0_179, %c0_180] : memref<3x8x2x32xf32, #tpu.memory_space<vmem>>, vector<1x1x2x32xf32>
    %294 = vector.shape_cast %293 : vector<1x1x2x32xf32> to vector<2x32xf32>
    %cst_181 = arith.constant dense<0.000000e+00> : vector<2x32xf32>
    %295 = tpu.matmul %239, %4, %cst_181 {dimension_numbers = #tpu.dot_dimension_numbers<[1], [0], [0], [1], [0, 0, 1, 1], [], []>} : vector<2x32xf32>, vector<32x32xf32>, vector<2x32xf32> -> vector<2x32xf32>
    %cst_182 = arith.constant dense<0.000000e+00> : vector<2x32xf32>
    %296 = tpu.matmul %239, %6, %cst_182 {dimension_numbers = #tpu.dot_dimension_numbers<[1], [0], [0], [1], [0, 0, 1, 1], [], []>} : vector<2x32xf32>, vector<32x32xf32>, vector<2x32xf32> -> vector<2x32xf32>
    %cst_183 = arith.constant dense<0.000000e+00> : vector<2x32xf32>
    %297 = tpu.matmul %239, %8, %cst_183 {dimension_numbers = #tpu.dot_dimension_numbers<[1], [0], [0], [1], [0, 0, 1, 1], [], []>} : vector<2x32xf32>, vector<32x32xf32>, vector<2x32xf32> -> vector<2x32xf32>
    %298 = arith.addf %279, %295 : vector<2x32xf32>
    %cst_184 = arith.constant 5.000000e-01 : f32
    %299 = vector.broadcast %cst_184 : f32 to vector<2x32xf32>
    %300 = arith.mulf %299, %298 : vector<2x32xf32>
    %301 = math.tanh %300 : vector<2x32xf32>
    %cst_185 = arith.constant 5.000000e-01 : f32
    %302 = vector.broadcast %cst_185 : f32 to vector<2x32xf32>
    %303 = arith.mulf %302, %301 : vector<2x32xf32>
    %cst_186 = arith.constant 5.000000e-01 : f32
    %304 = vector.broadcast %cst_186 : f32 to vector<2x32xf32>
    %305 = arith.addf %303, %304 : vector<2x32xf32>
    %306 = arith.addf %282, %296 : vector<2x32xf32>
    %cst_187 = arith.constant 5.000000e-01 : f32
    %307 = vector.broadcast %cst_187 : f32 to vector<2x32xf32>
    %308 = arith.mulf %307, %306 : vector<2x32xf32>
    %309 = math.tanh %308 : vector<2x32xf32>
    %cst_188 = arith.constant 5.000000e-01 : f32
    %310 = vector.broadcast %cst_188 : f32 to vector<2x32xf32>
    %311 = arith.mulf %310, %309 : vector<2x32xf32>
    %cst_189 = arith.constant 5.000000e-01 : f32
    %312 = vector.broadcast %cst_189 : f32 to vector<2x32xf32>
    %313 = arith.addf %311, %312 : vector<2x32xf32>
    %314 = arith.addf %297, %18 : vector<2x32xf32>
    %315 = arith.mulf %305, %314 : vector<2x32xf32>
    %316 = arith.addf %285, %315 : vector<2x32xf32>
    %317 = math.tanh %316 : vector<2x32xf32>
    %cst_190 = arith.constant 1.000000e+00 : f32
    %318 = vector.broadcast %cst_190 : f32 to vector<2x32xf32>
    %319 = arith.subf %318, %313 : vector<2x32xf32>
    %320 = arith.mulf %319, %317 : vector<2x32xf32>
    %321 = arith.mulf %313, %239 : vector<2x32xf32>
    %322 = arith.addf %320, %321 : vector<2x32xf32>
    %cst_191 = arith.constant dense<0.000000e+00> : vector<2x32xf32>
    %323 = tpu.matmul %267, %10, %cst_191 {dimension_numbers = #tpu.dot_dimension_numbers<[1], [0], [0], [1], [0, 0, 1, 1], [], []>} : vector<2x32xf32>, vector<32x32xf32>, vector<2x32xf32> -> vector<2x32xf32>
    %cst_192 = arith.constant dense<0.000000e+00> : vector<2x32xf32>
    %324 = tpu.matmul %267, %12, %cst_192 {dimension_numbers = #tpu.dot_dimension_numbers<[1], [0], [0], [1], [0, 0, 1, 1], [], []>} : vector<2x32xf32>, vector<32x32xf32>, vector<2x32xf32> -> vector<2x32xf32>
    %cst_193 = arith.constant dense<0.000000e+00> : vector<2x32xf32>
    %325 = tpu.matmul %267, %14, %cst_193 {dimension_numbers = #tpu.dot_dimension_numbers<[1], [0], [0], [1], [0, 0, 1, 1], [], []>} : vector<2x32xf32>, vector<32x32xf32>, vector<2x32xf32> -> vector<2x32xf32>
    %326 = arith.addf %288, %323 : vector<2x32xf32>
    %cst_194 = arith.constant 5.000000e-01 : f32
    %327 = vector.broadcast %cst_194 : f32 to vector<2x32xf32>
    %328 = arith.mulf %327, %326 : vector<2x32xf32>
    %329 = math.tanh %328 : vector<2x32xf32>
    %cst_195 = arith.constant 5.000000e-01 : f32
    %330 = vector.broadcast %cst_195 : f32 to vector<2x32xf32>
    %331 = arith.mulf %330, %329 : vector<2x32xf32>
    %cst_196 = arith.constant 5.000000e-01 : f32
    %332 = vector.broadcast %cst_196 : f32 to vector<2x32xf32>
    %333 = arith.addf %331, %332 : vector<2x32xf32>
    %334 = arith.addf %291, %324 : vector<2x32xf32>
    %cst_197 = arith.constant 5.000000e-01 : f32
    %335 = vector.broadcast %cst_197 : f32 to vector<2x32xf32>
    %336 = arith.mulf %335, %334 : vector<2x32xf32>
    %337 = math.tanh %336 : vector<2x32xf32>
    %cst_198 = arith.constant 5.000000e-01 : f32
    %338 = vector.broadcast %cst_198 : f32 to vector<2x32xf32>
    %339 = arith.mulf %338, %337 : vector<2x32xf32>
    %cst_199 = arith.constant 5.000000e-01 : f32
    %340 = vector.broadcast %cst_199 : f32 to vector<2x32xf32>
    %341 = arith.addf %339, %340 : vector<2x32xf32>
    %342 = arith.addf %325, %22 : vector<2x32xf32>
    %343 = arith.mulf %333, %342 : vector<2x32xf32>
    %344 = arith.addf %294, %343 : vector<2x32xf32>
    %345 = math.tanh %344 : vector<2x32xf32>
    %cst_200 = arith.constant 1.000000e+00 : f32
    %346 = vector.broadcast %cst_200 : f32 to vector<2x32xf32>
    %347 = arith.subf %346, %341 : vector<2x32xf32>
    %348 = arith.mulf %347, %345 : vector<2x32xf32>
    %349 = arith.mulf %341, %267 : vector<2x32xf32>
    %350 = arith.addf %348, %349 : vector<2x32xf32>
    %351 = arith.index_cast %c3_i32 : i32 to index
    %c0_201 = arith.constant 0 : index
    %c0_202 = arith.constant 0 : index
    %352 = vector.load %arg6[%351, %c0_201, %c0_202] : memref<8x2x32xf32, #tpu.memory_space<vmem>>, vector<1x2x32xf32>
    %353 = vector.shape_cast %352 : vector<1x2x32xf32> to vector<2x32xf32>
    %354 = vector.shape_cast %322 : vector<2x32xf32> to vector<1x2x32xf32>
    tpu.vector_store %arg6[%351, %c0_201, %c0_202], %354 {strides = array<i32>} : memref<8x2x32xf32, #tpu.memory_space<vmem>>, vector<1x2x32xf32>,
    %355 = arith.index_cast %276 : i32 to index
    %c0_203 = arith.constant 0 : index
    %c0_204 = arith.constant 0 : index
    %356 = vector.load %arg7[%355, %c0_203, %c0_204] : memref<8x2x32xf32, #tpu.memory_space<vmem>>, vector<1x2x32xf32>
    %357 = vector.shape_cast %356 : vector<1x2x32xf32> to vector<2x32xf32>
    %358 = vector.shape_cast %350 : vector<2x32xf32> to vector<1x2x32xf32>
    tpu.vector_store %arg7[%355, %c0_203, %c0_204], %358 {strides = array<i32>} : memref<8x2x32xf32, #tpu.memory_space<vmem>>, vector<1x2x32xf32>,
    %c4_i32 = arith.constant 4 : i32
    %c7_i32_205 = arith.constant 7 : i32
    %359 = arith.subi %c7_i32_205, %c4_i32 : i32
    %c0_206 = arith.constant 0 : index
    %360 = arith.index_cast %c4_i32 : i32 to index
    %c0_207 = arith.constant 0 : index
    %c0_208 = arith.constant 0 : index
    %361 = vector.load %arg2[%c0_206, %360, %c0_207, %c0_208] : memref<3x8x2x32xf32, #tpu.memory_space<vmem>>, vector<1x1x2x32xf32>
    %362 = vector.shape_cast %361 : vector<1x1x2x32xf32> to vector<2x32xf32>
    %c1_209 = arith.constant 1 : index
    %363 = arith.index_cast %c4_i32 : i32 to index
    %c0_210 = arith.constant 0 : index
    %c0_211 = arith.constant 0 : index
    %364 = vector.load %arg2[%c1_209, %363, %c0_210, %c0_211] : memref<3x8x2x32xf32, #tpu.memory_space<vmem>>, vector<1x1x2x32xf32>
    %365 = vector.shape_cast %364 : vector<1x1x2x32xf32> to vector<2x32xf32>
    %c2_212 = arith.constant 2 : index
    %366 = arith.index_cast %c4_i32 : i32 to index
    %c0_213 = arith.constant 0 : index
    %c0_214 = arith.constant 0 : index
    %367 = vector.load %arg2[%c2_212, %366, %c0_213, %c0_214] : memref<3x8x2x32xf32, #tpu.memory_space<vmem>>, vector<1x1x2x32xf32>
    %368 = vector.shape_cast %367 : vector<1x1x2x32xf32> to vector<2x32xf32>
    %c0_215 = arith.constant 0 : index
    %369 = arith.index_cast %359 : i32 to index
    %c0_216 = arith.constant 0 : index
    %c0_217 = arith.constant 0 : index
    %370 = vector.load %arg3[%c0_215, %369, %c0_216, %c0_217] : memref<3x8x2x32xf32, #tpu.memory_space<vmem>>, vector<1x1x2x32xf32>
    %371 = vector.shape_cast %370 : vector<1x1x2x32xf32> to vector<2x32xf32>
    %c1_218 = arith.constant 1 : index
    %372 = arith.index_cast %359 : i32 to index
    %c0_219 = arith.constant 0 : index
    %c0_220 = arith.constant 0 : index
    %373 = vector.load %arg3[%c1_218, %372, %c0_219, %c0_220] : memref<3x8x2x32xf32, #tpu.memory_space<vmem>>, vector<1x1x2x32xf32>
    %374 = vector.shape_cast %373 : vector<1x1x2x32xf32> to vector<2x32xf32>
    %c2_221 = arith.constant 2 : index
    %375 = arith.index_cast %359 : i32 to index
    %c0_222 = arith.constant 0 : index
    %c0_223 = arith.constant 0 : index
    %376 = vector.load %arg3[%c2_221, %375, %c0_222, %c0_223] : memref<3x8x2x32xf32, #tpu.memory_space<vmem>>, vector<1x1x2x32xf32>
    %377 = vector.shape_cast %376 : vector<1x1x2x32xf32> to vector<2x32xf32>
    %cst_224 = arith.constant dense<0.000000e+00> : vector<2x32xf32>
    %378 = tpu.matmul %322, %4, %cst_224 {dimension_numbers = #tpu.dot_dimension_numbers<[1], [0], [0], [1], [0, 0, 1, 1], [], []>} : vector<2x32xf32>, vector<32x32xf32>, vector<2x32xf32> -> vector<2x32xf32>
    %cst_225 = arith.constant dense<0.000000e+00> : vector<2x32xf32>
    %379 = tpu.matmul %322, %6, %cst_225 {dimension_numbers = #tpu.dot_dimension_numbers<[1], [0], [0], [1], [0, 0, 1, 1], [], []>} : vector<2x32xf32>, vector<32x32xf32>, vector<2x32xf32> -> vector<2x32xf32>
    %cst_226 = arith.constant dense<0.000000e+00> : vector<2x32xf32>
    %380 = tpu.matmul %322, %8, %cst_226 {dimension_numbers = #tpu.dot_dimension_numbers<[1], [0], [0], [1], [0, 0, 1, 1], [], []>} : vector<2x32xf32>, vector<32x32xf32>, vector<2x32xf32> -> vector<2x32xf32>
    %381 = arith.addf %362, %378 : vector<2x32xf32>
    %cst_227 = arith.constant 5.000000e-01 : f32
    %382 = vector.broadcast %cst_227 : f32 to vector<2x32xf32>
    %383 = arith.mulf %382, %381 : vector<2x32xf32>
    %384 = math.tanh %383 : vector<2x32xf32>
    %cst_228 = arith.constant 5.000000e-01 : f32
    %385 = vector.broadcast %cst_228 : f32 to vector<2x32xf32>
    %386 = arith.mulf %385, %384 : vector<2x32xf32>
    %cst_229 = arith.constant 5.000000e-01 : f32
    %387 = vector.broadcast %cst_229 : f32 to vector<2x32xf32>
    %388 = arith.addf %386, %387 : vector<2x32xf32>
    %389 = arith.addf %365, %379 : vector<2x32xf32>
    %cst_230 = arith.constant 5.000000e-01 : f32
    %390 = vector.broadcast %cst_230 : f32 to vector<2x32xf32>
    %391 = arith.mulf %390, %389 : vector<2x32xf32>
    %392 = math.tanh %391 : vector<2x32xf32>
    %cst_231 = arith.constant 5.000000e-01 : f32
    %393 = vector.broadcast %cst_231 : f32 to vector<2x32xf32>
    %394 = arith.mulf %393, %392 : vector<2x32xf32>
    %cst_232 = arith.constant 5.000000e-01 : f32
    %395 = vector.broadcast %cst_232 : f32 to vector<2x32xf32>
    %396 = arith.addf %394, %395 : vector<2x32xf32>
    %397 = arith.addf %380, %18 : vector<2x32xf32>
    %398 = arith.mulf %388, %397 : vector<2x32xf32>
    %399 = arith.addf %368, %398 : vector<2x32xf32>
    %400 = math.tanh %399 : vector<2x32xf32>
    %cst_233 = arith.constant 1.000000e+00 : f32
    %401 = vector.broadcast %cst_233 : f32 to vector<2x32xf32>
    %402 = arith.subf %401, %396 : vector<2x32xf32>
    %403 = arith.mulf %402, %400 : vector<2x32xf32>
    %404 = arith.mulf %396, %322 : vector<2x32xf32>
    %405 = arith.addf %403, %404 : vector<2x32xf32>
    %cst_234 = arith.constant dense<0.000000e+00> : vector<2x32xf32>
    %406 = tpu.matmul %350, %10, %cst_234 {dimension_numbers = #tpu.dot_dimension_numbers<[1], [0], [0], [1], [0, 0, 1, 1], [], []>} : vector<2x32xf32>, vector<32x32xf32>, vector<2x32xf32> -> vector<2x32xf32>
    %cst_235 = arith.constant dense<0.000000e+00> : vector<2x32xf32>
    %407 = tpu.matmul %350, %12, %cst_235 {dimension_numbers = #tpu.dot_dimension_numbers<[1], [0], [0], [1], [0, 0, 1, 1], [], []>} : vector<2x32xf32>, vector<32x32xf32>, vector<2x32xf32> -> vector<2x32xf32>
    %cst_236 = arith.constant dense<0.000000e+00> : vector<2x32xf32>
    %408 = tpu.matmul %350, %14, %cst_236 {dimension_numbers = #tpu.dot_dimension_numbers<[1], [0], [0], [1], [0, 0, 1, 1], [], []>} : vector<2x32xf32>, vector<32x32xf32>, vector<2x32xf32> -> vector<2x32xf32>
    %409 = arith.addf %371, %406 : vector<2x32xf32>
    %cst_237 = arith.constant 5.000000e-01 : f32
    %410 = vector.broadcast %cst_237 : f32 to vector<2x32xf32>
    %411 = arith.mulf %410, %409 : vector<2x32xf32>
    %412 = math.tanh %411 : vector<2x32xf32>
    %cst_238 = arith.constant 5.000000e-01 : f32
    %413 = vector.broadcast %cst_238 : f32 to vector<2x32xf32>
    %414 = arith.mulf %413, %412 : vector<2x32xf32>
    %cst_239 = arith.constant 5.000000e-01 : f32
    %415 = vector.broadcast %cst_239 : f32 to vector<2x32xf32>
    %416 = arith.addf %414, %415 : vector<2x32xf32>
    %417 = arith.addf %374, %407 : vector<2x32xf32>
    %cst_240 = arith.constant 5.000000e-01 : f32
    %418 = vector.broadcast %cst_240 : f32 to vector<2x32xf32>
    %419 = arith.mulf %418, %417 : vector<2x32xf32>
    %420 = math.tanh %419 : vector<2x32xf32>
    %cst_241 = arith.constant 5.000000e-01 : f32
    %421 = vector.broadcast %cst_241 : f32 to vector<2x32xf32>
    %422 = arith.mulf %421, %420 : vector<2x32xf32>
    %cst_242 = arith.constant 5.000000e-01 : f32
    %423 = vector.broadcast %cst_242 : f32 to vector<2x32xf32>
    %424 = arith.addf %422, %423 : vector<2x32xf32>
    %425 = arith.addf %408, %22 : vector<2x32xf32>
    %426 = arith.mulf %416, %425 : vector<2x32xf32>
    %427 = arith.addf %377, %426 : vector<2x32xf32>
    %428 = math.tanh %427 : vector<2x32xf32>
    %cst_243 = arith.constant 1.000000e+00 : f32
    %429 = vector.broadcast %cst_243 : f32 to vector<2x32xf32>
    %430 = arith.subf %429, %424 : vector<2x32xf32>
    %431 = arith.mulf %430, %428 : vector<2x32xf32>
    %432 = arith.mulf %424, %350 : vector<2x32xf32>
    %433 = arith.addf %431, %432 : vector<2x32xf32>
    %434 = arith.index_cast %c4_i32 : i32 to index
    %c0_244 = arith.constant 0 : index
    %c0_245 = arith.constant 0 : index
    %435 = vector.load %arg6[%434, %c0_244, %c0_245] : memref<8x2x32xf32, #tpu.memory_space<vmem>>, vector<1x2x32xf32>
    %436 = vector.shape_cast %435 : vector<1x2x32xf32> to vector<2x32xf32>
    %437 = vector.shape_cast %405 : vector<2x32xf32> to vector<1x2x32xf32>
    tpu.vector_store %arg6[%434, %c0_244, %c0_245], %437 {strides = array<i32>} : memref<8x2x32xf32, #tpu.memory_space<vmem>>, vector<1x2x32xf32>,
    %438 = arith.index_cast %359 : i32 to index
    %c0_246 = arith.constant 0 : index
    %c0_247 = arith.constant 0 : index
    %439 = vector.load %arg7[%438, %c0_246, %c0_247] : memref<8x2x32xf32, #tpu.memory_space<vmem>>, vector<1x2x32xf32>
    %440 = vector.shape_cast %439 : vector<1x2x32xf32> to vector<2x32xf32>
    %441 = vector.shape_cast %433 : vector<2x32xf32> to vector<1x2x32xf32>
    tpu.vector_store %arg7[%438, %c0_246, %c0_247], %441 {strides = array<i32>} : memref<8x2x32xf32, #tpu.memory_space<vmem>>, vector<1x2x32xf32>,
    %c5_i32 = arith.constant 5 : i32
    %c7_i32_248 = arith.constant 7 : i32
    %442 = arith.subi %c7_i32_248, %c5_i32 : i32
    %c0_249 = arith.constant 0 : index
    %443 = arith.index_cast %c5_i32 : i32 to index
    %c0_250 = arith.constant 0 : index
    %c0_251 = arith.constant 0 : index
    %444 = vector.load %arg2[%c0_249, %443, %c0_250, %c0_251] : memref<3x8x2x32xf32, #tpu.memory_space<vmem>>, vector<1x1x2x32xf32>
    %445 = vector.shape_cast %444 : vector<1x1x2x32xf32> to vector<2x32xf32>
    %c1_252 = arith.constant 1 : index
    %446 = arith.index_cast %c5_i32 : i32 to index
    %c0_253 = arith.constant 0 : index
    %c0_254 = arith.constant 0 : index
    %447 = vector.load %arg2[%c1_252, %446, %c0_253, %c0_254] : memref<3x8x2x32xf32, #tpu.memory_space<vmem>>, vector<1x1x2x32xf32>
    %448 = vector.shape_cast %447 : vector<1x1x2x32xf32> to vector<2x32xf32>
    %c2_255 = arith.constant 2 : index
    %449 = arith.index_cast %c5_i32 : i32 to index
    %c0_256 = arith.constant 0 : index
    %c0_257 = arith.constant 0 : index
    %450 = vector.load %arg2[%c2_255, %449, %c0_256, %c0_257] : memref<3x8x2x32xf32, #tpu.memory_space<vmem>>, vector<1x1x2x32xf32>
    %451 = vector.shape_cast %450 : vector<1x1x2x32xf32> to vector<2x32xf32>
    %c0_258 = arith.constant 0 : index
    %452 = arith.index_cast %442 : i32 to index
    %c0_259 = arith.constant 0 : index
    %c0_260 = arith.constant 0 : index
    %453 = vector.load %arg3[%c0_258, %452, %c0_259, %c0_260] : memref<3x8x2x32xf32, #tpu.memory_space<vmem>>, vector<1x1x2x32xf32>
    %454 = vector.shape_cast %453 : vector<1x1x2x32xf32> to vector<2x32xf32>
    %c1_261 = arith.constant 1 : index
    %455 = arith.index_cast %442 : i32 to index
    %c0_262 = arith.constant 0 : index
    %c0_263 = arith.constant 0 : index
    %456 = vector.load %arg3[%c1_261, %455, %c0_262, %c0_263] : memref<3x8x2x32xf32, #tpu.memory_space<vmem>>, vector<1x1x2x32xf32>
    %457 = vector.shape_cast %456 : vector<1x1x2x32xf32> to vector<2x32xf32>
    %c2_264 = arith.constant 2 : index
    %458 = arith.index_cast %442 : i32 to index
    %c0_265 = arith.constant 0 : index
    %c0_266 = arith.constant 0 : index
    %459 = vector.load %arg3[%c2_264, %458, %c0_265, %c0_266] : memref<3x8x2x32xf32, #tpu.memory_space<vmem>>, vector<1x1x2x32xf32>
    %460 = vector.shape_cast %459 : vector<1x1x2x32xf32> to vector<2x32xf32>
    %cst_267 = arith.constant dense<0.000000e+00> : vector<2x32xf32>
    %461 = tpu.matmul %405, %4, %cst_267 {dimension_numbers = #tpu.dot_dimension_numbers<[1], [0], [0], [1], [0, 0, 1, 1], [], []>} : vector<2x32xf32>, vector<32x32xf32>, vector<2x32xf32> -> vector<2x32xf32>
    %cst_268 = arith.constant dense<0.000000e+00> : vector<2x32xf32>
    %462 = tpu.matmul %405, %6, %cst_268 {dimension_numbers = #tpu.dot_dimension_numbers<[1], [0], [0], [1], [0, 0, 1, 1], [], []>} : vector<2x32xf32>, vector<32x32xf32>, vector<2x32xf32> -> vector<2x32xf32>
    %cst_269 = arith.constant dense<0.000000e+00> : vector<2x32xf32>
    %463 = tpu.matmul %405, %8, %cst_269 {dimension_numbers = #tpu.dot_dimension_numbers<[1], [0], [0], [1], [0, 0, 1, 1], [], []>} : vector<2x32xf32>, vector<32x32xf32>, vector<2x32xf32> -> vector<2x32xf32>
    %464 = arith.addf %445, %461 : vector<2x32xf32>
    %cst_270 = arith.constant 5.000000e-01 : f32
    %465 = vector.broadcast %cst_270 : f32 to vector<2x32xf32>
    %466 = arith.mulf %465, %464 : vector<2x32xf32>
    %467 = math.tanh %466 : vector<2x32xf32>
    %cst_271 = arith.constant 5.000000e-01 : f32
    %468 = vector.broadcast %cst_271 : f32 to vector<2x32xf32>
    %469 = arith.mulf %468, %467 : vector<2x32xf32>
    %cst_272 = arith.constant 5.000000e-01 : f32
    %470 = vector.broadcast %cst_272 : f32 to vector<2x32xf32>
    %471 = arith.addf %469, %470 : vector<2x32xf32>
    %472 = arith.addf %448, %462 : vector<2x32xf32>
    %cst_273 = arith.constant 5.000000e-01 : f32
    %473 = vector.broadcast %cst_273 : f32 to vector<2x32xf32>
    %474 = arith.mulf %473, %472 : vector<2x32xf32>
    %475 = math.tanh %474 : vector<2x32xf32>
    %cst_274 = arith.constant 5.000000e-01 : f32
    %476 = vector.broadcast %cst_274 : f32 to vector<2x32xf32>
    %477 = arith.mulf %476, %475 : vector<2x32xf32>
    %cst_275 = arith.constant 5.000000e-01 : f32
    %478 = vector.broadcast %cst_275 : f32 to vector<2x32xf32>
    %479 = arith.addf %477, %478 : vector<2x32xf32>
    %480 = arith.addf %463, %18 : vector<2x32xf32>
    %481 = arith.mulf %471, %480 : vector<2x32xf32>
    %482 = arith.addf %451, %481 : vector<2x32xf32>
    %483 = math.tanh %482 : vector<2x32xf32>
    %cst_276 = arith.constant 1.000000e+00 : f32
    %484 = vector.broadcast %cst_276 : f32 to vector<2x32xf32>
    %485 = arith.subf %484, %479 : vector<2x32xf32>
    %486 = arith.mulf %485, %483 : vector<2x32xf32>
    %487 = arith.mulf %479, %405 : vector<2x32xf32>
    %488 = arith.addf %486, %487 : vector<2x32xf32>
    %cst_277 = arith.constant dense<0.000000e+00> : vector<2x32xf32>
    %489 = tpu.matmul %433, %10, %cst_277 {dimension_numbers = #tpu.dot_dimension_numbers<[1], [0], [0], [1], [0, 0, 1, 1], [], []>} : vector<2x32xf32>, vector<32x32xf32>, vector<2x32xf32> -> vector<2x32xf32>
    %cst_278 = arith.constant dense<0.000000e+00> : vector<2x32xf32>
    %490 = tpu.matmul %433, %12, %cst_278 {dimension_numbers = #tpu.dot_dimension_numbers<[1], [0], [0], [1], [0, 0, 1, 1], [], []>} : vector<2x32xf32>, vector<32x32xf32>, vector<2x32xf32> -> vector<2x32xf32>
    %cst_279 = arith.constant dense<0.000000e+00> : vector<2x32xf32>
    %491 = tpu.matmul %433, %14, %cst_279 {dimension_numbers = #tpu.dot_dimension_numbers<[1], [0], [0], [1], [0, 0, 1, 1], [], []>} : vector<2x32xf32>, vector<32x32xf32>, vector<2x32xf32> -> vector<2x32xf32>
    %492 = arith.addf %454, %489 : vector<2x32xf32>
    %cst_280 = arith.constant 5.000000e-01 : f32
    %493 = vector.broadcast %cst_280 : f32 to vector<2x32xf32>
    %494 = arith.mulf %493, %492 : vector<2x32xf32>
    %495 = math.tanh %494 : vector<2x32xf32>
    %cst_281 = arith.constant 5.000000e-01 : f32
    %496 = vector.broadcast %cst_281 : f32 to vector<2x32xf32>
    %497 = arith.mulf %496, %495 : vector<2x32xf32>
    %cst_282 = arith.constant 5.000000e-01 : f32
    %498 = vector.broadcast %cst_282 : f32 to vector<2x32xf32>
    %499 = arith.addf %497, %498 : vector<2x32xf32>
    %500 = arith.addf %457, %490 : vector<2x32xf32>
    %cst_283 = arith.constant 5.000000e-01 : f32
    %501 = vector.broadcast %cst_283 : f32 to vector<2x32xf32>
    %502 = arith.mulf %501, %500 : vector<2x32xf32>
    %503 = math.tanh %502 : vector<2x32xf32>
    %cst_284 = arith.constant 5.000000e-01 : f32
    %504 = vector.broadcast %cst_284 : f32 to vector<2x32xf32>
    %505 = arith.mulf %504, %503 : vector<2x32xf32>
    %cst_285 = arith.constant 5.000000e-01 : f32
    %506 = vector.broadcast %cst_285 : f32 to vector<2x32xf32>
    %507 = arith.addf %505, %506 : vector<2x32xf32>
    %508 = arith.addf %491, %22 : vector<2x32xf32>
    %509 = arith.mulf %499, %508 : vector<2x32xf32>
    %510 = arith.addf %460, %509 : vector<2x32xf32>
    %511 = math.tanh %510 : vector<2x32xf32>
    %cst_286 = arith.constant 1.000000e+00 : f32
    %512 = vector.broadcast %cst_286 : f32 to vector<2x32xf32>
    %513 = arith.subf %512, %507 : vector<2x32xf32>
    %514 = arith.mulf %513, %511 : vector<2x32xf32>
    %515 = arith.mulf %507, %433 : vector<2x32xf32>
    %516 = arith.addf %514, %515 : vector<2x32xf32>
    %517 = arith.index_cast %c5_i32 : i32 to index
    %c0_287 = arith.constant 0 : index
    %c0_288 = arith.constant 0 : index
    %518 = vector.load %arg6[%517, %c0_287, %c0_288] : memref<8x2x32xf32, #tpu.memory_space<vmem>>, vector<1x2x32xf32>
    %519 = vector.shape_cast %518 : vector<1x2x32xf32> to vector<2x32xf32>
    %520 = vector.shape_cast %488 : vector<2x32xf32> to vector<1x2x32xf32>
    tpu.vector_store %arg6[%517, %c0_287, %c0_288], %520 {strides = array<i32>} : memref<8x2x32xf32, #tpu.memory_space<vmem>>, vector<1x2x32xf32>,
    %521 = arith.index_cast %442 : i32 to index
    %c0_289 = arith.constant 0 : index
    %c0_290 = arith.constant 0 : index
    %522 = vector.load %arg7[%521, %c0_289, %c0_290] : memref<8x2x32xf32, #tpu.memory_space<vmem>>, vector<1x2x32xf32>
    %523 = vector.shape_cast %522 : vector<1x2x32xf32> to vector<2x32xf32>
    %524 = vector.shape_cast %516 : vector<2x32xf32> to vector<1x2x32xf32>
    tpu.vector_store %arg7[%521, %c0_289, %c0_290], %524 {strides = array<i32>} : memref<8x2x32xf32, #tpu.memory_space<vmem>>, vector<1x2x32xf32>,
    %c6_i32 = arith.constant 6 : i32
    %c7_i32_291 = arith.constant 7 : i32
    %525 = arith.subi %c7_i32_291, %c6_i32 : i32
    %c0_292 = arith.constant 0 : index
    %526 = arith.index_cast %c6_i32 : i32 to index
    %c0_293 = arith.constant 0 : index
    %c0_294 = arith.constant 0 : index
    %527 = vector.load %arg2[%c0_292, %526, %c0_293, %c0_294] : memref<3x8x2x32xf32, #tpu.memory_space<vmem>>, vector<1x1x2x32xf32>
    %528 = vector.shape_cast %527 : vector<1x1x2x32xf32> to vector<2x32xf32>
    %c1_295 = arith.constant 1 : index
    %529 = arith.index_cast %c6_i32 : i32 to index
    %c0_296 = arith.constant 0 : index
    %c0_297 = arith.constant 0 : index
    %530 = vector.load %arg2[%c1_295, %529, %c0_296, %c0_297] : memref<3x8x2x32xf32, #tpu.memory_space<vmem>>, vector<1x1x2x32xf32>
    %531 = vector.shape_cast %530 : vector<1x1x2x32xf32> to vector<2x32xf32>
    %c2_298 = arith.constant 2 : index
    %532 = arith.index_cast %c6_i32 : i32 to index
    %c0_299 = arith.constant 0 : index
    %c0_300 = arith.constant 0 : index
    %533 = vector.load %arg2[%c2_298, %532, %c0_299, %c0_300] : memref<3x8x2x32xf32, #tpu.memory_space<vmem>>, vector<1x1x2x32xf32>
    %534 = vector.shape_cast %533 : vector<1x1x2x32xf32> to vector<2x32xf32>
    %c0_301 = arith.constant 0 : index
    %535 = arith.index_cast %525 : i32 to index
    %c0_302 = arith.constant 0 : index
    %c0_303 = arith.constant 0 : index
    %536 = vector.load %arg3[%c0_301, %535, %c0_302, %c0_303] : memref<3x8x2x32xf32, #tpu.memory_space<vmem>>, vector<1x1x2x32xf32>
    %537 = vector.shape_cast %536 : vector<1x1x2x32xf32> to vector<2x32xf32>
    %c1_304 = arith.constant 1 : index
    %538 = arith.index_cast %525 : i32 to index
    %c0_305 = arith.constant 0 : index
    %c0_306 = arith.constant 0 : index
    %539 = vector.load %arg3[%c1_304, %538, %c0_305, %c0_306] : memref<3x8x2x32xf32, #tpu.memory_space<vmem>>, vector<1x1x2x32xf32>
    %540 = vector.shape_cast %539 : vector<1x1x2x32xf32> to vector<2x32xf32>
    %c2_307 = arith.constant 2 : index
    %541 = arith.index_cast %525 : i32 to index
    %c0_308 = arith.constant 0 : index
    %c0_309 = arith.constant 0 : index
    %542 = vector.load %arg3[%c2_307, %541, %c0_308, %c0_309] : memref<3x8x2x32xf32, #tpu.memory_space<vmem>>, vector<1x1x2x32xf32>
    %543 = vector.shape_cast %542 : vector<1x1x2x32xf32> to vector<2x32xf32>
    %cst_310 = arith.constant dense<0.000000e+00> : vector<2x32xf32>
    %544 = tpu.matmul %488, %4, %cst_310 {dimension_numbers = #tpu.dot_dimension_numbers<[1], [0], [0], [1], [0, 0, 1, 1], [], []>} : vector<2x32xf32>, vector<32x32xf32>, vector<2x32xf32> -> vector<2x32xf32>
    %cst_311 = arith.constant dense<0.000000e+00> : vector<2x32xf32>
    %545 = tpu.matmul %488, %6, %cst_311 {dimension_numbers = #tpu.dot_dimension_numbers<[1], [0], [0], [1], [0, 0, 1, 1], [], []>} : vector<2x32xf32>, vector<32x32xf32>, vector<2x32xf32> -> vector<2x32xf32>
    %cst_312 = arith.constant dense<0.000000e+00> : vector<2x32xf32>
    %546 = tpu.matmul %488, %8, %cst_312 {dimension_numbers = #tpu.dot_dimension_numbers<[1], [0], [0], [1], [0, 0, 1, 1], [], []>} : vector<2x32xf32>, vector<32x32xf32>, vector<2x32xf32> -> vector<2x32xf32>
    %547 = arith.addf %528, %544 : vector<2x32xf32>
    %cst_313 = arith.constant 5.000000e-01 : f32
    %548 = vector.broadcast %cst_313 : f32 to vector<2x32xf32>
    %549 = arith.mulf %548, %547 : vector<2x32xf32>
    %550 = math.tanh %549 : vector<2x32xf32>
    %cst_314 = arith.constant 5.000000e-01 : f32
    %551 = vector.broadcast %cst_314 : f32 to vector<2x32xf32>
    %552 = arith.mulf %551, %550 : vector<2x32xf32>
    %cst_315 = arith.constant 5.000000e-01 : f32
    %553 = vector.broadcast %cst_315 : f32 to vector<2x32xf32>
    %554 = arith.addf %552, %553 : vector<2x32xf32>
    %555 = arith.addf %531, %545 : vector<2x32xf32>
    %cst_316 = arith.constant 5.000000e-01 : f32
    %556 = vector.broadcast %cst_316 : f32 to vector<2x32xf32>
    %557 = arith.mulf %556, %555 : vector<2x32xf32>
    %558 = math.tanh %557 : vector<2x32xf32>
    %cst_317 = arith.constant 5.000000e-01 : f32
    %559 = vector.broadcast %cst_317 : f32 to vector<2x32xf32>
    %560 = arith.mulf %559, %558 : vector<2x32xf32>
    %cst_318 = arith.constant 5.000000e-01 : f32
    %561 = vector.broadcast %cst_318 : f32 to vector<2x32xf32>
    %562 = arith.addf %560, %561 : vector<2x32xf32>
    %563 = arith.addf %546, %18 : vector<2x32xf32>
    %564 = arith.mulf %554, %563 : vector<2x32xf32>
    %565 = arith.addf %534, %564 : vector<2x32xf32>
    %566 = math.tanh %565 : vector<2x32xf32>
    %cst_319 = arith.constant 1.000000e+00 : f32
    %567 = vector.broadcast %cst_319 : f32 to vector<2x32xf32>
    %568 = arith.subf %567, %562 : vector<2x32xf32>
    %569 = arith.mulf %568, %566 : vector<2x32xf32>
    %570 = arith.mulf %562, %488 : vector<2x32xf32>
    %571 = arith.addf %569, %570 : vector<2x32xf32>
    %cst_320 = arith.constant dense<0.000000e+00> : vector<2x32xf32>
    %572 = tpu.matmul %516, %10, %cst_320 {dimension_numbers = #tpu.dot_dimension_numbers<[1], [0], [0], [1], [0, 0, 1, 1], [], []>} : vector<2x32xf32>, vector<32x32xf32>, vector<2x32xf32> -> vector<2x32xf32>
    %cst_321 = arith.constant dense<0.000000e+00> : vector<2x32xf32>
    %573 = tpu.matmul %516, %12, %cst_321 {dimension_numbers = #tpu.dot_dimension_numbers<[1], [0], [0], [1], [0, 0, 1, 1], [], []>} : vector<2x32xf32>, vector<32x32xf32>, vector<2x32xf32> -> vector<2x32xf32>
    %cst_322 = arith.constant dense<0.000000e+00> : vector<2x32xf32>
    %574 = tpu.matmul %516, %14, %cst_322 {dimension_numbers = #tpu.dot_dimension_numbers<[1], [0], [0], [1], [0, 0, 1, 1], [], []>} : vector<2x32xf32>, vector<32x32xf32>, vector<2x32xf32> -> vector<2x32xf32>
    %575 = arith.addf %537, %572 : vector<2x32xf32>
    %cst_323 = arith.constant 5.000000e-01 : f32
    %576 = vector.broadcast %cst_323 : f32 to vector<2x32xf32>
    %577 = arith.mulf %576, %575 : vector<2x32xf32>
    %578 = math.tanh %577 : vector<2x32xf32>
    %cst_324 = arith.constant 5.000000e-01 : f32
    %579 = vector.broadcast %cst_324 : f32 to vector<2x32xf32>
    %580 = arith.mulf %579, %578 : vector<2x32xf32>
    %cst_325 = arith.constant 5.000000e-01 : f32
    %581 = vector.broadcast %cst_325 : f32 to vector<2x32xf32>
    %582 = arith.addf %580, %581 : vector<2x32xf32>
    %583 = arith.addf %540, %573 : vector<2x32xf32>
    %cst_326 = arith.constant 5.000000e-01 : f32
    %584 = vector.broadcast %cst_326 : f32 to vector<2x32xf32>
    %585 = arith.mulf %584, %583 : vector<2x32xf32>
    %586 = math.tanh %585 : vector<2x32xf32>
    %cst_327 = arith.constant 5.000000e-01 : f32
    %587 = vector.broadcast %cst_327 : f32 to vector<2x32xf32>
    %588 = arith.mulf %587, %586 : vector<2x32xf32>
    %cst_328 = arith.constant 5.000000e-01 : f32
    %589 = vector.broadcast %cst_328 : f32 to vector<2x32xf32>
    %590 = arith.addf %588, %589 : vector<2x32xf32>
    %591 = arith.addf %574, %22 : vector<2x32xf32>
    %592 = arith.mulf %582, %591 : vector<2x32xf32>
    %593 = arith.addf %543, %592 : vector<2x32xf32>
    %594 = math.tanh %593 : vector<2x32xf32>
    %cst_329 = arith.constant 1.000000e+00 : f32
    %595 = vector.broadcast %cst_329 : f32 to vector<2x32xf32>
    %596 = arith.subf %595, %590 : vector<2x32xf32>
    %597 = arith.mulf %596, %594 : vector<2x32xf32>
    %598 = arith.mulf %590, %516 : vector<2x32xf32>
    %599 = arith.addf %597, %598 : vector<2x32xf32>
    %600 = arith.index_cast %c6_i32 : i32 to index
    %c0_330 = arith.constant 0 : index
    %c0_331 = arith.constant 0 : index
    %601 = vector.load %arg6[%600, %c0_330, %c0_331] : memref<8x2x32xf32, #tpu.memory_space<vmem>>, vector<1x2x32xf32>
    %602 = vector.shape_cast %601 : vector<1x2x32xf32> to vector<2x32xf32>
    %603 = vector.shape_cast %571 : vector<2x32xf32> to vector<1x2x32xf32>
    tpu.vector_store %arg6[%600, %c0_330, %c0_331], %603 {strides = array<i32>} : memref<8x2x32xf32, #tpu.memory_space<vmem>>, vector<1x2x32xf32>,
    %604 = arith.index_cast %525 : i32 to index
    %c0_332 = arith.constant 0 : index
    %c0_333 = arith.constant 0 : index
    %605 = vector.load %arg7[%604, %c0_332, %c0_333] : memref<8x2x32xf32, #tpu.memory_space<vmem>>, vector<1x2x32xf32>
    %606 = vector.shape_cast %605 : vector<1x2x32xf32> to vector<2x32xf32>
    %607 = vector.shape_cast %599 : vector<2x32xf32> to vector<1x2x32xf32>
    tpu.vector_store %arg7[%604, %c0_332, %c0_333], %607 {strides = array<i32>} : memref<8x2x32xf32, #tpu.memory_space<vmem>>, vector<1x2x32xf32>,
    %c7_i32_334 = arith.constant 7 : i32
    %c7_i32_335 = arith.constant 7 : i32
    %608 = arith.subi %c7_i32_335, %c7_i32_334 : i32
    %c0_336 = arith.constant 0 : index
    %609 = arith.index_cast %c7_i32_334 : i32 to index
    %c0_337 = arith.constant 0 : index
    %c0_338 = arith.constant 0 : index
    %610 = vector.load %arg2[%c0_336, %609, %c0_337, %c0_338] : memref<3x8x2x32xf32, #tpu.memory_space<vmem>>, vector<1x1x2x32xf32>
    %611 = vector.shape_cast %610 : vector<1x1x2x32xf32> to vector<2x32xf32>
    %c1_339 = arith.constant 1 : index
    %612 = arith.index_cast %c7_i32_334 : i32 to index
    %c0_340 = arith.constant 0 : index
    %c0_341 = arith.constant 0 : index
    %613 = vector.load %arg2[%c1_339, %612, %c0_340, %c0_341] : memref<3x8x2x32xf32, #tpu.memory_space<vmem>>, vector<1x1x2x32xf32>
    %614 = vector.shape_cast %613 : vector<1x1x2x32xf32> to vector<2x32xf32>
    %c2_342 = arith.constant 2 : index
    %615 = arith.index_cast %c7_i32_334 : i32 to index
    %c0_343 = arith.constant 0 : index
    %c0_344 = arith.constant 0 : index
    %616 = vector.load %arg2[%c2_342, %615, %c0_343, %c0_344] : memref<3x8x2x32xf32, #tpu.memory_space<vmem>>, vector<1x1x2x32xf32>
    %617 = vector.shape_cast %616 : vector<1x1x2x32xf32> to vector<2x32xf32>
    %c0_345 = arith.constant 0 : index
    %618 = arith.index_cast %608 : i32 to index
    %c0_346 = arith.constant 0 : index
    %c0_347 = arith.constant 0 : index
    %619 = vector.load %arg3[%c0_345, %618, %c0_346, %c0_347] : memref<3x8x2x32xf32, #tpu.memory_space<vmem>>, vector<1x1x2x32xf32>
    %620 = vector.shape_cast %619 : vector<1x1x2x32xf32> to vector<2x32xf32>
    %c1_348 = arith.constant 1 : index
    %621 = arith.index_cast %608 : i32 to index
    %c0_349 = arith.constant 0 : index
    %c0_350 = arith.constant 0 : index
    %622 = vector.load %arg3[%c1_348, %621, %c0_349, %c0_350] : memref<3x8x2x32xf32, #tpu.memory_space<vmem>>, vector<1x1x2x32xf32>
    %623 = vector.shape_cast %622 : vector<1x1x2x32xf32> to vector<2x32xf32>
    %c2_351 = arith.constant 2 : index
    %624 = arith.index_cast %608 : i32 to index
    %c0_352 = arith.constant 0 : index
    %c0_353 = arith.constant 0 : index
    %625 = vector.load %arg3[%c2_351, %624, %c0_352, %c0_353] : memref<3x8x2x32xf32, #tpu.memory_space<vmem>>, vector<1x1x2x32xf32>
    %626 = vector.shape_cast %625 : vector<1x1x2x32xf32> to vector<2x32xf32>
    %cst_354 = arith.constant dense<0.000000e+00> : vector<2x32xf32>
    %627 = tpu.matmul %571, %4, %cst_354 {dimension_numbers = #tpu.dot_dimension_numbers<[1], [0], [0], [1], [0, 0, 1, 1], [], []>} : vector<2x32xf32>, vector<32x32xf32>, vector<2x32xf32> -> vector<2x32xf32>
    %cst_355 = arith.constant dense<0.000000e+00> : vector<2x32xf32>
    %628 = tpu.matmul %571, %6, %cst_355 {dimension_numbers = #tpu.dot_dimension_numbers<[1], [0], [0], [1], [0, 0, 1, 1], [], []>} : vector<2x32xf32>, vector<32x32xf32>, vector<2x32xf32> -> vector<2x32xf32>
    %cst_356 = arith.constant dense<0.000000e+00> : vector<2x32xf32>
    %629 = tpu.matmul %571, %8, %cst_356 {dimension_numbers = #tpu.dot_dimension_numbers<[1], [0], [0], [1], [0, 0, 1, 1], [], []>} : vector<2x32xf32>, vector<32x32xf32>, vector<2x32xf32> -> vector<2x32xf32>
    %630 = arith.addf %611, %627 : vector<2x32xf32>
    %cst_357 = arith.constant 5.000000e-01 : f32
    %631 = vector.broadcast %cst_357 : f32 to vector<2x32xf32>
    %632 = arith.mulf %631, %630 : vector<2x32xf32>
    %633 = math.tanh %632 : vector<2x32xf32>
    %cst_358 = arith.constant 5.000000e-01 : f32
    %634 = vector.broadcast %cst_358 : f32 to vector<2x32xf32>
    %635 = arith.mulf %634, %633 : vector<2x32xf32>
    %cst_359 = arith.constant 5.000000e-01 : f32
    %636 = vector.broadcast %cst_359 : f32 to vector<2x32xf32>
    %637 = arith.addf %635, %636 : vector<2x32xf32>
    %638 = arith.addf %614, %628 : vector<2x32xf32>
    %cst_360 = arith.constant 5.000000e-01 : f32
    %639 = vector.broadcast %cst_360 : f32 to vector<2x32xf32>
    %640 = arith.mulf %639, %638 : vector<2x32xf32>
    %641 = math.tanh %640 : vector<2x32xf32>
    %cst_361 = arith.constant 5.000000e-01 : f32
    %642 = vector.broadcast %cst_361 : f32 to vector<2x32xf32>
    %643 = arith.mulf %642, %641 : vector<2x32xf32>
    %cst_362 = arith.constant 5.000000e-01 : f32
    %644 = vector.broadcast %cst_362 : f32 to vector<2x32xf32>
    %645 = arith.addf %643, %644 : vector<2x32xf32>
    %646 = arith.addf %629, %18 : vector<2x32xf32>
    %647 = arith.mulf %637, %646 : vector<2x32xf32>
    %648 = arith.addf %617, %647 : vector<2x32xf32>
    %649 = math.tanh %648 : vector<2x32xf32>
    %cst_363 = arith.constant 1.000000e+00 : f32
    %650 = vector.broadcast %cst_363 : f32 to vector<2x32xf32>
    %651 = arith.subf %650, %645 : vector<2x32xf32>
    %652 = arith.mulf %651, %649 : vector<2x32xf32>
    %653 = arith.mulf %645, %571 : vector<2x32xf32>
    %654 = arith.addf %652, %653 : vector<2x32xf32>
    %cst_364 = arith.constant dense<0.000000e+00> : vector<2x32xf32>
    %655 = tpu.matmul %599, %10, %cst_364 {dimension_numbers = #tpu.dot_dimension_numbers<[1], [0], [0], [1], [0, 0, 1, 1], [], []>} : vector<2x32xf32>, vector<32x32xf32>, vector<2x32xf32> -> vector<2x32xf32>
    %cst_365 = arith.constant dense<0.000000e+00> : vector<2x32xf32>
    %656 = tpu.matmul %599, %12, %cst_365 {dimension_numbers = #tpu.dot_dimension_numbers<[1], [0], [0], [1], [0, 0, 1, 1], [], []>} : vector<2x32xf32>, vector<32x32xf32>, vector<2x32xf32> -> vector<2x32xf32>
    %cst_366 = arith.constant dense<0.000000e+00> : vector<2x32xf32>
    %657 = tpu.matmul %599, %14, %cst_366 {dimension_numbers = #tpu.dot_dimension_numbers<[1], [0], [0], [1], [0, 0, 1, 1], [], []>} : vector<2x32xf32>, vector<32x32xf32>, vector<2x32xf32> -> vector<2x32xf32>
    %658 = arith.addf %620, %655 : vector<2x32xf32>
    %cst_367 = arith.constant 5.000000e-01 : f32
    %659 = vector.broadcast %cst_367 : f32 to vector<2x32xf32>
    %660 = arith.mulf %659, %658 : vector<2x32xf32>
    %661 = math.tanh %660 : vector<2x32xf32>
    %cst_368 = arith.constant 5.000000e-01 : f32
    %662 = vector.broadcast %cst_368 : f32 to vector<2x32xf32>
    %663 = arith.mulf %662, %661 : vector<2x32xf32>
    %cst_369 = arith.constant 5.000000e-01 : f32
    %664 = vector.broadcast %cst_369 : f32 to vector<2x32xf32>
    %665 = arith.addf %663, %664 : vector<2x32xf32>
    %666 = arith.addf %623, %656 : vector<2x32xf32>
    %cst_370 = arith.constant 5.000000e-01 : f32
    %667 = vector.broadcast %cst_370 : f32 to vector<2x32xf32>
    %668 = arith.mulf %667, %666 : vector<2x32xf32>
    %669 = math.tanh %668 : vector<2x32xf32>
    %cst_371 = arith.constant 5.000000e-01 : f32
    %670 = vector.broadcast %cst_371 : f32 to vector<2x32xf32>
    %671 = arith.mulf %670, %669 : vector<2x32xf32>
    %cst_372 = arith.constant 5.000000e-01 : f32
    %672 = vector.broadcast %cst_372 : f32 to vector<2x32xf32>
    %673 = arith.addf %671, %672 : vector<2x32xf32>
    %674 = arith.addf %657, %22 : vector<2x32xf32>
    %675 = arith.mulf %665, %674 : vector<2x32xf32>
    %676 = arith.addf %626, %675 : vector<2x32xf32>
    %677 = math.tanh %676 : vector<2x32xf32>
    %cst_373 = arith.constant 1.000000e+00 : f32
    %678 = vector.broadcast %cst_373 : f32 to vector<2x32xf32>
    %679 = arith.subf %678, %673 : vector<2x32xf32>
    %680 = arith.mulf %679, %677 : vector<2x32xf32>
    %681 = arith.mulf %673, %599 : vector<2x32xf32>
    %682 = arith.addf %680, %681 : vector<2x32xf32>
    %683 = arith.index_cast %c7_i32_334 : i32 to index
    %c0_374 = arith.constant 0 : index
    %c0_375 = arith.constant 0 : index
    %684 = vector.load %arg6[%683, %c0_374, %c0_375] : memref<8x2x32xf32, #tpu.memory_space<vmem>>, vector<1x2x32xf32>
    %685 = vector.shape_cast %684 : vector<1x2x32xf32> to vector<2x32xf32>
    %686 = vector.shape_cast %654 : vector<2x32xf32> to vector<1x2x32xf32>
    tpu.vector_store %arg6[%683, %c0_374, %c0_375], %686 {strides = array<i32>} : memref<8x2x32xf32, #tpu.memory_space<vmem>>, vector<1x2x32xf32>,
    %687 = arith.index_cast %608 : i32 to index
    %c0_376 = arith.constant 0 : index
    %c0_377 = arith.constant 0 : index
    %688 = vector.load %arg7[%687, %c0_376, %c0_377] : memref<8x2x32xf32, #tpu.memory_space<vmem>>, vector<1x2x32xf32>
    %689 = vector.shape_cast %688 : vector<1x2x32xf32> to vector<2x32xf32>
    %690 = vector.shape_cast %682 : vector<2x32xf32> to vector<1x2x32xf32>
    tpu.vector_store %arg7[%687, %c0_376, %c0_377], %690 {strides = array<i32>} : memref<8x2x32xf32, #tpu.memory_space<vmem>>, vector<1x2x32xf32>,
    %c8_i32 = arith.constant 8 : i32
    %c0_378 = arith.constant 0 : index
    %c0_379 = arith.constant 0 : index
    %c0_380 = arith.constant 0 : index
    %691 = vector.load %arg9[%c0_378, %c0_379, %c0_380] : memref<2x2x32xf32, #tpu.memory_space<vmem>>, vector<1x2x32xf32>
    %692 = vector.shape_cast %691 : vector<1x2x32xf32> to vector<2x32xf32>
    %693 = vector.shape_cast %654 : vector<2x32xf32> to vector<1x2x32xf32>
    tpu.vector_store %arg9[%c0_378, %c0_379, %c0_380], %693 {strides = array<i32>} : memref<2x2x32xf32, #tpu.memory_space<vmem>>, vector<1x2x32xf32>,
    %c1_381 = arith.constant 1 : index
    %c0_382 = arith.constant 0 : index
    %c0_383 = arith.constant 0 : index
    %694 = vector.load %arg9[%c1_381, %c0_382, %c0_383] : memref<2x2x32xf32, #tpu.memory_space<vmem>>, vector<1x2x32xf32>
    %695 = vector.shape_cast %694 : vector<1x2x32xf32> to vector<2x32xf32>
    %696 = vector.shape_cast %682 : vector<2x32xf32> to vector<1x2x32xf32>
    tpu.vector_store %arg9[%c1_381, %c0_382, %c0_383], %696 {strides = array<i32>} : memref<2x2x32xf32, #tpu.memory_space<vmem>>, vector<1x2x32xf32>,
    %c0_i32_384 = arith.constant 0 : i32
    %697 = arith.cmpi eq, %arg1, %c0_i32_384 : i32
    %698 = arith.extui %697 : i1 to i32
    %c0_i32_385 = arith.constant 0 : i32
    %699 = arith.cmpi ne, %698, %c0_i32_385 : i32
    scf.if %699 {
      %c0_386 = arith.constant 0 : index
      %c0_387 = arith.constant 0 : index
      %c0_388 = arith.constant 0 : index
      %700 = vector.load %arg8[%c0_386, %c0_387, %c0_388] : memref<2x2x32xf32, #tpu.memory_space<vmem>>, vector<1x2x32xf32>
      %701 = vector.shape_cast %700 : vector<1x2x32xf32> to vector<2x32xf32>
      %702 = vector.shape_cast %654 : vector<2x32xf32> to vector<1x2x32xf32>
      tpu.vector_store %arg8[%c0_386, %c0_387, %c0_388], %702 {strides = array<i32>} : memref<2x2x32xf32, #tpu.memory_space<vmem>>, vector<1x2x32xf32>,
      %c1_389 = arith.constant 1 : index
      %c0_390 = arith.constant 0 : index
      %c0_391 = arith.constant 0 : index
      %703 = vector.load %arg8[%c1_389, %c0_390, %c0_391] : memref<2x2x32xf32, #tpu.memory_space<vmem>>, vector<1x2x32xf32>
      %704 = vector.shape_cast %703 : vector<1x2x32xf32> to vector<2x32xf32>
      %705 = vector.shape_cast %682 : vector<2x32xf32> to vector<1x2x32xf32>
      tpu.vector_store %arg8[%c1_389, %c0_390, %c0_391], %705 {strides = array<i32>} : memref<2x2x32xf32, #tpu.memory_space<vmem>>, vector<1x2x32xf32>,
    } else {
    }
    return
  }
  func.func @transform_0(%arg0: i32, %arg1: i32) -> (i32, i32, i32, i32) {
    %c0_i32 = arith.constant 0 : i32
    %c0_i32_0 = arith.constant 0 : i32
    %c0_i32_1 = arith.constant 0 : i32
    return %c0_i32, %arg1, %arg0, %c0_i32_0 : i32, i32, i32, i32
  }
  func.func @transform_1(%arg0: i32, %arg1: i32) -> (i32, i32, i32, i32) {
    %c0_i32 = arith.constant 0 : i32
    %0 = arith.subi %c0_i32, %arg1 : i32
    %c0_i32_0 = arith.constant 0 : i32
    %c0_i32_1 = arith.constant 0 : i32
    %c0_i32_2 = arith.constant 0 : i32
    return %c0_i32_0, %0, %arg0, %c0_i32_1 : i32, i32, i32, i32
  }
  func.func @transform_3(%arg0: i32, %arg1: i32) -> (i32, i32, i32) {
    %c0_i32 = arith.constant 0 : i32
    %c0_i32_0 = arith.constant 0 : i32
    %c0_i32_1 = arith.constant 0 : i32
    %c0_i32_2 = arith.constant 0 : i32
    return %c0_i32, %c0_i32_0, %c0_i32_1 : i32, i32, i32
  }
  func.func @transform_4(%arg0: i32, %arg1: i32) -> (i32, i32, i32) {
    %c0_i32 = arith.constant 0 : i32
    %c0_i32_0 = arith.constant 0 : i32
    return %arg1, %arg0, %c0_i32 : i32, i32, i32
  }
  func.func @transform_5(%arg0: i32, %arg1: i32) -> (i32, i32, i32) {
    %c0_i32 = arith.constant 0 : i32
    %0 = arith.subi %c0_i32, %arg1 : i32
    %c0_i32_0 = arith.constant 0 : i32
    %c0_i32_1 = arith.constant 0 : i32
    return %0, %arg0, %c0_i32_0 : i32, i32, i32
  }
  func.func @transform_6(%arg0: i32, %arg1: i32) -> (i32, i32, i32) {
    %c0_i32 = arith.constant 0 : i32
    %c0_i32_0 = arith.constant 0 : i32
    %c0_i32_1 = arith.constant 0 : i32
    return %c0_i32, %arg0, %c0_i32_0 : i32, i32, i32
  }
}

module attributes {stable_mosaic.version = 11 : i64} {
  func.func @_bigru_chunk_kernel(%arg0: i32, %arg1: i32, %arg2: memref<3x8x2x32xf32, #tpu.memory_space<vmem>>, %arg3: memref<3x8x2x32xf32, #tpu.memory_space<vmem>>, %arg4: memref<2x3x32x32xf32, #tpu.memory_space<any>>, %arg5: memref<2x1x32xf32, #tpu.memory_space<vmem>>, %arg6: memref<8x2x32xf32, #tpu.memory_space<vmem>>, %arg7: memref<8x2x32xf32, #tpu.memory_space<vmem>>, %arg8: memref<2x2x32xf32, #tpu.memory_space<vmem>>, %arg9: memref<2x2x32xf32, #tpu.memory_space<vmem>>, %arg10: memref<2x3x32x32xf32, #tpu.memory_space<vmem>>, %arg11: memref<1x!tpu.dma_semaphore, #tpu.memory_space<semaphore_mem>>) attributes {dimension_semantics = [#tpu.dimension_semantics<parallel>, #tpu.dimension_semantics<arbitrary>], iteration_bounds = array<i64: 1, 1>, scalar_prefetch = 0 : i64, scratch_operands = 3 : i64, tpu.core_type = #tpu.core_type<tc>, window_params = [{transform_indices = @transform_0, window_bounds = array<i64: 3, 8, 2, 32>}, {transform_indices = @transform_1, window_bounds = array<i64: 3, 8, 2, 32>}, {}, {pipeline_mode = #tpu.pipeline_mode<synchronous>, transform_indices = @transform_3, window_bounds = array<i64: 2, 1, 32>}, {transform_indices = @transform_4, window_bounds = array<i64: 8, 2, 32>}, {transform_indices = @transform_5, window_bounds = array<i64: 8, 2, 32>}, {transform_indices = @transform_6, window_bounds = array<i64: 2, 2, 32>}]} {
    %c0_i32 = arith.constant 0 : i32
    %0 = arith.cmpi eq, %arg1, %c0_i32 : i32
    %1 = arith.extui %0 : i1 to i32
    %c0_i32_0 = arith.constant 0 : i32
    %2 = arith.cmpi ne, %1, %c0_i32_0 : i32
    scf.if %2 {
      %cst_386 = arith.constant 0.000000e+00 : f32
      %700 = vector.broadcast %cst_386 : f32 to vector<2x2x32xf32>
      %c0_387 = arith.constant 0 : index
      %c0_388 = arith.constant 0 : index
      %c0_389 = arith.constant 0 : index
      %701 = vector.load %arg9[%c0_387, %c0_388, %c0_389] : memref<2x2x32xf32, #tpu.memory_space<vmem>>, vector<2x2x32xf32>
      tpu.vector_store %arg9[%c0_387, %c0_388, %c0_389], %700 {strides = array<i32>} : memref<2x2x32xf32, #tpu.memory_space<vmem>>, vector<2x2x32xf32>,
      %c0_i32_390 = arith.constant 0 : i32
      %702 = tpu.memref_slice %arg11[%c0_i32_390] : memref<1x!tpu.dma_semaphore, #tpu.memory_space<semaphore_mem>> -> memref<1x!tpu.dma_semaphore, #tpu.memory_space<semaphore_mem>>
      %703 = tpu.memref_squeeze %702 : memref<1x!tpu.dma_semaphore, #tpu.memory_space<semaphore_mem>> -> memref<!tpu.dma_semaphore, #tpu.memory_space<semaphore_mem>>
      tpu.enqueue_dma source(%arg4 : memref<2x3x32x32xf32, #tpu.memory_space<any>>) target(%arg10 : memref<2x3x32x32xf32, #tpu.memory_space<vmem>>) target_semaphore(%703 : memref<!tpu.dma_semaphore, #tpu.memory_space<semaphore_mem>>)
      %c0_i32_391 = arith.constant 0 : i32
      %704 = tpu.memref_slice %arg11[%c0_i32_391] : memref<1x!tpu.dma_semaphore, #tpu.memory_space<semaphore_mem>> -> memref<1x!tpu.dma_semaphore, #tpu.memory_space<semaphore_mem>>
      %705 = tpu.memref_squeeze %704 : memref<1x!tpu.dma_semaphore, #tpu.memory_space<semaphore_mem>> -> memref<!tpu.dma_semaphore, #tpu.memory_space<semaphore_mem>>
      tpu.wait_dma2 semaphore(%705 : memref<!tpu.dma_semaphore, #tpu.memory_space<semaphore_mem>>) src(%arg4 : memref<2x3x32x32xf32, #tpu.memory_space<any>>) dst(%arg10 : memref<2x3x32x32xf32, #tpu.memory_space<vmem>>)
    } else {
    }
    %c0 = arith.constant 0 : index
    %c0_1 = arith.constant 0 : index
    %c0_2 = arith.constant 0 : index
    %c0_3 = arith.constant 0 : index
    %3 = vector.load %arg10[%c0, %c0_1, %c0_2, %c0_3] : memref<2x3x32x32xf32, #tpu.memory_space<vmem>>, vector<1x1x32x32xf32>
    %4 = vector.shape_cast %3 : vector<1x1x32x32xf32> to vector<32x32xf32>
    %c0_4 = arith.constant 0 : index
    %c1 = arith.constant 1 : index
    %c0_5 = arith.constant 0 : index
    %c0_6 = arith.constant 0 : index
    %5 = vector.load %arg10[%c0_4, %c1, %c0_5, %c0_6] : memref<2x3x32x32xf32, #tpu.memory_space<vmem>>, vector<1x1x32x32xf32>
    %6 = vector.shape_cast %5 : vector<1x1x32x32xf32> to vector<32x32xf32>
    %c0_7 = arith.constant 0 : index
    %c2 = arith.constant 2 : index
    %c0_8 = arith.constant 0 : index
    %c0_9 = arith.constant 0 : index
    %7 = vector.load %arg10[%c0_7, %c2, %c0_8, %c0_9] : memref<2x3x32x32xf32, #tpu.memory_space<vmem>>, vector<1x1x32x32xf32>
    %8 = vector.shape_cast %7 : vector<1x1x32x32xf32> to vector<32x32xf32>
    %c1_10 = arith.constant 1 : index
    %c0_11 = arith.constant 0 : index
    %c0_12 = arith.constant 0 : index
    %c0_13 = arith.constant 0 : index
    %9 = vector.load %arg10[%c1_10, %c0_11, %c0_12, %c0_13] : memref<2x3x32x32xf32, #tpu.memory_space<vmem>>, vector<1x1x32x32xf32>
    %10 = vector.shape_cast %9 : vector<1x1x32x32xf32> to vector<32x32xf32>
    %c1_14 = arith.constant 1 : index
    %c1_15 = arith.constant 1 : index
    %c0_16 = arith.constant 0 : index
    %c0_17 = arith.constant 0 : index
    %11 = vector.load %arg10[%c1_14, %c1_15, %c0_16, %c0_17] : memref<2x3x32x32xf32, #tpu.memory_space<vmem>>, vector<1x1x32x32xf32>
    %12 = vector.shape_cast %11 : vector<1x1x32x32xf32> to vector<32x32xf32>
    %c1_18 = arith.constant 1 : index
    %c2_19 = arith.constant 2 : index
    %c0_20 = arith.constant 0 : index
    %c0_21 = arith.constant 0 : index
    %13 = vector.load %arg10[%c1_18, %c2_19, %c0_20, %c0_21] : memref<2x3x32x32xf32, #tpu.memory_space<vmem>>, vector<1x1x32x32xf32>
    %14 = vector.shape_cast %13 : vector<1x1x32x32xf32> to vector<32x32xf32>
    %c0_22 = arith.constant 0 : index
    %c0_23 = arith.constant 0 : index
    %c0_24 = arith.constant 0 : index
    %15 = vector.load %arg5[%c0_22, %c0_23, %c0_24] : memref<2x1x32xf32, #tpu.memory_space<vmem>>, vector<1x1x32xf32>
    %16 = vector.shape_cast %15 : vector<1x1x32xf32> to vector<1x32xf32>
    %17 = vector.shape_cast %16 : vector<1x32xf32> to vector<1x32xf32>
    %18 = vector.broadcast %17 : vector<1x32xf32> to vector<2x32xf32>
    %c1_25 = arith.constant 1 : index
    %c0_26 = arith.constant 0 : index
    %c0_27 = arith.constant 0 : index
    %19 = vector.load %arg5[%c1_25, %c0_26, %c0_27] : memref<2x1x32xf32, #tpu.memory_space<vmem>>, vector<1x1x32xf32>
    %20 = vector.shape_cast %19 : vector<1x1x32xf32> to vector<1x32xf32>
    %21 = vector.shape_cast %20 : vector<1x32xf32> to vector<1x32xf32>
    %22 = vector.broadcast %21 : vector<1x32xf32> to vector<2x32xf32>
    %c0_28 = arith.constant 0 : index
    %c0_29 = arith.constant 0 : index
    %c0_30 = arith.constant 0 : index
    %23 = vector.load %arg9[%c0_28, %c0_29, %c0_30] : memref<2x2x32xf32, #tpu.memory_space<vmem>>, vector<1x2x32xf32>
    %24 = vector.shape_cast %23 : vector<1x2x32xf32> to vector<2x32xf32>
    %c1_31 = arith.constant 1 : index
    %c0_32 = arith.constant 0 : index
    %c0_33 = arith.constant 0 : index
    %25 = vector.load %arg9[%c1_31, %c0_32, %c0_33] : memref<2x2x32xf32, #tpu.memory_space<vmem>>, vector<1x2x32xf32>
    %26 = vector.shape_cast %25 : vector<1x2x32xf32> to vector<2x32xf32>
    %c0_i32_34 = arith.constant 0 : i32
    %c7_i32 = arith.constant 7 : i32
    %27 = arith.subi %c7_i32, %c0_i32_34 : i32
    %c0_35 = arith.constant 0 : index
    %28 = arith.index_cast %c0_i32_34 : i32 to index
    %c0_36 = arith.constant 0 : index
    %c0_37 = arith.constant 0 : index
    %29 = vector.load %arg2[%c0_35, %28, %c0_36, %c0_37] : memref<3x8x2x32xf32, #tpu.memory_space<vmem>>, vector<1x1x2x32xf32>
    %30 = vector.shape_cast %29 : vector<1x1x2x32xf32> to vector<2x32xf32>
    %c1_38 = arith.constant 1 : index
    %31 = arith.index_cast %c0_i32_34 : i32 to index
    %c0_39 = arith.constant 0 : index
    %c0_40 = arith.constant 0 : index
    %32 = vector.load %arg2[%c1_38, %31, %c0_39, %c0_40] : memref<3x8x2x32xf32, #tpu.memory_space<vmem>>, vector<1x1x2x32xf32>
    %33 = vector.shape_cast %32 : vector<1x1x2x32xf32> to vector<2x32xf32>
    %c2_41 = arith.constant 2 : index
    %34 = arith.index_cast %c0_i32_34 : i32 to index
    %c0_42 = arith.constant 0 : index
    %c0_43 = arith.constant 0 : index
    %35 = vector.load %arg2[%c2_41, %34, %c0_42, %c0_43] : memref<3x8x2x32xf32, #tpu.memory_space<vmem>>, vector<1x1x2x32xf32>
    %36 = vector.shape_cast %35 : vector<1x1x2x32xf32> to vector<2x32xf32>
    %c0_44 = arith.constant 0 : index
    %37 = arith.index_cast %27 : i32 to index
    %c0_45 = arith.constant 0 : index
    %c0_46 = arith.constant 0 : index
    %38 = vector.load %arg3[%c0_44, %37, %c0_45, %c0_46] : memref<3x8x2x32xf32, #tpu.memory_space<vmem>>, vector<1x1x2x32xf32>
    %39 = vector.shape_cast %38 : vector<1x1x2x32xf32> to vector<2x32xf32>
    %c1_47 = arith.constant 1 : index
    %40 = arith.index_cast %27 : i32 to index
    %c0_48 = arith.constant 0 : index
    %c0_49 = arith.constant 0 : index
    %41 = vector.load %arg3[%c1_47, %40, %c0_48, %c0_49] : memref<3x8x2x32xf32, #tpu.memory_space<vmem>>, vector<1x1x2x32xf32>
    %42 = vector.shape_cast %41 : vector<1x1x2x32xf32> to vector<2x32xf32>
    %c2_50 = arith.constant 2 : index
    %43 = arith.index_cast %27 : i32 to index
    %c0_51 = arith.constant 0 : index
    %c0_52 = arith.constant 0 : index
    %44 = vector.load %arg3[%c2_50, %43, %c0_51, %c0_52] : memref<3x8x2x32xf32, #tpu.memory_space<vmem>>, vector<1x1x2x32xf32>
    %45 = vector.shape_cast %44 : vector<1x1x2x32xf32> to vector<2x32xf32>
    %cst = arith.constant dense<0.000000e+00> : vector<2x32xf32>
    %46 = tpu.matmul %24, %4, %cst {dimension_numbers = #tpu.dot_dimension_numbers<[1], [0], [0], [1], [0, 0, 1, 1], [], []>} : vector<2x32xf32>, vector<32x32xf32>, vector<2x32xf32> -> vector<2x32xf32>
    %cst_53 = arith.constant dense<0.000000e+00> : vector<2x32xf32>
    %47 = tpu.matmul %24, %6, %cst_53 {dimension_numbers = #tpu.dot_dimension_numbers<[1], [0], [0], [1], [0, 0, 1, 1], [], []>} : vector<2x32xf32>, vector<32x32xf32>, vector<2x32xf32> -> vector<2x32xf32>
    %cst_54 = arith.constant dense<0.000000e+00> : vector<2x32xf32>
    %48 = tpu.matmul %24, %8, %cst_54 {dimension_numbers = #tpu.dot_dimension_numbers<[1], [0], [0], [1], [0, 0, 1, 1], [], []>} : vector<2x32xf32>, vector<32x32xf32>, vector<2x32xf32> -> vector<2x32xf32>
    %49 = arith.addf %30, %46 : vector<2x32xf32>
    %cst_55 = arith.constant 5.000000e-01 : f32
    %50 = vector.broadcast %cst_55 : f32 to vector<2x32xf32>
    %51 = arith.mulf %50, %49 : vector<2x32xf32>
    %52 = math.tanh %51 : vector<2x32xf32>
    %cst_56 = arith.constant 5.000000e-01 : f32
    %53 = vector.broadcast %cst_56 : f32 to vector<2x32xf32>
    %54 = arith.mulf %53, %52 : vector<2x32xf32>
    %cst_57 = arith.constant 5.000000e-01 : f32
    %55 = vector.broadcast %cst_57 : f32 to vector<2x32xf32>
    %56 = arith.addf %54, %55 : vector<2x32xf32>
    %57 = arith.addf %33, %47 : vector<2x32xf32>
    %cst_58 = arith.constant 5.000000e-01 : f32
    %58 = vector.broadcast %cst_58 : f32 to vector<2x32xf32>
    %59 = arith.mulf %58, %57 : vector<2x32xf32>
    %60 = math.tanh %59 : vector<2x32xf32>
    %cst_59 = arith.constant 5.000000e-01 : f32
    %61 = vector.broadcast %cst_59 : f32 to vector<2x32xf32>
    %62 = arith.mulf %61, %60 : vector<2x32xf32>
    %cst_60 = arith.constant 5.000000e-01 : f32
    %63 = vector.broadcast %cst_60 : f32 to vector<2x32xf32>
    %64 = arith.addf %62, %63 : vector<2x32xf32>
    %65 = arith.addf %48, %18 : vector<2x32xf32>
    %66 = arith.mulf %56, %65 : vector<2x32xf32>
    %67 = arith.addf %36, %66 : vector<2x32xf32>
    %68 = math.tanh %67 : vector<2x32xf32>
    %cst_61 = arith.constant 1.000000e+00 : f32
    %69 = vector.broadcast %cst_61 : f32 to vector<2x32xf32>
    %70 = arith.subf %69, %64 : vector<2x32xf32>
    %71 = arith.mulf %70, %68 : vector<2x32xf32>
    %72 = arith.mulf %64, %24 : vector<2x32xf32>
    %73 = arith.addf %71, %72 : vector<2x32xf32>
    %cst_62 = arith.constant dense<0.000000e+00> : vector<2x32xf32>
    %74 = tpu.matmul %26, %10, %cst_62 {dimension_numbers = #tpu.dot_dimension_numbers<[1], [0], [0], [1], [0, 0, 1, 1], [], []>} : vector<2x32xf32>, vector<32x32xf32>, vector<2x32xf32> -> vector<2x32xf32>
    %cst_63 = arith.constant dense<0.000000e+00> : vector<2x32xf32>
    %75 = tpu.matmul %26, %12, %cst_63 {dimension_numbers = #tpu.dot_dimension_numbers<[1], [0], [0], [1], [0, 0, 1, 1], [], []>} : vector<2x32xf32>, vector<32x32xf32>, vector<2x32xf32> -> vector<2x32xf32>
    %cst_64 = arith.constant dense<0.000000e+00> : vector<2x32xf32>
    %76 = tpu.matmul %26, %14, %cst_64 {dimension_numbers = #tpu.dot_dimension_numbers<[1], [0], [0], [1], [0, 0, 1, 1], [], []>} : vector<2x32xf32>, vector<32x32xf32>, vector<2x32xf32> -> vector<2x32xf32>
    %77 = arith.addf %39, %74 : vector<2x32xf32>
    %cst_65 = arith.constant 5.000000e-01 : f32
    %78 = vector.broadcast %cst_65 : f32 to vector<2x32xf32>
    %79 = arith.mulf %78, %77 : vector<2x32xf32>
    %80 = math.tanh %79 : vector<2x32xf32>
    %cst_66 = arith.constant 5.000000e-01 : f32
    %81 = vector.broadcast %cst_66 : f32 to vector<2x32xf32>
    %82 = arith.mulf %81, %80 : vector<2x32xf32>
    %cst_67 = arith.constant 5.000000e-01 : f32
    %83 = vector.broadcast %cst_67 : f32 to vector<2x32xf32>
    %84 = arith.addf %82, %83 : vector<2x32xf32>
    %85 = arith.addf %42, %75 : vector<2x32xf32>
    %cst_68 = arith.constant 5.000000e-01 : f32
    %86 = vector.broadcast %cst_68 : f32 to vector<2x32xf32>
    %87 = arith.mulf %86, %85 : vector<2x32xf32>
    %88 = math.tanh %87 : vector<2x32xf32>
    %cst_69 = arith.constant 5.000000e-01 : f32
    %89 = vector.broadcast %cst_69 : f32 to vector<2x32xf32>
    %90 = arith.mulf %89, %88 : vector<2x32xf32>
    %cst_70 = arith.constant 5.000000e-01 : f32
    %91 = vector.broadcast %cst_70 : f32 to vector<2x32xf32>
    %92 = arith.addf %90, %91 : vector<2x32xf32>
    %93 = arith.addf %76, %22 : vector<2x32xf32>
    %94 = arith.mulf %84, %93 : vector<2x32xf32>
    %95 = arith.addf %45, %94 : vector<2x32xf32>
    %96 = math.tanh %95 : vector<2x32xf32>
    %cst_71 = arith.constant 1.000000e+00 : f32
    %97 = vector.broadcast %cst_71 : f32 to vector<2x32xf32>
    %98 = arith.subf %97, %92 : vector<2x32xf32>
    %99 = arith.mulf %98, %96 : vector<2x32xf32>
    %100 = arith.mulf %92, %26 : vector<2x32xf32>
    %101 = arith.addf %99, %100 : vector<2x32xf32>
    %102 = arith.index_cast %c0_i32_34 : i32 to index
    %c0_72 = arith.constant 0 : index
    %c0_73 = arith.constant 0 : index
    %103 = vector.load %arg6[%102, %c0_72, %c0_73] : memref<8x2x32xf32, #tpu.memory_space<vmem>>, vector<1x2x32xf32>
    %104 = vector.shape_cast %103 : vector<1x2x32xf32> to vector<2x32xf32>
    %105 = vector.shape_cast %73 : vector<2x32xf32> to vector<1x2x32xf32>
    tpu.vector_store %arg6[%102, %c0_72, %c0_73], %105 {strides = array<i32>} : memref<8x2x32xf32, #tpu.memory_space<vmem>>, vector<1x2x32xf32>,
    %106 = arith.index_cast %27 : i32 to index
    %c0_74 = arith.constant 0 : index
    %c0_75 = arith.constant 0 : index
    %107 = vector.load %arg7[%106, %c0_74, %c0_75] : memref<8x2x32xf32, #tpu.memory_space<vmem>>, vector<1x2x32xf32>
    %108 = vector.shape_cast %107 : vector<1x2x32xf32> to vector<2x32xf32>
    %109 = vector.shape_cast %101 : vector<2x32xf32> to vector<1x2x32xf32>
    tpu.vector_store %arg7[%106, %c0_74, %c0_75], %109 {strides = array<i32>} : memref<8x2x32xf32, #tpu.memory_space<vmem>>, vector<1x2x32xf32>,
    %c1_i32 = arith.constant 1 : i32
    %c7_i32_76 = arith.constant 7 : i32
    %110 = arith.subi %c7_i32_76, %c1_i32 : i32
    %c0_77 = arith.constant 0 : index
    %111 = arith.index_cast %c1_i32 : i32 to index
    %c0_78 = arith.constant 0 : index
    %c0_79 = arith.constant 0 : index
    %112 = vector.load %arg2[%c0_77, %111, %c0_78, %c0_79] : memref<3x8x2x32xf32, #tpu.memory_space<vmem>>, vector<1x1x2x32xf32>
    %113 = vector.shape_cast %112 : vector<1x1x2x32xf32> to vector<2x32xf32>
    %c1_80 = arith.constant 1 : index
    %114 = arith.index_cast %c1_i32 : i32 to index
    %c0_81 = arith.constant 0 : index
    %c0_82 = arith.constant 0 : index
    %115 = vector.load %arg2[%c1_80, %114, %c0_81, %c0_82] : memref<3x8x2x32xf32, #tpu.memory_space<vmem>>, vector<1x1x2x32xf32>
    %116 = vector.shape_cast %115 : vector<1x1x2x32xf32> to vector<2x32xf32>
    %c2_83 = arith.constant 2 : index
    %117 = arith.index_cast %c1_i32 : i32 to index
    %c0_84 = arith.constant 0 : index
    %c0_85 = arith.constant 0 : index
    %118 = vector.load %arg2[%c2_83, %117, %c0_84, %c0_85] : memref<3x8x2x32xf32, #tpu.memory_space<vmem>>, vector<1x1x2x32xf32>
    %119 = vector.shape_cast %118 : vector<1x1x2x32xf32> to vector<2x32xf32>
    %c0_86 = arith.constant 0 : index
    %120 = arith.index_cast %110 : i32 to index
    %c0_87 = arith.constant 0 : index
    %c0_88 = arith.constant 0 : index
    %121 = vector.load %arg3[%c0_86, %120, %c0_87, %c0_88] : memref<3x8x2x32xf32, #tpu.memory_space<vmem>>, vector<1x1x2x32xf32>
    %122 = vector.shape_cast %121 : vector<1x1x2x32xf32> to vector<2x32xf32>
    %c1_89 = arith.constant 1 : index
    %123 = arith.index_cast %110 : i32 to index
    %c0_90 = arith.constant 0 : index
    %c0_91 = arith.constant 0 : index
    %124 = vector.load %arg3[%c1_89, %123, %c0_90, %c0_91] : memref<3x8x2x32xf32, #tpu.memory_space<vmem>>, vector<1x1x2x32xf32>
    %125 = vector.shape_cast %124 : vector<1x1x2x32xf32> to vector<2x32xf32>
    %c2_92 = arith.constant 2 : index
    %126 = arith.index_cast %110 : i32 to index
    %c0_93 = arith.constant 0 : index
    %c0_94 = arith.constant 0 : index
    %127 = vector.load %arg3[%c2_92, %126, %c0_93, %c0_94] : memref<3x8x2x32xf32, #tpu.memory_space<vmem>>, vector<1x1x2x32xf32>
    %128 = vector.shape_cast %127 : vector<1x1x2x32xf32> to vector<2x32xf32>
    %cst_95 = arith.constant dense<0.000000e+00> : vector<2x32xf32>
    %129 = tpu.matmul %73, %4, %cst_95 {dimension_numbers = #tpu.dot_dimension_numbers<[1], [0], [0], [1], [0, 0, 1, 1], [], []>} : vector<2x32xf32>, vector<32x32xf32>, vector<2x32xf32> -> vector<2x32xf32>
    %cst_96 = arith.constant dense<0.000000e+00> : vector<2x32xf32>
    %130 = tpu.matmul %73, %6, %cst_96 {dimension_numbers = #tpu.dot_dimension_numbers<[1], [0], [0], [1], [0, 0, 1, 1], [], []>} : vector<2x32xf32>, vector<32x32xf32>, vector<2x32xf32> -> vector<2x32xf32>
    %cst_97 = arith.constant dense<0.000000e+00> : vector<2x32xf32>
    %131 = tpu.matmul %73, %8, %cst_97 {dimension_numbers = #tpu.dot_dimension_numbers<[1], [0], [0], [1], [0, 0, 1, 1], [], []>} : vector<2x32xf32>, vector<32x32xf32>, vector<2x32xf32> -> vector<2x32xf32>
    %132 = arith.addf %113, %129 : vector<2x32xf32>
    %cst_98 = arith.constant 5.000000e-01 : f32
    %133 = vector.broadcast %cst_98 : f32 to vector<2x32xf32>
    %134 = arith.mulf %133, %132 : vector<2x32xf32>
    %135 = math.tanh %134 : vector<2x32xf32>
    %cst_99 = arith.constant 5.000000e-01 : f32
    %136 = vector.broadcast %cst_99 : f32 to vector<2x32xf32>
    %137 = arith.mulf %136, %135 : vector<2x32xf32>
    %cst_100 = arith.constant 5.000000e-01 : f32
    %138 = vector.broadcast %cst_100 : f32 to vector<2x32xf32>
    %139 = arith.addf %137, %138 : vector<2x32xf32>
    %140 = arith.addf %116, %130 : vector<2x32xf32>
    %cst_101 = arith.constant 5.000000e-01 : f32
    %141 = vector.broadcast %cst_101 : f32 to vector<2x32xf32>
    %142 = arith.mulf %141, %140 : vector<2x32xf32>
    %143 = math.tanh %142 : vector<2x32xf32>
    %cst_102 = arith.constant 5.000000e-01 : f32
    %144 = vector.broadcast %cst_102 : f32 to vector<2x32xf32>
    %145 = arith.mulf %144, %143 : vector<2x32xf32>
    %cst_103 = arith.constant 5.000000e-01 : f32
    %146 = vector.broadcast %cst_103 : f32 to vector<2x32xf32>
    %147 = arith.addf %145, %146 : vector<2x32xf32>
    %148 = arith.addf %131, %18 : vector<2x32xf32>
    %149 = arith.mulf %139, %148 : vector<2x32xf32>
    %150 = arith.addf %119, %149 : vector<2x32xf32>
    %151 = math.tanh %150 : vector<2x32xf32>
    %cst_104 = arith.constant 1.000000e+00 : f32
    %152 = vector.broadcast %cst_104 : f32 to vector<2x32xf32>
    %153 = arith.subf %152, %147 : vector<2x32xf32>
    %154 = arith.mulf %153, %151 : vector<2x32xf32>
    %155 = arith.mulf %147, %73 : vector<2x32xf32>
    %156 = arith.addf %154, %155 : vector<2x32xf32>
    %cst_105 = arith.constant dense<0.000000e+00> : vector<2x32xf32>
    %157 = tpu.matmul %101, %10, %cst_105 {dimension_numbers = #tpu.dot_dimension_numbers<[1], [0], [0], [1], [0, 0, 1, 1], [], []>} : vector<2x32xf32>, vector<32x32xf32>, vector<2x32xf32> -> vector<2x32xf32>
    %cst_106 = arith.constant dense<0.000000e+00> : vector<2x32xf32>
    %158 = tpu.matmul %101, %12, %cst_106 {dimension_numbers = #tpu.dot_dimension_numbers<[1], [0], [0], [1], [0, 0, 1, 1], [], []>} : vector<2x32xf32>, vector<32x32xf32>, vector<2x32xf32> -> vector<2x32xf32>
    %cst_107 = arith.constant dense<0.000000e+00> : vector<2x32xf32>
    %159 = tpu.matmul %101, %14, %cst_107 {dimension_numbers = #tpu.dot_dimension_numbers<[1], [0], [0], [1], [0, 0, 1, 1], [], []>} : vector<2x32xf32>, vector<32x32xf32>, vector<2x32xf32> -> vector<2x32xf32>
    %160 = arith.addf %122, %157 : vector<2x32xf32>
    %cst_108 = arith.constant 5.000000e-01 : f32
    %161 = vector.broadcast %cst_108 : f32 to vector<2x32xf32>
    %162 = arith.mulf %161, %160 : vector<2x32xf32>
    %163 = math.tanh %162 : vector<2x32xf32>
    %cst_109 = arith.constant 5.000000e-01 : f32
    %164 = vector.broadcast %cst_109 : f32 to vector<2x32xf32>
    %165 = arith.mulf %164, %163 : vector<2x32xf32>
    %cst_110 = arith.constant 5.000000e-01 : f32
    %166 = vector.broadcast %cst_110 : f32 to vector<2x32xf32>
    %167 = arith.addf %165, %166 : vector<2x32xf32>
    %168 = arith.addf %125, %158 : vector<2x32xf32>
    %cst_111 = arith.constant 5.000000e-01 : f32
    %169 = vector.broadcast %cst_111 : f32 to vector<2x32xf32>
    %170 = arith.mulf %169, %168 : vector<2x32xf32>
    %171 = math.tanh %170 : vector<2x32xf32>
    %cst_112 = arith.constant 5.000000e-01 : f32
    %172 = vector.broadcast %cst_112 : f32 to vector<2x32xf32>
    %173 = arith.mulf %172, %171 : vector<2x32xf32>
    %cst_113 = arith.constant 5.000000e-01 : f32
    %174 = vector.broadcast %cst_113 : f32 to vector<2x32xf32>
    %175 = arith.addf %173, %174 : vector<2x32xf32>
    %176 = arith.addf %159, %22 : vector<2x32xf32>
    %177 = arith.mulf %167, %176 : vector<2x32xf32>
    %178 = arith.addf %128, %177 : vector<2x32xf32>
    %179 = math.tanh %178 : vector<2x32xf32>
    %cst_114 = arith.constant 1.000000e+00 : f32
    %180 = vector.broadcast %cst_114 : f32 to vector<2x32xf32>
    %181 = arith.subf %180, %175 : vector<2x32xf32>
    %182 = arith.mulf %181, %179 : vector<2x32xf32>
    %183 = arith.mulf %175, %101 : vector<2x32xf32>
    %184 = arith.addf %182, %183 : vector<2x32xf32>
    %185 = arith.index_cast %c1_i32 : i32 to index
    %c0_115 = arith.constant 0 : index
    %c0_116 = arith.constant 0 : index
    %186 = vector.load %arg6[%185, %c0_115, %c0_116] : memref<8x2x32xf32, #tpu.memory_space<vmem>>, vector<1x2x32xf32>
    %187 = vector.shape_cast %186 : vector<1x2x32xf32> to vector<2x32xf32>
    %188 = vector.shape_cast %156 : vector<2x32xf32> to vector<1x2x32xf32>
    tpu.vector_store %arg6[%185, %c0_115, %c0_116], %188 {strides = array<i32>} : memref<8x2x32xf32, #tpu.memory_space<vmem>>, vector<1x2x32xf32>,
    %189 = arith.index_cast %110 : i32 to index
    %c0_117 = arith.constant 0 : index
    %c0_118 = arith.constant 0 : index
    %190 = vector.load %arg7[%189, %c0_117, %c0_118] : memref<8x2x32xf32, #tpu.memory_space<vmem>>, vector<1x2x32xf32>
    %191 = vector.shape_cast %190 : vector<1x2x32xf32> to vector<2x32xf32>
    %192 = vector.shape_cast %184 : vector<2x32xf32> to vector<1x2x32xf32>
    tpu.vector_store %arg7[%189, %c0_117, %c0_118], %192 {strides = array<i32>} : memref<8x2x32xf32, #tpu.memory_space<vmem>>, vector<1x2x32xf32>,
    %c2_i32 = arith.constant 2 : i32
    %c7_i32_119 = arith.constant 7 : i32
    %193 = arith.subi %c7_i32_119, %c2_i32 : i32
    %c0_120 = arith.constant 0 : index
    %194 = arith.index_cast %c2_i32 : i32 to index
    %c0_121 = arith.constant 0 : index
    %c0_122 = arith.constant 0 : index
    %195 = vector.load %arg2[%c0_120, %194, %c0_121, %c0_122] : memref<3x8x2x32xf32, #tpu.memory_space<vmem>>, vector<1x1x2x32xf32>
    %196 = vector.shape_cast %195 : vector<1x1x2x32xf32> to vector<2x32xf32>
    %c1_123 = arith.constant 1 : index
    %197 = arith.index_cast %c2_i32 : i32 to index
    %c0_124 = arith.constant 0 : index
    %c0_125 = arith.constant 0 : index
    %198 = vector.load %arg2[%c1_123, %197, %c0_124, %c0_125] : memref<3x8x2x32xf32, #tpu.memory_space<vmem>>, vector<1x1x2x32xf32>
    %199 = vector.shape_cast %198 : vector<1x1x2x32xf32> to vector<2x32xf32>
    %c2_126 = arith.constant 2 : index
    %200 = arith.index_cast %c2_i32 : i32 to index
    %c0_127 = arith.constant 0 : index
    %c0_128 = arith.constant 0 : index
    %201 = vector.load %arg2[%c2_126, %200, %c0_127, %c0_128] : memref<3x8x2x32xf32, #tpu.memory_space<vmem>>, vector<1x1x2x32xf32>
    %202 = vector.shape_cast %201 : vector<1x1x2x32xf32> to vector<2x32xf32>
    %c0_129 = arith.constant 0 : index
    %203 = arith.index_cast %193 : i32 to index
    %c0_130 = arith.constant 0 : index
    %c0_131 = arith.constant 0 : index
    %204 = vector.load %arg3[%c0_129, %203, %c0_130, %c0_131] : memref<3x8x2x32xf32, #tpu.memory_space<vmem>>, vector<1x1x2x32xf32>
    %205 = vector.shape_cast %204 : vector<1x1x2x32xf32> to vector<2x32xf32>
    %c1_132 = arith.constant 1 : index
    %206 = arith.index_cast %193 : i32 to index
    %c0_133 = arith.constant 0 : index
    %c0_134 = arith.constant 0 : index
    %207 = vector.load %arg3[%c1_132, %206, %c0_133, %c0_134] : memref<3x8x2x32xf32, #tpu.memory_space<vmem>>, vector<1x1x2x32xf32>
    %208 = vector.shape_cast %207 : vector<1x1x2x32xf32> to vector<2x32xf32>
    %c2_135 = arith.constant 2 : index
    %209 = arith.index_cast %193 : i32 to index
    %c0_136 = arith.constant 0 : index
    %c0_137 = arith.constant 0 : index
    %210 = vector.load %arg3[%c2_135, %209, %c0_136, %c0_137] : memref<3x8x2x32xf32, #tpu.memory_space<vmem>>, vector<1x1x2x32xf32>
    %211 = vector.shape_cast %210 : vector<1x1x2x32xf32> to vector<2x32xf32>
    %cst_138 = arith.constant dense<0.000000e+00> : vector<2x32xf32>
    %212 = tpu.matmul %156, %4, %cst_138 {dimension_numbers = #tpu.dot_dimension_numbers<[1], [0], [0], [1], [0, 0, 1, 1], [], []>} : vector<2x32xf32>, vector<32x32xf32>, vector<2x32xf32> -> vector<2x32xf32>
    %cst_139 = arith.constant dense<0.000000e+00> : vector<2x32xf32>
    %213 = tpu.matmul %156, %6, %cst_139 {dimension_numbers = #tpu.dot_dimension_numbers<[1], [0], [0], [1], [0, 0, 1, 1], [], []>} : vector<2x32xf32>, vector<32x32xf32>, vector<2x32xf32> -> vector<2x32xf32>
    %cst_140 = arith.constant dense<0.000000e+00> : vector<2x32xf32>
    %214 = tpu.matmul %156, %8, %cst_140 {dimension_numbers = #tpu.dot_dimension_numbers<[1], [0], [0], [1], [0, 0, 1, 1], [], []>} : vector<2x32xf32>, vector<32x32xf32>, vector<2x32xf32> -> vector<2x32xf32>
    %215 = arith.addf %196, %212 : vector<2x32xf32>
    %cst_141 = arith.constant 5.000000e-01 : f32
    %216 = vector.broadcast %cst_141 : f32 to vector<2x32xf32>
    %217 = arith.mulf %216, %215 : vector<2x32xf32>
    %218 = math.tanh %217 : vector<2x32xf32>
    %cst_142 = arith.constant 5.000000e-01 : f32
    %219 = vector.broadcast %cst_142 : f32 to vector<2x32xf32>
    %220 = arith.mulf %219, %218 : vector<2x32xf32>
    %cst_143 = arith.constant 5.000000e-01 : f32
    %221 = vector.broadcast %cst_143 : f32 to vector<2x32xf32>
    %222 = arith.addf %220, %221 : vector<2x32xf32>
    %223 = arith.addf %199, %213 : vector<2x32xf32>
    %cst_144 = arith.constant 5.000000e-01 : f32
    %224 = vector.broadcast %cst_144 : f32 to vector<2x32xf32>
    %225 = arith.mulf %224, %223 : vector<2x32xf32>
    %226 = math.tanh %225 : vector<2x32xf32>
    %cst_145 = arith.constant 5.000000e-01 : f32
    %227 = vector.broadcast %cst_145 : f32 to vector<2x32xf32>
    %228 = arith.mulf %227, %226 : vector<2x32xf32>
    %cst_146 = arith.constant 5.000000e-01 : f32
    %229 = vector.broadcast %cst_146 : f32 to vector<2x32xf32>
    %230 = arith.addf %228, %229 : vector<2x32xf32>
    %231 = arith.addf %214, %18 : vector<2x32xf32>
    %232 = arith.mulf %222, %231 : vector<2x32xf32>
    %233 = arith.addf %202, %232 : vector<2x32xf32>
    %234 = math.tanh %233 : vector<2x32xf32>
    %cst_147 = arith.constant 1.000000e+00 : f32
    %235 = vector.broadcast %cst_147 : f32 to vector<2x32xf32>
    %236 = arith.subf %235, %230 : vector<2x32xf32>
    %237 = arith.mulf %236, %234 : vector<2x32xf32>
    %238 = arith.mulf %230, %156 : vector<2x32xf32>
    %239 = arith.addf %237, %238 : vector<2x32xf32>
    %cst_148 = arith.constant dense<0.000000e+00> : vector<2x32xf32>
    %240 = tpu.matmul %184, %10, %cst_148 {dimension_numbers = #tpu.dot_dimension_numbers<[1], [0], [0], [1], [0, 0, 1, 1], [], []>} : vector<2x32xf32>, vector<32x32xf32>, vector<2x32xf32> -> vector<2x32xf32>
    %cst_149 = arith.constant dense<0.000000e+00> : vector<2x32xf32>
    %241 = tpu.matmul %184, %12, %cst_149 {dimension_numbers = #tpu.dot_dimension_numbers<[1], [0], [0], [1], [0, 0, 1, 1], [], []>} : vector<2x32xf32>, vector<32x32xf32>, vector<2x32xf32> -> vector<2x32xf32>
    %cst_150 = arith.constant dense<0.000000e+00> : vector<2x32xf32>
    %242 = tpu.matmul %184, %14, %cst_150 {dimension_numbers = #tpu.dot_dimension_numbers<[1], [0], [0], [1], [0, 0, 1, 1], [], []>} : vector<2x32xf32>, vector<32x32xf32>, vector<2x32xf32> -> vector<2x32xf32>
    %243 = arith.addf %205, %240 : vector<2x32xf32>
    %cst_151 = arith.constant 5.000000e-01 : f32
    %244 = vector.broadcast %cst_151 : f32 to vector<2x32xf32>
    %245 = arith.mulf %244, %243 : vector<2x32xf32>
    %246 = math.tanh %245 : vector<2x32xf32>
    %cst_152 = arith.constant 5.000000e-01 : f32
    %247 = vector.broadcast %cst_152 : f32 to vector<2x32xf32>
    %248 = arith.mulf %247, %246 : vector<2x32xf32>
    %cst_153 = arith.constant 5.000000e-01 : f32
    %249 = vector.broadcast %cst_153 : f32 to vector<2x32xf32>
    %250 = arith.addf %248, %249 : vector<2x32xf32>
    %251 = arith.addf %208, %241 : vector<2x32xf32>
    %cst_154 = arith.constant 5.000000e-01 : f32
    %252 = vector.broadcast %cst_154 : f32 to vector<2x32xf32>
    %253 = arith.mulf %252, %251 : vector<2x32xf32>
    %254 = math.tanh %253 : vector<2x32xf32>
    %cst_155 = arith.constant 5.000000e-01 : f32
    %255 = vector.broadcast %cst_155 : f32 to vector<2x32xf32>
    %256 = arith.mulf %255, %254 : vector<2x32xf32>
    %cst_156 = arith.constant 5.000000e-01 : f32
    %257 = vector.broadcast %cst_156 : f32 to vector<2x32xf32>
    %258 = arith.addf %256, %257 : vector<2x32xf32>
    %259 = arith.addf %242, %22 : vector<2x32xf32>
    %260 = arith.mulf %250, %259 : vector<2x32xf32>
    %261 = arith.addf %211, %260 : vector<2x32xf32>
    %262 = math.tanh %261 : vector<2x32xf32>
    %cst_157 = arith.constant 1.000000e+00 : f32
    %263 = vector.broadcast %cst_157 : f32 to vector<2x32xf32>
    %264 = arith.subf %263, %258 : vector<2x32xf32>
    %265 = arith.mulf %264, %262 : vector<2x32xf32>
    %266 = arith.mulf %258, %184 : vector<2x32xf32>
    %267 = arith.addf %265, %266 : vector<2x32xf32>
    %268 = arith.index_cast %c2_i32 : i32 to index
    %c0_158 = arith.constant 0 : index
    %c0_159 = arith.constant 0 : index
    %269 = vector.load %arg6[%268, %c0_158, %c0_159] : memref<8x2x32xf32, #tpu.memory_space<vmem>>, vector<1x2x32xf32>
    %270 = vector.shape_cast %269 : vector<1x2x32xf32> to vector<2x32xf32>
    %271 = vector.shape_cast %239 : vector<2x32xf32> to vector<1x2x32xf32>
    tpu.vector_store %arg6[%268, %c0_158, %c0_159], %271 {strides = array<i32>} : memref<8x2x32xf32, #tpu.memory_space<vmem>>, vector<1x2x32xf32>,
    %272 = arith.index_cast %193 : i32 to index
    %c0_160 = arith.constant 0 : index
    %c0_161 = arith.constant 0 : index
    %273 = vector.load %arg7[%272, %c0_160, %c0_161] : memref<8x2x32xf32, #tpu.memory_space<vmem>>, vector<1x2x32xf32>
    %274 = vector.shape_cast %273 : vector<1x2x32xf32> to vector<2x32xf32>
    %275 = vector.shape_cast %267 : vector<2x32xf32> to vector<1x2x32xf32>
    tpu.vector_store %arg7[%272, %c0_160, %c0_161], %275 {strides = array<i32>} : memref<8x2x32xf32, #tpu.memory_space<vmem>>, vector<1x2x32xf32>,
    %c3_i32 = arith.constant 3 : i32
    %c7_i32_162 = arith.constant 7 : i32
    %276 = arith.subi %c7_i32_162, %c3_i32 : i32
    %c0_163 = arith.constant 0 : index
    %277 = arith.index_cast %c3_i32 : i32 to index
    %c0_164 = arith.constant 0 : index
    %c0_165 = arith.constant 0 : index
    %278 = vector.load %arg2[%c0_163, %277, %c0_164, %c0_165] : memref<3x8x2x32xf32, #tpu.memory_space<vmem>>, vector<1x1x2x32xf32>
    %279 = vector.shape_cast %278 : vector<1x1x2x32xf32> to vector<2x32xf32>
    %c1_166 = arith.constant 1 : index
    %280 = arith.index_cast %c3_i32 : i32 to index
    %c0_167 = arith.constant 0 : index
    %c0_168 = arith.constant 0 : index
    %281 = vector.load %arg2[%c1_166, %280, %c0_167, %c0_168] : memref<3x8x2x32xf32, #tpu.memory_space<vmem>>, vector<1x1x2x32xf32>
    %282 = vector.shape_cast %281 : vector<1x1x2x32xf32> to vector<2x32xf32>
    %c2_169 = arith.constant 2 : index
    %283 = arith.index_cast %c3_i32 : i32 to index
    %c0_170 = arith.constant 0 : index
    %c0_171 = arith.constant 0 : index
    %284 = vector.load %arg2[%c2_169, %283, %c0_170, %c0_171] : memref<3x8x2x32xf32, #tpu.memory_space<vmem>>, vector<1x1x2x32xf32>
    %285 = vector.shape_cast %284 : vector<1x1x2x32xf32> to vector<2x32xf32>
    %c0_172 = arith.constant 0 : index
    %286 = arith.index_cast %276 : i32 to index
    %c0_173 = arith.constant 0 : index
    %c0_174 = arith.constant 0 : index
    %287 = vector.load %arg3[%c0_172, %286, %c0_173, %c0_174] : memref<3x8x2x32xf32, #tpu.memory_space<vmem>>, vector<1x1x2x32xf32>
    %288 = vector.shape_cast %287 : vector<1x1x2x32xf32> to vector<2x32xf32>
    %c1_175 = arith.constant 1 : index
    %289 = arith.index_cast %276 : i32 to index
    %c0_176 = arith.constant 0 : index
    %c0_177 = arith.constant 0 : index
    %290 = vector.load %arg3[%c1_175, %289, %c0_176, %c0_177] : memref<3x8x2x32xf32, #tpu.memory_space<vmem>>, vector<1x1x2x32xf32>
    %291 = vector.shape_cast %290 : vector<1x1x2x32xf32> to vector<2x32xf32>
    %c2_178 = arith.constant 2 : index
    %292 = arith.index_cast %276 : i32 to index
    %c0_179 = arith.constant 0 : index
    %c0_180 = arith.constant 0 : index
    %293 = vector.load %arg3[%c2_178, %292, %c0_179, %c0_180] : memref<3x8x2x32xf32, #tpu.memory_space<vmem>>, vector<1x1x2x32xf32>
    %294 = vector.shape_cast %293 : vector<1x1x2x32xf32> to vector<2x32xf32>
    %cst_181 = arith.constant dense<0.000000e+00> : vector<2x32xf32>
    %295 = tpu.matmul %239, %4, %cst_181 {dimension_numbers = #tpu.dot_dimension_numbers<[1], [0], [0], [1], [0, 0, 1, 1], [], []>} : vector<2x32xf32>, vector<32x32xf32>, vector<2x32xf32> -> vector<2x32xf32>
    %cst_182 = arith.constant dense<0.000000e+00> : vector<2x32xf32>
    %296 = tpu.matmul %239, %6, %cst_182 {dimension_numbers = #tpu.dot_dimension_numbers<[1], [0], [0], [1], [0, 0, 1, 1], [], []>} : vector<2x32xf32>, vector<32x32xf32>, vector<2x32xf32> -> vector<2x32xf32>
    %cst_183 = arith.constant dense<0.000000e+00> : vector<2x32xf32>
    %297 = tpu.matmul %239, %8, %cst_183 {dimension_numbers = #tpu.dot_dimension_numbers<[1], [0], [0], [1], [0, 0, 1, 1], [], []>} : vector<2x32xf32>, vector<32x32xf32>, vector<2x32xf32> -> vector<2x32xf32>
    %298 = arith.addf %279, %295 : vector<2x32xf32>
    %cst_184 = arith.constant 5.000000e-01 : f32
    %299 = vector.broadcast %cst_184 : f32 to vector<2x32xf32>
    %300 = arith.mulf %299, %298 : vector<2x32xf32>
    %301 = math.tanh %300 : vector<2x32xf32>
    %cst_185 = arith.constant 5.000000e-01 : f32
    %302 = vector.broadcast %cst_185 : f32 to vector<2x32xf32>
    %303 = arith.mulf %302, %301 : vector<2x32xf32>
    %cst_186 = arith.constant 5.000000e-01 : f32
    %304 = vector.broadcast %cst_186 : f32 to vector<2x32xf32>
    %305 = arith.addf %303, %304 : vector<2x32xf32>
    %306 = arith.addf %282, %296 : vector<2x32xf32>
    %cst_187 = arith.constant 5.000000e-01 : f32
    %307 = vector.broadcast %cst_187 : f32 to vector<2x32xf32>
    %308 = arith.mulf %307, %306 : vector<2x32xf32>
    %309 = math.tanh %308 : vector<2x32xf32>
    %cst_188 = arith.constant 5.000000e-01 : f32
    %310 = vector.broadcast %cst_188 : f32 to vector<2x32xf32>
    %311 = arith.mulf %310, %309 : vector<2x32xf32>
    %cst_189 = arith.constant 5.000000e-01 : f32
    %312 = vector.broadcast %cst_189 : f32 to vector<2x32xf32>
    %313 = arith.addf %311, %312 : vector<2x32xf32>
    %314 = arith.addf %297, %18 : vector<2x32xf32>
    %315 = arith.mulf %305, %314 : vector<2x32xf32>
    %316 = arith.addf %285, %315 : vector<2x32xf32>
    %317 = math.tanh %316 : vector<2x32xf32>
    %cst_190 = arith.constant 1.000000e+00 : f32
    %318 = vector.broadcast %cst_190 : f32 to vector<2x32xf32>
    %319 = arith.subf %318, %313 : vector<2x32xf32>
    %320 = arith.mulf %319, %317 : vector<2x32xf32>
    %321 = arith.mulf %313, %239 : vector<2x32xf32>
    %322 = arith.addf %320, %321 : vector<2x32xf32>
    %cst_191 = arith.constant dense<0.000000e+00> : vector<2x32xf32>
    %323 = tpu.matmul %267, %10, %cst_191 {dimension_numbers = #tpu.dot_dimension_numbers<[1], [0], [0], [1], [0, 0, 1, 1], [], []>} : vector<2x32xf32>, vector<32x32xf32>, vector<2x32xf32> -> vector<2x32xf32>
    %cst_192 = arith.constant dense<0.000000e+00> : vector<2x32xf32>
    %324 = tpu.matmul %267, %12, %cst_192 {dimension_numbers = #tpu.dot_dimension_numbers<[1], [0], [0], [1], [0, 0, 1, 1], [], []>} : vector<2x32xf32>, vector<32x32xf32>, vector<2x32xf32> -> vector<2x32xf32>
    %cst_193 = arith.constant dense<0.000000e+00> : vector<2x32xf32>
    %325 = tpu.matmul %267, %14, %cst_193 {dimension_numbers = #tpu.dot_dimension_numbers<[1], [0], [0], [1], [0, 0, 1, 1], [], []>} : vector<2x32xf32>, vector<32x32xf32>, vector<2x32xf32> -> vector<2x32xf32>
    %326 = arith.addf %288, %323 : vector<2x32xf32>
    %cst_194 = arith.constant 5.000000e-01 : f32
    %327 = vector.broadcast %cst_194 : f32 to vector<2x32xf32>
    %328 = arith.mulf %327, %326 : vector<2x32xf32>
    %329 = math.tanh %328 : vector<2x32xf32>
    %cst_195 = arith.constant 5.000000e-01 : f32
    %330 = vector.broadcast %cst_195 : f32 to vector<2x32xf32>
    %331 = arith.mulf %330, %329 : vector<2x32xf32>
    %cst_196 = arith.constant 5.000000e-01 : f32
    %332 = vector.broadcast %cst_196 : f32 to vector<2x32xf32>
    %333 = arith.addf %331, %332 : vector<2x32xf32>
    %334 = arith.addf %291, %324 : vector<2x32xf32>
    %cst_197 = arith.constant 5.000000e-01 : f32
    %335 = vector.broadcast %cst_197 : f32 to vector<2x32xf32>
    %336 = arith.mulf %335, %334 : vector<2x32xf32>
    %337 = math.tanh %336 : vector<2x32xf32>
    %cst_198 = arith.constant 5.000000e-01 : f32
    %338 = vector.broadcast %cst_198 : f32 to vector<2x32xf32>
    %339 = arith.mulf %338, %337 : vector<2x32xf32>
    %cst_199 = arith.constant 5.000000e-01 : f32
    %340 = vector.broadcast %cst_199 : f32 to vector<2x32xf32>
    %341 = arith.addf %339, %340 : vector<2x32xf32>
    %342 = arith.addf %325, %22 : vector<2x32xf32>
    %343 = arith.mulf %333, %342 : vector<2x32xf32>
    %344 = arith.addf %294, %343 : vector<2x32xf32>
    %345 = math.tanh %344 : vector<2x32xf32>
    %cst_200 = arith.constant 1.000000e+00 : f32
    %346 = vector.broadcast %cst_200 : f32 to vector<2x32xf32>
    %347 = arith.subf %346, %341 : vector<2x32xf32>
    %348 = arith.mulf %347, %345 : vector<2x32xf32>
    %349 = arith.mulf %341, %267 : vector<2x32xf32>
    %350 = arith.addf %348, %349 : vector<2x32xf32>
    %351 = arith.index_cast %c3_i32 : i32 to index
    %c0_201 = arith.constant 0 : index
    %c0_202 = arith.constant 0 : index
    %352 = vector.load %arg6[%351, %c0_201, %c0_202] : memref<8x2x32xf32, #tpu.memory_space<vmem>>, vector<1x2x32xf32>
    %353 = vector.shape_cast %352 : vector<1x2x32xf32> to vector<2x32xf32>
    %354 = vector.shape_cast %322 : vector<2x32xf32> to vector<1x2x32xf32>
    tpu.vector_store %arg6[%351, %c0_201, %c0_202], %354 {strides = array<i32>} : memref<8x2x32xf32, #tpu.memory_space<vmem>>, vector<1x2x32xf32>,
    %355 = arith.index_cast %276 : i32 to index
    %c0_203 = arith.constant 0 : index
    %c0_204 = arith.constant 0 : index
    %356 = vector.load %arg7[%355, %c0_203, %c0_204] : memref<8x2x32xf32, #tpu.memory_space<vmem>>, vector<1x2x32xf32>
    %357 = vector.shape_cast %356 : vector<1x2x32xf32> to vector<2x32xf32>
    %358 = vector.shape_cast %350 : vector<2x32xf32> to vector<1x2x32xf32>
    tpu.vector_store %arg7[%355, %c0_203, %c0_204], %358 {strides = array<i32>} : memref<8x2x32xf32, #tpu.memory_space<vmem>>, vector<1x2x32xf32>,
    %c4_i32 = arith.constant 4 : i32
    %c7_i32_205 = arith.constant 7 : i32
    %359 = arith.subi %c7_i32_205, %c4_i32 : i32
    %c0_206 = arith.constant 0 : index
    %360 = arith.index_cast %c4_i32 : i32 to index
    %c0_207 = arith.constant 0 : index
    %c0_208 = arith.constant 0 : index
    %361 = vector.load %arg2[%c0_206, %360, %c0_207, %c0_208] : memref<3x8x2x32xf32, #tpu.memory_space<vmem>>, vector<1x1x2x32xf32>
    %362 = vector.shape_cast %361 : vector<1x1x2x32xf32> to vector<2x32xf32>
    %c1_209 = arith.constant 1 : index
    %363 = arith.index_cast %c4_i32 : i32 to index
    %c0_210 = arith.constant 0 : index
    %c0_211 = arith.constant 0 : index
    %364 = vector.load %arg2[%c1_209, %363, %c0_210, %c0_211] : memref<3x8x2x32xf32, #tpu.memory_space<vmem>>, vector<1x1x2x32xf32>
    %365 = vector.shape_cast %364 : vector<1x1x2x32xf32> to vector<2x32xf32>
    %c2_212 = arith.constant 2 : index
    %366 = arith.index_cast %c4_i32 : i32 to index
    %c0_213 = arith.constant 0 : index
    %c0_214 = arith.constant 0 : index
    %367 = vector.load %arg2[%c2_212, %366, %c0_213, %c0_214] : memref<3x8x2x32xf32, #tpu.memory_space<vmem>>, vector<1x1x2x32xf32>
    %368 = vector.shape_cast %367 : vector<1x1x2x32xf32> to vector<2x32xf32>
    %c0_215 = arith.constant 0 : index
    %369 = arith.index_cast %359 : i32 to index
    %c0_216 = arith.constant 0 : index
    %c0_217 = arith.constant 0 : index
    %370 = vector.load %arg3[%c0_215, %369, %c0_216, %c0_217] : memref<3x8x2x32xf32, #tpu.memory_space<vmem>>, vector<1x1x2x32xf32>
    %371 = vector.shape_cast %370 : vector<1x1x2x32xf32> to vector<2x32xf32>
    %c1_218 = arith.constant 1 : index
    %372 = arith.index_cast %359 : i32 to index
    %c0_219 = arith.constant 0 : index
    %c0_220 = arith.constant 0 : index
    %373 = vector.load %arg3[%c1_218, %372, %c0_219, %c0_220] : memref<3x8x2x32xf32, #tpu.memory_space<vmem>>, vector<1x1x2x32xf32>
    %374 = vector.shape_cast %373 : vector<1x1x2x32xf32> to vector<2x32xf32>
    %c2_221 = arith.constant 2 : index
    %375 = arith.index_cast %359 : i32 to index
    %c0_222 = arith.constant 0 : index
    %c0_223 = arith.constant 0 : index
    %376 = vector.load %arg3[%c2_221, %375, %c0_222, %c0_223] : memref<3x8x2x32xf32, #tpu.memory_space<vmem>>, vector<1x1x2x32xf32>
    %377 = vector.shape_cast %376 : vector<1x1x2x32xf32> to vector<2x32xf32>
    %cst_224 = arith.constant dense<0.000000e+00> : vector<2x32xf32>
    %378 = tpu.matmul %322, %4, %cst_224 {dimension_numbers = #tpu.dot_dimension_numbers<[1], [0], [0], [1], [0, 0, 1, 1], [], []>} : vector<2x32xf32>, vector<32x32xf32>, vector<2x32xf32> -> vector<2x32xf32>
    %cst_225 = arith.constant dense<0.000000e+00> : vector<2x32xf32>
    %379 = tpu.matmul %322, %6, %cst_225 {dimension_numbers = #tpu.dot_dimension_numbers<[1], [0], [0], [1], [0, 0, 1, 1], [], []>} : vector<2x32xf32>, vector<32x32xf32>, vector<2x32xf32> -> vector<2x32xf32>
    %cst_226 = arith.constant dense<0.000000e+00> : vector<2x32xf32>
    %380 = tpu.matmul %322, %8, %cst_226 {dimension_numbers = #tpu.dot_dimension_numbers<[1], [0], [0], [1], [0, 0, 1, 1], [], []>} : vector<2x32xf32>, vector<32x32xf32>, vector<2x32xf32> -> vector<2x32xf32>
    %381 = arith.addf %362, %378 : vector<2x32xf32>
    %cst_227 = arith.constant 5.000000e-01 : f32
    %382 = vector.broadcast %cst_227 : f32 to vector<2x32xf32>
    %383 = arith.mulf %382, %381 : vector<2x32xf32>
    %384 = math.tanh %383 : vector<2x32xf32>
    %cst_228 = arith.constant 5.000000e-01 : f32
    %385 = vector.broadcast %cst_228 : f32 to vector<2x32xf32>
    %386 = arith.mulf %385, %384 : vector<2x32xf32>
    %cst_229 = arith.constant 5.000000e-01 : f32
    %387 = vector.broadcast %cst_229 : f32 to vector<2x32xf32>
    %388 = arith.addf %386, %387 : vector<2x32xf32>
    %389 = arith.addf %365, %379 : vector<2x32xf32>
    %cst_230 = arith.constant 5.000000e-01 : f32
    %390 = vector.broadcast %cst_230 : f32 to vector<2x32xf32>
    %391 = arith.mulf %390, %389 : vector<2x32xf32>
    %392 = math.tanh %391 : vector<2x32xf32>
    %cst_231 = arith.constant 5.000000e-01 : f32
    %393 = vector.broadcast %cst_231 : f32 to vector<2x32xf32>
    %394 = arith.mulf %393, %392 : vector<2x32xf32>
    %cst_232 = arith.constant 5.000000e-01 : f32
    %395 = vector.broadcast %cst_232 : f32 to vector<2x32xf32>
    %396 = arith.addf %394, %395 : vector<2x32xf32>
    %397 = arith.addf %380, %18 : vector<2x32xf32>
    %398 = arith.mulf %388, %397 : vector<2x32xf32>
    %399 = arith.addf %368, %398 : vector<2x32xf32>
    %400 = math.tanh %399 : vector<2x32xf32>
    %cst_233 = arith.constant 1.000000e+00 : f32
    %401 = vector.broadcast %cst_233 : f32 to vector<2x32xf32>
    %402 = arith.subf %401, %396 : vector<2x32xf32>
    %403 = arith.mulf %402, %400 : vector<2x32xf32>
    %404 = arith.mulf %396, %322 : vector<2x32xf32>
    %405 = arith.addf %403, %404 : vector<2x32xf32>
    %cst_234 = arith.constant dense<0.000000e+00> : vector<2x32xf32>
    %406 = tpu.matmul %350, %10, %cst_234 {dimension_numbers = #tpu.dot_dimension_numbers<[1], [0], [0], [1], [0, 0, 1, 1], [], []>} : vector<2x32xf32>, vector<32x32xf32>, vector<2x32xf32> -> vector<2x32xf32>
    %cst_235 = arith.constant dense<0.000000e+00> : vector<2x32xf32>
    %407 = tpu.matmul %350, %12, %cst_235 {dimension_numbers = #tpu.dot_dimension_numbers<[1], [0], [0], [1], [0, 0, 1, 1], [], []>} : vector<2x32xf32>, vector<32x32xf32>, vector<2x32xf32> -> vector<2x32xf32>
    %cst_236 = arith.constant dense<0.000000e+00> : vector<2x32xf32>
    %408 = tpu.matmul %350, %14, %cst_236 {dimension_numbers = #tpu.dot_dimension_numbers<[1], [0], [0], [1], [0, 0, 1, 1], [], []>} : vector<2x32xf32>, vector<32x32xf32>, vector<2x32xf32> -> vector<2x32xf32>
    %409 = arith.addf %371, %406 : vector<2x32xf32>
    %cst_237 = arith.constant 5.000000e-01 : f32
    %410 = vector.broadcast %cst_237 : f32 to vector<2x32xf32>
    %411 = arith.mulf %410, %409 : vector<2x32xf32>
    %412 = math.tanh %411 : vector<2x32xf32>
    %cst_238 = arith.constant 5.000000e-01 : f32
    %413 = vector.broadcast %cst_238 : f32 to vector<2x32xf32>
    %414 = arith.mulf %413, %412 : vector<2x32xf32>
    %cst_239 = arith.constant 5.000000e-01 : f32
    %415 = vector.broadcast %cst_239 : f32 to vector<2x32xf32>
    %416 = arith.addf %414, %415 : vector<2x32xf32>
    %417 = arith.addf %374, %407 : vector<2x32xf32>
    %cst_240 = arith.constant 5.000000e-01 : f32
    %418 = vector.broadcast %cst_240 : f32 to vector<2x32xf32>
    %419 = arith.mulf %418, %417 : vector<2x32xf32>
    %420 = math.tanh %419 : vector<2x32xf32>
    %cst_241 = arith.constant 5.000000e-01 : f32
    %421 = vector.broadcast %cst_241 : f32 to vector<2x32xf32>
    %422 = arith.mulf %421, %420 : vector<2x32xf32>
    %cst_242 = arith.constant 5.000000e-01 : f32
    %423 = vector.broadcast %cst_242 : f32 to vector<2x32xf32>
    %424 = arith.addf %422, %423 : vector<2x32xf32>
    %425 = arith.addf %408, %22 : vector<2x32xf32>
    %426 = arith.mulf %416, %425 : vector<2x32xf32>
    %427 = arith.addf %377, %426 : vector<2x32xf32>
    %428 = math.tanh %427 : vector<2x32xf32>
    %cst_243 = arith.constant 1.000000e+00 : f32
    %429 = vector.broadcast %cst_243 : f32 to vector<2x32xf32>
    %430 = arith.subf %429, %424 : vector<2x32xf32>
    %431 = arith.mulf %430, %428 : vector<2x32xf32>
    %432 = arith.mulf %424, %350 : vector<2x32xf32>
    %433 = arith.addf %431, %432 : vector<2x32xf32>
    %434 = arith.index_cast %c4_i32 : i32 to index
    %c0_244 = arith.constant 0 : index
    %c0_245 = arith.constant 0 : index
    %435 = vector.load %arg6[%434, %c0_244, %c0_245] : memref<8x2x32xf32, #tpu.memory_space<vmem>>, vector<1x2x32xf32>
    %436 = vector.shape_cast %435 : vector<1x2x32xf32> to vector<2x32xf32>
    %437 = vector.shape_cast %405 : vector<2x32xf32> to vector<1x2x32xf32>
    tpu.vector_store %arg6[%434, %c0_244, %c0_245], %437 {strides = array<i32>} : memref<8x2x32xf32, #tpu.memory_space<vmem>>, vector<1x2x32xf32>,
    %438 = arith.index_cast %359 : i32 to index
    %c0_246 = arith.constant 0 : index
    %c0_247 = arith.constant 0 : index
    %439 = vector.load %arg7[%438, %c0_246, %c0_247] : memref<8x2x32xf32, #tpu.memory_space<vmem>>, vector<1x2x32xf32>
    %440 = vector.shape_cast %439 : vector<1x2x32xf32> to vector<2x32xf32>
    %441 = vector.shape_cast %433 : vector<2x32xf32> to vector<1x2x32xf32>
    tpu.vector_store %arg7[%438, %c0_246, %c0_247], %441 {strides = array<i32>} : memref<8x2x32xf32, #tpu.memory_space<vmem>>, vector<1x2x32xf32>,
    %c5_i32 = arith.constant 5 : i32
    %c7_i32_248 = arith.constant 7 : i32
    %442 = arith.subi %c7_i32_248, %c5_i32 : i32
    %c0_249 = arith.constant 0 : index
    %443 = arith.index_cast %c5_i32 : i32 to index
    %c0_250 = arith.constant 0 : index
    %c0_251 = arith.constant 0 : index
    %444 = vector.load %arg2[%c0_249, %443, %c0_250, %c0_251] : memref<3x8x2x32xf32, #tpu.memory_space<vmem>>, vector<1x1x2x32xf32>
    %445 = vector.shape_cast %444 : vector<1x1x2x32xf32> to vector<2x32xf32>
    %c1_252 = arith.constant 1 : index
    %446 = arith.index_cast %c5_i32 : i32 to index
    %c0_253 = arith.constant 0 : index
    %c0_254 = arith.constant 0 : index
    %447 = vector.load %arg2[%c1_252, %446, %c0_253, %c0_254] : memref<3x8x2x32xf32, #tpu.memory_space<vmem>>, vector<1x1x2x32xf32>
    %448 = vector.shape_cast %447 : vector<1x1x2x32xf32> to vector<2x32xf32>
    %c2_255 = arith.constant 2 : index
    %449 = arith.index_cast %c5_i32 : i32 to index
    %c0_256 = arith.constant 0 : index
    %c0_257 = arith.constant 0 : index
    %450 = vector.load %arg2[%c2_255, %449, %c0_256, %c0_257] : memref<3x8x2x32xf32, #tpu.memory_space<vmem>>, vector<1x1x2x32xf32>
    %451 = vector.shape_cast %450 : vector<1x1x2x32xf32> to vector<2x32xf32>
    %c0_258 = arith.constant 0 : index
    %452 = arith.index_cast %442 : i32 to index
    %c0_259 = arith.constant 0 : index
    %c0_260 = arith.constant 0 : index
    %453 = vector.load %arg3[%c0_258, %452, %c0_259, %c0_260] : memref<3x8x2x32xf32, #tpu.memory_space<vmem>>, vector<1x1x2x32xf32>
    %454 = vector.shape_cast %453 : vector<1x1x2x32xf32> to vector<2x32xf32>
    %c1_261 = arith.constant 1 : index
    %455 = arith.index_cast %442 : i32 to index
    %c0_262 = arith.constant 0 : index
    %c0_263 = arith.constant 0 : index
    %456 = vector.load %arg3[%c1_261, %455, %c0_262, %c0_263] : memref<3x8x2x32xf32, #tpu.memory_space<vmem>>, vector<1x1x2x32xf32>
    %457 = vector.shape_cast %456 : vector<1x1x2x32xf32> to vector<2x32xf32>
    %c2_264 = arith.constant 2 : index
    %458 = arith.index_cast %442 : i32 to index
    %c0_265 = arith.constant 0 : index
    %c0_266 = arith.constant 0 : index
    %459 = vector.load %arg3[%c2_264, %458, %c0_265, %c0_266] : memref<3x8x2x32xf32, #tpu.memory_space<vmem>>, vector<1x1x2x32xf32>
    %460 = vector.shape_cast %459 : vector<1x1x2x32xf32> to vector<2x32xf32>
    %cst_267 = arith.constant dense<0.000000e+00> : vector<2x32xf32>
    %461 = tpu.matmul %405, %4, %cst_267 {dimension_numbers = #tpu.dot_dimension_numbers<[1], [0], [0], [1], [0, 0, 1, 1], [], []>} : vector<2x32xf32>, vector<32x32xf32>, vector<2x32xf32> -> vector<2x32xf32>
    %cst_268 = arith.constant dense<0.000000e+00> : vector<2x32xf32>
    %462 = tpu.matmul %405, %6, %cst_268 {dimension_numbers = #tpu.dot_dimension_numbers<[1], [0], [0], [1], [0, 0, 1, 1], [], []>} : vector<2x32xf32>, vector<32x32xf32>, vector<2x32xf32> -> vector<2x32xf32>
    %cst_269 = arith.constant dense<0.000000e+00> : vector<2x32xf32>
    %463 = tpu.matmul %405, %8, %cst_269 {dimension_numbers = #tpu.dot_dimension_numbers<[1], [0], [0], [1], [0, 0, 1, 1], [], []>} : vector<2x32xf32>, vector<32x32xf32>, vector<2x32xf32> -> vector<2x32xf32>
    %464 = arith.addf %445, %461 : vector<2x32xf32>
    %cst_270 = arith.constant 5.000000e-01 : f32
    %465 = vector.broadcast %cst_270 : f32 to vector<2x32xf32>
    %466 = arith.mulf %465, %464 : vector<2x32xf32>
    %467 = math.tanh %466 : vector<2x32xf32>
    %cst_271 = arith.constant 5.000000e-01 : f32
    %468 = vector.broadcast %cst_271 : f32 to vector<2x32xf32>
    %469 = arith.mulf %468, %467 : vector<2x32xf32>
    %cst_272 = arith.constant 5.000000e-01 : f32
    %470 = vector.broadcast %cst_272 : f32 to vector<2x32xf32>
    %471 = arith.addf %469, %470 : vector<2x32xf32>
    %472 = arith.addf %448, %462 : vector<2x32xf32>
    %cst_273 = arith.constant 5.000000e-01 : f32
    %473 = vector.broadcast %cst_273 : f32 to vector<2x32xf32>
    %474 = arith.mulf %473, %472 : vector<2x32xf32>
    %475 = math.tanh %474 : vector<2x32xf32>
    %cst_274 = arith.constant 5.000000e-01 : f32
    %476 = vector.broadcast %cst_274 : f32 to vector<2x32xf32>
    %477 = arith.mulf %476, %475 : vector<2x32xf32>
    %cst_275 = arith.constant 5.000000e-01 : f32
    %478 = vector.broadcast %cst_275 : f32 to vector<2x32xf32>
    %479 = arith.addf %477, %478 : vector<2x32xf32>
    %480 = arith.addf %463, %18 : vector<2x32xf32>
    %481 = arith.mulf %471, %480 : vector<2x32xf32>
    %482 = arith.addf %451, %481 : vector<2x32xf32>
    %483 = math.tanh %482 : vector<2x32xf32>
    %cst_276 = arith.constant 1.000000e+00 : f32
    %484 = vector.broadcast %cst_276 : f32 to vector<2x32xf32>
    %485 = arith.subf %484, %479 : vector<2x32xf32>
    %486 = arith.mulf %485, %483 : vector<2x32xf32>
    %487 = arith.mulf %479, %405 : vector<2x32xf32>
    %488 = arith.addf %486, %487 : vector<2x32xf32>
    %cst_277 = arith.constant dense<0.000000e+00> : vector<2x32xf32>
    %489 = tpu.matmul %433, %10, %cst_277 {dimension_numbers = #tpu.dot_dimension_numbers<[1], [0], [0], [1], [0, 0, 1, 1], [], []>} : vector<2x32xf32>, vector<32x32xf32>, vector<2x32xf32> -> vector<2x32xf32>
    %cst_278 = arith.constant dense<0.000000e+00> : vector<2x32xf32>
    %490 = tpu.matmul %433, %12, %cst_278 {dimension_numbers = #tpu.dot_dimension_numbers<[1], [0], [0], [1], [0, 0, 1, 1], [], []>} : vector<2x32xf32>, vector<32x32xf32>, vector<2x32xf32> -> vector<2x32xf32>
    %cst_279 = arith.constant dense<0.000000e+00> : vector<2x32xf32>
    %491 = tpu.matmul %433, %14, %cst_279 {dimension_numbers = #tpu.dot_dimension_numbers<[1], [0], [0], [1], [0, 0, 1, 1], [], []>} : vector<2x32xf32>, vector<32x32xf32>, vector<2x32xf32> -> vector<2x32xf32>
    %492 = arith.addf %454, %489 : vector<2x32xf32>
    %cst_280 = arith.constant 5.000000e-01 : f32
    %493 = vector.broadcast %cst_280 : f32 to vector<2x32xf32>
    %494 = arith.mulf %493, %492 : vector<2x32xf32>
    %495 = math.tanh %494 : vector<2x32xf32>
    %cst_281 = arith.constant 5.000000e-01 : f32
    %496 = vector.broadcast %cst_281 : f32 to vector<2x32xf32>
    %497 = arith.mulf %496, %495 : vector<2x32xf32>
    %cst_282 = arith.constant 5.000000e-01 : f32
    %498 = vector.broadcast %cst_282 : f32 to vector<2x32xf32>
    %499 = arith.addf %497, %498 : vector<2x32xf32>
    %500 = arith.addf %457, %490 : vector<2x32xf32>
    %cst_283 = arith.constant 5.000000e-01 : f32
    %501 = vector.broadcast %cst_283 : f32 to vector<2x32xf32>
    %502 = arith.mulf %501, %500 : vector<2x32xf32>
    %503 = math.tanh %502 : vector<2x32xf32>
    %cst_284 = arith.constant 5.000000e-01 : f32
    %504 = vector.broadcast %cst_284 : f32 to vector<2x32xf32>
    %505 = arith.mulf %504, %503 : vector<2x32xf32>
    %cst_285 = arith.constant 5.000000e-01 : f32
    %506 = vector.broadcast %cst_285 : f32 to vector<2x32xf32>
    %507 = arith.addf %505, %506 : vector<2x32xf32>
    %508 = arith.addf %491, %22 : vector<2x32xf32>
    %509 = arith.mulf %499, %508 : vector<2x32xf32>
    %510 = arith.addf %460, %509 : vector<2x32xf32>
    %511 = math.tanh %510 : vector<2x32xf32>
    %cst_286 = arith.constant 1.000000e+00 : f32
    %512 = vector.broadcast %cst_286 : f32 to vector<2x32xf32>
    %513 = arith.subf %512, %507 : vector<2x32xf32>
    %514 = arith.mulf %513, %511 : vector<2x32xf32>
    %515 = arith.mulf %507, %433 : vector<2x32xf32>
    %516 = arith.addf %514, %515 : vector<2x32xf32>
    %517 = arith.index_cast %c5_i32 : i32 to index
    %c0_287 = arith.constant 0 : index
    %c0_288 = arith.constant 0 : index
    %518 = vector.load %arg6[%517, %c0_287, %c0_288] : memref<8x2x32xf32, #tpu.memory_space<vmem>>, vector<1x2x32xf32>
    %519 = vector.shape_cast %518 : vector<1x2x32xf32> to vector<2x32xf32>
    %520 = vector.shape_cast %488 : vector<2x32xf32> to vector<1x2x32xf32>
    tpu.vector_store %arg6[%517, %c0_287, %c0_288], %520 {strides = array<i32>} : memref<8x2x32xf32, #tpu.memory_space<vmem>>, vector<1x2x32xf32>,
    %521 = arith.index_cast %442 : i32 to index
    %c0_289 = arith.constant 0 : index
    %c0_290 = arith.constant 0 : index
    %522 = vector.load %arg7[%521, %c0_289, %c0_290] : memref<8x2x32xf32, #tpu.memory_space<vmem>>, vector<1x2x32xf32>
    %523 = vector.shape_cast %522 : vector<1x2x32xf32> to vector<2x32xf32>
    %524 = vector.shape_cast %516 : vector<2x32xf32> to vector<1x2x32xf32>
    tpu.vector_store %arg7[%521, %c0_289, %c0_290], %524 {strides = array<i32>} : memref<8x2x32xf32, #tpu.memory_space<vmem>>, vector<1x2x32xf32>,
    %c6_i32 = arith.constant 6 : i32
    %c7_i32_291 = arith.constant 7 : i32
    %525 = arith.subi %c7_i32_291, %c6_i32 : i32
    %c0_292 = arith.constant 0 : index
    %526 = arith.index_cast %c6_i32 : i32 to index
    %c0_293 = arith.constant 0 : index
    %c0_294 = arith.constant 0 : index
    %527 = vector.load %arg2[%c0_292, %526, %c0_293, %c0_294] : memref<3x8x2x32xf32, #tpu.memory_space<vmem>>, vector<1x1x2x32xf32>
    %528 = vector.shape_cast %527 : vector<1x1x2x32xf32> to vector<2x32xf32>
    %c1_295 = arith.constant 1 : index
    %529 = arith.index_cast %c6_i32 : i32 to index
    %c0_296 = arith.constant 0 : index
    %c0_297 = arith.constant 0 : index
    %530 = vector.load %arg2[%c1_295, %529, %c0_296, %c0_297] : memref<3x8x2x32xf32, #tpu.memory_space<vmem>>, vector<1x1x2x32xf32>
    %531 = vector.shape_cast %530 : vector<1x1x2x32xf32> to vector<2x32xf32>
    %c2_298 = arith.constant 2 : index
    %532 = arith.index_cast %c6_i32 : i32 to index
    %c0_299 = arith.constant 0 : index
    %c0_300 = arith.constant 0 : index
    %533 = vector.load %arg2[%c2_298, %532, %c0_299, %c0_300] : memref<3x8x2x32xf32, #tpu.memory_space<vmem>>, vector<1x1x2x32xf32>
    %534 = vector.shape_cast %533 : vector<1x1x2x32xf32> to vector<2x32xf32>
    %c0_301 = arith.constant 0 : index
    %535 = arith.index_cast %525 : i32 to index
    %c0_302 = arith.constant 0 : index
    %c0_303 = arith.constant 0 : index
    %536 = vector.load %arg3[%c0_301, %535, %c0_302, %c0_303] : memref<3x8x2x32xf32, #tpu.memory_space<vmem>>, vector<1x1x2x32xf32>
    %537 = vector.shape_cast %536 : vector<1x1x2x32xf32> to vector<2x32xf32>
    %c1_304 = arith.constant 1 : index
    %538 = arith.index_cast %525 : i32 to index
    %c0_305 = arith.constant 0 : index
    %c0_306 = arith.constant 0 : index
    %539 = vector.load %arg3[%c1_304, %538, %c0_305, %c0_306] : memref<3x8x2x32xf32, #tpu.memory_space<vmem>>, vector<1x1x2x32xf32>
    %540 = vector.shape_cast %539 : vector<1x1x2x32xf32> to vector<2x32xf32>
    %c2_307 = arith.constant 2 : index
    %541 = arith.index_cast %525 : i32 to index
    %c0_308 = arith.constant 0 : index
    %c0_309 = arith.constant 0 : index
    %542 = vector.load %arg3[%c2_307, %541, %c0_308, %c0_309] : memref<3x8x2x32xf32, #tpu.memory_space<vmem>>, vector<1x1x2x32xf32>
    %543 = vector.shape_cast %542 : vector<1x1x2x32xf32> to vector<2x32xf32>
    %cst_310 = arith.constant dense<0.000000e+00> : vector<2x32xf32>
    %544 = tpu.matmul %488, %4, %cst_310 {dimension_numbers = #tpu.dot_dimension_numbers<[1], [0], [0], [1], [0, 0, 1, 1], [], []>} : vector<2x32xf32>, vector<32x32xf32>, vector<2x32xf32> -> vector<2x32xf32>
    %cst_311 = arith.constant dense<0.000000e+00> : vector<2x32xf32>
    %545 = tpu.matmul %488, %6, %cst_311 {dimension_numbers = #tpu.dot_dimension_numbers<[1], [0], [0], [1], [0, 0, 1, 1], [], []>} : vector<2x32xf32>, vector<32x32xf32>, vector<2x32xf32> -> vector<2x32xf32>
    %cst_312 = arith.constant dense<0.000000e+00> : vector<2x32xf32>
    %546 = tpu.matmul %488, %8, %cst_312 {dimension_numbers = #tpu.dot_dimension_numbers<[1], [0], [0], [1], [0, 0, 1, 1], [], []>} : vector<2x32xf32>, vector<32x32xf32>, vector<2x32xf32> -> vector<2x32xf32>
    %547 = arith.addf %528, %544 : vector<2x32xf32>
    %cst_313 = arith.constant 5.000000e-01 : f32
    %548 = vector.broadcast %cst_313 : f32 to vector<2x32xf32>
    %549 = arith.mulf %548, %547 : vector<2x32xf32>
    %550 = math.tanh %549 : vector<2x32xf32>
    %cst_314 = arith.constant 5.000000e-01 : f32
    %551 = vector.broadcast %cst_314 : f32 to vector<2x32xf32>
    %552 = arith.mulf %551, %550 : vector<2x32xf32>
    %cst_315 = arith.constant 5.000000e-01 : f32
    %553 = vector.broadcast %cst_315 : f32 to vector<2x32xf32>
    %554 = arith.addf %552, %553 : vector<2x32xf32>
    %555 = arith.addf %531, %545 : vector<2x32xf32>
    %cst_316 = arith.constant 5.000000e-01 : f32
    %556 = vector.broadcast %cst_316 : f32 to vector<2x32xf32>
    %557 = arith.mulf %556, %555 : vector<2x32xf32>
    %558 = math.tanh %557 : vector<2x32xf32>
    %cst_317 = arith.constant 5.000000e-01 : f32
    %559 = vector.broadcast %cst_317 : f32 to vector<2x32xf32>
    %560 = arith.mulf %559, %558 : vector<2x32xf32>
    %cst_318 = arith.constant 5.000000e-01 : f32
    %561 = vector.broadcast %cst_318 : f32 to vector<2x32xf32>
    %562 = arith.addf %560, %561 : vector<2x32xf32>
    %563 = arith.addf %546, %18 : vector<2x32xf32>
    %564 = arith.mulf %554, %563 : vector<2x32xf32>
    %565 = arith.addf %534, %564 : vector<2x32xf32>
    %566 = math.tanh %565 : vector<2x32xf32>
    %cst_319 = arith.constant 1.000000e+00 : f32
    %567 = vector.broadcast %cst_319 : f32 to vector<2x32xf32>
    %568 = arith.subf %567, %562 : vector<2x32xf32>
    %569 = arith.mulf %568, %566 : vector<2x32xf32>
    %570 = arith.mulf %562, %488 : vector<2x32xf32>
    %571 = arith.addf %569, %570 : vector<2x32xf32>
    %cst_320 = arith.constant dense<0.000000e+00> : vector<2x32xf32>
    %572 = tpu.matmul %516, %10, %cst_320 {dimension_numbers = #tpu.dot_dimension_numbers<[1], [0], [0], [1], [0, 0, 1, 1], [], []>} : vector<2x32xf32>, vector<32x32xf32>, vector<2x32xf32> -> vector<2x32xf32>
    %cst_321 = arith.constant dense<0.000000e+00> : vector<2x32xf32>
    %573 = tpu.matmul %516, %12, %cst_321 {dimension_numbers = #tpu.dot_dimension_numbers<[1], [0], [0], [1], [0, 0, 1, 1], [], []>} : vector<2x32xf32>, vector<32x32xf32>, vector<2x32xf32> -> vector<2x32xf32>
    %cst_322 = arith.constant dense<0.000000e+00> : vector<2x32xf32>
    %574 = tpu.matmul %516, %14, %cst_322 {dimension_numbers = #tpu.dot_dimension_numbers<[1], [0], [0], [1], [0, 0, 1, 1], [], []>} : vector<2x32xf32>, vector<32x32xf32>, vector<2x32xf32> -> vector<2x32xf32>
    %575 = arith.addf %537, %572 : vector<2x32xf32>
    %cst_323 = arith.constant 5.000000e-01 : f32
    %576 = vector.broadcast %cst_323 : f32 to vector<2x32xf32>
    %577 = arith.mulf %576, %575 : vector<2x32xf32>
    %578 = math.tanh %577 : vector<2x32xf32>
    %cst_324 = arith.constant 5.000000e-01 : f32
    %579 = vector.broadcast %cst_324 : f32 to vector<2x32xf32>
    %580 = arith.mulf %579, %578 : vector<2x32xf32>
    %cst_325 = arith.constant 5.000000e-01 : f32
    %581 = vector.broadcast %cst_325 : f32 to vector<2x32xf32>
    %582 = arith.addf %580, %581 : vector<2x32xf32>
    %583 = arith.addf %540, %573 : vector<2x32xf32>
    %cst_326 = arith.constant 5.000000e-01 : f32
    %584 = vector.broadcast %cst_326 : f32 to vector<2x32xf32>
    %585 = arith.mulf %584, %583 : vector<2x32xf32>
    %586 = math.tanh %585 : vector<2x32xf32>
    %cst_327 = arith.constant 5.000000e-01 : f32
    %587 = vector.broadcast %cst_327 : f32 to vector<2x32xf32>
    %588 = arith.mulf %587, %586 : vector<2x32xf32>
    %cst_328 = arith.constant 5.000000e-01 : f32
    %589 = vector.broadcast %cst_328 : f32 to vector<2x32xf32>
    %590 = arith.addf %588, %589 : vector<2x32xf32>
    %591 = arith.addf %574, %22 : vector<2x32xf32>
    %592 = arith.mulf %582, %591 : vector<2x32xf32>
    %593 = arith.addf %543, %592 : vector<2x32xf32>
    %594 = math.tanh %593 : vector<2x32xf32>
    %cst_329 = arith.constant 1.000000e+00 : f32
    %595 = vector.broadcast %cst_329 : f32 to vector<2x32xf32>
    %596 = arith.subf %595, %590 : vector<2x32xf32>
    %597 = arith.mulf %596, %594 : vector<2x32xf32>
    %598 = arith.mulf %590, %516 : vector<2x32xf32>
    %599 = arith.addf %597, %598 : vector<2x32xf32>
    %600 = arith.index_cast %c6_i32 : i32 to index
    %c0_330 = arith.constant 0 : index
    %c0_331 = arith.constant 0 : index
    %601 = vector.load %arg6[%600, %c0_330, %c0_331] : memref<8x2x32xf32, #tpu.memory_space<vmem>>, vector<1x2x32xf32>
    %602 = vector.shape_cast %601 : vector<1x2x32xf32> to vector<2x32xf32>
    %603 = vector.shape_cast %571 : vector<2x32xf32> to vector<1x2x32xf32>
    tpu.vector_store %arg6[%600, %c0_330, %c0_331], %603 {strides = array<i32>} : memref<8x2x32xf32, #tpu.memory_space<vmem>>, vector<1x2x32xf32>,
    %604 = arith.index_cast %525 : i32 to index
    %c0_332 = arith.constant 0 : index
    %c0_333 = arith.constant 0 : index
    %605 = vector.load %arg7[%604, %c0_332, %c0_333] : memref<8x2x32xf32, #tpu.memory_space<vmem>>, vector<1x2x32xf32>
    %606 = vector.shape_cast %605 : vector<1x2x32xf32> to vector<2x32xf32>
    %607 = vector.shape_cast %599 : vector<2x32xf32> to vector<1x2x32xf32>
    tpu.vector_store %arg7[%604, %c0_332, %c0_333], %607 {strides = array<i32>} : memref<8x2x32xf32, #tpu.memory_space<vmem>>, vector<1x2x32xf32>,
    %c7_i32_334 = arith.constant 7 : i32
    %c7_i32_335 = arith.constant 7 : i32
    %608 = arith.subi %c7_i32_335, %c7_i32_334 : i32
    %c0_336 = arith.constant 0 : index
    %609 = arith.index_cast %c7_i32_334 : i32 to index
    %c0_337 = arith.constant 0 : index
    %c0_338 = arith.constant 0 : index
    %610 = vector.load %arg2[%c0_336, %609, %c0_337, %c0_338] : memref<3x8x2x32xf32, #tpu.memory_space<vmem>>, vector<1x1x2x32xf32>
    %611 = vector.shape_cast %610 : vector<1x1x2x32xf32> to vector<2x32xf32>
    %c1_339 = arith.constant 1 : index
    %612 = arith.index_cast %c7_i32_334 : i32 to index
    %c0_340 = arith.constant 0 : index
    %c0_341 = arith.constant 0 : index
    %613 = vector.load %arg2[%c1_339, %612, %c0_340, %c0_341] : memref<3x8x2x32xf32, #tpu.memory_space<vmem>>, vector<1x1x2x32xf32>
    %614 = vector.shape_cast %613 : vector<1x1x2x32xf32> to vector<2x32xf32>
    %c2_342 = arith.constant 2 : index
    %615 = arith.index_cast %c7_i32_334 : i32 to index
    %c0_343 = arith.constant 0 : index
    %c0_344 = arith.constant 0 : index
    %616 = vector.load %arg2[%c2_342, %615, %c0_343, %c0_344] : memref<3x8x2x32xf32, #tpu.memory_space<vmem>>, vector<1x1x2x32xf32>
    %617 = vector.shape_cast %616 : vector<1x1x2x32xf32> to vector<2x32xf32>
    %c0_345 = arith.constant 0 : index
    %618 = arith.index_cast %608 : i32 to index
    %c0_346 = arith.constant 0 : index
    %c0_347 = arith.constant 0 : index
    %619 = vector.load %arg3[%c0_345, %618, %c0_346, %c0_347] : memref<3x8x2x32xf32, #tpu.memory_space<vmem>>, vector<1x1x2x32xf32>
    %620 = vector.shape_cast %619 : vector<1x1x2x32xf32> to vector<2x32xf32>
    %c1_348 = arith.constant 1 : index
    %621 = arith.index_cast %608 : i32 to index
    %c0_349 = arith.constant 0 : index
    %c0_350 = arith.constant 0 : index
    %622 = vector.load %arg3[%c1_348, %621, %c0_349, %c0_350] : memref<3x8x2x32xf32, #tpu.memory_space<vmem>>, vector<1x1x2x32xf32>
    %623 = vector.shape_cast %622 : vector<1x1x2x32xf32> to vector<2x32xf32>
    %c2_351 = arith.constant 2 : index
    %624 = arith.index_cast %608 : i32 to index
    %c0_352 = arith.constant 0 : index
    %c0_353 = arith.constant 0 : index
    %625 = vector.load %arg3[%c2_351, %624, %c0_352, %c0_353] : memref<3x8x2x32xf32, #tpu.memory_space<vmem>>, vector<1x1x2x32xf32>
    %626 = vector.shape_cast %625 : vector<1x1x2x32xf32> to vector<2x32xf32>
    %cst_354 = arith.constant dense<0.000000e+00> : vector<2x32xf32>
    %627 = tpu.matmul %571, %4, %cst_354 {dimension_numbers = #tpu.dot_dimension_numbers<[1], [0], [0], [1], [0, 0, 1, 1], [], []>} : vector<2x32xf32>, vector<32x32xf32>, vector<2x32xf32> -> vector<2x32xf32>
    %cst_355 = arith.constant dense<0.000000e+00> : vector<2x32xf32>
    %628 = tpu.matmul %571, %6, %cst_355 {dimension_numbers = #tpu.dot_dimension_numbers<[1], [0], [0], [1], [0, 0, 1, 1], [], []>} : vector<2x32xf32>, vector<32x32xf32>, vector<2x32xf32> -> vector<2x32xf32>
    %cst_356 = arith.constant dense<0.000000e+00> : vector<2x32xf32>
    %629 = tpu.matmul %571, %8, %cst_356 {dimension_numbers = #tpu.dot_dimension_numbers<[1], [0], [0], [1], [0, 0, 1, 1], [], []>} : vector<2x32xf32>, vector<32x32xf32>, vector<2x32xf32> -> vector<2x32xf32>
    %630 = arith.addf %611, %627 : vector<2x32xf32>
    %cst_357 = arith.constant 5.000000e-01 : f32
    %631 = vector.broadcast %cst_357 : f32 to vector<2x32xf32>
    %632 = arith.mulf %631, %630 : vector<2x32xf32>
    %633 = math.tanh %632 : vector<2x32xf32>
    %cst_358 = arith.constant 5.000000e-01 : f32
    %634 = vector.broadcast %cst_358 : f32 to vector<2x32xf32>
    %635 = arith.mulf %634, %633 : vector<2x32xf32>
    %cst_359 = arith.constant 5.000000e-01 : f32
    %636 = vector.broadcast %cst_359 : f32 to vector<2x32xf32>
    %637 = arith.addf %635, %636 : vector<2x32xf32>
    %638 = arith.addf %614, %628 : vector<2x32xf32>
    %cst_360 = arith.constant 5.000000e-01 : f32
    %639 = vector.broadcast %cst_360 : f32 to vector<2x32xf32>
    %640 = arith.mulf %639, %638 : vector<2x32xf32>
    %641 = math.tanh %640 : vector<2x32xf32>
    %cst_361 = arith.constant 5.000000e-01 : f32
    %642 = vector.broadcast %cst_361 : f32 to vector<2x32xf32>
    %643 = arith.mulf %642, %641 : vector<2x32xf32>
    %cst_362 = arith.constant 5.000000e-01 : f32
    %644 = vector.broadcast %cst_362 : f32 to vector<2x32xf32>
    %645 = arith.addf %643, %644 : vector<2x32xf32>
    %646 = arith.addf %629, %18 : vector<2x32xf32>
    %647 = arith.mulf %637, %646 : vector<2x32xf32>
    %648 = arith.addf %617, %647 : vector<2x32xf32>
    %649 = math.tanh %648 : vector<2x32xf32>
    %cst_363 = arith.constant 1.000000e+00 : f32
    %650 = vector.broadcast %cst_363 : f32 to vector<2x32xf32>
    %651 = arith.subf %650, %645 : vector<2x32xf32>
    %652 = arith.mulf %651, %649 : vector<2x32xf32>
    %653 = arith.mulf %645, %571 : vector<2x32xf32>
    %654 = arith.addf %652, %653 : vector<2x32xf32>
    %cst_364 = arith.constant dense<0.000000e+00> : vector<2x32xf32>
    %655 = tpu.matmul %599, %10, %cst_364 {dimension_numbers = #tpu.dot_dimension_numbers<[1], [0], [0], [1], [0, 0, 1, 1], [], []>} : vector<2x32xf32>, vector<32x32xf32>, vector<2x32xf32> -> vector<2x32xf32>
    %cst_365 = arith.constant dense<0.000000e+00> : vector<2x32xf32>
    %656 = tpu.matmul %599, %12, %cst_365 {dimension_numbers = #tpu.dot_dimension_numbers<[1], [0], [0], [1], [0, 0, 1, 1], [], []>} : vector<2x32xf32>, vector<32x32xf32>, vector<2x32xf32> -> vector<2x32xf32>
    %cst_366 = arith.constant dense<0.000000e+00> : vector<2x32xf32>
    %657 = tpu.matmul %599, %14, %cst_366 {dimension_numbers = #tpu.dot_dimension_numbers<[1], [0], [0], [1], [0, 0, 1, 1], [], []>} : vector<2x32xf32>, vector<32x32xf32>, vector<2x32xf32> -> vector<2x32xf32>
    %658 = arith.addf %620, %655 : vector<2x32xf32>
    %cst_367 = arith.constant 5.000000e-01 : f32
    %659 = vector.broadcast %cst_367 : f32 to vector<2x32xf32>
    %660 = arith.mulf %659, %658 : vector<2x32xf32>
    %661 = math.tanh %660 : vector<2x32xf32>
    %cst_368 = arith.constant 5.000000e-01 : f32
    %662 = vector.broadcast %cst_368 : f32 to vector<2x32xf32>
    %663 = arith.mulf %662, %661 : vector<2x32xf32>
    %cst_369 = arith.constant 5.000000e-01 : f32
    %664 = vector.broadcast %cst_369 : f32 to vector<2x32xf32>
    %665 = arith.addf %663, %664 : vector<2x32xf32>
    %666 = arith.addf %623, %656 : vector<2x32xf32>
    %cst_370 = arith.constant 5.000000e-01 : f32
    %667 = vector.broadcast %cst_370 : f32 to vector<2x32xf32>
    %668 = arith.mulf %667, %666 : vector<2x32xf32>
    %669 = math.tanh %668 : vector<2x32xf32>
    %cst_371 = arith.constant 5.000000e-01 : f32
    %670 = vector.broadcast %cst_371 : f32 to vector<2x32xf32>
    %671 = arith.mulf %670, %669 : vector<2x32xf32>
    %cst_372 = arith.constant 5.000000e-01 : f32
    %672 = vector.broadcast %cst_372 : f32 to vector<2x32xf32>
    %673 = arith.addf %671, %672 : vector<2x32xf32>
    %674 = arith.addf %657, %22 : vector<2x32xf32>
    %675 = arith.mulf %665, %674 : vector<2x32xf32>
    %676 = arith.addf %626, %675 : vector<2x32xf32>
    %677 = math.tanh %676 : vector<2x32xf32>
    %cst_373 = arith.constant 1.000000e+00 : f32
    %678 = vector.broadcast %cst_373 : f32 to vector<2x32xf32>
    %679 = arith.subf %678, %673 : vector<2x32xf32>
    %680 = arith.mulf %679, %677 : vector<2x32xf32>
    %681 = arith.mulf %673, %599 : vector<2x32xf32>
    %682 = arith.addf %680, %681 : vector<2x32xf32>
    %683 = arith.index_cast %c7_i32_334 : i32 to index
    %c0_374 = arith.constant 0 : index
    %c0_375 = arith.constant 0 : index
    %684 = vector.load %arg6[%683, %c0_374, %c0_375] : memref<8x2x32xf32, #tpu.memory_space<vmem>>, vector<1x2x32xf32>
    %685 = vector.shape_cast %684 : vector<1x2x32xf32> to vector<2x32xf32>
    %686 = vector.shape_cast %654 : vector<2x32xf32> to vector<1x2x32xf32>
    tpu.vector_store %arg6[%683, %c0_374, %c0_375], %686 {strides = array<i32>} : memref<8x2x32xf32, #tpu.memory_space<vmem>>, vector<1x2x32xf32>,
    %687 = arith.index_cast %608 : i32 to index
    %c0_376 = arith.constant 0 : index
    %c0_377 = arith.constant 0 : index
    %688 = vector.load %arg7[%687, %c0_376, %c0_377] : memref<8x2x32xf32, #tpu.memory_space<vmem>>, vector<1x2x32xf32>
    %689 = vector.shape_cast %688 : vector<1x2x32xf32> to vector<2x32xf32>
    %690 = vector.shape_cast %682 : vector<2x32xf32> to vector<1x2x32xf32>
    tpu.vector_store %arg7[%687, %c0_376, %c0_377], %690 {strides = array<i32>} : memref<8x2x32xf32, #tpu.memory_space<vmem>>, vector<1x2x32xf32>,
    %c8_i32 = arith.constant 8 : i32
    %c0_378 = arith.constant 0 : index
    %c0_379 = arith.constant 0 : index
    %c0_380 = arith.constant 0 : index
    %691 = vector.load %arg9[%c0_378, %c0_379, %c0_380] : memref<2x2x32xf32, #tpu.memory_space<vmem>>, vector<1x2x32xf32>
    %692 = vector.shape_cast %691 : vector<1x2x32xf32> to vector<2x32xf32>
    %693 = vector.shape_cast %654 : vector<2x32xf32> to vector<1x2x32xf32>
    tpu.vector_store %arg9[%c0_378, %c0_379, %c0_380], %693 {strides = array<i32>} : memref<2x2x32xf32, #tpu.memory_space<vmem>>, vector<1x2x32xf32>,
    %c1_381 = arith.constant 1 : index
    %c0_382 = arith.constant 0 : index
    %c0_383 = arith.constant 0 : index
    %694 = vector.load %arg9[%c1_381, %c0_382, %c0_383] : memref<2x2x32xf32, #tpu.memory_space<vmem>>, vector<1x2x32xf32>
    %695 = vector.shape_cast %694 : vector<1x2x32xf32> to vector<2x32xf32>
    %696 = vector.shape_cast %682 : vector<2x32xf32> to vector<1x2x32xf32>
    tpu.vector_store %arg9[%c1_381, %c0_382, %c0_383], %696 {strides = array<i32>} : memref<2x2x32xf32, #tpu.memory_space<vmem>>, vector<1x2x32xf32>,
    %c0_i32_384 = arith.constant 0 : i32
    %697 = arith.cmpi eq, %arg1, %c0_i32_384 : i32
    %698 = arith.extui %697 : i1 to i32
    %c0_i32_385 = arith.constant 0 : i32
    %699 = arith.cmpi ne, %698, %c0_i32_385 : i32
    scf.if %699 {
      %c0_386 = arith.constant 0 : index
      %c0_387 = arith.constant 0 : index
      %c0_388 = arith.constant 0 : index
      %700 = vector.load %arg8[%c0_386, %c0_387, %c0_388] : memref<2x2x32xf32, #tpu.memory_space<vmem>>, vector<1x2x32xf32>
      %701 = vector.shape_cast %700 : vector<1x2x32xf32> to vector<2x32xf32>
      %702 = vector.shape_cast %654 : vector<2x32xf32> to vector<1x2x32xf32>
      tpu.vector_store %arg8[%c0_386, %c0_387, %c0_388], %702 {strides = array<i32>} : memref<2x2x32xf32, #tpu.memory_space<vmem>>, vector<1x2x32xf32>,
      %c1_389 = arith.constant 1 : index
      %c0_390 = arith.constant 0 : index
      %c0_391 = arith.constant 0 : index
      %703 = vector.load %arg8[%c1_389, %c0_390, %c0_391] : memref<2x2x32xf32, #tpu.memory_space<vmem>>, vector<1x2x32xf32>
      %704 = vector.shape_cast %703 : vector<1x2x32xf32> to vector<2x32xf32>
      %705 = vector.shape_cast %682 : vector<2x32xf32> to vector<1x2x32xf32>
      tpu.vector_store %arg8[%c1_389, %c0_390, %c0_391], %705 {strides = array<i32>} : memref<2x2x32xf32, #tpu.memory_space<vmem>>, vector<1x2x32xf32>,
    } else {
    }
    return
  }
  func.func @transform_0(%arg0: i32, %arg1: i32) -> (i32, i32, i32, i32) {
    %c0_i32 = arith.constant 0 : i32
    %c0_i32_0 = arith.constant 0 : i32
    %c0_i32_1 = arith.constant 0 : i32
    return %c0_i32, %arg1, %arg0, %c0_i32_0 : i32, i32, i32, i32
  }
  func.func @transform_1(%arg0: i32, %arg1: i32) -> (i32, i32, i32, i32) {
    %c0_i32 = arith.constant 0 : i32
    %0 = arith.subi %c0_i32, %arg1 : i32
    %c0_i32_0 = arith.constant 0 : i32
    %c0_i32_1 = arith.constant 0 : i32
    %c0_i32_2 = arith.constant 0 : i32
    return %c0_i32_0, %0, %arg0, %c0_i32_1 : i32, i32, i32, i32
  }
  func.func @transform_3(%arg0: i32, %arg1: i32) -> (i32, i32, i32) {
    %c0_i32 = arith.constant 0 : i32
    %c0_i32_0 = arith.constant 0 : i32
    %c0_i32_1 = arith.constant 0 : i32
    %c0_i32_2 = arith.constant 0 : i32
    return %c0_i32, %c0_i32_0, %c0_i32_1 : i32, i32, i32
  }
  func.func @transform_4(%arg0: i32, %arg1: i32) -> (i32, i32, i32) {
    %c0_i32 = arith.constant 0 : i32
    %c0_i32_0 = arith.constant 0 : i32
    return %arg1, %arg0, %c0_i32 : i32, i32, i32
  }
  func.func @transform_5(%arg0: i32, %arg1: i32) -> (i32, i32, i32) {
    %c0_i32 = arith.constant 0 : i32
    %0 = arith.subi %c0_i32, %arg1 : i32
    %c0_i32_0 = arith.constant 0 : i32
    %c0_i32_1 = arith.constant 0 : i32
    return %0, %arg0, %c0_i32_0 : i32, i32, i32
  }
  func.func @transform_6(%arg0: i32, %arg1: i32) -> (i32, i32, i32) {
    %c0_i32 = arith.constant 0 : i32
    %c0_i32_0 = arith.constant 0 : i32
    %c0_i32_1 = arith.constant 0 : i32
    return %c0_i32, %arg0, %c0_i32_0 : i32, i32, i32
  }
}

</mosaic_0001>

<llo_original>
// kernel: encoder_forward.2
$region0: #{encoder_forward.2}
  #allocation0 [shape = 'u32[]', space=smem, size = 0x4, offset = 0x4, fixed_abs, tag = 'smem constant byte address 0x4 - core index']
  #allocation1 [shape = 'u32[72,128]{1,0:T(1,128)}', space=vmem, size = 0x9000, scoped, tag = 'internal scratch']
  #allocation2 [shape = 'f32[2,2,32]{2,1,0:T(2,128)}', space=vmem, size = 0x800, scoped, tag = 'scratch operand']
  #allocation3 [shape = 'f32[2,3,32,32]{3,2,1,0:T(8,128)}', space=vmem, size = 0x18000, scoped, tag = 'scratch operand']
  #allocation4 [shape = 's32[1]{0}', space=sflag, size = 0x4, scoped, tag = 'scratch operand']
  #allocation5 [shape = 's32[]', space=sflag, size = 0x4, offset = 0, fixed_abs, tag = 'sflag constant byte address 0x0 - dummy sync flag']
  #allocation6 [shape = 's32[]', space=sflag, size = 0x4, offset = 0, fixed_abs, tag = 'sflag constant byte address 0x0 - dummy sync flag']
  #allocation7 [shape = 'u32[]', space=smem, size = 0x4, offset = 0x44, fixed_abs, tag = 'smem constant byte address 0x44 - assertion arg 0']
  #allocation8 [shape = 'u32[]', space=smem, size = 0x4, offset = 0x48, fixed_abs, tag = 'smem constant byte address 0x48 - assertion arg 1']
  %s0 = inlined_call_operand.vmem [shape: f32[3,8,2,32], index: 0, kind: input, shape index: {}]
  %s1 = inlined_call_operand.vmem [shape: f32[3,8,2,32], index: 1, kind: input, shape index: {}]
  %s2 = inlined_call_operand.hbm [shape: f32[2,3,32,32], index: 2, kind: input, shape index: {}]
  %s3 = inlined_call_operand.vmem [shape: f32[2,1,32], index: 3, kind: input, shape index: {}]
  %s4 = inlined_call_operand.vmem [shape: f32[8,2,32], index: 4, kind: output, shape index: {0}]
  %s5 = inlined_call_operand.vmem [shape: f32[8,2,32], index: 5, kind: output, shape index: {1}]
  %s6 = inlined_call_operand.vmem [shape: f32[2,2,32], index: 6, kind: output, shape index: {2}]
  %7 = xla_tuple %s4, %s5, %s6
  %s8 = sld [smem:[#allocation0]]
  $region50: #{encoder_forward.2} parent=0
    _
  %s10 = ssub.s32 1, %s8
  %s11 = scalar_select 0, %s10, %s8
  // Predicated region
  $region2: #{encoder_forward.2} parent=0 // pred_check
    _
  $region3: #{encoder_forward.2} parent=0 // pred_check_branch
    %13 = sbr.rel (0) target = $region5
  $region4: #{encoder_forward.2} parent=0 // pred_region
    _
  $region5: #{encoder_forward.2} parent=0 // pred_fallthru
    _
  // Predicated region
  $region6: #{encoder_forward.2} parent=0 // pred_check
    _
  $region7: #{encoder_forward.2} parent=0 // pred_check_branch
    %15 = sbr.rel (0) target = $region9
  $region8: #{encoder_forward.2} parent=0 // pred_region
    %s16 = ssub.s32 0, 0
    %s17 = smul.u32 8, %s16
    %p18 = scmp.lt.s32.totalorder %s17, 7
    %s19 = scalar_select %p18, %s17, 7
    %s20 = smul.addr %s19, 2
    %s21 = scalar_lea.vmem %s1, %s20
    %s22 = ssub.s32 0, 0
    %s23 = smul.u32 8, %s22
  $region9: #{encoder_forward.2} parent=0 // pred_fallthru
    _
  // Predicated region
  $region10: #{encoder_forward.2} parent=0 // pred_check
    _
  $region11: #{encoder_forward.2} parent=0 // pred_check_branch
    %25 = sbr.rel (0) target = $region13
  $region12: #{encoder_forward.2} parent=0 // pred_region
    _
  $region13: #{encoder_forward.2} parent=0 // pred_fallthru
    _
  %s26 = ssub.s32 0, 0
  %s27 = smul.u32 8, %s26
  %p28 = scmp.lt.s32.totalorder %s27, 7
  %s29 = scalar_select %p28, %s27, 7
  %s30 = smul.addr %s29, 2
  %s31 = scalar_lea.vmem %s1, %s30
  %s32 = ssub.s32 0, 0
  %s33 = smul.u32 8, %s32
  %p34 = scmp.lt.s32.totalorder %s33, 7
  %s35 = scalar_select %p34, %s33, 7
  %s36 = smul.addr %s35, 2
  %s37 = scalar_lea.vmem %s5, %s36
  %s38 = ssub.s32 0, 0
  %s39 = smul.u32 8, %s38
  %p40 = scmp.lt.s32.totalorder %s39, 7
  %s41 = scalar_select %p40, %s39, 7
  %s42 = smul.addr %s41, 2
  %s43 = scalar_lea.vmem %s1, %s42
  %s44 = ssub.s32 0, 0
  %s45 = smul.u32 8, %s44
  %s46 = ssub.s32 0, 0
  %s47 = smul.u32 8, %s46
  %p48 = scmp.lt.s32.totalorder %s47, 7
  %s49 = scalar_select %p48, %s47, 7
  %s50 = smul.addr %s49, 2
  %s51 = scalar_lea.vmem %s5, %s50
  %s52 = ssub.s32 0, 0
  %s53 = smul.u32 8, %s52
  %p54 = scmp.eq.s32.totalorder 0, 0
  // Predicated region
  $region14: #{encoder_forward.2} parent=0 // pred_check
    %p55 = pneg %p54
  $region15: #{encoder_forward.2} parent=0 // pred_check_branch
    %57 = sbr.rel (%p55) target = $region17
  $region16: #{encoder_forward.2} parent=0 // pred_region
    %vm58 = vcmask 254976
    %59 = vst.msk [vmem:[#allocation2] sm:$0x3] %vm58, 0.0
    %60 = vst.msk [vmem:[#allocation2 + $0x2] sm:$0x3] %vm58, 0.0
    // Predicated region
    $region18: #{encoder_forward.2} parent=16 // pred_check
      _
    $region19: #{encoder_forward.2} parent=16 // pred_check_branch
      %62 = sbr.rel target = $region21
    $region20: #{encoder_forward.2} parent=16 // pred_region
      %63 = sst [smem:[#allocation7]] [#allocation6]
      %64 = sst [smem:[#allocation8]] [#allocation5]
    $region21: #{encoder_forward.2} parent=16 // pred_fallthru
      _
    %66 = shalt.err (0)
    %s68 = sshll.u32 %s2, 4
    %s69 = int_to_ptr.hbm [resolvable:$true] %s68
    %s70 = sshll.u32 [#allocation3], 4
    %s71 = int_to_ptr.vmem [resolvable:$true] %s70
    %73 = dma.hbm_to_vmem [thread:$0]  %s69, 3072, %s71, [#allocation4]
    %s74 = smul.u32 2, 3
    %s75 = smul.u32 %s74, 32
    %s76 = smul.u32 %s75, 1
    %s77 = sshll.u32 %s76, 4
    %78 = dma.done [#allocation4], %s77
  $region17: #{encoder_forward.2} parent=0 // pred_fallthru
    _
  %v79 = vld [vmem:[#allocation3] sm:$0xff]
  %v80 = vld [vmem:[#allocation3 + $0x8] sm:$0xff]
  %v81 = vld [vmem:[#allocation3 + $0x10] sm:$0xff]
  %v82 = vld [vmem:[#allocation3 + $0x18] sm:$0xff]
  %s83 = scalar_lea.vmem [#allocation3], 32
  %v84 = vld [vmem:[%s83] sm:$0xff]
  %v85 = vld [vmem:[%s83 + $0x8] sm:$0xff]
  %v86 = vld [vmem:[%s83 + $0x10] sm:$0xff]
  %v87 = vld [vmem:[%s83 + $0x18] sm:$0xff]
  %s88 = scalar_lea.vmem [#allocation3], 64
  %v89 = vld [vmem:[%s88] sm:$0xff]
  %v90 = vld [vmem:[%s88 + $0x8] sm:$0xff]
  %v91 = vld [vmem:[%s88 + $0x10] sm:$0xff]
  %v92 = vld [vmem:[%s88 + $0x18] sm:$0xff]
  %s93 = scalar_lea.vmem [#allocation3], 96
  %v94 = vld [vmem:[%s93] sm:$0xff]
  %v95 = vld [vmem:[%s93 + $0x8] sm:$0xff]
  %v96 = vld [vmem:[%s93 + $0x10] sm:$0xff]
  %v97 = vld [vmem:[%s93 + $0x18] sm:$0xff]
  %s98 = scalar_lea.vmem [#allocation3], 128
  %v99 = vld [vmem:[%s98] sm:$0xff]
  %v100 = vld [vmem:[%s98 + $0x8] sm:$0xff]
  %v101 = vld [vmem:[%s98 + $0x10] sm:$0xff]
  %v102 = vld [vmem:[%s98 + $0x18] sm:$0xff]
  %s103 = scalar_lea.vmem [#allocation3], 160
  %v104 = vld [vmem:[%s103] sm:$0xff]
  %v105 = vld [vmem:[%s103 + $0x8] sm:$0xff]
  %v106 = vld [vmem:[%s103 + $0x10] sm:$0xff]
  %v107 = vld [vmem:[%s103 + $0x18] sm:$0xff]
  %v108 = vld [vmem:[%s3] sm:$0x1]
  %v110 = vperm.slane %v108, 0
  %s112 = scalar_lea.vmem %s3, 1
  %v113 = vld [vmem:[%s112] sm:$0x1]
  %v115 = vperm.slane %v113, 0
  %v117 = vld [vmem:[#allocation2] sm:$0x3]
  %s118 = scalar_lea.vmem [#allocation2], 2
  %v119 = vld [vmem:[%s118] sm:$0x3]
  %v120 = vld [vmem:[%s0] sm:$0x3]
  %s121 = scalar_lea.vmem %s0, 16
  %v122 = vld [vmem:[%s121] sm:$0x3]
  %s123 = scalar_lea.vmem %s0, 32
  %v124 = vld [vmem:[%s123] sm:$0x3]
  %s125 = scalar_lea.vmem %s43, 14
  %v126 = vld [vmem:[%s125] sm:$0x3]
  %s127 = scalar_lea.vmem %s43, 30
  %v128 = vld [vmem:[%s127] sm:$0x3]
  %s129 = scalar_lea.vmem %s43, 46
  %v130 = vld [vmem:[%s129] sm:$0x3]
  %vm131 = vcmask 261120
  %v133 = vsel %vm131, %v117, 0
  %135 = vmatpush.msra.mxu0 0.0
  %136 = vmatpush.msra.mxu0 0.0
  %137 = vmatpush.msra.mxu0 0.0
  %138 = vmatpush.msra.mxu0 0.0
  %139 = vmatpush.msra.mxu0 0.0
  %140 = vmatpush.msra.mxu0 0.0
  %141 = vmatpush.msra.mxu0 0.0
  %142 = vmatpush.msra.mxu0 0.0
  %143 = vmatpush.msra.mxu0 0.0
  %144 = vmatpush.msra.mxu0 0.0
  %145 = vmatpush.msra.mxu0 0.0
  %146 = vmatpush.msra.mxu0 0.0
  %147 = vmatpush.msra.mxu0 %v82
  %148 = vmatpush.msra.mxu0 %v81
  %149 = vmatpush.msra.mxu0 %v80
  %150 = vmatpush.msra.mxu0 %v79
  %151 = vmatmul.f32.gmra.mxu0 %v133
  %v152 = vpop.f32.mrf.mxu0
  %v153 = vadd.f32 0.0, %v152
  %154 = vdwg.mxu0
  %155 = vmatpush.msra.mxu0 0.0
  %156 = vmatpush.msra.mxu0 0.0
  %157 = vmatpush.msra.mxu0 0.0
  %158 = vmatpush.msra.mxu0 0.0
  %159 = vmatpush.msra.mxu0 0.0
  %160 = vmatpush.msra.mxu0 0.0
  %161 = vmatpush.msra.mxu0 0.0
  %162 = vmatpush.msra.mxu0 0.0
  %163 = vmatpush.msra.mxu0 0.0
  %164 = vmatpush.msra.mxu0 0.0
  %165 = vmatpush.msra.mxu0 0.0
  %166 = vmatpush.msra.mxu0 0.0
  %167 = vmatpush.msra.mxu0 %v87
  %168 = vmatpush.msra.mxu0 %v86
  %169 = vmatpush.msra.mxu0 %v85
  %170 = vmatpush.msra.mxu0 %v84
  %171 = vmatmul.f32.gmra.mxu0 %v133
  %v172 = vpop.f32.mrf.mxu0
  %v173 = vadd.f32 0.0, %v172
  %174 = vdwg.mxu0
  %v175 = vadd.f32 %v120, %v153
  %v176 = vmul.f32 %v175, 0.5
  %v177 = vtanh.pop %v176
  %v178 = vmul.f32 %v177, 0.5
  %v179 = vadd.f32 %v178, 0.5
  %v180 = vadd.f32 %v122, %v173
  %v181 = vmul.f32 %v180, 0.5
  %v182 = vtanh.pop %v181
  %v183 = vmul.f32 %v182, 0.5
  %v184 = vadd.f32 %v183, 0.5
  %185 = vmatpush.msra.mxu0 0.0
  %186 = vmatpush.msra.mxu0 0.0
  %187 = vmatpush.msra.mxu0 0.0
  %188 = vmatpush.msra.mxu0 0.0
  %189 = vmatpush.msra.mxu0 0.0
  %190 = vmatpush.msra.mxu0 0.0
  %191 = vmatpush.msra.mxu0 0.0
  %192 = vmatpush.msra.mxu0 0.0
  %193 = vmatpush.msra.mxu0 0.0
  %194 = vmatpush.msra.mxu0 0.0
  %195 = vmatpush.msra.mxu0 0.0
  %196 = vmatpush.msra.mxu0 0.0
  %197 = vmatpush.msra.mxu0 %v92
  %198 = vmatpush.msra.mxu0 %v91
  %199 = vmatpush.msra.mxu0 %v90
  %200 = vmatpush.msra.mxu0 %v89
  %201 = vmatmul.f32.gmra.mxu0 %v133
  %v202 = vpop.f32.mrf.mxu0
  %v203 = vadd.f32 %v110, %v202
  %204 = vdwg.mxu0
  %v205 = vmul.f32 %v179, %v203
  %v206 = vadd.f32 %v124, %v205
  %v207 = vtanh.pop %v206
  %v208 = vsub.f32 1.0, %v184
  %v209 = vmul.f32 %v208, %v207
  %v210 = vmul.f32 %v184, %v117
  %v211 = vadd.f32 %v209, %v210
  %v213 = vsel %vm131, %v119, 0
  %215 = vmatpush.msra.mxu0 0.0
  %216 = vmatpush.msra.mxu0 0.0
  %217 = vmatpush.msra.mxu0 0.0
  %218 = vmatpush.msra.mxu0 0.0
  %219 = vmatpush.msra.mxu0 0.0
  %220 = vmatpush.msra.mxu0 0.0
  %221 = vmatpush.msra.mxu0 0.0
  %222 = vmatpush.msra.mxu0 0.0
  %223 = vmatpush.msra.mxu0 0.0
  %224 = vmatpush.msra.mxu0 0.0
  %225 = vmatpush.msra.mxu0 0.0
  %226 = vmatpush.msra.mxu0 0.0
  %227 = vmatpush.msra.mxu0 %v97
  %228 = vmatpush.msra.mxu0 %v96
  %229 = vmatpush.msra.mxu0 %v95
  %230 = vmatpush.msra.mxu0 %v94
  %231 = vmatmul.f32.gmra.mxu0 %v213
  %v232 = vpop.f32.mrf.mxu0
  %v233 = vadd.f32 0.0, %v232
  %234 = vdwg.mxu0
  %235 = vmatpush.msra.mxu0 0.0
  %236 = vmatpush.msra.mxu0 0.0
  %237 = vmatpush.msra.mxu0 0.0
  %238 = vmatpush.msra.mxu0 0.0
  %239 = vmatpush.msra.mxu0 0.0
  %240 = vmatpush.msra.mxu0 0.0
  %241 = vmatpush.msra.mxu0 0.0
  %242 = vmatpush.msra.mxu0 0.0
  %243 = vmatpush.msra.mxu0 0.0
  %244 = vmatpush.msra.mxu0 0.0
  %245 = vmatpush.msra.mxu0 0.0
  %246 = vmatpush.msra.mxu0 0.0
  %247 = vmatpush.msra.mxu0 %v102
  %248 = vmatpush.msra.mxu0 %v101
  %249 = vmatpush.msra.mxu0 %v100
  %250 = vmatpush.msra.mxu0 %v99
  %251 = vmatmul.f32.gmra.mxu0 %v213
  %v252 = vpop.f32.mrf.mxu0
  %v253 = vadd.f32 0.0, %v252
  %254 = vdwg.mxu0
  %v255 = vadd.f32 %v126, %v233
  %v256 = vmul.f32 %v255, 0.5
  %v257 = vtanh.pop %v256
  %v258 = vmul.f32 %v257, 0.5
  %v259 = vadd.f32 %v258, 0.5
  %v260 = vadd.f32 %v128, %v253
  %v261 = vmul.f32 %v260, 0.5
  %v262 = vtanh.pop %v261
  %v263 = vmul.f32 %v262, 0.5
  %v264 = vadd.f32 %v263, 0.5
  %265 = vmatpush.msra.mxu0 0.0
  %266 = vmatpush.msra.mxu0 0.0
  %267 = vmatpush.msra.mxu0 0.0
  %268 = vmatpush.msra.mxu0 0.0
  %269 = vmatpush.msra.mxu0 0.0
  %270 = vmatpush.msra.mxu0 0.0
  %271 = vmatpush.msra.mxu0 0.0
  %272 = vmatpush.msra.mxu0 0.0
  %273 = vmatpush.msra.mxu0 0.0
  %274 = vmatpush.msra.mxu0 0.0
  %275 = vmatpush.msra.mxu0 0.0
  %276 = vmatpush.msra.mxu0 0.0
  %277 = vmatpush.msra.mxu0 %v107
  %278 = vmatpush.msra.mxu0 %v106
  %279 = vmatpush.msra.mxu0 %v105
  %280 = vmatpush.msra.mxu0 %v104
  %281 = vmatmul.f32.gmra.mxu0 %v213
  %v282 = vpop.f32.mrf.mxu0
  %v283 = vadd.f32 %v115, %v282
  %284 = vdwg.mxu0
  %v285 = vmul.f32 %v259, %v283
  %v286 = vadd.f32 %v130, %v285
  %v287 = vtanh.pop %v286
  %v288 = vsub.f32 1.0, %v264
  %v289 = vmul.f32 %v288, %v287
  %v290 = vmul.f32 %v264, %v119
  %v291 = vadd.f32 %v289, %v290
  %vm292 = vcmask 254976
  %293 = vst.msk [vmem:[%s4] sm:$0x3] %vm292, %v211
  %s294 = scalar_lea.vmem %s51, 14
  %295 = vst.msk [vmem:[%s294] sm:$0x3] %vm292, %v291
  %s296 = scalar_lea.vmem %s0, 2
  %v297 = vld [vmem:[%s296] sm:$0x3]
  %s298 = scalar_lea.vmem %s0, 18
  %v299 = vld [vmem:[%s298] sm:$0x3]
  %s300 = scalar_lea.vmem %s0, 34
  %v301 = vld [vmem:[%s300] sm:$0x3]
  %s302 = scalar_lea.vmem %s43, 12
  %v303 = vld [vmem:[%s302] sm:$0x3]
  %s304 = scalar_lea.vmem %s43, 28
  %v305 = vld [vmem:[%s304] sm:$0x3]
  %s306 = scalar_lea.vmem %s43, 44
  %v307 = vld [vmem:[%s306] sm:$0x3]
  %v309 = vsel %vm131, %v211, 0
  %311 = vmatpush.msra.mxu0 0.0
  %312 = vmatpush.msra.mxu0 0.0
  %313 = vmatpush.msra.mxu0 0.0
  %314 = vmatpush.msra.mxu0 0.0
  %315 = vmatpush.msra.mxu0 0.0
  %316 = vmatpush.msra.mxu0 0.0
  %317 = vmatpush.msra.mxu0 0.0
  %318 = vmatpush.msra.mxu0 0.0
  %319 = vmatpush.msra.mxu0 0.0
  %320 = vmatpush.msra.mxu0 0.0
  %321 = vmatpush.msra.mxu0 0.0
  %322 = vmatpush.msra.mxu0 0.0
  %323 = vmatpush.msra.mxu0 %v82
  %324 = vmatpush.msra.mxu0 %v81
  %325 = vmatpush.msra.mxu0 %v80
  %326 = vmatpush.msra.mxu0 %v79
  %327 = vmatmul.f32.gmra.mxu0 %v309
  %v328 = vpop.f32.mrf.mxu0
  %v329 = vadd.f32 0.0, %v328
  %330 = vdwg.mxu0
  %331 = vmatpush.msra.mxu0 0.0
  %332 = vmatpush.msra.mxu0 0.0
  %333 = vmatpush.msra.mxu0 0.0
  %334 = vmatpush.msra.mxu0 0.0
  %335 = vmatpush.msra.mxu0 0.0
  %336 = vmatpush.msra.mxu0 0.0
  %337 = vmatpush.msra.mxu0 0.0
  %338 = vmatpush.msra.mxu0 0.0
  %339 = vmatpush.msra.mxu0 0.0
  %340 = vmatpush.msra.mxu0 0.0
  %341 = vmatpush.msra.mxu0 0.0
  %342 = vmatpush.msra.mxu0 0.0
  %343 = vmatpush.msra.mxu0 %v87
  %344 = vmatpush.msra.mxu0 %v86
  %345 = vmatpush.msra.mxu0 %v85
  %346 = vmatpush.msra.mxu0 %v84
  %347 = vmatmul.f32.gmra.mxu0 %v309
  %v348 = vpop.f32.mrf.mxu0
  %v349 = vadd.f32 0.0, %v348
  %350 = vdwg.mxu0
  %v351 = vadd.f32 %v297, %v329
  %v352 = vmul.f32 %v351, 0.5
  %v353 = vtanh.pop %v352
  %v354 = vmul.f32 %v353, 0.5
  %v355 = vadd.f32 %v354, 0.5
  %v356 = vadd.f32 %v299, %v349
  %v357 = vmul.f32 %v356, 0.5
  %v358 = vtanh.pop %v357
  %v359 = vmul.f32 %v358, 0.5
  %v360 = vadd.f32 %v359, 0.5
  %361 = vmatpush.msra.mxu0 0.0
  %362 = vmatpush.msra.mxu0 0.0
  %363 = vmatpush.msra.mxu0 0.0
  %364 = vmatpush.msra.mxu0 0.0
  %365 = vmatpush.msra.mxu0 0.0
  %366 = vmatpush.msra.mxu0 0.0
  %367 = vmatpush.msra.mxu0 0.0
  %368 = vmatpush.msra.mxu0 0.0
  %369 = vmatpush.msra.mxu0 0.0
  %370 = vmatpush.msra.mxu0 0.0
  %371 = vmatpush.msra.mxu0 0.0
  %372 = vmatpush.msra.mxu0 0.0
  %373 = vmatpush.msra.mxu0 %v92
  %374 = vmatpush.msra.mxu0 %v91
  %375 = vmatpush.msra.mxu0 %v90
  %376 = vmatpush.msra.mxu0 %v89
  %377 = vmatmul.f32.gmra.mxu0 %v309
  %v378 = vpop.f32.mrf.mxu0
  %v379 = vadd.f32 %v110, %v378
  %380 = vdwg.mxu0
  %v381 = vmul.f32 %v355, %v379
  %v382 = vadd.f32 %v301, %v381
  %v383 = vtanh.pop %v382
  %v384 = vsub.f32 1.0, %v360
  %v385 = vmul.f32 %v384, %v383
  %v386 = vmul.f32 %v360, %v211
  %v387 = vadd.f32 %v385, %v386
  %v389 = vsel %vm131, %v291, 0
  %391 = vmatpush.msra.mxu0 0.0
  %392 = vmatpush.msra.mxu0 0.0
  %393 = vmatpush.msra.mxu0 0.0
  %394 = vmatpush.msra.mxu0 0.0
  %395 = vmatpush.msra.mxu0 0.0
  %396 = vmatpush.msra.mxu0 0.0
  %397 = vmatpush.msra.mxu0 0.0
  %398 = vmatpush.msra.mxu0 0.0
  %399 = vmatpush.msra.mxu0 0.0
  %400 = vmatpush.msra.mxu0 0.0
  %401 = vmatpush.msra.mxu0 0.0
  %402 = vmatpush.msra.mxu0 0.0
  %403 = vmatpush.msra.mxu0 %v97
  %404 = vmatpush.msra.mxu0 %v96
  %405 = vmatpush.msra.mxu0 %v95
  %406 = vmatpush.msra.mxu0 %v94
  %407 = vmatmul.f32.gmra.mxu0 %v389
  %v408 = vpop.f32.mrf.mxu0
  %v409 = vadd.f32 0.0, %v408
  %410 = vdwg.mxu0
  %411 = vmatpush.msra.mxu0 0.0
  %412 = vmatpush.msra.mxu0 0.0
  %413 = vmatpush.msra.mxu0 0.0
  %414 = vmatpush.msra.mxu0 0.0
  %415 = vmatpush.msra.mxu0 0.0
  %416 = vmatpush.msra.mxu0 0.0
  %417 = vmatpush.msra.mxu0 0.0
  %418 = vmatpush.msra.mxu0 0.0
  %419 = vmatpush.msra.mxu0 0.0
  %420 = vmatpush.msra.mxu0 0.0
  %421 = vmatpush.msra.mxu0 0.0
  %422 = vmatpush.msra.mxu0 0.0
  %423 = vmatpush.msra.mxu0 %v102
  %424 = vmatpush.msra.mxu0 %v101
  %425 = vmatpush.msra.mxu0 %v100
  %426 = vmatpush.msra.mxu0 %v99
  %427 = vmatmul.f32.gmra.mxu0 %v389
  %v428 = vpop.f32.mrf.mxu0
  %v429 = vadd.f32 0.0, %v428
  %430 = vdwg.mxu0
  %v431 = vadd.f32 %v303, %v409
  %v432 = vmul.f32 %v431, 0.5
  %v433 = vtanh.pop %v432
  %v434 = vmul.f32 %v433, 0.5
  %v435 = vadd.f32 %v434, 0.5
  %v436 = vadd.f32 %v305, %v429
  %v437 = vmul.f32 %v436, 0.5
  %v438 = vtanh.pop %v437
  %v439 = vmul.f32 %v438, 0.5
  %v440 = vadd.f32 %v439, 0.5
  %441 = vmatpush.msra.mxu0 0.0
  %442 = vmatpush.msra.mxu0 0.0
  %443 = vmatpush.msra.mxu0 0.0
  %444 = vmatpush.msra.mxu0 0.0
  %445 = vmatpush.msra.mxu0 0.0
  %446 = vmatpush.msra.mxu0 0.0
  %447 = vmatpush.msra.mxu0 0.0
  %448 = vmatpush.msra.mxu0 0.0
  %449 = vmatpush.msra.mxu0 0.0
  %450 = vmatpush.msra.mxu0 0.0
  %451 = vmatpush.msra.mxu0 0.0
  %452 = vmatpush.msra.mxu0 0.0
  %453 = vmatpush.msra.mxu0 %v107
  %454 = vmatpush.msra.mxu0 %v106
  %455 = vmatpush.msra.mxu0 %v105
  %456 = vmatpush.msra.mxu0 %v104
  %457 = vmatmul.f32.gmra.mxu0 %v389
  %v458 = vpop.f32.mrf.mxu0
  %v459 = vadd.f32 %v115, %v458
  %460 = vdwg.mxu0
  %v461 = vmul.f32 %v435, %v459
  %v462 = vadd.f32 %v307, %v461
  %v463 = vtanh.pop %v462
  %v464 = vsub.f32 1.0, %v440
  %v465 = vmul.f32 %v464, %v463
  %v466 = vmul.f32 %v440, %v291
  %v467 = vadd.f32 %v465, %v466
  %s468 = scalar_lea.vmem %s4, 2
  %469 = vst.msk [vmem:[%s468] sm:$0x3] %vm292, %v387
  %s470 = scalar_lea.vmem %s51, 12
  %471 = vst.msk [vmem:[%s470] sm:$0x3] %vm292, %v467
  %s472 = scalar_lea.vmem %s0, 4
  %v473 = vld [vmem:[%s472] sm:$0x3]
  %s474 = scalar_lea.vmem %s0, 20
  %v475 = vld [vmem:[%s474] sm:$0x3]
  %s476 = scalar_lea.vmem %s0, 36
  %v477 = vld [vmem:[%s476] sm:$0x3]
  %s478 = scalar_lea.vmem %s43, 10
  %v479 = vld [vmem:[%s478] sm:$0x3]
  %s480 = scalar_lea.vmem %s43, 26
  %v481 = vld [vmem:[%s480] sm:$0x3]
  %s482 = scalar_lea.vmem %s43, 42
  %v483 = vld [vmem:[%s482] sm:$0x3]
  %v485 = vsel %vm131, %v387, 0
  %487 = vmatpush.msra.mxu0 0.0
  %488 = vmatpush.msra.mxu0 0.0
  %489 = vmatpush.msra.mxu0 0.0
  %490 = vmatpush.msra.mxu0 0.0
  %491 = vmatpush.msra.mxu0 0.0
  %492 = vmatpush.msra.mxu0 0.0
  %493 = vmatpush.msra.mxu0 0.0
  %494 = vmatpush.msra.mxu0 0.0
  %495 = vmatpush.msra.mxu0 0.0
  %496 = vmatpush.msra.mxu0 0.0
  %497 = vmatpush.msra.mxu0 0.0
  %498 = vmatpush.msra.mxu0 0.0
  %499 = vmatpush.msra.mxu0 %v82
  %500 = vmatpush.msra.mxu0 %v81
  %501 = vmatpush.msra.mxu0 %v80
  %502 = vmatpush.msra.mxu0 %v79
  %503 = vmatmul.f32.gmra.mxu0 %v485
  %v504 = vpop.f32.mrf.mxu0
  %v505 = vadd.f32 0.0, %v504
  %506 = vdwg.mxu0
  %507 = vmatpush.msra.mxu0 0.0
  %508 = vmatpush.msra.mxu0 0.0
  %509 = vmatpush.msra.mxu0 0.0
  %510 = vmatpush.msra.mxu0 0.0
  %511 = vmatpush.msra.mxu0 0.0
  %512 = vmatpush.msra.mxu0 0.0
  %513 = vmatpush.msra.mxu0 0.0
  %514 = vmatpush.msra.mxu0 0.0
  %515 = vmatpush.msra.mxu0 0.0
  %516 = vmatpush.msra.mxu0 0.0
  %517 = vmatpush.msra.mxu0 0.0
  %518 = vmatpush.msra.mxu0 0.0
  %519 = vmatpush.msra.mxu0 %v87
  %520 = vmatpush.msra.mxu0 %v86
  %521 = vmatpush.msra.mxu0 %v85
  %522 = vmatpush.msra.mxu0 %v84
  %523 = vmatmul.f32.gmra.mxu0 %v485
  %v524 = vpop.f32.mrf.mxu0
  %v525 = vadd.f32 0.0, %v524
  %526 = vdwg.mxu0
  %v527 = vadd.f32 %v473, %v505
  %v528 = vmul.f32 %v527, 0.5
  %v529 = vtanh.pop %v528
  %v530 = vmul.f32 %v529, 0.5
  %v531 = vadd.f32 %v530, 0.5
  %v532 = vadd.f32 %v475, %v525
  %v533 = vmul.f32 %v532, 0.5
  %v534 = vtanh.pop %v533
  %v535 = vmul.f32 %v534, 0.5
  %v536 = vadd.f32 %v535, 0.5
  %537 = vmatpush.msra.mxu0 0.0
  %538 = vmatpush.msra.mxu0 0.0
  %539 = vmatpush.msra.mxu0 0.0
  %540 = vmatpush.msra.mxu0 0.0
  %541 = vmatpush.msra.mxu0 0.0
  %542 = vmatpush.msra.mxu0 0.0
  %543 = vmatpush.msra.mxu0 0.0
  %544 = vmatpush.msra.mxu0 0.0
  %545 = vmatpush.msra.mxu0 0.0
  %546 = vmatpush.msra.mxu0 0.0
  %547 = vmatpush.msra.mxu0 0.0
  %548 = vmatpush.msra.mxu0 0.0
  %549 = vmatpush.msra.mxu0 %v92
  %550 = vmatpush.msra.mxu0 %v91
  %551 = vmatpush.msra.mxu0 %v90
  %552 = vmatpush.msra.mxu0 %v89
  %553 = vmatmul.f32.gmra.mxu0 %v485
  %v554 = vpop.f32.mrf.mxu0
  %v555 = vadd.f32 %v110, %v554
  %556 = vdwg.mxu0
  %v557 = vmul.f32 %v531, %v555
  %v558 = vadd.f32 %v477, %v557
  %v559 = vtanh.pop %v558
  %v560 = vsub.f32 1.0, %v536
  %v561 = vmul.f32 %v560, %v559
  %v562 = vmul.f32 %v536, %v387
  %v563 = vadd.f32 %v561, %v562
  %v565 = vsel %vm131, %v467, 0
  %567 = vmatpush.msra.mxu0 0.0
  %568 = vmatpush.msra.mxu0 0.0
  %569 = vmatpush.msra.mxu0 0.0
  %570 = vmatpush.msra.mxu0 0.0
  %571 = vmatpush.msra.mxu0 0.0
  %572 = vmatpush.msra.mxu0 0.0
  %573 = vmatpush.msra.mxu0 0.0
  %574 = vmatpush.msra.mxu0 0.0
  %575 = vmatpush.msra.mxu0 0.0
  %576 = vmatpush.msra.mxu0 0.0
  %577 = vmatpush.msra.mxu0 0.0
  %578 = vmatpush.msra.mxu0 0.0
  %579 = vmatpush.msra.mxu0 %v97
  %580 = vmatpush.msra.mxu0 %v96
  %581 = vmatpush.msra.mxu0 %v95
  %582 = vmatpush.msra.mxu0 %v94
  %583 = vmatmul.f32.gmra.mxu0 %v565
  %v584 = vpop.f32.mrf.mxu0
  %v585 = vadd.f32 0.0, %v584
  %586 = vdwg.mxu0
  %587 = vmatpush.msra.mxu0 0.0
  %588 = vmatpush.msra.mxu0 0.0
  %589 = vmatpush.msra.mxu0 0.0
  %590 = vmatpush.msra.mxu0 0.0
  %591 = vmatpush.msra.mxu0 0.0
  %592 = vmatpush.msra.mxu0 0.0
  %593 = vmatpush.msra.mxu0 0.0
  %594 = vmatpush.msra.mxu0 0.0
  %595 = vmatpush.msra.mxu0 0.0
  %596 = vmatpush.msra.mxu0 0.0
  %597 = vmatpush.msra.mxu0 0.0
  %598 = vmatpush.msra.mxu0 0.0
  %599 = vmatpush.msra.mxu0 %v102
  %600 = vmatpush.msra.mxu0 %v101
  %601 = vmatpush.msra.mxu0 %v100
  %602 = vmatpush.msra.mxu0 %v99
  %603 = vmatmul.f32.gmra.mxu0 %v565
  %v604 = vpop.f32.mrf.mxu0
  %v605 = vadd.f32 0.0, %v604
  %606 = vdwg.mxu0
  %v607 = vadd.f32 %v479, %v585
  %v608 = vmul.f32 %v607, 0.5
  %v609 = vtanh.pop %v608
  %v610 = vmul.f32 %v609, 0.5
  %v611 = vadd.f32 %v610, 0.5
  %v612 = vadd.f32 %v481, %v605
  %v613 = vmul.f32 %v612, 0.5
  %v614 = vtanh.pop %v613
  %v615 = vmul.f32 %v614, 0.5
  %v616 = vadd.f32 %v615, 0.5
  %617 = vmatpush.msra.mxu0 0.0
  %618 = vmatpush.msra.mxu0 0.0
  %619 = vmatpush.msra.mxu0 0.0
  %620 = vmatpush.msra.mxu0 0.0
  %621 = vmatpush.msra.mxu0 0.0
  %622 = vmatpush.msra.mxu0 0.0
  %623 = vmatpush.msra.mxu0 0.0
  %624 = vmatpush.msra.mxu0 0.0
  %625 = vmatpush.msra.mxu0 0.0
  %626 = vmatpush.msra.mxu0 0.0
  %627 = vmatpush.msra.mxu0 0.0
  %628 = vmatpush.msra.mxu0 0.0
  %629 = vmatpush.msra.mxu0 %v107
  %630 = vmatpush.msra.mxu0 %v106
  %631 = vmatpush.msra.mxu0 %v105
  %632 = vmatpush.msra.mxu0 %v104
  %633 = vmatmul.f32.gmra.mxu0 %v565
  %v634 = vpop.f32.mrf.mxu0
  %v635 = vadd.f32 %v115, %v634
  %636 = vdwg.mxu0
  %v637 = vmul.f32 %v611, %v635
  %v638 = vadd.f32 %v483, %v637
  %v639 = vtanh.pop %v638
  %v640 = vsub.f32 1.0, %v616
  %v641 = vmul.f32 %v640, %v639
  %v642 = vmul.f32 %v616, %v467
  %v643 = vadd.f32 %v641, %v642
  %s644 = scalar_lea.vmem %s4, 4
  %645 = vst.msk [vmem:[%s644] sm:$0x3] %vm292, %v563
  %s646 = scalar_lea.vmem %s51, 10
  %647 = vst.msk [vmem:[%s646] sm:$0x3] %vm292, %v643
  %s648 = scalar_lea.vmem %s0, 6
  %v649 = vld [vmem:[%s648] sm:$0x3]
  %s650 = scalar_lea.vmem %s0, 22
  %v651 = vld [vmem:[%s650] sm:$0x3]
  %s652 = scalar_lea.vmem %s0, 38
  %v653 = vld [vmem:[%s652] sm:$0x3]
  %s654 = scalar_lea.vmem %s43, 8
  %v655 = vld [vmem:[%s654] sm:$0x3]
  %s656 = scalar_lea.vmem %s43, 24
  %v657 = vld [vmem:[%s656] sm:$0x3]
  %s658 = scalar_lea.vmem %s43, 40
  %v659 = vld [vmem:[%s658] sm:$0x3]
  %v661 = vsel %vm131, %v563, 0
  %663 = vmatpush.msra.mxu0 0.0
  %664 = vmatpush.msra.mxu0 0.0
  %665 = vmatpush.msra.mxu0 0.0
  %666 = vmatpush.msra.mxu0 0.0
  %667 = vmatpush.msra.mxu0 0.0
  %668 = vmatpush.msra.mxu0 0.0
  %669 = vmatpush.msra.mxu0 0.0
  %670 = vmatpush.msra.mxu0 0.0
  %671 = vmatpush.msra.mxu0 0.0
  %672 = vmatpush.msra.mxu0 0.0
  %673 = vmatpush.msra.mxu0 0.0
  %674 = vmatpush.msra.mxu0 0.0
  %675 = vmatpush.msra.mxu0 %v82
  %676 = vmatpush.msra.mxu0 %v81
  %677 = vmatpush.msra.mxu0 %v80
  %678 = vmatpush.msra.mxu0 %v79
  %679 = vmatmul.f32.gmra.mxu0 %v661
  %v680 = vpop.f32.mrf.mxu0
  %v681 = vadd.f32 0.0, %v680
  %682 = vdwg.mxu0
  %683 = vmatpush.msra.mxu0 0.0
  %684 = vmatpush.msra.mxu0 0.0
  %685 = vmatpush.msra.mxu0 0.0
  %686 = vmatpush.msra.mxu0 0.0
  %687 = vmatpush.msra.mxu0 0.0
  %688 = vmatpush.msra.mxu0 0.0
  %689 = vmatpush.msra.mxu0 0.0
  %690 = vmatpush.msra.mxu0 0.0
  %691 = vmatpush.msra.mxu0 0.0
  %692 = vmatpush.msra.mxu0 0.0
  %693 = vmatpush.msra.mxu0 0.0
  %694 = vmatpush.msra.mxu0 0.0
  %695 = vmatpush.msra.mxu0 %v87
  %696 = vmatpush.msra.mxu0 %v86
  %697 = vmatpush.msra.mxu0 %v85
  %698 = vmatpush.msra.mxu0 %v84
  %699 = vmatmul.f32.gmra.mxu0 %v661
  %v700 = vpop.f32.mrf.mxu0
  %v701 = vadd.f32 0.0, %v700
  %702 = vdwg.mxu0
  %v703 = vadd.f32 %v649, %v681
  %v704 = vmul.f32 %v703, 0.5
  %v705 = vtanh.pop %v704
  %v706 = vmul.f32 %v705, 0.5
  %v707 = vadd.f32 %v706, 0.5
  %v708 = vadd.f32 %v651, %v701
  %v709 = vmul.f32 %v708, 0.5
  %v710 = vtanh.pop %v709
  %v711 = vmul.f32 %v710, 0.5
  %v712 = vadd.f32 %v711, 0.5
  %713 = vmatpush.msra.mxu0 0.0
  %714 = vmatpush.msra.mxu0 0.0
  %715 = vmatpush.msra.mxu0 0.0
  %716 = vmatpush.msra.mxu0 0.0
  %717 = vmatpush.msra.mxu0 0.0
  %718 = vmatpush.msra.mxu0 0.0
  %719 = vmatpush.msra.mxu0 0.0
  %720 = vmatpush.msra.mxu0 0.0
  %721 = vmatpush.msra.mxu0 0.0
  %722 = vmatpush.msra.mxu0 0.0
  %723 = vmatpush.msra.mxu0 0.0
  %724 = vmatpush.msra.mxu0 0.0
  %725 = vmatpush.msra.mxu0 %v92
  %726 = vmatpush.msra.mxu0 %v91
  %727 = vmatpush.msra.mxu0 %v90
  %728 = vmatpush.msra.mxu0 %v89
  %729 = vmatmul.f32.gmra.mxu0 %v661
  %v730 = vpop.f32.mrf.mxu0
  %v731 = vadd.f32 %v110, %v730
  %732 = vdwg.mxu0
  %v733 = vmul.f32 %v707, %v731
  %v734 = vadd.f32 %v653, %v733
  %v735 = vtanh.pop %v734
  %v736 = vsub.f32 1.0, %v712
  %v737 = vmul.f32 %v736, %v735
  %v738 = vmul.f32 %v712, %v563
  %v739 = vadd.f32 %v737, %v738
  %v741 = vsel %vm131, %v643, 0
  %743 = vmatpush.msra.mxu0 0.0
  %744 = vmatpush.msra.mxu0 0.0
  %745 = vmatpush.msra.mxu0 0.0
  %746 = vmatpush.msra.mxu0 0.0
  %747 = vmatpush.msra.mxu0 0.0
  %748 = vmatpush.msra.mxu0 0.0
  %749 = vmatpush.msra.mxu0 0.0
  %750 = vmatpush.msra.mxu0 0.0
  %751 = vmatpush.msra.mxu0 0.0
  %752 = vmatpush.msra.mxu0 0.0
  %753 = vmatpush.msra.mxu0 0.0
  %754 = vmatpush.msra.mxu0 0.0
  %755 = vmatpush.msra.mxu0 %v97
  %756 = vmatpush.msra.mxu0 %v96
  %757 = vmatpush.msra.mxu0 %v95
  %758 = vmatpush.msra.mxu0 %v94
  %759 = vmatmul.f32.gmra.mxu0 %v741
  %v760 = vpop.f32.mrf.mxu0
  %v761 = vadd.f32 0.0, %v760
  %762 = vdwg.mxu0
  %763 = vmatpush.msra.mxu0 0.0
  %764 = vmatpush.msra.mxu0 0.0
  %765 = vmatpush.msra.mxu0 0.0
  %766 = vmatpush.msra.mxu0 0.0
  %767 = vmatpush.msra.mxu0 0.0
  %768 = vmatpush.msra.mxu0 0.0
  %769 = vmatpush.msra.mxu0 0.0
  %770 = vmatpush.msra.mxu0 0.0
  %771 = vmatpush.msra.mxu0 0.0
  %772 = vmatpush.msra.mxu0 0.0
  %773 = vmatpush.msra.mxu0 0.0
  %774 = vmatpush.msra.mxu0 0.0
  %775 = vmatpush.msra.mxu0 %v102
  %776 = vmatpush.msra.mxu0 %v101
  %777 = vmatpush.msra.mxu0 %v100
  %778 = vmatpush.msra.mxu0 %v99
  %779 = vmatmul.f32.gmra.mxu0 %v741
  %v780 = vpop.f32.mrf.mxu0
  %v781 = vadd.f32 0.0, %v780
  %782 = vdwg.mxu0
  %v783 = vadd.f32 %v655, %v761
  %v784 = vmul.f32 %v783, 0.5
  %v785 = vtanh.pop %v784
  %v786 = vmul.f32 %v785, 0.5
  %v787 = vadd.f32 %v786, 0.5
  %v788 = vadd.f32 %v657, %v781
  %v789 = vmul.f32 %v788, 0.5
  %v790 = vtanh.pop %v789
  %v791 = vmul.f32 %v790, 0.5
  %v792 = vadd.f32 %v791, 0.5
  %793 = vmatpush.msra.mxu0 0.0
  %794 = vmatpush.msra.mxu0 0.0
  %795 = vmatpush.msra.mxu0 0.0
  %796 = vmatpush.msra.mxu0 0.0
  %797 = vmatpush.msra.mxu0 0.0
  %798 = vmatpush.msra.mxu0 0.0
  %799 = vmatpush.msra.mxu0 0.0
  %800 = vmatpush.msra.mxu0 0.0
  %801 = vmatpush.msra.mxu0 0.0
  %802 = vmatpush.msra.mxu0 0.0
  %803 = vmatpush.msra.mxu0 0.0
  %804 = vmatpush.msra.mxu0 0.0
  %805 = vmatpush.msra.mxu0 %v107
  %806 = vmatpush.msra.mxu0 %v106
  %807 = vmatpush.msra.mxu0 %v105
  %808 = vmatpush.msra.mxu0 %v104
  %809 = vmatmul.f32.gmra.mxu0 %v741
  %v810 = vpop.f32.mrf.mxu0
  %v811 = vadd.f32 %v115, %v810
  %812 = vdwg.mxu0
  %v813 = vmul.f32 %v787, %v811
  %v814 = vadd.f32 %v659, %v813
  %v815 = vtanh.pop %v814
  %v816 = vsub.f32 1.0, %v792
  %v817 = vmul.f32 %v816, %v815
  %v818 = vmul.f32 %v792, %v643
  %v819 = vadd.f32 %v817, %v818
  %s820 = scalar_lea.vmem %s4, 6
  %821 = vst.msk [vmem:[%s820] sm:$0x3] %vm292, %v739
  %s822 = scalar_lea.vmem %s51, 8
  %823 = vst.msk [vmem:[%s822] sm:$0x3] %vm292, %v819
  %s824 = scalar_lea.vmem %s0, 8
  %v825 = vld [vmem:[%s824] sm:$0x3]
  %s826 = scalar_lea.vmem %s0, 24
  %v827 = vld [vmem:[%s826] sm:$0x3]
  %s828 = scalar_lea.vmem %s0, 40
  %v829 = vld [vmem:[%s828] sm:$0x3]
  %s830 = scalar_lea.vmem %s43, 6
  %v831 = vld [vmem:[%s830] sm:$0x3]
  %s832 = scalar_lea.vmem %s43, 22
  %v833 = vld [vmem:[%s832] sm:$0x3]
  %s834 = scalar_lea.vmem %s43, 38
  %v835 = vld [vmem:[%s834] sm:$0x3]
  %v837 = vsel %vm131, %v739, 0
  %839 = vmatpush.msra.mxu0 0.0
  %840 = vmatpush.msra.mxu0 0.0
  %841 = vmatpush.msra.mxu0 0.0
  %842 = vmatpush.msra.mxu0 0.0
  %843 = vmatpush.msra.mxu0 0.0
  %844 = vmatpush.msra.mxu0 0.0
  %845 = vmatpush.msra.mxu0 0.0
  %846 = vmatpush.msra.mxu0 0.0
  %847 = vmatpush.msra.mxu0 0.0
  %848 = vmatpush.msra.mxu0 0.0
  %849 = vmatpush.msra.mxu0 0.0
  %850 = vmatpush.msra.mxu0 0.0
  %851 = vmatpush.msra.mxu0 %v82
  %852 = vmatpush.msra.mxu0 %v81
  %853 = vmatpush.msra.mxu0 %v80
  %854 = vmatpush.msra.mxu0 %v79
  %855 = vmatmul.f32.gmra.mxu0 %v837
  %v856 = vpop.f32.mrf.mxu0
  %v857 = vadd.f32 0.0, %v856
  %858 = vdwg.mxu0
  %859 = vmatpush.msra.mxu0 0.0
  %860 = vmatpush.msra.mxu0 0.0
  %861 = vmatpush.msra.mxu0 0.0
  %862 = vmatpush.msra.mxu0 0.0
  %863 = vmatpush.msra.mxu0 0.0
  %864 = vmatpush.msra.mxu0 0.0
  %865 = vmatpush.msra.mxu0 0.0
  %866 = vmatpush.msra.mxu0 0.0
  %867 = vmatpush.msra.mxu0 0.0
  %868 = vmatpush.msra.mxu0 0.0
  %869 = vmatpush.msra.mxu0 0.0
  %870 = vmatpush.msra.mxu0 0.0
  %871 = vmatpush.msra.mxu0 %v87
  %872 = vmatpush.msra.mxu0 %v86
  %873 = vmatpush.msra.mxu0 %v85
  %874 = vmatpush.msra.mxu0 %v84
  %875 = vmatmul.f32.gmra.mxu0 %v837
  %v876 = vpop.f32.mrf.mxu0
  %v877 = vadd.f32 0.0, %v876
  %878 = vdwg.mxu0
  %v879 = vadd.f32 %v825, %v857
  %v880 = vmul.f32 %v879, 0.5
  %v881 = vtanh.pop %v880
  %v882 = vmul.f32 %v881, 0.5
  %v883 = vadd.f32 %v882, 0.5
  %v884 = vadd.f32 %v827, %v877
  %v885 = vmul.f32 %v884, 0.5
  %v886 = vtanh.pop %v885
  %v887 = vmul.f32 %v886, 0.5
  %v888 = vadd.f32 %v887, 0.5
  %889 = vmatpush.msra.mxu0 0.0
  %890 = vmatpush.msra.mxu0 0.0
  %891 = vmatpush.msra.mxu0 0.0
  %892 = vmatpush.msra.mxu0 0.0
  %893 = vmatpush.msra.mxu0 0.0
  %894 = vmatpush.msra.mxu0 0.0
  %895 = vmatpush.msra.mxu0 0.0
  %896 = vmatpush.msra.mxu0 0.0
  %897 = vmatpush.msra.mxu0 0.0
  %898 = vmatpush.msra.mxu0 0.0
  %899 = vmatpush.msra.mxu0 0.0
  %900 = vmatpush.msra.mxu0 0.0
  %901 = vmatpush.msra.mxu0 %v92
  %902 = vmatpush.msra.mxu0 %v91
  %903 = vmatpush.msra.mxu0 %v90
  %904 = vmatpush.msra.mxu0 %v89
  %905 = vmatmul.f32.gmra.mxu0 %v837
  %v906 = vpop.f32.mrf.mxu0
  %v907 = vadd.f32 %v110, %v906
  %908 = vdwg.mxu0
  %v909 = vmul.f32 %v883, %v907
  %v910 = vadd.f32 %v829, %v909
  %v911 = vtanh.pop %v910
  %v912 = vsub.f32 1.0, %v888
  %v913 = vmul.f32 %v912, %v911
  %v914 = vmul.f32 %v888, %v739
  %v915 = vadd.f32 %v913, %v914
  %v917 = vsel %vm131, %v819, 0
  %919 = vmatpush.msra.mxu0 0.0
  %920 = vmatpush.msra.mxu0 0.0
  %921 = vmatpush.msra.mxu0 0.0
  %922 = vmatpush.msra.mxu0 0.0
  %923 = vmatpush.msra.mxu0 0.0
  %924 = vmatpush.msra.mxu0 0.0
  %925 = vmatpush.msra.mxu0 0.0
  %926 = vmatpush.msra.mxu0 0.0
  %927 = vmatpush.msra.mxu0 0.0
  %928 = vmatpush.msra.mxu0 0.0
  %929 = vmatpush.msra.mxu0 0.0
  %930 = vmatpush.msra.mxu0 0.0
  %931 = vmatpush.msra.mxu0 %v97
  %932 = vmatpush.msra.mxu0 %v96
  %933 = vmatpush.msra.mxu0 %v95
  %934 = vmatpush.msra.mxu0 %v94
  %935 = vmatmul.f32.gmra.mxu0 %v917
  %v936 = vpop.f32.mrf.mxu0
  %v937 = vadd.f32 0.0, %v936
  %938 = vdwg.mxu0
  %939 = vmatpush.msra.mxu0 0.0
  %940 = vmatpush.msra.mxu0 0.0
  %941 = vmatpush.msra.mxu0 0.0
  %942 = vmatpush.msra.mxu0 0.0
  %943 = vmatpush.msra.mxu0 0.0
  %944 = vmatpush.msra.mxu0 0.0
  %945 = vmatpush.msra.mxu0 0.0
  %946 = vmatpush.msra.mxu0 0.0
  %947 = vmatpush.msra.mxu0 0.0
  %948 = vmatpush.msra.mxu0 0.0
  %949 = vmatpush.msra.mxu0 0.0
  %950 = vmatpush.msra.mxu0 0.0
  %951 = vmatpush.msra.mxu0 %v102
  %952 = vmatpush.msra.mxu0 %v101
  %953 = vmatpush.msra.mxu0 %v100
  %954 = vmatpush.msra.mxu0 %v99
  %955 = vmatmul.f32.gmra.mxu0 %v917
  %v956 = vpop.f32.mrf.mxu0
  %v957 = vadd.f32 0.0, %v956
  %958 = vdwg.mxu0
  %v959 = vadd.f32 %v831, %v937
  %v960 = vmul.f32 %v959, 0.5
  %v961 = vtanh.pop %v960
  %v962 = vmul.f32 %v961, 0.5
  %v963 = vadd.f32 %v962, 0.5
  %v964 = vadd.f32 %v833, %v957
  %v965 = vmul.f32 %v964, 0.5
  %v966 = vtanh.pop %v965
  %v967 = vmul.f32 %v966, 0.5
  %v968 = vadd.f32 %v967, 0.5
  %969 = vmatpush.msra.mxu0 0.0
  %970 = vmatpush.msra.mxu0 0.0
  %971 = vmatpush.msra.mxu0 0.0
  %972 = vmatpush.msra.mxu0 0.0
  %973 = vmatpush.msra.mxu0 0.0
  %974 = vmatpush.msra.mxu0 0.0
  %975 = vmatpush.msra.mxu0 0.0
  %976 = vmatpush.msra.mxu0 0.0
  %977 = vmatpush.msra.mxu0 0.0
  %978 = vmatpush.msra.mxu0 0.0
  %979 = vmatpush.msra.mxu0 0.0
  %980 = vmatpush.msra.mxu0 0.0
  %981 = vmatpush.msra.mxu0 %v107
  %982 = vmatpush.msra.mxu0 %v106
  %983 = vmatpush.msra.mxu0 %v105
  %984 = vmatpush.msra.mxu0 %v104
  %985 = vmatmul.f32.gmra.mxu0 %v917
  %v986 = vpop.f32.mrf.mxu0
  %v987 = vadd.f32 %v115, %v986
  %988 = vdwg.mxu0
  %v989 = vmul.f32 %v963, %v987
  %v990 = vadd.f32 %v835, %v989
  %v991 = vtanh.pop %v990
  %v992 = vsub.f32 1.0, %v968
  %v993 = vmul.f32 %v992, %v991
  %v994 = vmul.f32 %v968, %v819
  %v995 = vadd.f32 %v993, %v994
  %s996 = scalar_lea.vmem %s4, 8
  %997 = vst.msk [vmem:[%s996] sm:$0x3] %vm292, %v915
  %s998 = scalar_lea.vmem %s51, 6
  %999 = vst.msk [vmem:[%s998] sm:$0x3] %vm292, %v995
  %s1000 = scalar_lea.vmem %s0, 10
  %v1001 = vld [vmem:[%s1000] sm:$0x3]
  %s1002 = scalar_lea.vmem %s0, 26
  %v1003 = vld [vmem:[%s1002] sm:$0x3]
  %s1004 = scalar_lea.vmem %s0, 42
  %v1005 = vld [vmem:[%s1004] sm:$0x3]
  %s1006 = scalar_lea.vmem %s43, 4
  %v1007 = vld [vmem:[%s1006] sm:$0x3]
  %s1008 = scalar_lea.vmem %s43, 20
  %v1009 = vld [vmem:[%s1008] sm:$0x3]
  %s1010 = scalar_lea.vmem %s43, 36
  %v1011 = vld [vmem:[%s1010] sm:$0x3]
  %v1013 = vsel %vm131, %v915, 0
  %1015 = vmatpush.msra.mxu0 0.0
  %1016 = vmatpush.msra.mxu0 0.0
  %1017 = vmatpush.msra.mxu0 0.0
  %1018 = vmatpush.msra.mxu0 0.0
  %1019 = vmatpush.msra.mxu0 0.0
  %1020 = vmatpush.msra.mxu0 0.0
  %1021 = vmatpush.msra.mxu0 0.0
  %1022 = vmatpush.msra.mxu0 0.0
  %1023 = vmatpush.msra.mxu0 0.0
  %1024 = vmatpush.msra.mxu0 0.0
  %1025 = vmatpush.msra.mxu0 0.0
  %1026 = vmatpush.msra.mxu0 0.0
  %1027 = vmatpush.msra.mxu0 %v82
  %1028 = vmatpush.msra.mxu0 %v81
  %1029 = vmatpush.msra.mxu0 %v80
  %1030 = vmatpush.msra.mxu0 %v79
  %1031 = vmatmul.f32.gmra.mxu0 %v1013
  %v1032 = vpop.f32.mrf.mxu0
  %v1033 = vadd.f32 0.0, %v1032
  %1034 = vdwg.mxu0
  %1035 = vmatpush.msra.mxu0 0.0
  %1036 = vmatpush.msra.mxu0 0.0
  %1037 = vmatpush.msra.mxu0 0.0
  %1038 = vmatpush.msra.mxu0 0.0
  %1039 = vmatpush.msra.mxu0 0.0
  %1040 = vmatpush.msra.mxu0 0.0
  %1041 = vmatpush.msra.mxu0 0.0
  %1042 = vmatpush.msra.mxu0 0.0
  %1043 = vmatpush.msra.mxu0 0.0
  %1044 = vmatpush.msra.mxu0 0.0
  %1045 = vmatpush.msra.mxu0 0.0
  %1046 = vmatpush.msra.mxu0 0.0
  %1047 = vmatpush.msra.mxu0 %v87
  %1048 = vmatpush.msra.mxu0 %v86
  %1049 = vmatpush.msra.mxu0 %v85
  %1050 = vmatpush.msra.mxu0 %v84
  %1051 = vmatmul.f32.gmra.mxu0 %v1013
  %v1052 = vpop.f32.mrf.mxu0
  %v1053 = vadd.f32 0.0, %v1052
  %1054 = vdwg.mxu0
  %v1055 = vadd.f32 %v1001, %v1033
  %v1056 = vmul.f32 %v1055, 0.5
  %v1057 = vtanh.pop %v1056
  %v1058 = vmul.f32 %v1057, 0.5
  %v1059 = vadd.f32 %v1058, 0.5
  %v1060 = vadd.f32 %v1003, %v1053
  %v1061 = vmul.f32 %v1060, 0.5
  %v1062 = vtanh.pop %v1061
  %v1063 = vmul.f32 %v1062, 0.5
  %v1064 = vadd.f32 %v1063, 0.5
  %1065 = vmatpush.msra.mxu0 0.0
  %1066 = vmatpush.msra.mxu0 0.0
  %1067 = vmatpush.msra.mxu0 0.0
  %1068 = vmatpush.msra.mxu0 0.0
  %1069 = vmatpush.msra.mxu0 0.0
  %1070 = vmatpush.msra.mxu0 0.0
  %1071 = vmatpush.msra.mxu0 0.0
  %1072 = vmatpush.msra.mxu0 0.0
  %1073 = vmatpush.msra.mxu0 0.0
  %1074 = vmatpush.msra.mxu0 0.0
  %1075 = vmatpush.msra.mxu0 0.0
  %1076 = vmatpush.msra.mxu0 0.0
  %1077 = vmatpush.msra.mxu0 %v92
  %1078 = vmatpush.msra.mxu0 %v91
  %1079 = vmatpush.msra.mxu0 %v90
  %1080 = vmatpush.msra.mxu0 %v89
  %1081 = vmatmul.f32.gmra.mxu0 %v1013
  %v1082 = vpop.f32.mrf.mxu0
  %v1083 = vadd.f32 %v110, %v1082
  %1084 = vdwg.mxu0
  %v1085 = vmul.f32 %v1059, %v1083
  %v1086 = vadd.f32 %v1005, %v1085
  %v1087 = vtanh.pop %v1086
  %v1088 = vsub.f32 1.0, %v1064
  %v1089 = vmul.f32 %v1088, %v1087
  %v1090 = vmul.f32 %v1064, %v915
  %v1091 = vadd.f32 %v1089, %v1090
  %v1093 = vsel %vm131, %v995, 0
  %1095 = vmatpush.msra.mxu0 0.0
  %1096 = vmatpush.msra.mxu0 0.0
  %1097 = vmatpush.msra.mxu0 0.0
  %1098 = vmatpush.msra.mxu0 0.0
  %1099 = vmatpush.msra.mxu0 0.0
  %1100 = vmatpush.msra.mxu0 0.0
  %1101 = vmatpush.msra.mxu0 0.0
  %1102 = vmatpush.msra.mxu0 0.0
  %1103 = vmatpush.msra.mxu0 0.0
  %1104 = vmatpush.msra.mxu0 0.0
  %1105 = vmatpush.msra.mxu0 0.0
  %1106 = vmatpush.msra.mxu0 0.0
  %1107 = vmatpush.msra.mxu0 %v97
  %1108 = vmatpush.msra.mxu0 %v96
  %1109 = vmatpush.msra.mxu0 %v95
  %1110 = vmatpush.msra.mxu0 %v94
  %1111 = vmatmul.f32.gmra.mxu0 %v1093
  %v1112 = vpop.f32.mrf.mxu0
  %v1113 = vadd.f32 0.0, %v1112
  %1114 = vdwg.mxu0
  %1115 = vmatpush.msra.mxu0 0.0
  %1116 = vmatpush.msra.mxu0 0.0
  %1117 = vmatpush.msra.mxu0 0.0
  %1118 = vmatpush.msra.mxu0 0.0
  %1119 = vmatpush.msra.mxu0 0.0
  %1120 = vmatpush.msra.mxu0 0.0
  %1121 = vmatpush.msra.mxu0 0.0
  %1122 = vmatpush.msra.mxu0 0.0
  %1123 = vmatpush.msra.mxu0 0.0
  %1124 = vmatpush.msra.mxu0 0.0
  %1125 = vmatpush.msra.mxu0 0.0
  %1126 = vmatpush.msra.mxu0 0.0
  %1127 = vmatpush.msra.mxu0 %v102
  %1128 = vmatpush.msra.mxu0 %v101
  %1129 = vmatpush.msra.mxu0 %v100
  %1130 = vmatpush.msra.mxu0 %v99
  %1131 = vmatmul.f32.gmra.mxu0 %v1093
  %v1132 = vpop.f32.mrf.mxu0
  %v1133 = vadd.f32 0.0, %v1132
  %1134 = vdwg.mxu0
  %v1135 = vadd.f32 %v1007, %v1113
  %v1136 = vmul.f32 %v1135, 0.5
  %v1137 = vtanh.pop %v1136
  %v1138 = vmul.f32 %v1137, 0.5
  %v1139 = vadd.f32 %v1138, 0.5
  %v1140 = vadd.f32 %v1009, %v1133
  %v1141 = vmul.f32 %v1140, 0.5
  %v1142 = vtanh.pop %v1141
  %v1143 = vmul.f32 %v1142, 0.5
  %v1144 = vadd.f32 %v1143, 0.5
  %1145 = vmatpush.msra.mxu0 0.0
  %1146 = vmatpush.msra.mxu0 0.0
  %1147 = vmatpush.msra.mxu0 0.0
  %1148 = vmatpush.msra.mxu0 0.0
  %1149 = vmatpush.msra.mxu0 0.0
  %1150 = vmatpush.msra.mxu0 0.0
  %1151 = vmatpush.msra.mxu0 0.0
  %1152 = vmatpush.msra.mxu0 0.0
  %1153 = vmatpush.msra.mxu0 0.0
  %1154 = vmatpush.msra.mxu0 0.0
  %1155 = vmatpush.msra.mxu0 0.0
  %1156 = vmatpush.msra.mxu0 0.0
  %1157 = vmatpush.msra.mxu0 %v107
  %1158 = vmatpush.msra.mxu0 %v106
  %1159 = vmatpush.msra.mxu0 %v105
  %1160 = vmatpush.msra.mxu0 %v104
  %1161 = vmatmul.f32.gmra.mxu0 %v1093
  %v1162 = vpop.f32.mrf.mxu0
  %v1163 = vadd.f32 %v115, %v1162
  %1164 = vdwg.mxu0
  %v1165 = vmul.f32 %v1139, %v1163
  %v1166 = vadd.f32 %v1011, %v1165
  %v1167 = vtanh.pop %v1166
  %v1168 = vsub.f32 1.0, %v1144
  %v1169 = vmul.f32 %v1168, %v1167
  %v1170 = vmul.f32 %v1144, %v995
  %v1171 = vadd.f32 %v1169, %v1170
  %s1172 = scalar_lea.vmem %s4, 10
  %1173 = vst.msk [vmem:[%s1172] sm:$0x3] %vm292, %v1091
  %s1174 = scalar_lea.vmem %s51, 4
  %1175 = vst.msk [vmem:[%s1174] sm:$0x3] %vm292, %v1171
  %s1176 = scalar_lea.vmem %s0, 12
  %v1177 = vld [vmem:[%s1176] sm:$0x3]
  %s1178 = scalar_lea.vmem %s0, 28
  %v1179 = vld [vmem:[%s1178] sm:$0x3]
  %s1180 = scalar_lea.vmem %s0, 44
  %v1181 = vld [vmem:[%s1180] sm:$0x3]
  %s1182 = scalar_lea.vmem %s43, 2
  %v1183 = vld [vmem:[%s1182] sm:$0x3]
  %s1184 = scalar_lea.vmem %s43, 18
  %v1185 = vld [vmem:[%s1184] sm:$0x3]
  %s1186 = scalar_lea.vmem %s43, 34
  %v1187 = vld [vmem:[%s1186] sm:$0x3]
  %v1189 = vsel %vm131, %v1091, 0
  %1191 = vmatpush.msra.mxu0 0.0
  %1192 = vmatpush.msra.mxu0 0.0
  %1193 = vmatpush.msra.mxu0 0.0
  %1194 = vmatpush.msra.mxu0 0.0
  %1195 = vmatpush.msra.mxu0 0.0
  %1196 = vmatpush.msra.mxu0 0.0
  %1197 = vmatpush.msra.mxu0 0.0
  %1198 = vmatpush.msra.mxu0 0.0
  %1199 = vmatpush.msra.mxu0 0.0
  %1200 = vmatpush.msra.mxu0 0.0
  %1201 = vmatpush.msra.mxu0 0.0
  %1202 = vmatpush.msra.mxu0 0.0
  %1203 = vmatpush.msra.mxu0 %v82
  %1204 = vmatpush.msra.mxu0 %v81
  %1205 = vmatpush.msra.mxu0 %v80
  %1206 = vmatpush.msra.mxu0 %v79
  %1207 = vmatmul.f32.gmra.mxu0 %v1189
  %v1208 = vpop.f32.mrf.mxu0
  %v1209 = vadd.f32 0.0, %v1208
  %1210 = vdwg.mxu0
  %1211 = vmatpush.msra.mxu0 0.0
  %1212 = vmatpush.msra.mxu0 0.0
  %1213 = vmatpush.msra.mxu0 0.0
  %1214 = vmatpush.msra.mxu0 0.0
  %1215 = vmatpush.msra.mxu0 0.0
  %1216 = vmatpush.msra.mxu0 0.0
  %1217 = vmatpush.msra.mxu0 0.0
  %1218 = vmatpush.msra.mxu0 0.0
  %1219 = vmatpush.msra.mxu0 0.0
  %1220 = vmatpush.msra.mxu0 0.0
  %1221 = vmatpush.msra.mxu0 0.0
  %1222 = vmatpush.msra.mxu0 0.0
  %1223 = vmatpush.msra.mxu0 %v87
  %1224 = vmatpush.msra.mxu0 %v86
  %1225 = vmatpush.msra.mxu0 %v85
  %1226 = vmatpush.msra.mxu0 %v84
  %1227 = vmatmul.f32.gmra.mxu0 %v1189
  %v1228 = vpop.f32.mrf.mxu0
  %v1229 = vadd.f32 0.0, %v1228
  %1230 = vdwg.mxu0
  %v1231 = vadd.f32 %v1177, %v1209
  %v1232 = vmul.f32 %v1231, 0.5
  %v1233 = vtanh.pop %v1232
  %v1234 = vmul.f32 %v1233, 0.5
  %v1235 = vadd.f32 %v1234, 0.5
  %v1236 = vadd.f32 %v1179, %v1229
  %v1237 = vmul.f32 %v1236, 0.5
  %v1238 = vtanh.pop %v1237
  %v1239 = vmul.f32 %v1238, 0.5
  %v1240 = vadd.f32 %v1239, 0.5
  %1241 = vmatpush.msra.mxu0 0.0
  %1242 = vmatpush.msra.mxu0 0.0
  %1243 = vmatpush.msra.mxu0 0.0
  %1244 = vmatpush.msra.mxu0 0.0
  %1245 = vmatpush.msra.mxu0 0.0
  %1246 = vmatpush.msra.mxu0 0.0
  %1247 = vmatpush.msra.mxu0 0.0
  %1248 = vmatpush.msra.mxu0 0.0
  %1249 = vmatpush.msra.mxu0 0.0
  %1250 = vmatpush.msra.mxu0 0.0
  %1251 = vmatpush.msra.mxu0 0.0
  %1252 = vmatpush.msra.mxu0 0.0
  %1253 = vmatpush.msra.mxu0 %v92
  %1254 = vmatpush.msra.mxu0 %v91
  %1255 = vmatpush.msra.mxu0 %v90
  %1256 = vmatpush.msra.mxu0 %v89
  %1257 = vmatmul.f32.gmra.mxu0 %v1189
  %v1258 = vpop.f32.mrf.mxu0
  %v1259 = vadd.f32 %v110, %v1258
  %1260 = vdwg.mxu0
  %v1261 = vmul.f32 %v1235, %v1259
  %v1262 = vadd.f32 %v1181, %v1261
  %v1263 = vtanh.pop %v1262
  %v1264 = vsub.f32 1.0, %v1240
  %v1265 = vmul.f32 %v1264, %v1263
  %v1266 = vmul.f32 %v1240, %v1091
  %v1267 = vadd.f32 %v1265, %v1266
  %v1269 = vsel %vm131, %v1171, 0
  %1271 = vmatpush.msra.mxu0 0.0
  %1272 = vmatpush.msra.mxu0 0.0
  %1273 = vmatpush.msra.mxu0 0.0
  %1274 = vmatpush.msra.mxu0 0.0
  %1275 = vmatpush.msra.mxu0 0.0
  %1276 = vmatpush.msra.mxu0 0.0
  %1277 = vmatpush.msra.mxu0 0.0
  %1278 = vmatpush.msra.mxu0 0.0
  %1279 = vmatpush.msra.mxu0 0.0
  %1280 = vmatpush.msra.mxu0 0.0
  %1281 = vmatpush.msra.mxu0 0.0
  %1282 = vmatpush.msra.mxu0 0.0
  %1283 = vmatpush.msra.mxu0 %v97
  %1284 = vmatpush.msra.mxu0 %v96
  %1285 = vmatpush.msra.mxu0 %v95
  %1286 = vmatpush.msra.mxu0 %v94
  %1287 = vmatmul.f32.gmra.mxu0 %v1269
  %v1288 = vpop.f32.mrf.mxu0
  %v1289 = vadd.f32 0.0, %v1288
  %1290 = vdwg.mxu0
  %1291 = vmatpush.msra.mxu0 0.0
  %1292 = vmatpush.msra.mxu0 0.0
  %1293 = vmatpush.msra.mxu0 0.0
  %1294 = vmatpush.msra.mxu0 0.0
  %1295 = vmatpush.msra.mxu0 0.0
  %1296 = vmatpush.msra.mxu0 0.0
  %1297 = vmatpush.msra.mxu0 0.0
  %1298 = vmatpush.msra.mxu0 0.0
  %1299 = vmatpush.msra.mxu0 0.0
  %1300 = vmatpush.msra.mxu0 0.0
  %1301 = vmatpush.msra.mxu0 0.0
  %1302 = vmatpush.msra.mxu0 0.0
  %1303 = vmatpush.msra.mxu0 %v102
  %1304 = vmatpush.msra.mxu0 %v101
  %1305 = vmatpush.msra.mxu0 %v100
  %1306 = vmatpush.msra.mxu0 %v99
  %1307 = vmatmul.f32.gmra.mxu0 %v1269
  %v1308 = vpop.f32.mrf.mxu0
  %v1309 = vadd.f32 0.0, %v1308
  %1310 = vdwg.mxu0
  %v1311 = vadd.f32 %v1183, %v1289
  %v1312 = vmul.f32 %v1311, 0.5
  %v1313 = vtanh.pop %v1312
  %v1314 = vmul.f32 %v1313, 0.5
  %v1315 = vadd.f32 %v1314, 0.5
  %v1316 = vadd.f32 %v1185, %v1309
  %v1317 = vmul.f32 %v1316, 0.5
  %v1318 = vtanh.pop %v1317
  %v1319 = vmul.f32 %v1318, 0.5
  %v1320 = vadd.f32 %v1319, 0.5
  %1321 = vmatpush.msra.mxu0 0.0
  %1322 = vmatpush.msra.mxu0 0.0
  %1323 = vmatpush.msra.mxu0 0.0
  %1324 = vmatpush.msra.mxu0 0.0
  %1325 = vmatpush.msra.mxu0 0.0
  %1326 = vmatpush.msra.mxu0 0.0
  %1327 = vmatpush.msra.mxu0 0.0
  %1328 = vmatpush.msra.mxu0 0.0
  %1329 = vmatpush.msra.mxu0 0.0
  %1330 = vmatpush.msra.mxu0 0.0
  %1331 = vmatpush.msra.mxu0 0.0
  %1332 = vmatpush.msra.mxu0 0.0
  %1333 = vmatpush.msra.mxu0 %v107
  %1334 = vmatpush.msra.mxu0 %v106
  %1335 = vmatpush.msra.mxu0 %v105
  %1336 = vmatpush.msra.mxu0 %v104
  %1337 = vmatmul.f32.gmra.mxu0 %v1269
  %v1338 = vpop.f32.mrf.mxu0
  %v1339 = vadd.f32 %v115, %v1338
  %1340 = vdwg.mxu0
  %v1341 = vmul.f32 %v1315, %v1339
  %v1342 = vadd.f32 %v1187, %v1341
  %v1343 = vtanh.pop %v1342
  %v1344 = vsub.f32 1.0, %v1320
  %v1345 = vmul.f32 %v1344, %v1343
  %v1346 = vmul.f32 %v1320, %v1171
  %v1347 = vadd.f32 %v1345, %v1346
  %s1348 = scalar_lea.vmem %s4, 12
  %1349 = vst.msk [vmem:[%s1348] sm:$0x3] %vm292, %v1267
  %s1350 = scalar_lea.vmem %s51, 2
  %1351 = vst.msk [vmem:[%s1350] sm:$0x3] %vm292, %v1347
  %s1352 = scalar_lea.vmem %s0, 14
  %v1353 = vld [vmem:[%s1352] sm:$0x3]
  %s1354 = scalar_lea.vmem %s0, 30
  %v1355 = vld [vmem:[%s1354] sm:$0x3]
  %s1356 = scalar_lea.vmem %s0, 46
  %v1357 = vld [vmem:[%s1356] sm:$0x3]
  %v1358 = vld [vmem:[%s43] sm:$0x3]
  %s1359 = scalar_lea.vmem %s43, 16
  %v1360 = vld [vmem:[%s1359] sm:$0x3]
  %s1361 = scalar_lea.vmem %s43, 32
  %v1362 = vld [vmem:[%s1361] sm:$0x3]
  %v1364 = vsel %vm131, %v1267, 0
  %1366 = vmatpush.msra.mxu0 0.0
  %1367 = vmatpush.msra.mxu0 0.0
  %1368 = vmatpush.msra.mxu0 0.0
  %1369 = vmatpush.msra.mxu0 0.0
  %1370 = vmatpush.msra.mxu0 0.0
  %1371 = vmatpush.msra.mxu0 0.0
  %1372 = vmatpush.msra.mxu0 0.0
  %1373 = vmatpush.msra.mxu0 0.0
  %1374 = vmatpush.msra.mxu0 0.0
  %1375 = vmatpush.msra.mxu0 0.0
  %1376 = vmatpush.msra.mxu0 0.0
  %1377 = vmatpush.msra.mxu0 0.0
  %1378 = vmatpush.msra.mxu0 %v82
  %1379 = vmatpush.msra.mxu0 %v81
  %1380 = vmatpush.msra.mxu0 %v80
  %1381 = vmatpush.msra.mxu0 %v79
  %1382 = vmatmul.f32.gmra.mxu0 %v1364
  %v1383 = vpop.f32.mrf.mxu0
  %v1384 = vadd.f32 0.0, %v1383
  %1385 = vdwg.mxu0
  %1386 = vmatpush.msra.mxu0 0.0
  %1387 = vmatpush.msra.mxu0 0.0
  %1388 = vmatpush.msra.mxu0 0.0
  %1389 = vmatpush.msra.mxu0 0.0
  %1390 = vmatpush.msra.mxu0 0.0
  %1391 = vmatpush.msra.mxu0 0.0
  %1392 = vmatpush.msra.mxu0 0.0
  %1393 = vmatpush.msra.mxu0 0.0
  %1394 = vmatpush.msra.mxu0 0.0
  %1395 = vmatpush.msra.mxu0 0.0
  %1396 = vmatpush.msra.mxu0 0.0
  %1397 = vmatpush.msra.mxu0 0.0
  %1398 = vmatpush.msra.mxu0 %v87
  %1399 = vmatpush.msra.mxu0 %v86
  %1400 = vmatpush.msra.mxu0 %v85
  %1401 = vmatpush.msra.mxu0 %v84
  %1402 = vmatmul.f32.gmra.mxu0 %v1364
  %v1403 = vpop.f32.mrf.mxu0
  %v1404 = vadd.f32 0.0, %v1403
  %1405 = vdwg.mxu0
  %v1406 = vadd.f32 %v1353, %v1384
  %v1407 = vmul.f32 %v1406, 0.5
  %v1408 = vtanh.pop %v1407
  %v1409 = vmul.f32 %v1408, 0.5
  %v1410 = vadd.f32 %v1409, 0.5
  %v1411 = vadd.f32 %v1355, %v1404
  %v1412 = vmul.f32 %v1411, 0.5
  %v1413 = vtanh.pop %v1412
  %v1414 = vmul.f32 %v1413, 0.5
  %v1415 = vadd.f32 %v1414, 0.5
  %1416 = vmatpush.msra.mxu0 0.0
  %1417 = vmatpush.msra.mxu0 0.0
  %1418 = vmatpush.msra.mxu0 0.0
  %1419 = vmatpush.msra.mxu0 0.0
  %1420 = vmatpush.msra.mxu0 0.0
  %1421 = vmatpush.msra.mxu0 0.0
  %1422 = vmatpush.msra.mxu0 0.0
  %1423 = vmatpush.msra.mxu0 0.0
  %1424 = vmatpush.msra.mxu0 0.0
  %1425 = vmatpush.msra.mxu0 0.0
  %1426 = vmatpush.msra.mxu0 0.0
  %1427 = vmatpush.msra.mxu0 0.0
  %1428 = vmatpush.msra.mxu0 %v92
  %1429 = vmatpush.msra.mxu0 %v91
  %1430 = vmatpush.msra.mxu0 %v90
  %1431 = vmatpush.msra.mxu0 %v89
  %1432 = vmatmul.f32.gmra.mxu0 %v1364
  %v1433 = vpop.f32.mrf.mxu0
  %v1434 = vadd.f32 %v110, %v1433
  %1435 = vdwg.mxu0
  %v1436 = vmul.f32 %v1410, %v1434
  %v1437 = vadd.f32 %v1357, %v1436
  %v1438 = vtanh.pop %v1437
  %v1439 = vsub.f32 1.0, %v1415
  %v1440 = vmul.f32 %v1439, %v1438
  %v1441 = vmul.f32 %v1415, %v1267
  %v1442 = vadd.f32 %v1440, %v1441
  %v1444 = vsel %vm131, %v1347, 0
  %1446 = vmatpush.msra.mxu0 0.0
  %1447 = vmatpush.msra.mxu0 0.0
  %1448 = vmatpush.msra.mxu0 0.0
  %1449 = vmatpush.msra.mxu0 0.0
  %1450 = vmatpush.msra.mxu0 0.0
  %1451 = vmatpush.msra.mxu0 0.0
  %1452 = vmatpush.msra.mxu0 0.0
  %1453 = vmatpush.msra.mxu0 0.0
  %1454 = vmatpush.msra.mxu0 0.0
  %1455 = vmatpush.msra.mxu0 0.0
  %1456 = vmatpush.msra.mxu0 0.0
  %1457 = vmatpush.msra.mxu0 0.0
  %1458 = vmatpush.msra.mxu0 %v97
  %1459 = vmatpush.msra.mxu0 %v96
  %1460 = vmatpush.msra.mxu0 %v95
  %1461 = vmatpush.msra.mxu0 %v94
  %1462 = vmatmul.f32.gmra.mxu0 %v1444
  %v1463 = vpop.f32.mrf.mxu0
  %v1464 = vadd.f32 0.0, %v1463
  %1465 = vdwg.mxu0
  %1466 = vmatpush.msra.mxu0 0.0
  %1467 = vmatpush.msra.mxu0 0.0
  %1468 = vmatpush.msra.mxu0 0.0
  %1469 = vmatpush.msra.mxu0 0.0
  %1470 = vmatpush.msra.mxu0 0.0
  %1471 = vmatpush.msra.mxu0 0.0
  %1472 = vmatpush.msra.mxu0 0.0
  %1473 = vmatpush.msra.mxu0 0.0
  %1474 = vmatpush.msra.mxu0 0.0
  %1475 = vmatpush.msra.mxu0 0.0
  %1476 = vmatpush.msra.mxu0 0.0
  %1477 = vmatpush.msra.mxu0 0.0
  %1478 = vmatpush.msra.mxu0 %v102
  %1479 = vmatpush.msra.mxu0 %v101
  %1480 = vmatpush.msra.mxu0 %v100
  %1481 = vmatpush.msra.mxu0 %v99
  %1482 = vmatmul.f32.gmra.mxu0 %v1444
  %v1483 = vpop.f32.mrf.mxu0
  %v1484 = vadd.f32 0.0, %v1483
  %1485 = vdwg.mxu0
  %v1486 = vadd.f32 %v1358, %v1464
  %v1487 = vmul.f32 %v1486, 0.5
  %v1488 = vtanh.pop %v1487
  %v1489 = vmul.f32 %v1488, 0.5
  %v1490 = vadd.f32 %v1489, 0.5
  %v1491 = vadd.f32 %v1360, %v1484
  %v1492 = vmul.f32 %v1491, 0.5
  %v1493 = vtanh.pop %v1492
  %v1494 = vmul.f32 %v1493, 0.5
  %v1495 = vadd.f32 %v1494, 0.5
  %1496 = vmatpush.msra.mxu0 0.0
  %1497 = vmatpush.msra.mxu0 0.0
  %1498 = vmatpush.msra.mxu0 0.0
  %1499 = vmatpush.msra.mxu0 0.0
  %1500 = vmatpush.msra.mxu0 0.0
  %1501 = vmatpush.msra.mxu0 0.0
  %1502 = vmatpush.msra.mxu0 0.0
  %1503 = vmatpush.msra.mxu0 0.0
  %1504 = vmatpush.msra.mxu0 0.0
  %1505 = vmatpush.msra.mxu0 0.0
  %1506 = vmatpush.msra.mxu0 0.0
  %1507 = vmatpush.msra.mxu0 0.0
  %1508 = vmatpush.msra.mxu0 %v107
  %1509 = vmatpush.msra.mxu0 %v106
  %1510 = vmatpush.msra.mxu0 %v105
  %1511 = vmatpush.msra.mxu0 %v104
  %1512 = vmatmul.f32.gmra.mxu0 %v1444
  %v1513 = vpop.f32.mrf.mxu0
  %v1514 = vadd.f32 %v115, %v1513
  %1515 = vdwg.mxu0
  %v1516 = vmul.f32 %v1490, %v1514
  %v1517 = vadd.f32 %v1362, %v1516
  %v1518 = vtanh.pop %v1517
  %v1519 = vsub.f32 1.0, %v1495
  %v1520 = vmul.f32 %v1519, %v1518
  %v1521 = vmul.f32 %v1495, %v1347
  %v1522 = vadd.f32 %v1520, %v1521
  %s1523 = scalar_lea.vmem %s4, 14
  %1524 = vst.msk [vmem:[%s1523] sm:$0x3] %vm292, %v1442
  %1525 = vst.msk [vmem:[%s51] sm:$0x3] %vm292, %v1522
  %1526 = vst.msk [vmem:[#allocation2] sm:$0x3] %vm292, %v1442
  %1527 = vst.msk [vmem:[%s118] sm:$0x3] %vm292, %v1522
  // Predicated region
  $region22: #{encoder_forward.2} parent=0 // pred_check
    %p1528 = pneg %p54
  $region23: #{encoder_forward.2} parent=0 // pred_check_branch
    %1530 = sbr.rel (%p1528) target = $region25
  $region24: #{encoder_forward.2} parent=0 // pred_region
    %1531 = vst.msk [vmem:[%s6] sm:$0x3] %vm292, %v1442
    %s1532 = scalar_lea.vmem %s6, 2
    %1533 = vst.msk [vmem:[%s1532] sm:$0x3] %vm292, %v1522
  $region25: #{encoder_forward.2} parent=0 // pred_fallthru
    _
  %s1534 = ssub.s32 0, 0
  %s1535 = smul.u32 8, %s1534
  %p1536 = scmp.lt.s32.totalorder %s1535, 7
  %s1537 = scalar_select %p1536, %s1535, 7
  %s1538 = smul.addr %s1537, 2
  %s1539 = scalar_lea.vmem %s5, %s1538
  // Predicated region
  $region26: #{encoder_forward.2} parent=0 // pred_check
    _
  $region27: #{encoder_forward.2} parent=0 // pred_check_branch
    %1541 = sbr.rel (0) target = $region29
  $region28: #{encoder_forward.2} parent=0 // pred_region
    _
  $region29: #{encoder_forward.2} parent=0 // pred_fallthru
    _
  // Predicated region
  $region30: #{encoder_forward.2} parent=0 // pred_check
    _
  $region31: #{encoder_forward.2} parent=0 // pred_check_branch
    %1543 = sbr.rel (0) target = $region33
  $region32: #{encoder_forward.2} parent=0 // pred_region
    %s1544 = ssub.s32 0, 0
    %s1545 = smul.u32 8, %s1544
  $region33: #{encoder_forward.2} parent=0 // pred_fallthru
    _
  // Predicated region
  $region34: #{encoder_forward.2} parent=0 // pred_check
    _
  $region35: #{encoder_forward.2} parent=0 // pred_check_branch
    %1547 = sbr.rel (0) target = $region37
  $region36: #{encoder_forward.2} parent=0 // pred_region
    _
  $region37: #{encoder_forward.2} parent=0 // pred_fallthru
    _
  // Predicated region
  $region38: #{encoder_forward.2} parent=0 // pred_check
    _
  $region39: #{encoder_forward.2} parent=0 // pred_check_branch
    %1549 = sbr.rel (0) target = $region41
  $region40: #{encoder_forward.2} parent=0 // pred_region
    _
  $region41: #{encoder_forward.2} parent=0 // pred_fallthru
    _
  // Predicated region
  $region42: #{encoder_forward.2} parent=0 // pred_check
    _
  $region43: #{encoder_forward.2} parent=0 // pred_check_branch
    %1551 = sbr.rel (0) target = $region45
  $region44: #{encoder_forward.2} parent=0 // pred_region
    %s1552 = ssub.s32 0, 0
    %s1553 = smul.u32 8, %s1552
    %p1554 = scmp.lt.s32.totalorder %s1553, 7
    %s1555 = scalar_select %p1554, %s1553, 7
    %s1556 = smul.addr %s1555, 2
    %s1557 = scalar_lea.vmem %s5, %s1556
  $region45: #{encoder_forward.2} parent=0 // pred_fallthru
    _
  // Predicated region
  $region46: #{encoder_forward.2} parent=0 // pred_check
    _
  $region47: #{encoder_forward.2} parent=0 // pred_check_branch
    %1559 = sbr.rel (0) target = $region49
  $region48: #{encoder_forward.2} parent=0 // pred_region
    _
  $region49: #{encoder_forward.2} parent=0 // pred_fallthru
    _
  %1560 = vsyncmov [#allocation4]
  %s1561 = vpop.sfrf %1560
  %p1562 = scmp.eq.s32.totalorder %s1561, 0
  %p1563 = pneg %p1562
  %1565 = shalt.err (%p1563)

// kernel: encoder_forward.3
$region0: #{encoder_forward.3}
  #allocation0 [shape = 'u32[]', space=smem, size = 0x4, offset = 0x4, fixed_abs, tag = 'smem constant byte address 0x4 - core index']
  #allocation1 [shape = 'u32[72,128]{1,0:T(1,128)}', space=vmem, size = 0x9000, scoped, tag = 'internal scratch']
  #allocation2 [shape = 'f32[2,2,32]{2,1,0:T(2,128)}', space=vmem, size = 0x800, scoped, tag = 'scratch operand']
  #allocation3 [shape = 'f32[2,3,32,32]{3,2,1,0:T(8,128)}', space=vmem, size = 0x18000, scoped, tag = 'scratch operand']
  #allocation4 [shape = 's32[1]{0}', space=sflag, size = 0x4, scoped, tag = 'scratch operand']
  #allocation5 [shape = 's32[]', space=sflag, size = 0x4, offset = 0, fixed_abs, tag = 'sflag constant byte address 0x0 - dummy sync flag']
  %s0 = inlined_call_operand.vmem [shape: f32[3,8,2,32], index: 0, kind: input, shape index: {}]
  %s1 = inlined_call_operand.vmem [shape: f32[3,8,2,32], index: 1, kind: input, shape index: {}]
  %s2 = inlined_call_operand.vmem [shape: f32[2,3,32,32], index: 2, kind: input, shape index: {}]
  %s3 = inlined_call_operand.vmem [shape: f32[2,1,32], index: 3, kind: input, shape index: {}]
  %s4 = inlined_call_operand.vmem [shape: f32[8,2,32], index: 4, kind: output, shape index: {0}]
  %s5 = inlined_call_operand.vmem [shape: f32[8,2,32], index: 5, kind: output, shape index: {1}]
  %s6 = inlined_call_operand.vmem [shape: f32[2,2,32], index: 6, kind: output, shape index: {2}]
  %7 = xla_tuple %s4, %s5, %s6
  %s8 = sld [smem:[#allocation0]]
  $region65: #{encoder_forward.3} parent=0
    _
  %s10 = ssub.s32 1, %s8
  %s11 = scalar_select 0, %s10, %s8
  // Predicated region
  $region2: #{encoder_forward.3} parent=0 // pred_check
    _
  $region3: #{encoder_forward.3} parent=0 // pred_check_branch
    %13 = sbr.rel (0) target = $region5
  $region4: #{encoder_forward.3} parent=0 // pred_region
    _
  $region5: #{encoder_forward.3} parent=0 // pred_fallthru
    _
  // Predicated region
  $region6: #{encoder_forward.3} parent=0 // pred_check
    _
  $region7: #{encoder_forward.3} parent=0 // pred_check_branch
    %15 = sbr.rel (0) target = $region9
  $region8: #{encoder_forward.3} parent=0 // pred_region
    %s16 = ssub.s32 0, 0
    %s17 = smul.u32 8, %s16
    %p18 = scmp.lt.s32.totalorder %s17, 7
    %s19 = scalar_select %p18, %s17, 7
    %s20 = smul.addr %s19, 2
    %s21 = scalar_lea.vmem %s1, %s20
    %s22 = ssub.s32 0, 0
    %s23 = smul.u32 8, %s22
  $region9: #{encoder_forward.3} parent=0 // pred_fallthru
    _
  // Predicated region
  $region10: #{encoder_forward.3} parent=0 // pred_check
    _
  $region11: #{encoder_forward.3} parent=0 // pred_check_branch
    %25 = sbr.rel (0) target = $region13
  $region12: #{encoder_forward.3} parent=0 // pred_region
    _
  $region13: #{encoder_forward.3} parent=0 // pred_fallthru
    _
  %s26 = ssub.s32 0, 0
  %s27 = smul.u32 8, %s26
  %p28 = scmp.lt.s32.totalorder %s27, 7
  %s29 = scalar_select %p28, %s27, 7
  %s30 = smul.addr %s29, 2
  %s31 = scalar_lea.vmem %s1, %s30
  %s32 = ssub.s32 0, 0
  %s33 = smul.u32 8, %s32
  %p34 = scmp.lt.s32.totalorder %s33, 7
  %s35 = scalar_select %p34, %s33, 7
  %s36 = smul.addr %s35, 2
  %s37 = scalar_lea.vmem %s5, %s36
  %s38 = ssub.s32 0, 0
  %s39 = smul.u32 8, %s38
  %p40 = scmp.lt.s32.totalorder %s39, 7
  %s41 = scalar_select %p40, %s39, 7
  %s42 = smul.addr %s41, 2
  %s43 = scalar_lea.vmem %s1, %s42
  %s44 = ssub.s32 0, 0
  %s45 = smul.u32 8, %s44
  %s46 = ssub.s32 0, 0
  %s47 = smul.u32 8, %s46
  %p48 = scmp.lt.s32.totalorder %s47, 7
  %s49 = scalar_select %p48, %s47, 7
  %s50 = smul.addr %s49, 2
  %s51 = scalar_lea.vmem %s5, %s50
  %s52 = ssub.s32 0, 0
  %s53 = smul.u32 8, %s52
  %p54 = scmp.eq.s32.totalorder 0, 0
  // Predicated region
  $region14: #{encoder_forward.3} parent=0 // pred_check
    %p55 = pneg %p54
  $region15: #{encoder_forward.3} parent=0 // pred_check_branch
    %57 = sbr.rel (%p55) target = $region17
  $region16: #{encoder_forward.3} parent=0 // pred_region
    %vm58 = vcmask 254976
    %59 = vst.msk [vmem:[#allocation2] sm:$0x3] %vm58, 0.0
    %60 = vst.msk [vmem:[#allocation2 + $0x2] sm:$0x3] %vm58, 0.0
    // Predicated region
    $region18: #{encoder_forward.3} parent=16 // pred_check
      _
    $region19: #{encoder_forward.3} parent=16 // pred_check_branch
      %62 = sbr.rel (0) target = $region21
    $region20: #{encoder_forward.3} parent=16 // pred_region
      loop: start=0, step=1, limit=1
      $region22: #{encoder_forward.3} parent=20 // loop_pre_header
        _
      $region23: #{encoder_forward.3} parent=20 // loop_header
        %s64 = sphi 0, %s68
        %p65 = scmp.ge.s32.totalorder %s64, 1
        %s69 = sphi %s2, %s2
        %s70 = sphi [#allocation3], [#allocation3]
      $region24: #{encoder_forward.3} parent=20 // loop_header_branch
        %67 = sbr.rel (%p65) target = $region28
      $region25: #{encoder_forward.3} parent=20 // loop_body
        %v71 = vld [vmem:[%s69] sm:$0xff]
        %72 = vst [vmem:[%s70] sm:$0xff] %v71
        %v73 = vld [vmem:[%s69 + $0x8] sm:$0xff]
        %74 = vst [vmem:[%s70 + $0x8] sm:$0xff] %v73
        %v75 = vld [vmem:[%s69 + $0x10] sm:$0xff]
        %76 = vst [vmem:[%s70 + $0x10] sm:$0xff] %v75
        %v77 = vld [vmem:[%s69 + $0x18] sm:$0xff]
        %78 = vst [vmem:[%s70 + $0x18] sm:$0xff] %v77
        %v79 = vld [vmem:[%s69 + $0x20] sm:$0xff]
        %80 = vst [vmem:[%s70 + $0x20] sm:$0xff] %v79
        %v81 = vld [vmem:[%s69 + $0x28] sm:$0xff]
        %82 = vst [vmem:[%s70 + $0x28] sm:$0xff] %v81
        %v83 = vld [vmem:[%s69 + $0x30] sm:$0xff]
        %84 = vst [vmem:[%s70 + $0x30] sm:$0xff] %v83
        %v85 = vld [vmem:[%s69 + $0x38] sm:$0xff]
        %86 = vst [vmem:[%s70 + $0x38] sm:$0xff] %v85
        %v87 = vld [vmem:[%s69 + $0x40] sm:$0xff]
        %88 = vst [vmem:[%s70 + $0x40] sm:$0xff] %v87
        %v89 = vld [vmem:[%s69 + $0x48] sm:$0xff]
        %90 = vst [vmem:[%s70 + $0x48] sm:$0xff] %v89
        %v91 = vld [vmem:[%s69 + $0x50] sm:$0xff]
        %92 = vst [vmem:[%s70 + $0x50] sm:$0xff] %v91
        %v93 = vld [vmem:[%s69 + $0x58] sm:$0xff]
        %94 = vst [vmem:[%s70 + $0x58] sm:$0xff] %v93
        %v95 = vld [vmem:[%s69 + $0x60] sm:$0xff]
        %96 = vst [vmem:[%s70 + $0x60] sm:$0xff] %v95
        %v97 = vld [vmem:[%s69 + $0x68] sm:$0xff]
        %98 = vst [vmem:[%s70 + $0x68] sm:$0xff] %v97
        %v99 = vld [vmem:[%s69 + $0x70] sm:$0xff]
        %100 = vst [vmem:[%s70 + $0x70] sm:$0xff] %v99
        %v101 = vld [vmem:[%s69 + $0x78] sm:$0xff]
        %102 = vst [vmem:[%s70 + $0x78] sm:$0xff] %v101
        %v103 = vld [vmem:[%s69 + $0x80] sm:$0xff]
        %104 = vst [vmem:[%s70 + $0x80] sm:$0xff] %v103
        %v105 = vld [vmem:[%s69 + $0x88] sm:$0xff]
        %106 = vst [vmem:[%s70 + $0x88] sm:$0xff] %v105
        %v107 = vld [vmem:[%s69 + $0x90] sm:$0xff]
        %108 = vst [vmem:[%s70 + $0x90] sm:$0xff] %v107
        %v109 = vld [vmem:[%s69 + $0x98] sm:$0xff]
        %110 = vst [vmem:[%s70 + $0x98] sm:$0xff] %v109
        %v111 = vld [vmem:[%s69 + $0xa0] sm:$0xff]
        %112 = vst [vmem:[%s70 + $0xa0] sm:$0xff] %v111
        %v113 = vld [vmem:[%s69 + $0xa8] sm:$0xff]
        %114 = vst [vmem:[%s70 + $0xa8] sm:$0xff] %v113
        %v115 = vld [vmem:[%s69 + $0xb0] sm:$0xff]
        %116 = vst [vmem:[%s70 + $0xb0] sm:$0xff] %v115
        %v117 = vld [vmem:[%s69 + $0xb8] sm:$0xff]
        %118 = vst [vmem:[%s70 + $0xb8] sm:$0xff] %v117
      $region26: #{encoder_forward.3} parent=20 // loop_footer
        %s68 = sadd.s32 1, %s64
      $region27: #{encoder_forward.3} parent=20 // loop_footer_branch
        %63 = sbr.rel target = $region23
      $region28: #{encoder_forward.3} parent=20 // loop_exit
        _
    $region21: #{encoder_forward.3} parent=16 // pred_fallthru
      _
    // Predicated region
    $region29: #{encoder_forward.3} parent=16 // pred_check
      _
    $region30: #{encoder_forward.3} parent=16 // pred_check_branch
      %120 = sbr.rel target = $region32
    $region31: #{encoder_forward.3} parent=16 // pred_region
      _
    $region32: #{encoder_forward.3} parent=16 // pred_fallthru
      _
    // Predicated region
    $region33: #{encoder_forward.3} parent=16 // pred_check
      _
    $region34: #{encoder_forward.3} parent=16 // pred_check_branch
      %123 = sbr.rel (0) target = $region36
    $region35: #{encoder_forward.3} parent=16 // pred_region
      %124 = vsyncadd [#allocation4], 3072
    $region36: #{encoder_forward.3} parent=16 // pred_fallthru
      _
    %s125 = smul.u32 2, 3
    %s126 = smul.u32 %s125, 32
    %s127 = smul.u32 %s126, 1
    %s128 = sshll.u32 %s127, 4
    %129 = dma.done [#allocation4], %s128
  $region17: #{encoder_forward.3} parent=0 // pred_fallthru
    _
  %v130 = vld [vmem:[#allocation3] sm:$0xff]
  %v131 = vld [vmem:[#allocation3 + $0x8] sm:$0xff]
  %v132 = vld [vmem:[#allocation3 + $0x10] sm:$0xff]
  %v133 = vld [vmem:[#allocation3 + $0x18] sm:$0xff]
  %s134 = scalar_lea.vmem [#allocation3], 32
  %v135 = vld [vmem:[%s134] sm:$0xff]
  %v136 = vld [vmem:[%s134 + $0x8] sm:$0xff]
  %v137 = vld [vmem:[%s134 + $0x10] sm:$0xff]
  %v138 = vld [vmem:[%s134 + $0x18] sm:$0xff]
  %s139 = scalar_lea.vmem [#allocation3], 64
  %v140 = vld [vmem:[%s139] sm:$0xff]
  %v141 = vld [vmem:[%s139 + $0x8] sm:$0xff]
  %v142 = vld [vmem:[%s139 + $0x10] sm:$0xff]
  %v143 = vld [vmem:[%s139 + $0x18] sm:$0xff]
  %s144 = scalar_lea.vmem [#allocation3], 96
  %v145 = vld [vmem:[%s144] sm:$0xff]
  %v146 = vld [vmem:[%s144 + $0x8] sm:$0xff]
  %v147 = vld [vmem:[%s144 + $0x10] sm:$0xff]
  %v148 = vld [vmem:[%s144 + $0x18] sm:$0xff]
  %s149 = scalar_lea.vmem [#allocation3], 128
  %v150 = vld [vmem:[%s149] sm:$0xff]
  %v151 = vld [vmem:[%s149 + $0x8] sm:$0xff]
  %v152 = vld [vmem:[%s149 + $0x10] sm:$0xff]
  %v153 = vld [vmem:[%s149 + $0x18] sm:$0xff]
  %s154 = scalar_lea.vmem [#allocation3], 160
  %v155 = vld [vmem:[%s154] sm:$0xff]
  %v156 = vld [vmem:[%s154 + $0x8] sm:$0xff]
  %v157 = vld [vmem:[%s154 + $0x10] sm:$0xff]
  %v158 = vld [vmem:[%s154 + $0x18] sm:$0xff]
  %v159 = vld [vmem:[%s3] sm:$0x1]
  %v161 = vperm.slane %v159, 0
  %s163 = scalar_lea.vmem %s3, 1
  %v164 = vld [vmem:[%s163] sm:$0x1]
  %v166 = vperm.slane %v164, 0
  %v168 = vld [vmem:[#allocation2] sm:$0x3]
  %s169 = scalar_lea.vmem [#allocation2], 2
  %v170 = vld [vmem:[%s169] sm:$0x3]
  %v171 = vld [vmem:[%s0] sm:$0x3]
  %s172 = scalar_lea.vmem %s0, 16
  %v173 = vld [vmem:[%s172] sm:$0x3]
  %s174 = scalar_lea.vmem %s0, 32
  %v175 = vld [vmem:[%s174] sm:$0x3]
  %s176 = scalar_lea.vmem %s43, 14
  %v177 = vld [vmem:[%s176] sm:$0x3]
  %s178 = scalar_lea.vmem %s43, 30
  %v179 = vld [vmem:[%s178] sm:$0x3]
  %s180 = scalar_lea.vmem %s43, 46
  %v181 = vld [vmem:[%s180] sm:$0x3]
  %vm182 = vcmask 261120
  %v184 = vsel %vm182, %v168, 0
  %186 = vmatpush.msra.mxu0 0.0
  %187 = vmatpush.msra.mxu0 0.0
  %188 = vmatpush.msra.mxu0 0.0
  %189 = vmatpush.msra.mxu0 0.0
  %190 = vmatpush.msra.mxu0 0.0
  %191 = vmatpush.msra.mxu0 0.0
  %192 = vmatpush.msra.mxu0 0.0
  %193 = vmatpush.msra.mxu0 0.0
  %194 = vmatpush.msra.mxu0 0.0
  %195 = vmatpush.msra.mxu0 0.0
  %196 = vmatpush.msra.mxu0 0.0
  %197 = vmatpush.msra.mxu0 0.0
  %198 = vmatpush.msra.mxu0 %v133
  %199 = vmatpush.msra.mxu0 %v132
  %200 = vmatpush.msra.mxu0 %v131
  %201 = vmatpush.msra.mxu0 %v130
  %202 = vmatmul.f32.gmra.mxu0 %v184
  %v203 = vpop.f32.mrf.mxu0
  %v204 = vadd.f32 0.0, %v203
  %205 = vdwg.mxu0
  %206 = vmatpush.msra.mxu0 0.0
  %207 = vmatpush.msra.mxu0 0.0
  %208 = vmatpush.msra.mxu0 0.0
  %209 = vmatpush.msra.mxu0 0.0
  %210 = vmatpush.msra.mxu0 0.0
  %211 = vmatpush.msra.mxu0 0.0
  %212 = vmatpush.msra.mxu0 0.0
  %213 = vmatpush.msra.mxu0 0.0
  %214 = vmatpush.msra.mxu0 0.0
  %215 = vmatpush.msra.mxu0 0.0
  %216 = vmatpush.msra.mxu0 0.0
  %217 = vmatpush.msra.mxu0 0.0
  %218 = vmatpush.msra.mxu0 %v138
  %219 = vmatpush.msra.mxu0 %v137
  %220 = vmatpush.msra.mxu0 %v136
  %221 = vmatpush.msra.mxu0 %v135
  %222 = vmatmul.f32.gmra.mxu0 %v184
  %v223 = vpop.f32.mrf.mxu0
  %v224 = vadd.f32 0.0, %v223
  %225 = vdwg.mxu0
  %v226 = vadd.f32 %v171, %v204
  %v227 = vmul.f32 %v226, 0.5
  %v228 = vtanh.pop %v227
  %v229 = vmul.f32 %v228, 0.5
  %v230 = vadd.f32 %v229, 0.5
  %v231 = vadd.f32 %v173, %v224
  %v232 = vmul.f32 %v231, 0.5
  %v233 = vtanh.pop %v232
  %v234 = vmul.f32 %v233, 0.5
  %v235 = vadd.f32 %v234, 0.5
  %236 = vmatpush.msra.mxu0 0.0
  %237 = vmatpush.msra.mxu0 0.0
  %238 = vmatpush.msra.mxu0 0.0
  %239 = vmatpush.msra.mxu0 0.0
  %240 = vmatpush.msra.mxu0 0.0
  %241 = vmatpush.msra.mxu0 0.0
  %242 = vmatpush.msra.mxu0 0.0
  %243 = vmatpush.msra.mxu0 0.0
  %244 = vmatpush.msra.mxu0 0.0
  %245 = vmatpush.msra.mxu0 0.0
  %246 = vmatpush.msra.mxu0 0.0
  %247 = vmatpush.msra.mxu0 0.0
  %248 = vmatpush.msra.mxu0 %v143
  %249 = vmatpush.msra.mxu0 %v142
  %250 = vmatpush.msra.mxu0 %v141
  %251 = vmatpush.msra.mxu0 %v140
  %252 = vmatmul.f32.gmra.mxu0 %v184
  %v253 = vpop.f32.mrf.mxu0
  %v254 = vadd.f32 %v161, %v253
  %255 = vdwg.mxu0
  %v256 = vmul.f32 %v230, %v254
  %v257 = vadd.f32 %v175, %v256
  %v258 = vtanh.pop %v257
  %v259 = vsub.f32 1.0, %v235
  %v260 = vmul.f32 %v259, %v258
  %v261 = vmul.f32 %v235, %v168
  %v262 = vadd.f32 %v260, %v261
  %v264 = vsel %vm182, %v170, 0
  %266 = vmatpush.msra.mxu0 0.0
  %267 = vmatpush.msra.mxu0 0.0
  %268 = vmatpush.msra.mxu0 0.0
  %269 = vmatpush.msra.mxu0 0.0
  %270 = vmatpush.msra.mxu0 0.0
  %271 = vmatpush.msra.mxu0 0.0
  %272 = vmatpush.msra.mxu0 0.0
  %273 = vmatpush.msra.mxu0 0.0
  %274 = vmatpush.msra.mxu0 0.0
  %275 = vmatpush.msra.mxu0 0.0
  %276 = vmatpush.msra.mxu0 0.0
  %277 = vmatpush.msra.mxu0 0.0
  %278 = vmatpush.msra.mxu0 %v148
  %279 = vmatpush.msra.mxu0 %v147
  %280 = vmatpush.msra.mxu0 %v146
  %281 = vmatpush.msra.mxu0 %v145
  %282 = vmatmul.f32.gmra.mxu0 %v264
  %v283 = vpop.f32.mrf.mxu0
  %v284 = vadd.f32 0.0, %v283
  %285 = vdwg.mxu0
  %286 = vmatpush.msra.mxu0 0.0
  %287 = vmatpush.msra.mxu0 0.0
  %288 = vmatpush.msra.mxu0 0.0
  %289 = vmatpush.msra.mxu0 0.0
  %290 = vmatpush.msra.mxu0 0.0
  %291 = vmatpush.msra.mxu0 0.0
  %292 = vmatpush.msra.mxu0 0.0
  %293 = vmatpush.msra.mxu0 0.0
  %294 = vmatpush.msra.mxu0 0.0
  %295 = vmatpush.msra.mxu0 0.0
  %296 = vmatpush.msra.mxu0 0.0
  %297 = vmatpush.msra.mxu0 0.0
  %298 = vmatpush.msra.mxu0 %v153
  %299 = vmatpush.msra.mxu0 %v152
  %300 = vmatpush.msra.mxu0 %v151
  %301 = vmatpush.msra.mxu0 %v150
  %302 = vmatmul.f32.gmra.mxu0 %v264
  %v303 = vpop.f32.mrf.mxu0
  %v304 = vadd.f32 0.0, %v303
  %305 = vdwg.mxu0
  %v306 = vadd.f32 %v177, %v284
  %v307 = vmul.f32 %v306, 0.5
  %v308 = vtanh.pop %v307
  %v309 = vmul.f32 %v308, 0.5
  %v310 = vadd.f32 %v309, 0.5
  %v311 = vadd.f32 %v179, %v304
  %v312 = vmul.f32 %v311, 0.5
  %v313 = vtanh.pop %v312
  %v314 = vmul.f32 %v313, 0.5
  %v315 = vadd.f32 %v314, 0.5
  %316 = vmatpush.msra.mxu0 0.0
  %317 = vmatpush.msra.mxu0 0.0
  %318 = vmatpush.msra.mxu0 0.0
  %319 = vmatpush.msra.mxu0 0.0
  %320 = vmatpush.msra.mxu0 0.0
  %321 = vmatpush.msra.mxu0 0.0
  %322 = vmatpush.msra.mxu0 0.0
  %323 = vmatpush.msra.mxu0 0.0
  %324 = vmatpush.msra.mxu0 0.0
  %325 = vmatpush.msra.mxu0 0.0
  %326 = vmatpush.msra.mxu0 0.0
  %327 = vmatpush.msra.mxu0 0.0
  %328 = vmatpush.msra.mxu0 %v158
  %329 = vmatpush.msra.mxu0 %v157
  %330 = vmatpush.msra.mxu0 %v156
  %331 = vmatpush.msra.mxu0 %v155
  %332 = vmatmul.f32.gmra.mxu0 %v264
  %v333 = vpop.f32.mrf.mxu0
  %v334 = vadd.f32 %v166, %v333
  %335 = vdwg.mxu0
  %v336 = vmul.f32 %v310, %v334
  %v337 = vadd.f32 %v181, %v336
  %v338 = vtanh.pop %v337
  %v339 = vsub.f32 1.0, %v315
  %v340 = vmul.f32 %v339, %v338
  %v341 = vmul.f32 %v315, %v170
  %v342 = vadd.f32 %v340, %v341
  %vm343 = vcmask 254976
  %344 = vst.msk [vmem:[%s4] sm:$0x3] %vm343, %v262
  %s345 = scalar_lea.vmem %s51, 14
  %346 = vst.msk [vmem:[%s345] sm:$0x3] %vm343, %v342
  %s347 = scalar_lea.vmem %s0, 2
  %v348 = vld [vmem:[%s347] sm:$0x3]
  %s349 = scalar_lea.vmem %s0, 18
  %v350 = vld [vmem:[%s349] sm:$0x3]
  %s351 = scalar_lea.vmem %s0, 34
  %v352 = vld [vmem:[%s351] sm:$0x3]
  %s353 = scalar_lea.vmem %s43, 12
  %v354 = vld [vmem:[%s353] sm:$0x3]
  %s355 = scalar_lea.vmem %s43, 28
  %v356 = vld [vmem:[%s355] sm:$0x3]
  %s357 = scalar_lea.vmem %s43, 44
  %v358 = vld [vmem:[%s357] sm:$0x3]
  %v360 = vsel %vm182, %v262, 0
  %362 = vmatpush.msra.mxu0 0.0
  %363 = vmatpush.msra.mxu0 0.0
  %364 = vmatpush.msra.mxu0 0.0
  %365 = vmatpush.msra.mxu0 0.0
  %366 = vmatpush.msra.mxu0 0.0
  %367 = vmatpush.msra.mxu0 0.0
  %368 = vmatpush.msra.mxu0 0.0
  %369 = vmatpush.msra.mxu0 0.0
  %370 = vmatpush.msra.mxu0 0.0
  %371 = vmatpush.msra.mxu0 0.0
  %372 = vmatpush.msra.mxu0 0.0
  %373 = vmatpush.msra.mxu0 0.0
  %374 = vmatpush.msra.mxu0 %v133
  %375 = vmatpush.msra.mxu0 %v132
  %376 = vmatpush.msra.mxu0 %v131
  %377 = vmatpush.msra.mxu0 %v130
  %378 = vmatmul.f32.gmra.mxu0 %v360
  %v379 = vpop.f32.mrf.mxu0
  %v380 = vadd.f32 0.0, %v379
  %381 = vdwg.mxu0
  %382 = vmatpush.msra.mxu0 0.0
  %383 = vmatpush.msra.mxu0 0.0
  %384 = vmatpush.msra.mxu0 0.0
  %385 = vmatpush.msra.mxu0 0.0
  %386 = vmatpush.msra.mxu0 0.0
  %387 = vmatpush.msra.mxu0 0.0
  %388 = vmatpush.msra.mxu0 0.0
  %389 = vmatpush.msra.mxu0 0.0
  %390 = vmatpush.msra.mxu0 0.0
  %391 = vmatpush.msra.mxu0 0.0
  %392 = vmatpush.msra.mxu0 0.0
  %393 = vmatpush.msra.mxu0 0.0
  %394 = vmatpush.msra.mxu0 %v138
  %395 = vmatpush.msra.mxu0 %v137
  %396 = vmatpush.msra.mxu0 %v136
  %397 = vmatpush.msra.mxu0 %v135
  %398 = vmatmul.f32.gmra.mxu0 %v360
  %v399 = vpop.f32.mrf.mxu0
  %v400 = vadd.f32 0.0, %v399
  %401 = vdwg.mxu0
  %v402 = vadd.f32 %v348, %v380
  %v403 = vmul.f32 %v402, 0.5
  %v404 = vtanh.pop %v403
  %v405 = vmul.f32 %v404, 0.5
  %v406 = vadd.f32 %v405, 0.5
  %v407 = vadd.f32 %v350, %v400
  %v408 = vmul.f32 %v407, 0.5
  %v409 = vtanh.pop %v408
  %v410 = vmul.f32 %v409, 0.5
  %v411 = vadd.f32 %v410, 0.5
  %412 = vmatpush.msra.mxu0 0.0
  %413 = vmatpush.msra.mxu0 0.0
  %414 = vmatpush.msra.mxu0 0.0
  %415 = vmatpush.msra.mxu0 0.0
  %416 = vmatpush.msra.mxu0 0.0
  %417 = vmatpush.msra.mxu0 0.0
  %418 = vmatpush.msra.mxu0 0.0
  %419 = vmatpush.msra.mxu0 0.0
  %420 = vmatpush.msra.mxu0 0.0
  %421 = vmatpush.msra.mxu0 0.0
  %422 = vmatpush.msra.mxu0 0.0
  %423 = vmatpush.msra.mxu0 0.0
  %424 = vmatpush.msra.mxu0 %v143
  %425 = vmatpush.msra.mxu0 %v142
  %426 = vmatpush.msra.mxu0 %v141
  %427 = vmatpush.msra.mxu0 %v140
  %428 = vmatmul.f32.gmra.mxu0 %v360
  %v429 = vpop.f32.mrf.mxu0
  %v430 = vadd.f32 %v161, %v429
  %431 = vdwg.mxu0
  %v432 = vmul.f32 %v406, %v430
  %v433 = vadd.f32 %v352, %v432
  %v434 = vtanh.pop %v433
  %v435 = vsub.f32 1.0, %v411
  %v436 = vmul.f32 %v435, %v434
  %v437 = vmul.f32 %v411, %v262
  %v438 = vadd.f32 %v436, %v437
  %v440 = vsel %vm182, %v342, 0
  %442 = vmatpush.msra.mxu0 0.0
  %443 = vmatpush.msra.mxu0 0.0
  %444 = vmatpush.msra.mxu0 0.0
  %445 = vmatpush.msra.mxu0 0.0
  %446 = vmatpush.msra.mxu0 0.0
  %447 = vmatpush.msra.mxu0 0.0
  %448 = vmatpush.msra.mxu0 0.0
  %449 = vmatpush.msra.mxu0 0.0
  %450 = vmatpush.msra.mxu0 0.0
  %451 = vmatpush.msra.mxu0 0.0
  %452 = vmatpush.msra.mxu0 0.0
  %453 = vmatpush.msra.mxu0 0.0
  %454 = vmatpush.msra.mxu0 %v148
  %455 = vmatpush.msra.mxu0 %v147
  %456 = vmatpush.msra.mxu0 %v146
  %457 = vmatpush.msra.mxu0 %v145
  %458 = vmatmul.f32.gmra.mxu0 %v440
  %v459 = vpop.f32.mrf.mxu0
  %v460 = vadd.f32 0.0, %v459
  %461 = vdwg.mxu0
  %462 = vmatpush.msra.mxu0 0.0
  %463 = vmatpush.msra.mxu0 0.0
  %464 = vmatpush.msra.mxu0 0.0
  %465 = vmatpush.msra.mxu0 0.0
  %466 = vmatpush.msra.mxu0 0.0
  %467 = vmatpush.msra.mxu0 0.0
  %468 = vmatpush.msra.mxu0 0.0
  %469 = vmatpush.msra.mxu0 0.0
  %470 = vmatpush.msra.mxu0 0.0
  %471 = vmatpush.msra.mxu0 0.0
  %472 = vmatpush.msra.mxu0 0.0
  %473 = vmatpush.msra.mxu0 0.0
  %474 = vmatpush.msra.mxu0 %v153
  %475 = vmatpush.msra.mxu0 %v152
  %476 = vmatpush.msra.mxu0 %v151
  %477 = vmatpush.msra.mxu0 %v150
  %478 = vmatmul.f32.gmra.mxu0 %v440
  %v479 = vpop.f32.mrf.mxu0
  %v480 = vadd.f32 0.0, %v479
  %481 = vdwg.mxu0
  %v482 = vadd.f32 %v354, %v460
  %v483 = vmul.f32 %v482, 0.5
  %v484 = vtanh.pop %v483
  %v485 = vmul.f32 %v484, 0.5
  %v486 = vadd.f32 %v485, 0.5
  %v487 = vadd.f32 %v356, %v480
  %v488 = vmul.f32 %v487, 0.5
  %v489 = vtanh.pop %v488
  %v490 = vmul.f32 %v489, 0.5
  %v491 = vadd.f32 %v490, 0.5
  %492 = vmatpush.msra.mxu0 0.0
  %493 = vmatpush.msra.mxu0 0.0
  %494 = vmatpush.msra.mxu0 0.0
  %495 = vmatpush.msra.mxu0 0.0
  %496 = vmatpush.msra.mxu0 0.0
  %497 = vmatpush.msra.mxu0 0.0
  %498 = vmatpush.msra.mxu0 0.0
  %499 = vmatpush.msra.mxu0 0.0
  %500 = vmatpush.msra.mxu0 0.0
  %501 = vmatpush.msra.mxu0 0.0
  %502 = vmatpush.msra.mxu0 0.0
  %503 = vmatpush.msra.mxu0 0.0
  %504 = vmatpush.msra.mxu0 %v158
  %505 = vmatpush.msra.mxu0 %v157
  %506 = vmatpush.msra.mxu0 %v156
  %507 = vmatpush.msra.mxu0 %v155
  %508 = vmatmul.f32.gmra.mxu0 %v440
  %v509 = vpop.f32.mrf.mxu0
  %v510 = vadd.f32 %v166, %v509
  %511 = vdwg.mxu0
  %v512 = vmul.f32 %v486, %v510
  %v513 = vadd.f32 %v358, %v512
  %v514 = vtanh.pop %v513
  %v515 = vsub.f32 1.0, %v491
  %v516 = vmul.f32 %v515, %v514
  %v517 = vmul.f32 %v491, %v342
  %v518 = vadd.f32 %v516, %v517
  %s519 = scalar_lea.vmem %s4, 2
  %520 = vst.msk [vmem:[%s519] sm:$0x3] %vm343, %v438
  %s521 = scalar_lea.vmem %s51, 12
  %522 = vst.msk [vmem:[%s521] sm:$0x3] %vm343, %v518
  %s523 = scalar_lea.vmem %s0, 4
  %v524 = vld [vmem:[%s523] sm:$0x3]
  %s525 = scalar_lea.vmem %s0, 20
  %v526 = vld [vmem:[%s525] sm:$0x3]
  %s527 = scalar_lea.vmem %s0, 36
  %v528 = vld [vmem:[%s527] sm:$0x3]
  %s529 = scalar_lea.vmem %s43, 10
  %v530 = vld [vmem:[%s529] sm:$0x3]
  %s531 = scalar_lea.vmem %s43, 26
  %v532 = vld [vmem:[%s531] sm:$0x3]
  %s533 = scalar_lea.vmem %s43, 42
  %v534 = vld [vmem:[%s533] sm:$0x3]
  %v536 = vsel %vm182, %v438, 0
  %538 = vmatpush.msra.mxu0 0.0
  %539 = vmatpush.msra.mxu0 0.0
  %540 = vmatpush.msra.mxu0 0.0
  %541 = vmatpush.msra.mxu0 0.0
  %542 = vmatpush.msra.mxu0 0.0
  %543 = vmatpush.msra.mxu0 0.0
  %544 = vmatpush.msra.mxu0 0.0
  %545 = vmatpush.msra.mxu0 0.0
  %546 = vmatpush.msra.mxu0 0.0
  %547 = vmatpush.msra.mxu0 0.0
  %548 = vmatpush.msra.mxu0 0.0
  %549 = vmatpush.msra.mxu0 0.0
  %550 = vmatpush.msra.mxu0 %v133
  %551 = vmatpush.msra.mxu0 %v132
  %552 = vmatpush.msra.mxu0 %v131
  %553 = vmatpush.msra.mxu0 %v130
  %554 = vmatmul.f32.gmra.mxu0 %v536
  %v555 = vpop.f32.mrf.mxu0
  %v556 = vadd.f32 0.0, %v555
  %557 = vdwg.mxu0
  %558 = vmatpush.msra.mxu0 0.0
  %559 = vmatpush.msra.mxu0 0.0
  %560 = vmatpush.msra.mxu0 0.0
  %561 = vmatpush.msra.mxu0 0.0
  %562 = vmatpush.msra.mxu0 0.0
  %563 = vmatpush.msra.mxu0 0.0
  %564 = vmatpush.msra.mxu0 0.0
  %565 = vmatpush.msra.mxu0 0.0
  %566 = vmatpush.msra.mxu0 0.0
  %567 = vmatpush.msra.mxu0 0.0
  %568 = vmatpush.msra.mxu0 0.0
  %569 = vmatpush.msra.mxu0 0.0
  %570 = vmatpush.msra.mxu0 %v138
  %571 = vmatpush.msra.mxu0 %v137
  %572 = vmatpush.msra.mxu0 %v136
  %573 = vmatpush.msra.mxu0 %v135
  %574 = vmatmul.f32.gmra.mxu0 %v536
  %v575 = vpop.f32.mrf.mxu0
  %v576 = vadd.f32 0.0, %v575
  %577 = vdwg.mxu0
  %v578 = vadd.f32 %v524, %v556
  %v579 = vmul.f32 %v578, 0.5
  %v580 = vtanh.pop %v579
  %v581 = vmul.f32 %v580, 0.5
  %v582 = vadd.f32 %v581, 0.5
  %v583 = vadd.f32 %v526, %v576
  %v584 = vmul.f32 %v583, 0.5
  %v585 = vtanh.pop %v584
  %v586 = vmul.f32 %v585, 0.5
  %v587 = vadd.f32 %v586, 0.5
  %588 = vmatpush.msra.mxu0 0.0
  %589 = vmatpush.msra.mxu0 0.0
  %590 = vmatpush.msra.mxu0 0.0
  %591 = vmatpush.msra.mxu0 0.0
  %592 = vmatpush.msra.mxu0 0.0
  %593 = vmatpush.msra.mxu0 0.0
  %594 = vmatpush.msra.mxu0 0.0
  %595 = vmatpush.msra.mxu0 0.0
  %596 = vmatpush.msra.mxu0 0.0
  %597 = vmatpush.msra.mxu0 0.0
  %598 = vmatpush.msra.mxu0 0.0
  %599 = vmatpush.msra.mxu0 0.0
  %600 = vmatpush.msra.mxu0 %v143
  %601 = vmatpush.msra.mxu0 %v142
  %602 = vmatpush.msra.mxu0 %v141
  %603 = vmatpush.msra.mxu0 %v140
  %604 = vmatmul.f32.gmra.mxu0 %v536
  %v605 = vpop.f32.mrf.mxu0
  %v606 = vadd.f32 %v161, %v605
  %607 = vdwg.mxu0
  %v608 = vmul.f32 %v582, %v606
  %v609 = vadd.f32 %v528, %v608
  %v610 = vtanh.pop %v609
  %v611 = vsub.f32 1.0, %v587
  %v612 = vmul.f32 %v611, %v610
  %v613 = vmul.f32 %v587, %v438
  %v614 = vadd.f32 %v612, %v613
  %v616 = vsel %vm182, %v518, 0
  %618 = vmatpush.msra.mxu0 0.0
  %619 = vmatpush.msra.mxu0 0.0
  %620 = vmatpush.msra.mxu0 0.0
  %621 = vmatpush.msra.mxu0 0.0
  %622 = vmatpush.msra.mxu0 0.0
  %623 = vmatpush.msra.mxu0 0.0
  %624 = vmatpush.msra.mxu0 0.0
  %625 = vmatpush.msra.mxu0 0.0
  %626 = vmatpush.msra.mxu0 0.0
  %627 = vmatpush.msra.mxu0 0.0
  %628 = vmatpush.msra.mxu0 0.0
  %629 = vmatpush.msra.mxu0 0.0
  %630 = vmatpush.msra.mxu0 %v148
  %631 = vmatpush.msra.mxu0 %v147
  %632 = vmatpush.msra.mxu0 %v146
  %633 = vmatpush.msra.mxu0 %v145
  %634 = vmatmul.f32.gmra.mxu0 %v616
  %v635 = vpop.f32.mrf.mxu0
  %v636 = vadd.f32 0.0, %v635
  %637 = vdwg.mxu0
  %638 = vmatpush.msra.mxu0 0.0
  %639 = vmatpush.msra.mxu0 0.0
  %640 = vmatpush.msra.mxu0 0.0
  %641 = vmatpush.msra.mxu0 0.0
  %642 = vmatpush.msra.mxu0 0.0
  %643 = vmatpush.msra.mxu0 0.0
  %644 = vmatpush.msra.mxu0 0.0
  %645 = vmatpush.msra.mxu0 0.0
  %646 = vmatpush.msra.mxu0 0.0
  %647 = vmatpush.msra.mxu0 0.0
  %648 = vmatpush.msra.mxu0 0.0
  %649 = vmatpush.msra.mxu0 0.0
  %650 = vmatpush.msra.mxu0 %v153
  %651 = vmatpush.msra.mxu0 %v152
  %652 = vmatpush.msra.mxu0 %v151
  %653 = vmatpush.msra.mxu0 %v150
  %654 = vmatmul.f32.gmra.mxu0 %v616
  %v655 = vpop.f32.mrf.mxu0
  %v656 = vadd.f32 0.0, %v655
  %657 = vdwg.mxu0
  %v658 = vadd.f32 %v530, %v636
  %v659 = vmul.f32 %v658, 0.5
  %v660 = vtanh.pop %v659
  %v661 = vmul.f32 %v660, 0.5
  %v662 = vadd.f32 %v661, 0.5
  %v663 = vadd.f32 %v532, %v656
  %v664 = vmul.f32 %v663, 0.5
  %v665 = vtanh.pop %v664
  %v666 = vmul.f32 %v665, 0.5
  %v667 = vadd.f32 %v666, 0.5
  %668 = vmatpush.msra.mxu0 0.0
  %669 = vmatpush.msra.mxu0 0.0
  %670 = vmatpush.msra.mxu0 0.0
  %671 = vmatpush.msra.mxu0 0.0
  %672 = vmatpush.msra.mxu0 0.0
  %673 = vmatpush.msra.mxu0 0.0
  %674 = vmatpush.msra.mxu0 0.0
  %675 = vmatpush.msra.mxu0 0.0
  %676 = vmatpush.msra.mxu0 0.0
  %677 = vmatpush.msra.mxu0 0.0
  %678 = vmatpush.msra.mxu0 0.0
  %679 = vmatpush.msra.mxu0 0.0
  %680 = vmatpush.msra.mxu0 %v158
  %681 = vmatpush.msra.mxu0 %v157
  %682 = vmatpush.msra.mxu0 %v156
  %683 = vmatpush.msra.mxu0 %v155
  %684 = vmatmul.f32.gmra.mxu0 %v616
  %v685 = vpop.f32.mrf.mxu0
  %v686 = vadd.f32 %v166, %v685
  %687 = vdwg.mxu0
  %v688 = vmul.f32 %v662, %v686
  %v689 = vadd.f32 %v534, %v688
  %v690 = vtanh.pop %v689
  %v691 = vsub.f32 1.0, %v667
  %v692 = vmul.f32 %v691, %v690
  %v693 = vmul.f32 %v667, %v518
  %v694 = vadd.f32 %v692, %v693
  %s695 = scalar_lea.vmem %s4, 4
  %696 = vst.msk [vmem:[%s695] sm:$0x3] %vm343, %v614
  %s697 = scalar_lea.vmem %s51, 10
  %698 = vst.msk [vmem:[%s697] sm:$0x3] %vm343, %v694
  %s699 = scalar_lea.vmem %s0, 6
  %v700 = vld [vmem:[%s699] sm:$0x3]
  %s701 = scalar_lea.vmem %s0, 22
  %v702 = vld [vmem:[%s701] sm:$0x3]
  %s703 = scalar_lea.vmem %s0, 38
  %v704 = vld [vmem:[%s703] sm:$0x3]
  %s705 = scalar_lea.vmem %s43, 8
  %v706 = vld [vmem:[%s705] sm:$0x3]
  %s707 = scalar_lea.vmem %s43, 24
  %v708 = vld [vmem:[%s707] sm:$0x3]
  %s709 = scalar_lea.vmem %s43, 40
  %v710 = vld [vmem:[%s709] sm:$0x3]
  %v712 = vsel %vm182, %v614, 0
  %714 = vmatpush.msra.mxu0 0.0
  %715 = vmatpush.msra.mxu0 0.0
  %716 = vmatpush.msra.mxu0 0.0
  %717 = vmatpush.msra.mxu0 0.0
  %718 = vmatpush.msra.mxu0 0.0
  %719 = vmatpush.msra.mxu0 0.0
  %720 = vmatpush.msra.mxu0 0.0
  %721 = vmatpush.msra.mxu0 0.0
  %722 = vmatpush.msra.mxu0 0.0
  %723 = vmatpush.msra.mxu0 0.0
  %724 = vmatpush.msra.mxu0 0.0
  %725 = vmatpush.msra.mxu0 0.0
  %726 = vmatpush.msra.mxu0 %v133
  %727 = vmatpush.msra.mxu0 %v132
  %728 = vmatpush.msra.mxu0 %v131
  %729 = vmatpush.msra.mxu0 %v130
  %730 = vmatmul.f32.gmra.mxu0 %v712
  %v731 = vpop.f32.mrf.mxu0
  %v732 = vadd.f32 0.0, %v731
  %733 = vdwg.mxu0
  %734 = vmatpush.msra.mxu0 0.0
  %735 = vmatpush.msra.mxu0 0.0
  %736 = vmatpush.msra.mxu0 0.0
  %737 = vmatpush.msra.mxu0 0.0
  %738 = vmatpush.msra.mxu0 0.0
  %739 = vmatpush.msra.mxu0 0.0
  %740 = vmatpush.msra.mxu0 0.0
  %741 = vmatpush.msra.mxu0 0.0
  %742 = vmatpush.msra.mxu0 0.0
  %743 = vmatpush.msra.mxu0 0.0
  %744 = vmatpush.msra.mxu0 0.0
  %745 = vmatpush.msra.mxu0 0.0
  %746 = vmatpush.msra.mxu0 %v138
  %747 = vmatpush.msra.mxu0 %v137
  %748 = vmatpush.msra.mxu0 %v136
  %749 = vmatpush.msra.mxu0 %v135
  %750 = vmatmul.f32.gmra.mxu0 %v712
  %v751 = vpop.f32.mrf.mxu0
  %v752 = vadd.f32 0.0, %v751
  %753 = vdwg.mxu0
  %v754 = vadd.f32 %v700, %v732
  %v755 = vmul.f32 %v754, 0.5
  %v756 = vtanh.pop %v755
  %v757 = vmul.f32 %v756, 0.5
  %v758 = vadd.f32 %v757, 0.5
  %v759 = vadd.f32 %v702, %v752
  %v760 = vmul.f32 %v759, 0.5
  %v761 = vtanh.pop %v760
  %v762 = vmul.f32 %v761, 0.5
  %v763 = vadd.f32 %v762, 0.5
  %764 = vmatpush.msra.mxu0 0.0
  %765 = vmatpush.msra.mxu0 0.0
  %766 = vmatpush.msra.mxu0 0.0
  %767 = vmatpush.msra.mxu0 0.0
  %768 = vmatpush.msra.mxu0 0.0
  %769 = vmatpush.msra.mxu0 0.0
  %770 = vmatpush.msra.mxu0 0.0
  %771 = vmatpush.msra.mxu0 0.0
  %772 = vmatpush.msra.mxu0 0.0
  %773 = vmatpush.msra.mxu0 0.0
  %774 = vmatpush.msra.mxu0 0.0
  %775 = vmatpush.msra.mxu0 0.0
  %776 = vmatpush.msra.mxu0 %v143
  %777 = vmatpush.msra.mxu0 %v142
  %778 = vmatpush.msra.mxu0 %v141
  %779 = vmatpush.msra.mxu0 %v140
  %780 = vmatmul.f32.gmra.mxu0 %v712
  %v781 = vpop.f32.mrf.mxu0
  %v782 = vadd.f32 %v161, %v781
  %783 = vdwg.mxu0
  %v784 = vmul.f32 %v758, %v782
  %v785 = vadd.f32 %v704, %v784
  %v786 = vtanh.pop %v785
  %v787 = vsub.f32 1.0, %v763
  %v788 = vmul.f32 %v787, %v786
  %v789 = vmul.f32 %v763, %v614
  %v790 = vadd.f32 %v788, %v789
  %v792 = vsel %vm182, %v694, 0
  %794 = vmatpush.msra.mxu0 0.0
  %795 = vmatpush.msra.mxu0 0.0
  %796 = vmatpush.msra.mxu0 0.0
  %797 = vmatpush.msra.mxu0 0.0
  %798 = vmatpush.msra.mxu0 0.0
  %799 = vmatpush.msra.mxu0 0.0
  %800 = vmatpush.msra.mxu0 0.0
  %801 = vmatpush.msra.mxu0 0.0
  %802 = vmatpush.msra.mxu0 0.0
  %803 = vmatpush.msra.mxu0 0.0
  %804 = vmatpush.msra.mxu0 0.0
  %805 = vmatpush.msra.mxu0 0.0
  %806 = vmatpush.msra.mxu0 %v148
  %807 = vmatpush.msra.mxu0 %v147
  %808 = vmatpush.msra.mxu0 %v146
  %809 = vmatpush.msra.mxu0 %v145
  %810 = vmatmul.f32.gmra.mxu0 %v792
  %v811 = vpop.f32.mrf.mxu0
  %v812 = vadd.f32 0.0, %v811
  %813 = vdwg.mxu0
  %814 = vmatpush.msra.mxu0 0.0
  %815 = vmatpush.msra.mxu0 0.0
  %816 = vmatpush.msra.mxu0 0.0
  %817 = vmatpush.msra.mxu0 0.0
  %818 = vmatpush.msra.mxu0 0.0
  %819 = vmatpush.msra.mxu0 0.0
  %820 = vmatpush.msra.mxu0 0.0
  %821 = vmatpush.msra.mxu0 0.0
  %822 = vmatpush.msra.mxu0 0.0
  %823 = vmatpush.msra.mxu0 0.0
  %824 = vmatpush.msra.mxu0 0.0
  %825 = vmatpush.msra.mxu0 0.0
  %826 = vmatpush.msra.mxu0 %v153
  %827 = vmatpush.msra.mxu0 %v152
  %828 = vmatpush.msra.mxu0 %v151
  %829 = vmatpush.msra.mxu0 %v150
  %830 = vmatmul.f32.gmra.mxu0 %v792
  %v831 = vpop.f32.mrf.mxu0
  %v832 = vadd.f32 0.0, %v831
  %833 = vdwg.mxu0
  %v834 = vadd.f32 %v706, %v812
  %v835 = vmul.f32 %v834, 0.5
  %v836 = vtanh.pop %v835
  %v837 = vmul.f32 %v836, 0.5
  %v838 = vadd.f32 %v837, 0.5
  %v839 = vadd.f32 %v708, %v832
  %v840 = vmul.f32 %v839, 0.5
  %v841 = vtanh.pop %v840
  %v842 = vmul.f32 %v841, 0.5
  %v843 = vadd.f32 %v842, 0.5
  %844 = vmatpush.msra.mxu0 0.0
  %845 = vmatpush.msra.mxu0 0.0
  %846 = vmatpush.msra.mxu0 0.0
  %847 = vmatpush.msra.mxu0 0.0
  %848 = vmatpush.msra.mxu0 0.0
  %849 = vmatpush.msra.mxu0 0.0
  %850 = vmatpush.msra.mxu0 0.0
  %851 = vmatpush.msra.mxu0 0.0
  %852 = vmatpush.msra.mxu0 0.0
  %853 = vmatpush.msra.mxu0 0.0
  %854 = vmatpush.msra.mxu0 0.0
  %855 = vmatpush.msra.mxu0 0.0
  %856 = vmatpush.msra.mxu0 %v158
  %857 = vmatpush.msra.mxu0 %v157
  %858 = vmatpush.msra.mxu0 %v156
  %859 = vmatpush.msra.mxu0 %v155
  %860 = vmatmul.f32.gmra.mxu0 %v792
  %v861 = vpop.f32.mrf.mxu0
  %v862 = vadd.f32 %v166, %v861
  %863 = vdwg.mxu0
  %v864 = vmul.f32 %v838, %v862
  %v865 = vadd.f32 %v710, %v864
  %v866 = vtanh.pop %v865
  %v867 = vsub.f32 1.0, %v843
  %v868 = vmul.f32 %v867, %v866
  %v869 = vmul.f32 %v843, %v694
  %v870 = vadd.f32 %v868, %v869
  %s871 = scalar_lea.vmem %s4, 6
  %872 = vst.msk [vmem:[%s871] sm:$0x3] %vm343, %v790
  %s873 = scalar_lea.vmem %s51, 8
  %874 = vst.msk [vmem:[%s873] sm:$0x3] %vm343, %v870
  %s875 = scalar_lea.vmem %s0, 8
  %v876 = vld [vmem:[%s875] sm:$0x3]
  %s877 = scalar_lea.vmem %s0, 24
  %v878 = vld [vmem:[%s877] sm:$0x3]
  %s879 = scalar_lea.vmem %s0, 40
  %v880 = vld [vmem:[%s879] sm:$0x3]
  %s881 = scalar_lea.vmem %s43, 6
  %v882 = vld [vmem:[%s881] sm:$0x3]
  %s883 = scalar_lea.vmem %s43, 22
  %v884 = vld [vmem:[%s883] sm:$0x3]
  %s885 = scalar_lea.vmem %s43, 38
  %v886 = vld [vmem:[%s885] sm:$0x3]
  %v888 = vsel %vm182, %v790, 0
  %890 = vmatpush.msra.mxu0 0.0
  %891 = vmatpush.msra.mxu0 0.0
  %892 = vmatpush.msra.mxu0 0.0
  %893 = vmatpush.msra.mxu0 0.0
  %894 = vmatpush.msra.mxu0 0.0
  %895 = vmatpush.msra.mxu0 0.0
  %896 = vmatpush.msra.mxu0 0.0
  %897 = vmatpush.msra.mxu0 0.0
  %898 = vmatpush.msra.mxu0 0.0
  %899 = vmatpush.msra.mxu0 0.0
  %900 = vmatpush.msra.mxu0 0.0
  %901 = vmatpush.msra.mxu0 0.0
  %902 = vmatpush.msra.mxu0 %v133
  %903 = vmatpush.msra.mxu0 %v132
  %904 = vmatpush.msra.mxu0 %v131
  %905 = vmatpush.msra.mxu0 %v130
  %906 = vmatmul.f32.gmra.mxu0 %v888
  %v907 = vpop.f32.mrf.mxu0
  %v908 = vadd.f32 0.0, %v907
  %909 = vdwg.mxu0
  %910 = vmatpush.msra.mxu0 0.0
  %911 = vmatpush.msra.mxu0 0.0
  %912 = vmatpush.msra.mxu0 0.0
  %913 = vmatpush.msra.mxu0 0.0
  %914 = vmatpush.msra.mxu0 0.0
  %915 = vmatpush.msra.mxu0 0.0
  %916 = vmatpush.msra.mxu0 0.0
  %917 = vmatpush.msra.mxu0 0.0
  %918 = vmatpush.msra.mxu0 0.0
  %919 = vmatpush.msra.mxu0 0.0
  %920 = vmatpush.msra.mxu0 0.0
  %921 = vmatpush.msra.mxu0 0.0
  %922 = vmatpush.msra.mxu0 %v138
  %923 = vmatpush.msra.mxu0 %v137
  %924 = vmatpush.msra.mxu0 %v136
  %925 = vmatpush.msra.mxu0 %v135
  %926 = vmatmul.f32.gmra.mxu0 %v888
  %v927 = vpop.f32.mrf.mxu0
  %v928 = vadd.f32 0.0, %v927
  %929 = vdwg.mxu0
  %v930 = vadd.f32 %v876, %v908
  %v931 = vmul.f32 %v930, 0.5
  %v932 = vtanh.pop %v931
  %v933 = vmul.f32 %v932, 0.5
  %v934 = vadd.f32 %v933, 0.5
  %v935 = vadd.f32 %v878, %v928
  %v936 = vmul.f32 %v935, 0.5
  %v937 = vtanh.pop %v936
  %v938 = vmul.f32 %v937, 0.5
  %v939 = vadd.f32 %v938, 0.5
  %940 = vmatpush.msra.mxu0 0.0
  %941 = vmatpush.msra.mxu0 0.0
  %942 = vmatpush.msra.mxu0 0.0
  %943 = vmatpush.msra.mxu0 0.0
  %944 = vmatpush.msra.mxu0 0.0
  %945 = vmatpush.msra.mxu0 0.0
  %946 = vmatpush.msra.mxu0 0.0
  %947 = vmatpush.msra.mxu0 0.0
  %948 = vmatpush.msra.mxu0 0.0
  %949 = vmatpush.msra.mxu0 0.0
  %950 = vmatpush.msra.mxu0 0.0
  %951 = vmatpush.msra.mxu0 0.0
  %952 = vmatpush.msra.mxu0 %v143
  %953 = vmatpush.msra.mxu0 %v142
  %954 = vmatpush.msra.mxu0 %v141
  %955 = vmatpush.msra.mxu0 %v140
  %956 = vmatmul.f32.gmra.mxu0 %v888
  %v957 = vpop.f32.mrf.mxu0
  %v958 = vadd.f32 %v161, %v957
  %959 = vdwg.mxu0
  %v960 = vmul.f32 %v934, %v958
  %v961 = vadd.f32 %v880, %v960
  %v962 = vtanh.pop %v961
  %v963 = vsub.f32 1.0, %v939
  %v964 = vmul.f32 %v963, %v962
  %v965 = vmul.f32 %v939, %v790
  %v966 = vadd.f32 %v964, %v965
  %v968 = vsel %vm182, %v870, 0
  %970 = vmatpush.msra.mxu0 0.0
  %971 = vmatpush.msra.mxu0 0.0
  %972 = vmatpush.msra.mxu0 0.0
  %973 = vmatpush.msra.mxu0 0.0
  %974 = vmatpush.msra.mxu0 0.0
  %975 = vmatpush.msra.mxu0 0.0
  %976 = vmatpush.msra.mxu0 0.0
  %977 = vmatpush.msra.mxu0 0.0
  %978 = vmatpush.msra.mxu0 0.0
  %979 = vmatpush.msra.mxu0 0.0
  %980 = vmatpush.msra.mxu0 0.0
  %981 = vmatpush.msra.mxu0 0.0
  %982 = vmatpush.msra.mxu0 %v148
  %983 = vmatpush.msra.mxu0 %v147
  %984 = vmatpush.msra.mxu0 %v146
  %985 = vmatpush.msra.mxu0 %v145
  %986 = vmatmul.f32.gmra.mxu0 %v968
  %v987 = vpop.f32.mrf.mxu0
  %v988 = vadd.f32 0.0, %v987
  %989 = vdwg.mxu0
  %990 = vmatpush.msra.mxu0 0.0
  %991 = vmatpush.msra.mxu0 0.0
  %992 = vmatpush.msra.mxu0 0.0
  %993 = vmatpush.msra.mxu0 0.0
  %994 = vmatpush.msra.mxu0 0.0
  %995 = vmatpush.msra.mxu0 0.0
  %996 = vmatpush.msra.mxu0 0.0
  %997 = vmatpush.msra.mxu0 0.0
  %998 = vmatpush.msra.mxu0 0.0
  %999 = vmatpush.msra.mxu0 0.0
  %1000 = vmatpush.msra.mxu0 0.0
  %1001 = vmatpush.msra.mxu0 0.0
  %1002 = vmatpush.msra.mxu0 %v153
  %1003 = vmatpush.msra.mxu0 %v152
  %1004 = vmatpush.msra.mxu0 %v151
  %1005 = vmatpush.msra.mxu0 %v150
  %1006 = vmatmul.f32.gmra.mxu0 %v968
  %v1007 = vpop.f32.mrf.mxu0
  %v1008 = vadd.f32 0.0, %v1007
  %1009 = vdwg.mxu0
  %v1010 = vadd.f32 %v882, %v988
  %v1011 = vmul.f32 %v1010, 0.5
  %v1012 = vtanh.pop %v1011
  %v1013 = vmul.f32 %v1012, 0.5
  %v1014 = vadd.f32 %v1013, 0.5
  %v1015 = vadd.f32 %v884, %v1008
  %v1016 = vmul.f32 %v1015, 0.5
  %v1017 = vtanh.pop %v1016
  %v1018 = vmul.f32 %v1017, 0.5
  %v1019 = vadd.f32 %v1018, 0.5
  %1020 = vmatpush.msra.mxu0 0.0
  %1021 = vmatpush.msra.mxu0 0.0
  %1022 = vmatpush.msra.mxu0 0.0
  %1023 = vmatpush.msra.mxu0 0.0
  %1024 = vmatpush.msra.mxu0 0.0
  %1025 = vmatpush.msra.mxu0 0.0
  %1026 = vmatpush.msra.mxu0 0.0
  %1027 = vmatpush.msra.mxu0 0.0
  %1028 = vmatpush.msra.mxu0 0.0
  %1029 = vmatpush.msra.mxu0 0.0
  %1030 = vmatpush.msra.mxu0 0.0
  %1031 = vmatpush.msra.mxu0 0.0
  %1032 = vmatpush.msra.mxu0 %v158
  %1033 = vmatpush.msra.mxu0 %v157
  %1034 = vmatpush.msra.mxu0 %v156
  %1035 = vmatpush.msra.mxu0 %v155
  %1036 = vmatmul.f32.gmra.mxu0 %v968
  %v1037 = vpop.f32.mrf.mxu0
  %v1038 = vadd.f32 %v166, %v1037
  %1039 = vdwg.mxu0
  %v1040 = vmul.f32 %v1014, %v1038
  %v1041 = vadd.f32 %v886, %v1040
  %v1042 = vtanh.pop %v1041
  %v1043 = vsub.f32 1.0, %v1019
  %v1044 = vmul.f32 %v1043, %v1042
  %v1045 = vmul.f32 %v1019, %v870
  %v1046 = vadd.f32 %v1044, %v1045
  %s1047 = scalar_lea.vmem %s4, 8
  %1048 = vst.msk [vmem:[%s1047] sm:$0x3] %vm343, %v966
  %s1049 = scalar_lea.vmem %s51, 6
  %1050 = vst.msk [vmem:[%s1049] sm:$0x3] %vm343, %v1046
  %s1051 = scalar_lea.vmem %s0, 10
  %v1052 = vld [vmem:[%s1051] sm:$0x3]
  %s1053 = scalar_lea.vmem %s0, 26
  %v1054 = vld [vmem:[%s1053] sm:$0x3]
  %s1055 = scalar_lea.vmem %s0, 42
  %v1056 = vld [vmem:[%s1055] sm:$0x3]
  %s1057 = scalar_lea.vmem %s43, 4
  %v1058 = vld [vmem:[%s1057] sm:$0x3]
  %s1059 = scalar_lea.vmem %s43, 20
  %v1060 = vld [vmem:[%s1059] sm:$0x3]
  %s1061 = scalar_lea.vmem %s43, 36
  %v1062 = vld [vmem:[%s1061] sm:$0x3]
  %v1064 = vsel %vm182, %v966, 0
  %1066 = vmatpush.msra.mxu0 0.0
  %1067 = vmatpush.msra.mxu0 0.0
  %1068 = vmatpush.msra.mxu0 0.0
  %1069 = vmatpush.msra.mxu0 0.0
  %1070 = vmatpush.msra.mxu0 0.0
  %1071 = vmatpush.msra.mxu0 0.0
  %1072 = vmatpush.msra.mxu0 0.0
  %1073 = vmatpush.msra.mxu0 0.0
  %1074 = vmatpush.msra.mxu0 0.0
  %1075 = vmatpush.msra.mxu0 0.0
  %1076 = vmatpush.msra.mxu0 0.0
  %1077 = vmatpush.msra.mxu0 0.0
  %1078 = vmatpush.msra.mxu0 %v133
  %1079 = vmatpush.msra.mxu0 %v132
  %1080 = vmatpush.msra.mxu0 %v131
  %1081 = vmatpush.msra.mxu0 %v130
  %1082 = vmatmul.f32.gmra.mxu0 %v1064
  %v1083 = vpop.f32.mrf.mxu0
  %v1084 = vadd.f32 0.0, %v1083
  %1085 = vdwg.mxu0
  %1086 = vmatpush.msra.mxu0 0.0
  %1087 = vmatpush.msra.mxu0 0.0
  %1088 = vmatpush.msra.mxu0 0.0
  %1089 = vmatpush.msra.mxu0 0.0
  %1090 = vmatpush.msra.mxu0 0.0
  %1091 = vmatpush.msra.mxu0 0.0
  %1092 = vmatpush.msra.mxu0 0.0
  %1093 = vmatpush.msra.mxu0 0.0
  %1094 = vmatpush.msra.mxu0 0.0
  %1095 = vmatpush.msra.mxu0 0.0
  %1096 = vmatpush.msra.mxu0 0.0
  %1097 = vmatpush.msra.mxu0 0.0
  %1098 = vmatpush.msra.mxu0 %v138
  %1099 = vmatpush.msra.mxu0 %v137
  %1100 = vmatpush.msra.mxu0 %v136
  %1101 = vmatpush.msra.mxu0 %v135
  %1102 = vmatmul.f32.gmra.mxu0 %v1064
  %v1103 = vpop.f32.mrf.mxu0
  %v1104 = vadd.f32 0.0, %v1103
  %1105 = vdwg.mxu0
  %v1106 = vadd.f32 %v1052, %v1084
  %v1107 = vmul.f32 %v1106, 0.5
  %v1108 = vtanh.pop %v1107
  %v1109 = vmul.f32 %v1108, 0.5
  %v1110 = vadd.f32 %v1109, 0.5
  %v1111 = vadd.f32 %v1054, %v1104
  %v1112 = vmul.f32 %v1111, 0.5
  %v1113 = vtanh.pop %v1112
  %v1114 = vmul.f32 %v1113, 0.5
  %v1115 = vadd.f32 %v1114, 0.5
  %1116 = vmatpush.msra.mxu0 0.0
  %1117 = vmatpush.msra.mxu0 0.0
  %1118 = vmatpush.msra.mxu0 0.0
  %1119 = vmatpush.msra.mxu0 0.0
  %1120 = vmatpush.msra.mxu0 0.0
  %1121 = vmatpush.msra.mxu0 0.0
  %1122 = vmatpush.msra.mxu0 0.0
  %1123 = vmatpush.msra.mxu0 0.0
  %1124 = vmatpush.msra.mxu0 0.0
  %1125 = vmatpush.msra.mxu0 0.0
  %1126 = vmatpush.msra.mxu0 0.0
  %1127 = vmatpush.msra.mxu0 0.0
  %1128 = vmatpush.msra.mxu0 %v143
  %1129 = vmatpush.msra.mxu0 %v142
  %1130 = vmatpush.msra.mxu0 %v141
  %1131 = vmatpush.msra.mxu0 %v140
  %1132 = vmatmul.f32.gmra.mxu0 %v1064
  %v1133 = vpop.f32.mrf.mxu0
  %v1134 = vadd.f32 %v161, %v1133
  %1135 = vdwg.mxu0
  %v1136 = vmul.f32 %v1110, %v1134
  %v1137 = vadd.f32 %v1056, %v1136
  %v1138 = vtanh.pop %v1137
  %v1139 = vsub.f32 1.0, %v1115
  %v1140 = vmul.f32 %v1139, %v1138
  %v1141 = vmul.f32 %v1115, %v966
  %v1142 = vadd.f32 %v1140, %v1141
  %v1144 = vsel %vm182, %v1046, 0
  %1146 = vmatpush.msra.mxu0 0.0
  %1147 = vmatpush.msra.mxu0 0.0
  %1148 = vmatpush.msra.mxu0 0.0
  %1149 = vmatpush.msra.mxu0 0.0
  %1150 = vmatpush.msra.mxu0 0.0
  %1151 = vmatpush.msra.mxu0 0.0
  %1152 = vmatpush.msra.mxu0 0.0
  %1153 = vmatpush.msra.mxu0 0.0
  %1154 = vmatpush.msra.mxu0 0.0
  %1155 = vmatpush.msra.mxu0 0.0
  %1156 = vmatpush.msra.mxu0 0.0
  %1157 = vmatpush.msra.mxu0 0.0
  %1158 = vmatpush.msra.mxu0 %v148
  %1159 = vmatpush.msra.mxu0 %v147
  %1160 = vmatpush.msra.mxu0 %v146
  %1161 = vmatpush.msra.mxu0 %v145
  %1162 = vmatmul.f32.gmra.mxu0 %v1144
  %v1163 = vpop.f32.mrf.mxu0
  %v1164 = vadd.f32 0.0, %v1163
  %1165 = vdwg.mxu0
  %1166 = vmatpush.msra.mxu0 0.0
  %1167 = vmatpush.msra.mxu0 0.0
  %1168 = vmatpush.msra.mxu0 0.0
  %1169 = vmatpush.msra.mxu0 0.0
  %1170 = vmatpush.msra.mxu0 0.0
  %1171 = vmatpush.msra.mxu0 0.0
  %1172 = vmatpush.msra.mxu0 0.0
  %1173 = vmatpush.msra.mxu0 0.0
  %1174 = vmatpush.msra.mxu0 0.0
  %1175 = vmatpush.msra.mxu0 0.0
  %1176 = vmatpush.msra.mxu0 0.0
  %1177 = vmatpush.msra.mxu0 0.0
  %1178 = vmatpush.msra.mxu0 %v153
  %1179 = vmatpush.msra.mxu0 %v152
  %1180 = vmatpush.msra.mxu0 %v151
  %1181 = vmatpush.msra.mxu0 %v150
  %1182 = vmatmul.f32.gmra.mxu0 %v1144
  %v1183 = vpop.f32.mrf.mxu0
  %v1184 = vadd.f32 0.0, %v1183
  %1185 = vdwg.mxu0
  %v1186 = vadd.f32 %v1058, %v1164
  %v1187 = vmul.f32 %v1186, 0.5
  %v1188 = vtanh.pop %v1187
  %v1189 = vmul.f32 %v1188, 0.5
  %v1190 = vadd.f32 %v1189, 0.5
  %v1191 = vadd.f32 %v1060, %v1184
  %v1192 = vmul.f32 %v1191, 0.5
  %v1193 = vtanh.pop %v1192
  %v1194 = vmul.f32 %v1193, 0.5
  %v1195 = vadd.f32 %v1194, 0.5
  %1196 = vmatpush.msra.mxu0 0.0
  %1197 = vmatpush.msra.mxu0 0.0
  %1198 = vmatpush.msra.mxu0 0.0
  %1199 = vmatpush.msra.mxu0 0.0
  %1200 = vmatpush.msra.mxu0 0.0
  %1201 = vmatpush.msra.mxu0 0.0
  %1202 = vmatpush.msra.mxu0 0.0
  %1203 = vmatpush.msra.mxu0 0.0
  %1204 = vmatpush.msra.mxu0 0.0
  %1205 = vmatpush.msra.mxu0 0.0
  %1206 = vmatpush.msra.mxu0 0.0
  %1207 = vmatpush.msra.mxu0 0.0
  %1208 = vmatpush.msra.mxu0 %v158
  %1209 = vmatpush.msra.mxu0 %v157
  %1210 = vmatpush.msra.mxu0 %v156
  %1211 = vmatpush.msra.mxu0 %v155
  %1212 = vmatmul.f32.gmra.mxu0 %v1144
  %v1213 = vpop.f32.mrf.mxu0
  %v1214 = vadd.f32 %v166, %v1213
  %1215 = vdwg.mxu0
  %v1216 = vmul.f32 %v1190, %v1214
  %v1217 = vadd.f32 %v1062, %v1216
  %v1218 = vtanh.pop %v1217
  %v1219 = vsub.f32 1.0, %v1195
  %v1220 = vmul.f32 %v1219, %v1218
  %v1221 = vmul.f32 %v1195, %v1046
  %v1222 = vadd.f32 %v1220, %v1221
  %s1223 = scalar_lea.vmem %s4, 10
  %1224 = vst.msk [vmem:[%s1223] sm:$0x3] %vm343, %v1142
  %s1225 = scalar_lea.vmem %s51, 4
  %1226 = vst.msk [vmem:[%s1225] sm:$0x3] %vm343, %v1222
  %s1227 = scalar_lea.vmem %s0, 12
  %v1228 = vld [vmem:[%s1227] sm:$0x3]
  %s1229 = scalar_lea.vmem %s0, 28
  %v1230 = vld [vmem:[%s1229] sm:$0x3]
  %s1231 = scalar_lea.vmem %s0, 44
  %v1232 = vld [vmem:[%s1231] sm:$0x3]
  %s1233 = scalar_lea.vmem %s43, 2
  %v1234 = vld [vmem:[%s1233] sm:$0x3]
  %s1235 = scalar_lea.vmem %s43, 18
  %v1236 = vld [vmem:[%s1235] sm:$0x3]
  %s1237 = scalar_lea.vmem %s43, 34
  %v1238 = vld [vmem:[%s1237] sm:$0x3]
  %v1240 = vsel %vm182, %v1142, 0
  %1242 = vmatpush.msra.mxu0 0.0
  %1243 = vmatpush.msra.mxu0 0.0
  %1244 = vmatpush.msra.mxu0 0.0
  %1245 = vmatpush.msra.mxu0 0.0
  %1246 = vmatpush.msra.mxu0 0.0
  %1247 = vmatpush.msra.mxu0 0.0
  %1248 = vmatpush.msra.mxu0 0.0
  %1249 = vmatpush.msra.mxu0 0.0
  %1250 = vmatpush.msra.mxu0 0.0
  %1251 = vmatpush.msra.mxu0 0.0
  %1252 = vmatpush.msra.mxu0 0.0
  %1253 = vmatpush.msra.mxu0 0.0
  %1254 = vmatpush.msra.mxu0 %v133
  %1255 = vmatpush.msra.mxu0 %v132
  %1256 = vmatpush.msra.mxu0 %v131
  %1257 = vmatpush.msra.mxu0 %v130
  %1258 = vmatmul.f32.gmra.mxu0 %v1240
  %v1259 = vpop.f32.mrf.mxu0
  %v1260 = vadd.f32 0.0, %v1259
  %1261 = vdwg.mxu0
  %1262 = vmatpush.msra.mxu0 0.0
  %1263 = vmatpush.msra.mxu0 0.0
  %1264 = vmatpush.msra.mxu0 0.0
  %1265 = vmatpush.msra.mxu0 0.0
  %1266 = vmatpush.msra.mxu0 0.0
  %1267 = vmatpush.msra.mxu0 0.0
  %1268 = vmatpush.msra.mxu0 0.0
  %1269 = vmatpush.msra.mxu0 0.0
  %1270 = vmatpush.msra.mxu0 0.0
  %1271 = vmatpush.msra.mxu0 0.0
  %1272 = vmatpush.msra.mxu0 0.0
  %1273 = vmatpush.msra.mxu0 0.0
  %1274 = vmatpush.msra.mxu0 %v138
  %1275 = vmatpush.msra.mxu0 %v137
  %1276 = vmatpush.msra.mxu0 %v136
  %1277 = vmatpush.msra.mxu0 %v135
  %1278 = vmatmul.f32.gmra.mxu0 %v1240
  %v1279 = vpop.f32.mrf.mxu0
  %v1280 = vadd.f32 0.0, %v1279
  %1281 = vdwg.mxu0
  %v1282 = vadd.f32 %v1228, %v1260
  %v1283 = vmul.f32 %v1282, 0.5
  %v1284 = vtanh.pop %v1283
  %v1285 = vmul.f32 %v1284, 0.5
  %v1286 = vadd.f32 %v1285, 0.5
  %v1287 = vadd.f32 %v1230, %v1280
  %v1288 = vmul.f32 %v1287, 0.5
  %v1289 = vtanh.pop %v1288
  %v1290 = vmul.f32 %v1289, 0.5
  %v1291 = vadd.f32 %v1290, 0.5
  %1292 = vmatpush.msra.mxu0 0.0
  %1293 = vmatpush.msra.mxu0 0.0
  %1294 = vmatpush.msra.mxu0 0.0
  %1295 = vmatpush.msra.mxu0 0.0
  %1296 = vmatpush.msra.mxu0 0.0
  %1297 = vmatpush.msra.mxu0 0.0
  %1298 = vmatpush.msra.mxu0 0.0
  %1299 = vmatpush.msra.mxu0 0.0
  %1300 = vmatpush.msra.mxu0 0.0
  %1301 = vmatpush.msra.mxu0 0.0
  %1302 = vmatpush.msra.mxu0 0.0
  %1303 = vmatpush.msra.mxu0 0.0
  %1304 = vmatpush.msra.mxu0 %v143
  %1305 = vmatpush.msra.mxu0 %v142
  %1306 = vmatpush.msra.mxu0 %v141
  %1307 = vmatpush.msra.mxu0 %v140
  %1308 = vmatmul.f32.gmra.mxu0 %v1240
  %v1309 = vpop.f32.mrf.mxu0
  %v1310 = vadd.f32 %v161, %v1309
  %1311 = vdwg.mxu0
  %v1312 = vmul.f32 %v1286, %v1310
  %v1313 = vadd.f32 %v1232, %v1312
  %v1314 = vtanh.pop %v1313
  %v1315 = vsub.f32 1.0, %v1291
  %v1316 = vmul.f32 %v1315, %v1314
  %v1317 = vmul.f32 %v1291, %v1142
  %v1318 = vadd.f32 %v1316, %v1317
  %v1320 = vsel %vm182, %v1222, 0
  %1322 = vmatpush.msra.mxu0 0.0
  %1323 = vmatpush.msra.mxu0 0.0
  %1324 = vmatpush.msra.mxu0 0.0
  %1325 = vmatpush.msra.mxu0 0.0
  %1326 = vmatpush.msra.mxu0 0.0
  %1327 = vmatpush.msra.mxu0 0.0
  %1328 = vmatpush.msra.mxu0 0.0
  %1329 = vmatpush.msra.mxu0 0.0
  %1330 = vmatpush.msra.mxu0 0.0
  %1331 = vmatpush.msra.mxu0 0.0
  %1332 = vmatpush.msra.mxu0 0.0
  %1333 = vmatpush.msra.mxu0 0.0
  %1334 = vmatpush.msra.mxu0 %v148
  %1335 = vmatpush.msra.mxu0 %v147
  %1336 = vmatpush.msra.mxu0 %v146
  %1337 = vmatpush.msra.mxu0 %v145
  %1338 = vmatmul.f32.gmra.mxu0 %v1320
  %v1339 = vpop.f32.mrf.mxu0
  %v1340 = vadd.f32 0.0, %v1339
  %1341 = vdwg.mxu0
  %1342 = vmatpush.msra.mxu0 0.0
  %1343 = vmatpush.msra.mxu0 0.0
  %1344 = vmatpush.msra.mxu0 0.0
  %1345 = vmatpush.msra.mxu0 0.0
  %1346 = vmatpush.msra.mxu0 0.0
  %1347 = vmatpush.msra.mxu0 0.0
  %1348 = vmatpush.msra.mxu0 0.0
  %1349 = vmatpush.msra.mxu0 0.0
  %1350 = vmatpush.msra.mxu0 0.0
  %1351 = vmatpush.msra.mxu0 0.0
  %1352 = vmatpush.msra.mxu0 0.0
  %1353 = vmatpush.msra.mxu0 0.0
  %1354 = vmatpush.msra.mxu0 %v153
  %1355 = vmatpush.msra.mxu0 %v152
  %1356 = vmatpush.msra.mxu0 %v151
  %1357 = vmatpush.msra.mxu0 %v150
  %1358 = vmatmul.f32.gmra.mxu0 %v1320
  %v1359 = vpop.f32.mrf.mxu0
  %v1360 = vadd.f32 0.0, %v1359
  %1361 = vdwg.mxu0
  %v1362 = vadd.f32 %v1234, %v1340
  %v1363 = vmul.f32 %v1362, 0.5
  %v1364 = vtanh.pop %v1363
  %v1365 = vmul.f32 %v1364, 0.5
  %v1366 = vadd.f32 %v1365, 0.5
  %v1367 = vadd.f32 %v1236, %v1360
  %v1368 = vmul.f32 %v1367, 0.5
  %v1369 = vtanh.pop %v1368
  %v1370 = vmul.f32 %v1369, 0.5
  %v1371 = vadd.f32 %v1370, 0.5
  %1372 = vmatpush.msra.mxu0 0.0
  %1373 = vmatpush.msra.mxu0 0.0
  %1374 = vmatpush.msra.mxu0 0.0
  %1375 = vmatpush.msra.mxu0 0.0
  %1376 = vmatpush.msra.mxu0 0.0
  %1377 = vmatpush.msra.mxu0 0.0
  %1378 = vmatpush.msra.mxu0 0.0
  %1379 = vmatpush.msra.mxu0 0.0
  %1380 = vmatpush.msra.mxu0 0.0
  %1381 = vmatpush.msra.mxu0 0.0
  %1382 = vmatpush.msra.mxu0 0.0
  %1383 = vmatpush.msra.mxu0 0.0
  %1384 = vmatpush.msra.mxu0 %v158
  %1385 = vmatpush.msra.mxu0 %v157
  %1386 = vmatpush.msra.mxu0 %v156
  %1387 = vmatpush.msra.mxu0 %v155
  %1388 = vmatmul.f32.gmra.mxu0 %v1320
  %v1389 = vpop.f32.mrf.mxu0
  %v1390 = vadd.f32 %v166, %v1389
  %1391 = vdwg.mxu0
  %v1392 = vmul.f32 %v1366, %v1390
  %v1393 = vadd.f32 %v1238, %v1392
  %v1394 = vtanh.pop %v1393
  %v1395 = vsub.f32 1.0, %v1371
  %v1396 = vmul.f32 %v1395, %v1394
  %v1397 = vmul.f32 %v1371, %v1222
  %v1398 = vadd.f32 %v1396, %v1397
  %s1399 = scalar_lea.vmem %s4, 12
  %1400 = vst.msk [vmem:[%s1399] sm:$0x3] %vm343, %v1318
  %s1401 = scalar_lea.vmem %s51, 2
  %1402 = vst.msk [vmem:[%s1401] sm:$0x3] %vm343, %v1398
  %s1403 = scalar_lea.vmem %s0, 14
  %v1404 = vld [vmem:[%s1403] sm:$0x3]
  %s1405 = scalar_lea.vmem %s0, 30
  %v1406 = vld [vmem:[%s1405] sm:$0x3]
  %s1407 = scalar_lea.vmem %s0, 46
  %v1408 = vld [vmem:[%s1407] sm:$0x3]
  %v1409 = vld [vmem:[%s43] sm:$0x3]
  %s1410 = scalar_lea.vmem %s43, 16
  %v1411 = vld [vmem:[%s1410] sm:$0x3]
  %s1412 = scalar_lea.vmem %s43, 32
  %v1413 = vld [vmem:[%s1412] sm:$0x3]
  %v1415 = vsel %vm182, %v1318, 0
  %1417 = vmatpush.msra.mxu0 0.0
  %1418 = vmatpush.msra.mxu0 0.0
  %1419 = vmatpush.msra.mxu0 0.0
  %1420 = vmatpush.msra.mxu0 0.0
  %1421 = vmatpush.msra.mxu0 0.0
  %1422 = vmatpush.msra.mxu0 0.0
  %1423 = vmatpush.msra.mxu0 0.0
  %1424 = vmatpush.msra.mxu0 0.0
  %1425 = vmatpush.msra.mxu0 0.0
  %1426 = vmatpush.msra.mxu0 0.0
  %1427 = vmatpush.msra.mxu0 0.0
  %1428 = vmatpush.msra.mxu0 0.0
  %1429 = vmatpush.msra.mxu0 %v133
  %1430 = vmatpush.msra.mxu0 %v132
  %1431 = vmatpush.msra.mxu0 %v131
  %1432 = vmatpush.msra.mxu0 %v130
  %1433 = vmatmul.f32.gmra.mxu0 %v1415
  %v1434 = vpop.f32.mrf.mxu0
  %v1435 = vadd.f32 0.0, %v1434
  %1436 = vdwg.mxu0
  %1437 = vmatpush.msra.mxu0 0.0
  %1438 = vmatpush.msra.mxu0 0.0
  %1439 = vmatpush.msra.mxu0 0.0
  %1440 = vmatpush.msra.mxu0 0.0
  %1441 = vmatpush.msra.mxu0 0.0
  %1442 = vmatpush.msra.mxu0 0.0
  %1443 = vmatpush.msra.mxu0 0.0
  %1444 = vmatpush.msra.mxu0 0.0
  %1445 = vmatpush.msra.mxu0 0.0
  %1446 = vmatpush.msra.mxu0 0.0
  %1447 = vmatpush.msra.mxu0 0.0
  %1448 = vmatpush.msra.mxu0 0.0
  %1449 = vmatpush.msra.mxu0 %v138
  %1450 = vmatpush.msra.mxu0 %v137
  %1451 = vmatpush.msra.mxu0 %v136
  %1452 = vmatpush.msra.mxu0 %v135
  %1453 = vmatmul.f32.gmra.mxu0 %v1415
  %v1454 = vpop.f32.mrf.mxu0
  %v1455 = vadd.f32 0.0, %v1454
  %1456 = vdwg.mxu0
  %v1457 = vadd.f32 %v1404, %v1435
  %v1458 = vmul.f32 %v1457, 0.5
  %v1459 = vtanh.pop %v1458
  %v1460 = vmul.f32 %v1459, 0.5
  %v1461 = vadd.f32 %v1460, 0.5
  %v1462 = vadd.f32 %v1406, %v1455
  %v1463 = vmul.f32 %v1462, 0.5
  %v1464 = vtanh.pop %v1463
  %v1465 = vmul.f32 %v1464, 0.5
  %v1466 = vadd.f32 %v1465, 0.5
  %1467 = vmatpush.msra.mxu0 0.0
  %1468 = vmatpush.msra.mxu0 0.0
  %1469 = vmatpush.msra.mxu0 0.0
  %1470 = vmatpush.msra.mxu0 0.0
  %1471 = vmatpush.msra.mxu0 0.0
  %1472 = vmatpush.msra.mxu0 0.0
  %1473 = vmatpush.msra.mxu0 0.0
  %1474 = vmatpush.msra.mxu0 0.0
  %1475 = vmatpush.msra.mxu0 0.0
  %1476 = vmatpush.msra.mxu0 0.0
  %1477 = vmatpush.msra.mxu0 0.0
  %1478 = vmatpush.msra.mxu0 0.0
  %1479 = vmatpush.msra.mxu0 %v143
  %1480 = vmatpush.msra.mxu0 %v142
  %1481 = vmatpush.msra.mxu0 %v141
  %1482 = vmatpush.msra.mxu0 %v140
  %1483 = vmatmul.f32.gmra.mxu0 %v1415
  %v1484 = vpop.f32.mrf.mxu0
  %v1485 = vadd.f32 %v161, %v1484
  %1486 = vdwg.mxu0
  %v1487 = vmul.f32 %v1461, %v1485
  %v1488 = vadd.f32 %v1408, %v1487
  %v1489 = vtanh.pop %v1488
  %v1490 = vsub.f32 1.0, %v1466
  %v1491 = vmul.f32 %v1490, %v1489
  %v1492 = vmul.f32 %v1466, %v1318
  %v1493 = vadd.f32 %v1491, %v1492
  %v1495 = vsel %vm182, %v1398, 0
  %1497 = vmatpush.msra.mxu0 0.0
  %1498 = vmatpush.msra.mxu0 0.0
  %1499 = vmatpush.msra.mxu0 0.0
  %1500 = vmatpush.msra.mxu0 0.0
  %1501 = vmatpush.msra.mxu0 0.0
  %1502 = vmatpush.msra.mxu0 0.0
  %1503 = vmatpush.msra.mxu0 0.0
  %1504 = vmatpush.msra.mxu0 0.0
  %1505 = vmatpush.msra.mxu0 0.0
  %1506 = vmatpush.msra.mxu0 0.0
  %1507 = vmatpush.msra.mxu0 0.0
  %1508 = vmatpush.msra.mxu0 0.0
  %1509 = vmatpush.msra.mxu0 %v148
  %1510 = vmatpush.msra.mxu0 %v147
  %1511 = vmatpush.msra.mxu0 %v146
  %1512 = vmatpush.msra.mxu0 %v145
  %1513 = vmatmul.f32.gmra.mxu0 %v1495
  %v1514 = vpop.f32.mrf.mxu0
  %v1515 = vadd.f32 0.0, %v1514
  %1516 = vdwg.mxu0
  %1517 = vmatpush.msra.mxu0 0.0
  %1518 = vmatpush.msra.mxu0 0.0
  %1519 = vmatpush.msra.mxu0 0.0
  %1520 = vmatpush.msra.mxu0 0.0
  %1521 = vmatpush.msra.mxu0 0.0
  %1522 = vmatpush.msra.mxu0 0.0
  %1523 = vmatpush.msra.mxu0 0.0
  %1524 = vmatpush.msra.mxu0 0.0
  %1525 = vmatpush.msra.mxu0 0.0
  %1526 = vmatpush.msra.mxu0 0.0
  %1527 = vmatpush.msra.mxu0 0.0
  %1528 = vmatpush.msra.mxu0 0.0
  %1529 = vmatpush.msra.mxu0 %v153
  %1530 = vmatpush.msra.mxu0 %v152
  %1531 = vmatpush.msra.mxu0 %v151
  %1532 = vmatpush.msra.mxu0 %v150
  %1533 = vmatmul.f32.gmra.mxu0 %v1495
  %v1534 = vpop.f32.mrf.mxu0
  %v1535 = vadd.f32 0.0, %v1534
  %1536 = vdwg.mxu0
  %v1537 = vadd.f32 %v1409, %v1515
  %v1538 = vmul.f32 %v1537, 0.5
  %v1539 = vtanh.pop %v1538
  %v1540 = vmul.f32 %v1539, 0.5
  %v1541 = vadd.f32 %v1540, 0.5
  %v1542 = vadd.f32 %v1411, %v1535
  %v1543 = vmul.f32 %v1542, 0.5
  %v1544 = vtanh.pop %v1543
  %v1545 = vmul.f32 %v1544, 0.5
  %v1546 = vadd.f32 %v1545, 0.5
  %1547 = vmatpush.msra.mxu0 0.0
  %1548 = vmatpush.msra.mxu0 0.0
  %1549 = vmatpush.msra.mxu0 0.0
  %1550 = vmatpush.msra.mxu0 0.0
  %1551 = vmatpush.msra.mxu0 0.0
  %1552 = vmatpush.msra.mxu0 0.0
  %1553 = vmatpush.msra.mxu0 0.0
  %1554 = vmatpush.msra.mxu0 0.0
  %1555 = vmatpush.msra.mxu0 0.0
  %1556 = vmatpush.msra.mxu0 0.0
  %1557 = vmatpush.msra.mxu0 0.0
  %1558 = vmatpush.msra.mxu0 0.0
  %1559 = vmatpush.msra.mxu0 %v158
  %1560 = vmatpush.msra.mxu0 %v157
  %1561 = vmatpush.msra.mxu0 %v156
  %1562 = vmatpush.msra.mxu0 %v155
  %1563 = vmatmul.f32.gmra.mxu0 %v1495
  %v1564 = vpop.f32.mrf.mxu0
  %v1565 = vadd.f32 %v166, %v1564
  %1566 = vdwg.mxu0
  %v1567 = vmul.f32 %v1541, %v1565
  %v1568 = vadd.f32 %v1413, %v1567
  %v1569 = vtanh.pop %v1568
  %v1570 = vsub.f32 1.0, %v1546
  %v1571 = vmul.f32 %v1570, %v1569
  %v1572 = vmul.f32 %v1546, %v1398
  %v1573 = vadd.f32 %v1571, %v1572
  %s1574 = scalar_lea.vmem %s4, 14
  %1575 = vst.msk [vmem:[%s1574] sm:$0x3] %vm343, %v1493
  %1576 = vst.msk [vmem:[%s51] sm:$0x3] %vm343, %v1573
  %1577 = vst.msk [vmem:[#allocation2] sm:$0x3] %vm343, %v1493
  %1578 = vst.msk [vmem:[%s169] sm:$0x3] %vm343, %v1573
  // Predicated region
  $region37: #{encoder_forward.3} parent=0 // pred_check
    %p1579 = pneg %p54
  $region38: #{encoder_forward.3} parent=0 // pred_check_branch
    %1581 = sbr.rel (%p1579) target = $region40
  $region39: #{encoder_forward.3} parent=0 // pred_region
    %1582 = vst.msk [vmem:[%s6] sm:$0x3] %vm343, %v1493
    %s1583 = scalar_lea.vmem %s6, 2
    %1584 = vst.msk [vmem:[%s1583] sm:$0x3] %vm343, %v1573
  $region40: #{encoder_forward.3} parent=0 // pred_fallthru
    _
  %s1585 = ssub.s32 0, 0
  %s1586 = smul.u32 8, %s1585
  %p1587 = scmp.lt.s32.totalorder %s1586, 7
  %s1588 = scalar_select %p1587, %s1586, 7
  %s1589 = smul.addr %s1588, 2
  %s1590 = scalar_lea.vmem %s5, %s1589
  // Predicated region
  $region41: #{encoder_forward.3} parent=0 // pred_check
    _
  $region42: #{encoder_forward.3} parent=0 // pred_check_branch
    %1592 = sbr.rel (0) target = $region44
  $region43: #{encoder_forward.3} parent=0 // pred_region
    _
  $region44: #{encoder_forward.3} parent=0 // pred_fallthru
    _
  // Predicated region
  $region45: #{encoder_forward.3} parent=0 // pred_check
    _
  $region46: #{encoder_forward.3} parent=0 // pred_check_branch
    %1594 = sbr.rel (0) target = $region48
  $region47: #{encoder_forward.3} parent=0 // pred_region
    %s1595 = ssub.s32 0, 0
    %s1596 = smul.u32 8, %s1595
  $region48: #{encoder_forward.3} parent=0 // pred_fallthru
    _
  // Predicated region
  $region49: #{encoder_forward.3} parent=0 // pred_check
    _
  $region50: #{encoder_forward.3} parent=0 // pred_check_branch
    %1598 = sbr.rel (0) target = $region52
  $region51: #{encoder_forward.3} parent=0 // pred_region
    _
  $region52: #{encoder_forward.3} parent=0 // pred_fallthru
    _
  // Predicated region
  $region53: #{encoder_forward.3} parent=0 // pred_check
    _
  $region54: #{encoder_forward.3} parent=0 // pred_check_branch
    %1600 = sbr.rel (0) target = $region56
  $region55: #{encoder_forward.3} parent=0 // pred_region
    _
  $region56: #{encoder_forward.3} parent=0 // pred_fallthru
    _
  // Predicated region
  $region57: #{encoder_forward.3} parent=0 // pred_check
    _
  $region58: #{encoder_forward.3} parent=0 // pred_check_branch
    %1602 = sbr.rel (0) target = $region60
  $region59: #{encoder_forward.3} parent=0 // pred_region
    %s1603 = ssub.s32 0, 0
    %s1604 = smul.u32 8, %s1603
    %p1605 = scmp.lt.s32.totalorder %s1604, 7
    %s1606 = scalar_select %p1605, %s1604, 7
    %s1607 = smul.addr %s1606, 2
    %s1608 = scalar_lea.vmem %s5, %s1607
  $region60: #{encoder_forward.3} parent=0 // pred_fallthru
    _
  // Predicated region
  $region61: #{encoder_forward.3} parent=0 // pred_check
    _
  $region62: #{encoder_forward.3} parent=0 // pred_check_branch
    %1610 = sbr.rel (0) target = $region64
  $region63: #{encoder_forward.3} parent=0 // pred_region
    _
  $region64: #{encoder_forward.3} parent=0 // pred_fallthru
    _
  %1611 = vsyncmov [#allocation4]
  %s1612 = vpop.sfrf %1611
  %p1613 = scmp.eq.s32.totalorder %s1612, 0
  %p1614 = pneg %p1613
  %1616 = shalt.err (%p1614)

</llo_original>
